<compile_context>
chip_gen: v6e
topology: v6e:2x2x1
jax: 0.10.0
libtpu: 0.0.40
codegen_flags: <defaults>
</compile_context>

<pallas_src>
import jax
import jax.numpy as jnp
from jax.experimental import pallas as pl
from jax.experimental.pallas import tpu as pltpu

D = 1024          # module's fixed in/out feature dim
MULTI = 4         # module default
H = D * MULTI     # hidden dim of the adaptor MLP
ALPHA = 0.5       # module default


def _quantize_per_column(w):
    """Symmetric per-output-column int8 quantization: w ≈ q * scale[None, :] (scale > 0)."""
    amax = jnp.max(jnp.abs(w), axis=0)                       # (N,)
    scale = jnp.maximum(amax / 127.0, 1e-12)
    q = jnp.clip(jnp.round(w / scale[None, :]), -127.0, 127.0).astype(jnp.int8)
    return q, scale


def prepare_adaptor_weights(w1, w2, *, alpha=ALPHA):
    """One-time weight prep (hoist out of the hot path when weights are static across calls).

    Returns:
      q1: (D, H) int8   — quantized W1 (per hidden-column scale s1 factored out)
      q2: (H, D) int8   — quantized (1-alpha) * diag(s1) @ W2 (per output-column scale s2)
      s2: (1, D) f32    — per-output-column dequant scale (carries s1, s2 and (1-alpha))
    so that  (1-alpha) * relu(x @ W1) @ W2  ≈  (relu(x @ q1) @ q2) * s2 .
    """
    w1 = w1.astype(jnp.float32)
    w2 = w2.astype(jnp.float32)
    q1, s1 = _quantize_per_column(w1)                         # s1: (H,), positive
    # relu(x @ (q1 * s1)) = s1 * relu(x @ q1)  (s1 > 0)  ->  fold s1 into W2's rows.
    w2_fold = (1.0 - alpha) * (s1[:, None] * w2)              # exact f32 fold of the blend
    q2, s2 = _quantize_per_column(w2_fold)                    # s2: (D,)
    return q1, q2, s2.reshape(1, D).astype(jnp.float32)


def _adaptor_kernel(x_ref, q1_ref, q2_ref, s2_ref, o_ref):
    """One grid step = (core c, hidden-chunk h).  Accumulates this core's partial output.

    x_ref:  (B, D)      f32   full activations (resident; constant block index)
    q1_ref: (D, TH)     int8  chunk of quantized W1
    q2_ref: (TH, D)     int8  chunk of quantized, scale-folded W2
    s2_ref: (1, D)      f32   per-output-column dequant scale (resident)
    o_ref:  (1, B, D)   f32   this core's partial-output block (in-place accumulator over h)
    """
    h = pl.program_id(1)

    x_bf = x_ref[...].astype(jnp.bfloat16)

    # relu(x @ q1[:, chunk]) — int8 values are exact in bf16; bf16 MXU matmul, f32 accumulate.
    hid = jnp.dot(x_bf, q1_ref[...].astype(jnp.bfloat16),
                  preferred_element_type=jnp.float32)
    hid = jnp.maximum(hid, 0.0)
    # TODO(synk): training-mode Dropout(0.6) (Bernoulli mask + 1/(1-p) via
    # pltpu.prng_random_bits) omitted; eval-mode dropout is identity.

    part = jnp.dot(hid.astype(jnp.bfloat16), q2_ref[...].astype(jnp.bfloat16),
                   preferred_element_type=jnp.float32)
    part = part * s2_ref[...]       # per-output-column f32 dequant (includes (1-alpha))

    # Same output block for all h within a core -> resident accumulator.  Each core owns its
    # own block (index c), so the "parallel" core axis has no write race.
    @pl.when(h == 0)
    def _():
        o_ref[...] = part[None]

    @pl.when(h != 0)
    def _():
        o_ref[...] += part[None]


def adaptor_learner(x, w1, w2, *, alpha=ALPHA, tile_h=2048, num_cores=2):
    """x: [B, D] f32, w1: [D, H] f32, w2: [H, D] f32. Returns [B, D] f32."""
    B, d = x.shape
    assert d == D and w1.shape == (D, H) and w2.shape == (H, D)
    assert H % (num_cores * tile_h) == 0
    assert x.dtype == jnp.float32
    steps_per_core = H // (num_cores * tile_h)

    # One-time weight prep (cheap; hoist out if weights are static across calls).
    q1, q2, s2 = prepare_adaptor_weights(w1, w2, alpha=alpha)

    # Advisory cost hint: small, memory-bound op — lets XLA overlap neighbouring HLOs.
    cost = pl.CostEstimate(
        flops=4 * B * D * H,                                        # two B x D x H matmuls
        bytes_accessed=D * H + H * D                                # int8 weights
                       + B * D * 4                                   # x read
                       + num_cores * B * D * 4                       # partial outputs
                       + D * 4,                                      # scales
        transcendentals=0,
    )

    partials = pl.pallas_call(
        _adaptor_kernel,
        out_shape=jax.ShapeDtypeStruct((num_cores, B, D), jnp.float32),
        grid_spec=pltpu.PrefetchScalarGridSpec(
            num_scalar_prefetch=0,
            grid=(num_cores, steps_per_core),
            in_specs=[
                pl.BlockSpec((B, D), lambda c, h: (0, 0)),                        # x (resident)
                pl.BlockSpec((D, tile_h),
                             lambda c, h: (0, c * steps_per_core + h)),           # W1 chunk (int8)
                pl.BlockSpec((tile_h, D),
                             lambda c, h: (c * steps_per_core + h, 0)),           # W2 chunk (int8)
                pl.BlockSpec((1, D), lambda c, h: (0, 0)),                        # s2 (resident)
            ],
            out_specs=pl.BlockSpec((1, B, D), lambda c, h: (c, 0, 0)),            # per-core partial
        ),
        compiler_params=pltpu.CompilerParams(
            # Core axis parallel (v7x megacore split of the weight stream); hidden-chunk axis
            # is a per-core sequential reduction into that core's resident output block.
            dimension_semantics=("parallel", "arbitrary"),
            # ~8.2 MiB double-buffered int8 chunks + up to ~8 MiB in-kernel bf16 dequant
            # temporaries; 28 MiB leaves headroom and stays below every generation's
            # 32 MiB scoped default (v7x physical VMEM is 64 MiB).
            vmem_limit_bytes=28 * 1024 * 1024,
        ),
        cost_estimate=cost,
    )(x, q1, q2, s2)

    # Tiny epilogue (few tens of KiB): blend the skip connection and sum per-core partials.
    return alpha * x + jnp.sum(partials, axis=0)


if __name__ == "__main__":
    key = jax.random.PRNGKey(0)
    kx, k1, k2 = jax.random.split(key, 3)

    B = 8  # small batch; feature dim is fixed at 1024 by the module definition
    x = jax.random.normal(kx, (B, D), dtype=jnp.float32)
    # Deterministic synthetic weights (kaiming-ish scale), stored as [in, out].
    w1 = jax.random.normal(k1, (D, H), dtype=jnp.float32) * (1.0 / jnp.sqrt(D))
    w2 = jax.random.normal(k2, (H, D), dtype=jnp.float32) * (1.0 / jnp.sqrt(H))

    out = adaptor_learner(x, w1, w2)
    out = jax.block_until_ready(out)

    # Reference with identical int8 quantization (isolates the kernel's bf16 matmul math).
    q1, q2, s2 = prepare_adaptor_weights(w1, w2)
    ref_quant = ALPHA * x + (jnp.maximum(x @ q1.astype(jnp.float32), 0.0)
                             @ q2.astype(jnp.float32)) * s2
    # Pure-f32 module reference (sanity check of the int8 per-channel quantization budget).
    ref_f32 = ALPHA * x + (1.0 - ALPHA) * (jnp.maximum(x @ w1, 0.0) @ w2)

    assert out.shape == (B, D) and out.dtype == jnp.float32
    assert jnp.allclose(out, ref_quant, atol=2e-2, rtol=2e-2), "mismatch vs quantized reference"
    assert jnp.allclose(out, ref_f32, atol=1e-1, rtol=1e-1), "mismatch vs f32 module reference"

    print("KERNEL_OK")
</pallas_src>

<mosaic_0001>
module attributes {stable_mosaic.version = 11 : i64} {
  func.func @_adaptor_kernel(%arg0: i32, %arg1: i32, %arg2: memref<8x1024xf32, #tpu.memory_space<vmem>>, %arg3: memref<1024x2048xi8, #tpu.memory_space<vmem>>, %arg4: memref<2048x1024xi8, #tpu.memory_space<vmem>>, %arg5: memref<1x1024xf32, #tpu.memory_space<vmem>>, %arg6: memref<1x8x1024xf32, #tpu.memory_space<vmem>>) attributes {dimension_semantics = [#tpu.dimension_semantics<parallel>, #tpu.dimension_semantics<arbitrary>], iteration_bounds = array<i64: 2, 1>, scalar_prefetch = 0 : i64, scratch_operands = 0 : i64, tpu.core_type = #tpu.core_type<tc>, window_params = [{pipeline_mode = #tpu.pipeline_mode<synchronous>, transform_indices = @transform_0, window_bounds = array<i64: 8, 1024>}, {transform_indices = @transform_1, window_bounds = array<i64: 1024, 2048>}, {transform_indices = @transform_2, window_bounds = array<i64: 2048, 1024>}, {pipeline_mode = #tpu.pipeline_mode<synchronous>, transform_indices = @transform_3, window_bounds = array<i64: 1, 1024>}, {transform_indices = @transform_4, window_bounds = array<i64: 1, 8, 1024>}]} {
    %c0 = arith.constant 0 : index
    %c0_0 = arith.constant 0 : index
    %0 = vector.load %arg2[%c0, %c0_0] : memref<8x1024xf32, #tpu.memory_space<vmem>>, vector<8x1024xf32>
    %1 = arith.truncf %0 : vector<8x1024xf32> to vector<8x1024xbf16>
    %c0_1 = arith.constant 0 : index
    %c0_2 = arith.constant 0 : index
    %2 = vector.load %arg3[%c0_1, %c0_2] : memref<1024x2048xi8, #tpu.memory_space<vmem>>, vector<1024x2048xi8>
    %3 = arith.sitofp %2 : vector<1024x2048xi8> to vector<1024x2048xbf16>
    %cst = arith.constant dense<0.000000e+00> : vector<8x2048xf32>
    %4 = tpu.matmul %1, %3, %cst {dimension_numbers = #tpu.dot_dimension_numbers<[1], [0], [0], [1], [0, 0, 1, 1], [], []>} : vector<8x1024xbf16>, vector<1024x2048xbf16>, vector<8x2048xf32> -> vector<8x2048xf32>
    %cst_3 = arith.constant 0.000000e+00 : f32
    %5 = vector.broadcast %cst_3 : f32 to vector<8x2048xf32>
    %6 = arith.maximumf %4, %5 : vector<8x2048xf32>
    %7 = arith.truncf %6 : vector<8x2048xf32> to vector<8x2048xbf16>
    %c0_4 = arith.constant 0 : index
    %c0_5 = arith.constant 0 : index
    %8 = vector.load %arg4[%c0_4, %c0_5] : memref<2048x1024xi8, #tpu.memory_space<vmem>>, vector<2048x1024xi8>
    %9 = arith.sitofp %8 : vector<2048x1024xi8> to vector<2048x1024xbf16>
    %cst_6 = arith.constant dense<0.000000e+00> : vector<8x1024xf32>
    %10 = tpu.matmul %7, %9, %cst_6 {dimension_numbers = #tpu.dot_dimension_numbers<[1], [0], [0], [1], [0, 0, 1, 1], [], []>} : vector<8x2048xbf16>, vector<2048x1024xbf16>, vector<8x1024xf32> -> vector<8x1024xf32>
    %c0_7 = arith.constant 0 : index
    %c0_8 = arith.constant 0 : index
    %11 = vector.load %arg5[%c0_7, %c0_8] : memref<1x1024xf32, #tpu.memory_space<vmem>>, vector<1x1024xf32>
    %12 = vector.broadcast %11 : vector<1x1024xf32> to vector<8x1024xf32>
    %13 = arith.mulf %10, %12 : vector<8x1024xf32>
    %c0_i32 = arith.constant 0 : i32
    %14 = arith.cmpi eq, %arg1, %c0_i32 : i32
    %15 = arith.extui %14 : i1 to i32
    %c0_i32_9 = arith.constant 0 : i32
    %16 = arith.cmpi ne, %15, %c0_i32_9 : i32
    scf.if %16 {
      %20 = vector.shape_cast %13 : vector<8x1024xf32> to vector<1x8x1024xf32>
      %c0_12 = arith.constant 0 : index
      %c0_13 = arith.constant 0 : index
      %c0_14 = arith.constant 0 : index
      %21 = vector.load %arg6[%c0_12, %c0_13, %c0_14] : memref<1x8x1024xf32, #tpu.memory_space<vmem>>, vector<1x8x1024xf32>
      tpu.vector_store %arg6[%c0_12, %c0_13, %c0_14], %20 {strides = array<i32>} : memref<1x8x1024xf32, #tpu.memory_space<vmem>>, vector<1x8x1024xf32>,
    } else {
    }
    %c0_i32_10 = arith.constant 0 : i32
    %17 = arith.cmpi ne, %arg1, %c0_i32_10 : i32
    %18 = arith.extui %17 : i1 to i32
    %c0_i32_11 = arith.constant 0 : i32
    %19 = arith.cmpi ne, %18, %c0_i32_11 : i32
    scf.if %19 {
      %c0_12 = arith.constant 0 : index
      %c0_13 = arith.constant 0 : index
      %c0_14 = arith.constant 0 : index
      %20 = vector.load %arg6[%c0_12, %c0_13, %c0_14] : memref<1x8x1024xf32, #tpu.memory_space<vmem>>, vector<1x8x1024xf32>
      %21 = vector.shape_cast %13 : vector<8x1024xf32> to vector<1x8x1024xf32>
      %22 = arith.addf %20, %21 : vector<1x8x1024xf32>
      %c0_15 = arith.constant 0 : index
      %c0_16 = arith.constant 0 : index
      %c0_17 = arith.constant 0 : index
      %23 = vector.load %arg6[%c0_15, %c0_16, %c0_17] : memref<1x8x1024xf32, #tpu.memory_space<vmem>>, vector<1x8x1024xf32>
      tpu.vector_store %arg6[%c0_15, %c0_16, %c0_17], %22 {strides = array<i32>} : memref<1x8x1024xf32, #tpu.memory_space<vmem>>, vector<1x8x1024xf32>,
    } else {
    }
    return
  }
  func.func @transform_0(%arg0: i32, %arg1: i32) -> (i32, i32) {
    %c0_i32 = arith.constant 0 : i32
    %c0_i32_0 = arith.constant 0 : i32
    %c0_i32_1 = arith.constant 0 : i32
    return %c0_i32, %c0_i32_0 : i32, i32
  }
  func.func @transform_1(%arg0: i32, %arg1: i32) -> (i32, i32) {
    %c1_i32 = arith.constant 1 : i32
    %0 = arith.muli %arg0, %c1_i32 : i32
    %1 = arith.addi %0, %arg1 : i32
    %c0_i32 = arith.constant 0 : i32
    %c0_i32_0 = arith.constant 0 : i32
    return %c0_i32, %1 : i32, i32
  }
  func.func @transform_2(%arg0: i32, %arg1: i32) -> (i32, i32) {
    %c1_i32 = arith.constant 1 : i32
    %0 = arith.muli %arg0, %c1_i32 : i32
    %1 = arith.addi %0, %arg1 : i32
    %c0_i32 = arith.constant 0 : i32
    %c0_i32_0 = arith.constant 0 : i32
    return %1, %c0_i32 : i32, i32
  }
  func.func @transform_3(%arg0: i32, %arg1: i32) -> (i32, i32) {
    %c0_i32 = arith.constant 0 : i32
    %c0_i32_0 = arith.constant 0 : i32
    %c0_i32_1 = arith.constant 0 : i32
    return %c0_i32, %c0_i32_0 : i32, i32
  }
  func.func @transform_4(%arg0: i32, %arg1: i32) -> (i32, i32, i32) {
    %c0_i32 = arith.constant 0 : i32
    %c0_i32_0 = arith.constant 0 : i32
    %c0_i32_1 = arith.constant 0 : i32
    return %arg0, %c0_i32, %c0_i32_0 : i32, i32, i32
  }
}

</mosaic_0001>

<llo_original>
// kernel: tpu_custom_call.1
$region0: #{tpu_custom_call.1}
  #allocation0 [shape = 'u32[]', space=smem, size = 0x4, offset = 0x4, fixed_abs, tag = 'smem constant byte address 0x4 - core index']
  #allocation1 [shape = 'u32[144,128]{1,0:T(1,128)}', space=vmem, size = 0x12000, scoped, tag = 'internal scratch']
  %s0 = inlined_call_operand.hbm [shape: f32[8,1024], index: 0, kind: input, shape index: {}]
  %s1 = inlined_call_operand.hbm [shape: s8[1024,4096], index: 1, kind: input, shape index: {}]
  %s2 = inlined_call_operand.hbm [shape: s8[4096,1024], index: 2, kind: input, shape index: {}]
  %s3 = inlined_call_operand.hbm [shape: f32[1,1024], index: 3, kind: input, shape index: {}]
  %s4 = inlined_call_operand.hbm [shape: f32[2,8,1024], index: 4, kind: output, shape index: {}]
  %s5 = sld [smem:[#allocation0]]
  $region73: #{tpu_custom_call.1} parent=0
    _
  %s7 = ssub.s32 1, %s5
  %s8 = scalar_select 0, %s7, %s5
  $region1: #{tpu_custom_call.1} parent=0
    #allocation2 [shape = 'u8[32768]{0}', space=vmem, size = 0x8000, scoped, tag = 'input window, operand 0, single buffered']
    #allocation3 [shape = 's32[2]{0}', space=sflag, size = 0x8, scoped, tag = 'scoped memory for tpu_custom_call.1']
    #allocation4 [shape = 's32[2]{0}', space=sflag, size = 0x8, scoped, tag = 'scoped memory for tpu_custom_call.1']
    #allocation5 [shape = 'u8[4194304]{0}', space=vmem, size = 0x400000, scoped, tag = 'input window, operand 1']
    #allocation6 [shape = 's32[2]{0}', space=sflag, size = 0x8, scoped, tag = 'scoped memory for tpu_custom_call.1']
    #allocation7 [shape = 'u8[4194304]{0}', space=vmem, size = 0x400000, scoped, tag = 'input window, operand 2']
    #allocation8 [shape = 'u8[4096]{0}', space=vmem, size = 0x1000, scoped, tag = 'input window, operand 3, single buffered']
    #allocation9 [shape = 's32[1]{0}', space=sflag, size = 0x4, scoped, tag = 'scoped memory for tpu_custom_call.1']
    #allocation10 [shape = 'u8[65536]{0}', space=vmem, size = 0x10000, scoped, tag = 'output window, operand 0']
    %9 = vsyncpa [#allocation3], 0
    %10 = vsyncpa [#allocation6], 0
    %s11 = scalar_lea.sflag [#allocation6], 1
    %12 = vsyncpa %s11, 0
    %13 = vsyncpa [#allocation9], 0
    %14 = vsyncpa [#allocation4], 0
    %s15 = scalar_lea.sflag [#allocation4], 1
    %16 = vsyncpa %s15, 0
    loop: start=0, step=1, limit=4
    $region2: #{tpu_custom_call.1} parent=1 // loop_pre_header
      _
    $region3: #{tpu_custom_call.1} parent=1 // loop_header
      %s18 = sphi 0, %s22
      %p19 = scmp.ge.s32.totalorder %s18, 4
      %s25 = sphi 0, %s37
      %s26 = sphi 0, %s33
      %s27 = sphi 0, %s25
      %s28 = sphi 0, %s26
      %s29 = sphi 0, %s27
      %s30 = sphi 0, %s28
      %s38 = sphi 0, %s38
      %s40 = sphi 0, %s38
      %s41 = sphi 0, %s40
      %s55 = sphi 0, %s41
      %s63 = sphi 0, %s65
      %s66 = sphi 0, %s63
      %s67 = sphi 0, %s66
      %s83 = sphi 0, %s67
      %s91 = sphi 0, %s93
      %s94 = sphi 0, %s91
      %s95 = sphi 0, %s94
      %s111 = sphi 0, %s95
      %s115 = sphi 0, %s115
      %s117 = sphi 0, %s115
      %s118 = sphi 0, %s117
      %s132 = sphi 0, %s118
      %s138 = sphi 0, %s140
      %s141 = sphi 0, %s138
      %s142 = sphi 0, %s141
      %s158 = sphi 0, %s142
    $region4: #{tpu_custom_call.1} parent=1 // loop_header_branch
      %21 = sbr.rel (%p19) target = $region8
    $region5: #{tpu_custom_call.1} parent=1 // loop_body
      %s23 = ssub.s32 %s18, 1
      %s24 = ssub.s32 %s18, 2
      %s31 = sadd.s32 1, %s26
      %p32 = scmp.ge.s32.totalorder %s31, 1
      %s33 = scalar_select %p32, 0, %s31
      %s34 = sadd.s32 1, %s25
      %s35 = scalar_select %p32, %s34, %s25
      %p36 = scmp.ge.s32.totalorder %s35, 2
      %s37 = scalar_select %p36, 0, %s35
      %s39 = sadd.s32 %s38, 1
      %p42 = scmp.eq.s32.totalorder %s18, 1
      %p43 = scmp.ne.s32.totalorder %s38, %s40
      %p44 = scmp.eq.s32.totalorder %s18, 0
      %p45 = por %p43, %p44
      %p46 = scmp.ne.s32.totalorder %s38, %s40
      %p47 = scmp.eq.s32.totalorder %s23, 1
      %p48 = por %p46, %p47
      %p49 = scmp.ne.s32.totalorder %s40, %s41
      %p50 = scmp.eq.s32.totalorder %s23, 0
      %p51 = por %p49, %p50
      %p52 = scmp.ne.s32.totalorder %s40, %s41
      %p53 = scmp.eq.s32.totalorder %s24, 1
      %p54 = por %p52, %p53
      %p56 = scmp.ne.s32.totalorder %s41, %s55
      %p57 = scmp.eq.s32.totalorder %s24, 0
      %p58 = por %p56, %p57
      %s59 = sadd.s32 %s25, %s26
      %s60 = sadd.s32 %s37, %s33
      %s61 = ssub.s32 %s59, %s60
      %p62 = scmp.eq.s32.totalorder %s61, 0
      %s64 = sadd.s32 %s63, 1
      %s65 = scalar_select %p62, %s63, %s64
      %p68 = pneg %p62
      %p69 = scmp.eq.s32.totalorder %s18, 1
      %p70 = por %p68, %p69
      %p71 = scmp.ne.s32.totalorder %s63, %s66
      %p72 = scmp.eq.s32.totalorder %s18, 0
      %p73 = por %p71, %p72
      %p74 = scmp.ne.s32.totalorder %s63, %s66
      %p75 = scmp.eq.s32.totalorder %s23, 1
      %p76 = por %p74, %p75
      %p77 = scmp.ne.s32.totalorder %s66, %s67
      %p78 = scmp.eq.s32.totalorder %s23, 0
      %p79 = por %p77, %p78
      %p80 = scmp.ne.s32.totalorder %s66, %s67
      %p81 = scmp.eq.s32.totalorder %s24, 1
      %p82 = por %p80, %p81
      %p84 = scmp.ne.s32.totalorder %s67, %s83
      %p85 = scmp.eq.s32.totalorder %s24, 0
      %p86 = por %p84, %p85
      %s87 = sadd.s32 %s25, %s26
      %s88 = sadd.s32 %s37, %s33
      %s89 = ssub.s32 %s87, %s88
      %p90 = scmp.eq.s32.totalorder %s89, 0
      %s92 = sadd.s32 %s91, 1
      %s93 = scalar_select %p90, %s91, %s92
      %p96 = pneg %p90
      %p97 = scmp.eq.s32.totalorder %s18, 1
      %p98 = por %p96, %p97
      %p99 = scmp.ne.s32.totalorder %s91, %s94
      %p100 = scmp.eq.s32.totalorder %s18, 0
      %p101 = por %p99, %p100
      %p102 = scmp.ne.s32.totalorder %s91, %s94
      %p103 = scmp.eq.s32.totalorder %s23, 1
      %p104 = por %p102, %p103
      %p105 = scmp.ne.s32.totalorder %s94, %s95
      %p106 = scmp.eq.s32.totalorder %s23, 0
      %p107 = por %p105, %p106
      %p108 = scmp.ne.s32.totalorder %s94, %s95
      %p109 = scmp.eq.s32.totalorder %s24, 1
      %p110 = por %p108, %p109
      %p112 = scmp.ne.s32.totalorder %s95, %s111
      %p113 = scmp.eq.s32.totalorder %s24, 0
      %p114 = por %p112, %p113
      %s116 = sadd.s32 %s115, 1
      %p119 = scmp.eq.s32.totalorder %s18, 1
      %p120 = scmp.ne.s32.totalorder %s115, %s117
      %p121 = scmp.eq.s32.totalorder %s18, 0
      %p122 = por %p120, %p121
      %p123 = scmp.ne.s32.totalorder %s115, %s117
      %p124 = scmp.eq.s32.totalorder %s23, 1
      %p125 = por %p123, %p124
      %p126 = scmp.ne.s32.totalorder %s117, %s118
      %p127 = scmp.eq.s32.totalorder %s23, 0
      %p128 = por %p126, %p127
      %p129 = scmp.ne.s32.totalorder %s117, %s118
      %p130 = scmp.eq.s32.totalorder %s24, 1
      %p131 = por %p129, %p130
      %p133 = scmp.ne.s32.totalorder %s118, %s132
      %p134 = scmp.eq.s32.totalorder %s24, 0
      %p135 = por %p133, %p134
      %s136 = ssub.s32 %s25, %s37
      %p137 = scmp.eq.s32.totalorder %s136, 0
      %s139 = sadd.s32 %s138, 1
      %s140 = scalar_select %p137, %s138, %s139
      %p143 = pneg %p137
      %p144 = scmp.eq.s32.totalorder %s18, 1
      %p145 = por %p143, %p144
      %p146 = scmp.ne.s32.totalorder %s138, %s141
      %p147 = scmp.eq.s32.totalorder %s18, 0
      %p148 = por %p146, %p147
      %p149 = scmp.ne.s32.totalorder %s138, %s141
      %p150 = scmp.eq.s32.totalorder %s23, 1
      %p151 = por %p149, %p150
      %p152 = scmp.ne.s32.totalorder %s141, %s142
      %p153 = scmp.eq.s32.totalorder %s23, 0
      %p154 = por %p152, %p153
      %p155 = scmp.ne.s32.totalorder %s141, %s142
      %p156 = scmp.eq.s32.totalorder %s24, 1
      %p157 = por %p155, %p156
      %p159 = scmp.ne.s32.totalorder %s142, %s158
      %p160 = scmp.eq.s32.totalorder %s24, 0
      %p161 = por %p159, %p160
      %p162 = scmp.le.s32.totalorder 1, %s18
      %p163 = scmp.lt.s32.totalorder %s18, 3
      %p164 = pnand %p162, %p163
      %p165 = pneg %p164
      // Predicated region
      $region9: #{tpu_custom_call.1} parent=5 // pred_check
        _
      $region10: #{tpu_custom_call.1} parent=5 // pred_check_branch
        %167 = sbr.rel (%p164) target = $region12
      $region11: #{tpu_custom_call.1} parent=5 // pred_region
        %s168 = ssub.s32 %s18, 1
        // Predicated region
        $region13: #{tpu_custom_call.1} parent=11 // pred_check
          %p169 = pneg %p51
        $region14: #{tpu_custom_call.1} parent=11 // pred_check_branch
          %171 = sbr.rel (%p169) target = $region16
        $region15: #{tpu_custom_call.1} parent=11 // pred_region
          %s173 = ssub.s32 1024, 1024
          %174 = vsyncadd [#allocation3], %s173
          %s176 = sshll.u32 [#allocation2], 4
          %s177 = int_to_ptr.vmem [resolvable:$true] %s176
          %179 = dma.hbm_to_vmem [thread:$0]  %s0, 1024, %s177, [#allocation3]
        $region16: #{tpu_custom_call.1} parent=11 // pred_fallthru
          _
        // Predicated region
        $region17: #{tpu_custom_call.1} parent=11 // pred_check
          %p180 = pneg %p128
        $region18: #{tpu_custom_call.1} parent=11 // pred_check_branch
          %182 = sbr.rel (%p180) target = $region20
        $region19: #{tpu_custom_call.1} parent=11 // pred_region
          %s184 = ssub.s32 128, 128
          %185 = vsyncadd [#allocation9], %s184
          %s187 = sshll.u32 [#allocation8], 4
          %s188 = int_to_ptr.vmem [resolvable:$true] %s187
          %190 = dma.hbm_to_vmem [thread:$0]  %s3, 128, %s188, [#allocation9]
        $region20: #{tpu_custom_call.1} parent=11 // pred_fallthru
          _
      $region12: #{tpu_custom_call.1} parent=5 // pred_fallthru
        _
      %p191 = scmp.lt.s32.totalorder %s18, 2
      // Predicated region
      $region21: #{tpu_custom_call.1} parent=5 // pred_check
        %p192 = pneg %p191
      $region22: #{tpu_custom_call.1} parent=5 // pred_check_branch
        %194 = sbr.rel (%p192) target = $region24
      $region23: #{tpu_custom_call.1} parent=5 // pred_region
        // Predicated region
        $region25: #{tpu_custom_call.1} parent=23 // pred_check
          %p195 = pneg %p73
        $region26: #{tpu_custom_call.1} parent=23 // pred_check_branch
          %197 = sbr.rel (%p195) target = $region28
        $region27: #{tpu_custom_call.1} parent=23 // pred_region
          %s198 = sand.u32 %s18, 1
          %s199 = scalar_lea.sflag [#allocation6], %s198
          %s200 = sand.u32 %s63, 1
          %s201 = smul.addr %s200, 4096
          %s202 = scalar_lea.vmem [#allocation5], %s201
          %s203 = sadd.s32 %s25, %s26
          %s204 = smul.u32 16, %s203
          %s206 = ssub.s32 65536, 65536
          %207 = vsyncadd %s199, %s206
          %s208 = smul.addr %s204, 128
          %s209 = scalar_lea.hbm %s1, %s208
          %s210 = sshll.u32 %s202, 4
          %s211 = int_to_ptr.vmem [resolvable:$true] %s210
          %216 = dma.hbm_to_vmem [thread:$0]  %s209, 65536, %s211, %s199, 4096, 2048, 128
        $region28: #{tpu_custom_call.1} parent=23 // pred_fallthru
          _
        // Predicated region
        $region29: #{tpu_custom_call.1} parent=23 // pred_check
          %p217 = pneg %p101
        $region30: #{tpu_custom_call.1} parent=23 // pred_check_branch
          %219 = sbr.rel (%p217) target = $region32
        $region31: #{tpu_custom_call.1} parent=23 // pred_region
          %s220 = sand.u32 %s18, 1
          %s221 = scalar_lea.sflag [#allocation6], %s220
          %s222 = sand.u32 %s91, 1
          %s223 = smul.addr %s222, 4096
          %s224 = scalar_lea.vmem [#allocation7], %s223
          %s225 = sadd.s32 %s25, %s26
          %s226 = smul.u32 64, %s225
          %s228 = ssub.s32 65536, 65536
          %229 = vsyncadd %s221, %s228
          %s230 = smul.addr %s226, 8
          %s231 = smul.addr %s230, 128
          %s232 = scalar_lea.hbm %s2, %s231
          %s233 = sshll.u32 %s224, 4
          %s234 = int_to_ptr.vmem [resolvable:$true] %s233
          %239 = dma.hbm_to_vmem [thread:$0]  %s232, 65536, %s234, %s221, 1024, 1024, 64
        $region32: #{tpu_custom_call.1} parent=23 // pred_fallthru
          _
      $region24: #{tpu_custom_call.1} parent=5 // pred_fallthru
        _
      %p240 = scmp.le.s32.totalorder 1, %s18
      %p241 = scmp.lt.s32.totalorder %s18, 3
      %p242 = pnand %p240, %p241
      %p243 = pneg %p242
      // Predicated region
      $region33: #{tpu_custom_call.1} parent=5 // pred_check
        _
      $region34: #{tpu_custom_call.1} parent=5 // pred_check_branch
        %245 = sbr.rel (%p242) target = $region36
      $region35: #{tpu_custom_call.1} parent=5 // pred_region
        %s246 = ssub.s32 %s18, 1
        // Predicated region
        $region37: #{tpu_custom_call.1} parent=35 // pred_check
          %p247 = pneg %p51
        $region38: #{tpu_custom_call.1} parent=35 // pred_check_branch
          %249 = sbr.rel (%p247) target = $region40
        $region39: #{tpu_custom_call.1} parent=35 // pred_region
          %250 = dma.done [#allocation3], 1024
        $region40: #{tpu_custom_call.1} parent=35 // pred_fallthru
          _
        %s251 = sand.u32 %s23, 1
        %s252 = scalar_lea.sflag [#allocation6], %s251
        %s253 = sand.u32 %s66, 1
        %s254 = smul.addr %s253, 4096
        %s255 = scalar_lea.vmem [#allocation5], %s254
        // Predicated region
        $region41: #{tpu_custom_call.1} parent=35 // pred_check
          %p256 = pneg %p79
        $region42: #{tpu_custom_call.1} parent=35 // pred_check_branch
          %258 = sbr.rel (%p256) target = $region44
        $region43: #{tpu_custom_call.1} parent=35 // pred_region
          %259 = dma.done %s252, 65536
        $region44: #{tpu_custom_call.1} parent=35 // pred_fallthru
          _
        %s260 = sand.u32 %s23, 1
        %s261 = scalar_lea.sflag [#allocation6], %s260
        %s262 = sand.u32 %s94, 1
        %s263 = smul.addr %s262, 4096
        %s264 = scalar_lea.vmem [#allocation7], %s263
        // Predicated region
        $region45: #{tpu_custom_call.1} parent=35 // pred_check
          %p265 = pneg %p107
        $region46: #{tpu_custom_call.1} parent=35 // pred_check_branch
          %267 = sbr.rel (%p265) target = $region48
        $region47: #{tpu_custom_call.1} parent=35 // pred_region
          %268 = dma.done %s261, 65536
        $region48: #{tpu_custom_call.1} parent=35 // pred_fallthru
          _
        // Predicated region
        $region49: #{tpu_custom_call.1} parent=35 // pred_check
          %p269 = pneg %p128
        $region50: #{tpu_custom_call.1} parent=35 // pred_check_branch
          %271 = sbr.rel (%p269) target = $region52
        $region51: #{tpu_custom_call.1} parent=35 // pred_region
          %272 = dma.done [#allocation9], 128
        $region52: #{tpu_custom_call.1} parent=35 // pred_fallthru
          _
        %p273 = pneg %p51
        %p274 = pneg %p48
        %s275 = sand.u32 %s23, 1
        %s276 = scalar_lea.sflag [#allocation6], %s275
        %s277 = sand.u32 %s66, 1
        %s278 = smul.addr %s277, 4096
        %s279 = scalar_lea.vmem [#allocation5], %s278
        %p280 = pneg %p79
        %p281 = pneg %p76
        %s282 = sand.u32 %s23, 1
        %s283 = scalar_lea.sflag [#allocation6], %s282
        %s284 = sand.u32 %s94, 1
        %s285 = smul.addr %s284, 4096
        %s286 = scalar_lea.vmem [#allocation7], %s285
        %p287 = pneg %p107
        %p288 = pneg %p104
        %p289 = pneg %p128
        %p290 = pneg %p125
        %p291 = pneg %p154
        %p292 = pneg %p151
        %s293 = sand.u32 %s141, 1
        %s294 = scalar_lea.sflag [#allocation4], %s293
        %s295 = sand.u32 %s141, 1
        %s296 = smul.addr %s295, 64
        %s297 = scalar_lea.vmem [#allocation10], %s296
        %s298 = sadd.s32 %s27, %s28
        %s299 = smul.u32 16, %s298
        %s300 = sadd.s32 %s27, %s28
        %s301 = smul.u32 64, %s300
        %v302 = vld [vmem:[#allocation2] sm:$0xff]
        %v303 = vld [vmem:[#allocation2 + $0x8] sm:$0xff]
        %v304 = vld [vmem:[#allocation2 + $0x10] sm:$0xff]
        %v305 = vld [vmem:[#allocation2 + $0x18] sm:$0xff]
        %v306 = vld [vmem:[#allocation2 + $0x20] sm:$0xff]
        %v307 = vld [vmem:[#allocation2 + $0x28] sm:$0xff]
        %v308 = vld [vmem:[#allocation2 + $0x30] sm:$0xff]
        %v309 = vld [vmem:[#allocation2 + $0x38] sm:$0xff]
        %v310 = vpack.c.bf16 %v302, %v302
        %v311 = vpack.c.bf16 %v303, %v303
        %v312 = vpack.c.bf16 %v304, %v304
        %v313 = vpack.c.bf16 %v305, %v305
        %v314 = vpack.c.bf16 %v306, %v306
        %v315 = vpack.c.bf16 %v307, %v307
        %v316 = vpack.c.bf16 %v308, %v308
        %v317 = vpack.c.bf16 %v309, %v309
        %v318 = vld [vmem:[%s255] sm:$0xff]
        %v319 = vld [vmem:[%s255 + $0x8] sm:$0xff]
        %v320 = vld [vmem:[%s255 + $0x10] sm:$0xff]
        %v321 = vld [vmem:[%s255 + $0x18] sm:$0xff]
        %v322 = vld [vmem:[%s255 + $0x20] sm:$0xff]
        %v323 = vld [vmem:[%s255 + $0x28] sm:$0xff]
        %v324 = vld [vmem:[%s255 + $0x30] sm:$0xff]
        %v325 = vld [vmem:[%s255 + $0x38] sm:$0xff]
        %v326 = vld [vmem:[%s255 + $0x40] sm:$0xff]
        %v327 = vld [vmem:[%s255 + $0x48] sm:$0xff]
        %v328 = vld [vmem:[%s255 + $0x50] sm:$0xff]
        %v329 = vld [vmem:[%s255 + $0x58] sm:$0xff]
        %v330 = vld [vmem:[%s255 + $0x60] sm:$0xff]
        %v331 = vld [vmem:[%s255 + $0x68] sm:$0xff]
        %v332 = vld [vmem:[%s255 + $0x70] sm:$0xff]
        %v333 = vld [vmem:[%s255 + $0x78] sm:$0xff]
        %v334 = vld [vmem:[%s255 + $0x80] sm:$0xff]
        %v335 = vld [vmem:[%s255 + $0x88] sm:$0xff]
        %v336 = vld [vmem:[%s255 + $0x90] sm:$0xff]
        %v337 = vld [vmem:[%s255 + $0x98] sm:$0xff]
        %v338 = vld [vmem:[%s255 + $0xa0] sm:$0xff]
        %v339 = vld [vmem:[%s255 + $0xa8] sm:$0xff]
        %v340 = vld [vmem:[%s255 + $0xb0] sm:$0xff]
        %v341 = vld [vmem:[%s255 + $0xb8] sm:$0xff]
        %v342 = vld [vmem:[%s255 + $0xc0] sm:$0xff]
        %v343 = vld [vmem:[%s255 + $0xc8] sm:$0xff]
        %v344 = vld [vmem:[%s255 + $0xd0] sm:$0xff]
        %v345 = vld [vmem:[%s255 + $0xd8] sm:$0xff]
        %v346 = vld [vmem:[%s255 + $0xe0] sm:$0xff]
        %v347 = vld [vmem:[%s255 + $0xe8] sm:$0xff]
        %v348 = vld [vmem:[%s255 + $0xf0] sm:$0xff]
        %v349 = vld [vmem:[%s255 + $0xf8] sm:$0xff]
        %v350 = vld [vmem:[%s255 + $0x100] sm:$0xff]
        %v351 = vld [vmem:[%s255 + $0x108] sm:$0xff]
        %v352 = vld [vmem:[%s255 + $0x110] sm:$0xff]
        %v353 = vld [vmem:[%s255 + $0x118] sm:$0xff]
        %v354 = vld [vmem:[%s255 + $0x120] sm:$0xff]
        %v355 = vld [vmem:[%s255 + $0x128] sm:$0xff]
        %v356 = vld [vmem:[%s255 + $0x130] sm:$0xff]
        %v357 = vld [vmem:[%s255 + $0x138] sm:$0xff]
        %v358 = vld [vmem:[%s255 + $0x140] sm:$0xff]
        %v359 = vld [vmem:[%s255 + $0x148] sm:$0xff]
        %v360 = vld [vmem:[%s255 + $0x150] sm:$0xff]
        %v361 = vld [vmem:[%s255 + $0x158] sm:$0xff]
        %v362 = vld [vmem:[%s255 + $0x160] sm:$0xff]
        %v363 = vld [vmem:[%s255 + $0x168] sm:$0xff]
        %v364 = vld [vmem:[%s255 + $0x170] sm:$0xff]
        %v365 = vld [vmem:[%s255 + $0x178] sm:$0xff]
        %v366 = vld [vmem:[%s255 + $0x180] sm:$0xff]
        %v367 = vld [vmem:[%s255 + $0x188] sm:$0xff]
        %v368 = vld [vmem:[%s255 + $0x190] sm:$0xff]
        %v369 = vld [vmem:[%s255 + $0x198] sm:$0xff]
        %v370 = vld [vmem:[%s255 + $0x1a0] sm:$0xff]
        %v371 = vld [vmem:[%s255 + $0x1a8] sm:$0xff]
        %v372 = vld [vmem:[%s255 + $0x1b0] sm:$0xff]
        %v373 = vld [vmem:[%s255 + $0x1b8] sm:$0xff]
        %v374 = vld [vmem:[%s255 + $0x1c0] sm:$0xff]
        %v375 = vld [vmem:[%s255 + $0x1c8] sm:$0xff]
        %v376 = vld [vmem:[%s255 + $0x1d0] sm:$0xff]
        %v377 = vld [vmem:[%s255 + $0x1d8] sm:$0xff]
        %v378 = vld [vmem:[%s255 + $0x1e0] sm:$0xff]
        %v379 = vld [vmem:[%s255 + $0x1e8] sm:$0xff]
        %v380 = vld [vmem:[%s255 + $0x1f0] sm:$0xff]
        %v381 = vld [vmem:[%s255 + $0x1f8] sm:$0xff]
        %v382 = vld [vmem:[%s255 + $0x200] sm:$0xff]
        %v383 = vld [vmem:[%s255 + $0x208] sm:$0xff]
        %v384 = vld [vmem:[%s255 + $0x210] sm:$0xff]
        %v385 = vld [vmem:[%s255 + $0x218] sm:$0xff]
        %v386 = vld [vmem:[%s255 + $0x220] sm:$0xff]
        %v387 = vld [vmem:[%s255 + $0x228] sm:$0xff]
        %v388 = vld [vmem:[%s255 + $0x230] sm:$0xff]
        %v389 = vld [vmem:[%s255 + $0x238] sm:$0xff]
        %v390 = vld [vmem:[%s255 + $0x240] sm:$0xff]
        %v391 = vld [vmem:[%s255 + $0x248] sm:$0xff]
        %v392 = vld [vmem:[%s255 + $0x250] sm:$0xff]
        %v393 = vld [vmem:[%s255 + $0x258] sm:$0xff]
        %v394 = vld [vmem:[%s255 + $0x260] sm:$0xff]
        %v395 = vld [vmem:[%s255 + $0x268] sm:$0xff]
        %v396 = vld [vmem:[%s255 + $0x270] sm:$0xff]
        %v397 = vld [vmem:[%s255 + $0x278] sm:$0xff]
        %v398 = vld [vmem:[%s255 + $0x280] sm:$0xff]
        %v399 = vld [vmem:[%s255 + $0x288] sm:$0xff]
        %v400 = vld [vmem:[%s255 + $0x290] sm:$0xff]
        %v401 = vld [vmem:[%s255 + $0x298] sm:$0xff]
        %v402 = vld [vmem:[%s255 + $0x2a0] sm:$0xff]
        %v403 = vld [vmem:[%s255 + $0x2a8] sm:$0xff]
        %v404 = vld [vmem:[%s255 + $0x2b0] sm:$0xff]
        %v405 = vld [vmem:[%s255 + $0x2b8] sm:$0xff]
        %v406 = vld [vmem:[%s255 + $0x2c0] sm:$0xff]
        %v407 = vld [vmem:[%s255 + $0x2c8] sm:$0xff]
        %v408 = vld [vmem:[%s255 + $0x2d0] sm:$0xff]
        %v409 = vld [vmem:[%s255 + $0x2d8] sm:$0xff]
        %v410 = vld [vmem:[%s255 + $0x2e0] sm:$0xff]
        %v411 = vld [vmem:[%s255 + $0x2e8] sm:$0xff]
        %v412 = vld [vmem:[%s255 + $0x2f0] sm:$0xff]
        %v413 = vld [vmem:[%s255 + $0x2f8] sm:$0xff]
        %v414 = vld [vmem:[%s255 + $0x300] sm:$0xff]
        %v415 = vld [vmem:[%s255 + $0x308] sm:$0xff]
        %v416 = vld [vmem:[%s255 + $0x310] sm:$0xff]
        %v417 = vld [vmem:[%s255 + $0x318] sm:$0xff]
        %v418 = vld [vmem:[%s255 + $0x320] sm:$0xff]
        %v419 = vld [vmem:[%s255 + $0x328] sm:$0xff]
        %v420 = vld [vmem:[%s255 + $0x330] sm:$0xff]
        %v421 = vld [vmem:[%s255 + $0x338] sm:$0xff]
        %v422 = vld [vmem:[%s255 + $0x340] sm:$0xff]
        %v423 = vld [vmem:[%s255 + $0x348] sm:$0xff]
        %v424 = vld [vmem:[%s255 + $0x350] sm:$0xff]
        %v425 = vld [vmem:[%s255 + $0x358] sm:$0xff]
        %v426 = vld [vmem:[%s255 + $0x360] sm:$0xff]
        %v427 = vld [vmem:[%s255 + $0x368] sm:$0xff]
        %v428 = vld [vmem:[%s255 + $0x370] sm:$0xff]
        %v429 = vld [vmem:[%s255 + $0x378] sm:$0xff]
        %v430 = vld [vmem:[%s255 + $0x380] sm:$0xff]
        %v431 = vld [vmem:[%s255 + $0x388] sm:$0xff]
        %v432 = vld [vmem:[%s255 + $0x390] sm:$0xff]
        %v433 = vld [vmem:[%s255 + $0x398] sm:$0xff]
        %v434 = vld [vmem:[%s255 + $0x3a0] sm:$0xff]
        %v435 = vld [vmem:[%s255 + $0x3a8] sm:$0xff]
        %v436 = vld [vmem:[%s255 + $0x3b0] sm:$0xff]
        %v437 = vld [vmem:[%s255 + $0x3b8] sm:$0xff]
        %v438 = vld [vmem:[%s255 + $0x3c0] sm:$0xff]
        %v439 = vld [vmem:[%s255 + $0x3c8] sm:$0xff]
        %v440 = vld [vmem:[%s255 + $0x3d0] sm:$0xff]
        %v441 = vld [vmem:[%s255 + $0x3d8] sm:$0xff]
        %v442 = vld [vmem:[%s255 + $0x3e0] sm:$0xff]
        %v443 = vld [vmem:[%s255 + $0x3e8] sm:$0xff]
        %v444 = vld [vmem:[%s255 + $0x3f0] sm:$0xff]
        %v445 = vld [vmem:[%s255 + $0x3f8] sm:$0xff]
        %v446 = vld [vmem:[%s255 + $0x400] sm:$0xff]
        %v447 = vld [vmem:[%s255 + $0x408] sm:$0xff]
        %v448 = vld [vmem:[%s255 + $0x410] sm:$0xff]
        %v449 = vld [vmem:[%s255 + $0x418] sm:$0xff]
        %v450 = vld [vmem:[%s255 + $0x420] sm:$0xff]
        %v451 = vld [vmem:[%s255 + $0x428] sm:$0xff]
        %v452 = vld [vmem:[%s255 + $0x430] sm:$0xff]
        %v453 = vld [vmem:[%s255 + $0x438] sm:$0xff]
        %v454 = vld [vmem:[%s255 + $0x440] sm:$0xff]
        %v455 = vld [vmem:[%s255 + $0x448] sm:$0xff]
        %v456 = vld [vmem:[%s255 + $0x450] sm:$0xff]
        %v457 = vld [vmem:[%s255 + $0x458] sm:$0xff]
        %v458 = vld [vmem:[%s255 + $0x460] sm:$0xff]
        %v459 = vld [vmem:[%s255 + $0x468] sm:$0xff]
        %v460 = vld [vmem:[%s255 + $0x470] sm:$0xff]
        %v461 = vld [vmem:[%s255 + $0x478] sm:$0xff]
        %v462 = vld [vmem:[%s255 + $0x480] sm:$0xff]
        %v463 = vld [vmem:[%s255 + $0x488] sm:$0xff]
        %v464 = vld [vmem:[%s255 + $0x490] sm:$0xff]
        %v465 = vld [vmem:[%s255 + $0x498] sm:$0xff]
        %v466 = vld [vmem:[%s255 + $0x4a0] sm:$0xff]
        %v467 = vld [vmem:[%s255 + $0x4a8] sm:$0xff]
        %v468 = vld [vmem:[%s255 + $0x4b0] sm:$0xff]
        %v469 = vld [vmem:[%s255 + $0x4b8] sm:$0xff]
        %v470 = vld [vmem:[%s255 + $0x4c0] sm:$0xff]
        %v471 = vld [vmem:[%s255 + $0x4c8] sm:$0xff]
        %v472 = vld [vmem:[%s255 + $0x4d0] sm:$0xff]
        %v473 = vld [vmem:[%s255 + $0x4d8] sm:$0xff]
        %v474 = vld [vmem:[%s255 + $0x4e0] sm:$0xff]
        %v475 = vld [vmem:[%s255 + $0x4e8] sm:$0xff]
        %v476 = vld [vmem:[%s255 + $0x4f0] sm:$0xff]
        %v477 = vld [vmem:[%s255 + $0x4f8] sm:$0xff]
        %v478 = vld [vmem:[%s255 + $0x500] sm:$0xff]
        %v479 = vld [vmem:[%s255 + $0x508] sm:$0xff]
        %v480 = vld [vmem:[%s255 + $0x510] sm:$0xff]
        %v481 = vld [vmem:[%s255 + $0x518] sm:$0xff]
        %v482 = vld [vmem:[%s255 + $0x520] sm:$0xff]
        %v483 = vld [vmem:[%s255 + $0x528] sm:$0xff]
        %v484 = vld [vmem:[%s255 + $0x530] sm:$0xff]
        %v485 = vld [vmem:[%s255 + $0x538] sm:$0xff]
        %v486 = vld [vmem:[%s255 + $0x540] sm:$0xff]
        %v487 = vld [vmem:[%s255 + $0x548] sm:$0xff]
        %v488 = vld [vmem:[%s255 + $0x550] sm:$0xff]
        %v489 = vld [vmem:[%s255 + $0x558] sm:$0xff]
        %v490 = vld [vmem:[%s255 + $0x560] sm:$0xff]
        %v491 = vld [vmem:[%s255 + $0x568] sm:$0xff]
        %v492 = vld [vmem:[%s255 + $0x570] sm:$0xff]
        %v493 = vld [vmem:[%s255 + $0x578] sm:$0xff]
        %v494 = vld [vmem:[%s255 + $0x580] sm:$0xff]
        %v495 = vld [vmem:[%s255 + $0x588] sm:$0xff]
        %v496 = vld [vmem:[%s255 + $0x590] sm:$0xff]
        %v497 = vld [vmem:[%s255 + $0x598] sm:$0xff]
        %v498 = vld [vmem:[%s255 + $0x5a0] sm:$0xff]
        %v499 = vld [vmem:[%s255 + $0x5a8] sm:$0xff]
        %v500 = vld [vmem:[%s255 + $0x5b0] sm:$0xff]
        %v501 = vld [vmem:[%s255 + $0x5b8] sm:$0xff]
        %v502 = vld [vmem:[%s255 + $0x5c0] sm:$0xff]
        %v503 = vld [vmem:[%s255 + $0x5c8] sm:$0xff]
        %v504 = vld [vmem:[%s255 + $0x5d0] sm:$0xff]
        %v505 = vld [vmem:[%s255 + $0x5d8] sm:$0xff]
        %v506 = vld [vmem:[%s255 + $0x5e0] sm:$0xff]
        %v507 = vld [vmem:[%s255 + $0x5e8] sm:$0xff]
        %v508 = vld [vmem:[%s255 + $0x5f0] sm:$0xff]
        %v509 = vld [vmem:[%s255 + $0x5f8] sm:$0xff]
        %v510 = vld [vmem:[%s255 + $0x600] sm:$0xff]
        %v511 = vld [vmem:[%s255 + $0x608] sm:$0xff]
        %v512 = vld [vmem:[%s255 + $0x610] sm:$0xff]
        %v513 = vld [vmem:[%s255 + $0x618] sm:$0xff]
        %v514 = vld [vmem:[%s255 + $0x620] sm:$0xff]
        %v515 = vld [vmem:[%s255 + $0x628] sm:$0xff]
        %v516 = vld [vmem:[%s255 + $0x630] sm:$0xff]
        %v517 = vld [vmem:[%s255 + $0x638] sm:$0xff]
        %v518 = vld [vmem:[%s255 + $0x640] sm:$0xff]
        %v519 = vld [vmem:[%s255 + $0x648] sm:$0xff]
        %v520 = vld [vmem:[%s255 + $0x650] sm:$0xff]
        %v521 = vld [vmem:[%s255 + $0x658] sm:$0xff]
        %v522 = vld [vmem:[%s255 + $0x660] sm:$0xff]
        %v523 = vld [vmem:[%s255 + $0x668] sm:$0xff]
        %v524 = vld [vmem:[%s255 + $0x670] sm:$0xff]
        %v525 = vld [vmem:[%s255 + $0x678] sm:$0xff]
        %v526 = vld [vmem:[%s255 + $0x680] sm:$0xff]
        %v527 = vld [vmem:[%s255 + $0x688] sm:$0xff]
        %v528 = vld [vmem:[%s255 + $0x690] sm:$0xff]
        %v529 = vld [vmem:[%s255 + $0x698] sm:$0xff]
        %v530 = vld [vmem:[%s255 + $0x6a0] sm:$0xff]
        %v531 = vld [vmem:[%s255 + $0x6a8] sm:$0xff]
        %v532 = vld [vmem:[%s255 + $0x6b0] sm:$0xff]
        %v533 = vld [vmem:[%s255 + $0x6b8] sm:$0xff]
        %v534 = vld [vmem:[%s255 + $0x6c0] sm:$0xff]
        %v535 = vld [vmem:[%s255 + $0x6c8] sm:$0xff]
        %v536 = vld [vmem:[%s255 + $0x6d0] sm:$0xff]
        %v537 = vld [vmem:[%s255 + $0x6d8] sm:$0xff]
        %v538 = vld [vmem:[%s255 + $0x6e0] sm:$0xff]
        %v539 = vld [vmem:[%s255 + $0x6e8] sm:$0xff]
        %v540 = vld [vmem:[%s255 + $0x6f0] sm:$0xff]
        %v541 = vld [vmem:[%s255 + $0x6f8] sm:$0xff]
        %v542 = vld [vmem:[%s255 + $0x700] sm:$0xff]
        %v543 = vld [vmem:[%s255 + $0x708] sm:$0xff]
        %v544 = vld [vmem:[%s255 + $0x710] sm:$0xff]
        %v545 = vld [vmem:[%s255 + $0x718] sm:$0xff]
        %v546 = vld [vmem:[%s255 + $0x720] sm:$0xff]
        %v547 = vld [vmem:[%s255 + $0x728] sm:$0xff]
        %v548 = vld [vmem:[%s255 + $0x730] sm:$0xff]
        %v549 = vld [vmem:[%s255 + $0x738] sm:$0xff]
        %v550 = vld [vmem:[%s255 + $0x740] sm:$0xff]
        %v551 = vld [vmem:[%s255 + $0x748] sm:$0xff]
        %v552 = vld [vmem:[%s255 + $0x750] sm:$0xff]
        %v553 = vld [vmem:[%s255 + $0x758] sm:$0xff]
        %v554 = vld [vmem:[%s255 + $0x760] sm:$0xff]
        %v555 = vld [vmem:[%s255 + $0x768] sm:$0xff]
        %v556 = vld [vmem:[%s255 + $0x770] sm:$0xff]
        %v557 = vld [vmem:[%s255 + $0x778] sm:$0xff]
        %v558 = vld [vmem:[%s255 + $0x780] sm:$0xff]
        %v559 = vld [vmem:[%s255 + $0x788] sm:$0xff]
        %v560 = vld [vmem:[%s255 + $0x790] sm:$0xff]
        %v561 = vld [vmem:[%s255 + $0x798] sm:$0xff]
        %v562 = vld [vmem:[%s255 + $0x7a0] sm:$0xff]
        %v563 = vld [vmem:[%s255 + $0x7a8] sm:$0xff]
        %v564 = vld [vmem:[%s255 + $0x7b0] sm:$0xff]
        %v565 = vld [vmem:[%s255 + $0x7b8] sm:$0xff]
        %v566 = vld [vmem:[%s255 + $0x7c0] sm:$0xff]
        %v567 = vld [vmem:[%s255 + $0x7c8] sm:$0xff]
        %v568 = vld [vmem:[%s255 + $0x7d0] sm:$0xff]
        %v569 = vld [vmem:[%s255 + $0x7d8] sm:$0xff]
        %v570 = vld [vmem:[%s255 + $0x7e0] sm:$0xff]
        %v571 = vld [vmem:[%s255 + $0x7e8] sm:$0xff]
        %v572 = vld [vmem:[%s255 + $0x7f0] sm:$0xff]
        %v573 = vld [vmem:[%s255 + $0x7f8] sm:$0xff]
        %v574 = vld [vmem:[%s255 + $0x800] sm:$0xff]
        %v575 = vld [vmem:[%s255 + $0x808] sm:$0xff]
        %v576 = vld [vmem:[%s255 + $0x810] sm:$0xff]
        %v577 = vld [vmem:[%s255 + $0x818] sm:$0xff]
        %v578 = vld [vmem:[%s255 + $0x820] sm:$0xff]
        %v579 = vld [vmem:[%s255 + $0x828] sm:$0xff]
        %v580 = vld [vmem:[%s255 + $0x830] sm:$0xff]
        %v581 = vld [vmem:[%s255 + $0x838] sm:$0xff]
        %v582 = vld [vmem:[%s255 + $0x840] sm:$0xff]
        %v583 = vld [vmem:[%s255 + $0x848] sm:$0xff]
        %v584 = vld [vmem:[%s255 + $0x850] sm:$0xff]
        %v585 = vld [vmem:[%s255 + $0x858] sm:$0xff]
        %v586 = vld [vmem:[%s255 + $0x860] sm:$0xff]
        %v587 = vld [vmem:[%s255 + $0x868] sm:$0xff]
        %v588 = vld [vmem:[%s255 + $0x870] sm:$0xff]
        %v589 = vld [vmem:[%s255 + $0x878] sm:$0xff]
        %v590 = vld [vmem:[%s255 + $0x880] sm:$0xff]
        %v591 = vld [vmem:[%s255 + $0x888] sm:$0xff]
        %v592 = vld [vmem:[%s255 + $0x890] sm:$0xff]
        %v593 = vld [vmem:[%s255 + $0x898] sm:$0xff]
        %v594 = vld [vmem:[%s255 + $0x8a0] sm:$0xff]
        %v595 = vld [vmem:[%s255 + $0x8a8] sm:$0xff]
        %v596 = vld [vmem:[%s255 + $0x8b0] sm:$0xff]
        %v597 = vld [vmem:[%s255 + $0x8b8] sm:$0xff]
        %v598 = vld [vmem:[%s255 + $0x8c0] sm:$0xff]
        %v599 = vld [vmem:[%s255 + $0x8c8] sm:$0xff]
        %v600 = vld [vmem:[%s255 + $0x8d0] sm:$0xff]
        %v601 = vld [vmem:[%s255 + $0x8d8] sm:$0xff]
        %v602 = vld [vmem:[%s255 + $0x8e0] sm:$0xff]
        %v603 = vld [vmem:[%s255 + $0x8e8] sm:$0xff]
        %v604 = vld [vmem:[%s255 + $0x8f0] sm:$0xff]
        %v605 = vld [vmem:[%s255 + $0x8f8] sm:$0xff]
        %v606 = vld [vmem:[%s255 + $0x900] sm:$0xff]
        %v607 = vld [vmem:[%s255 + $0x908] sm:$0xff]
        %v608 = vld [vmem:[%s255 + $0x910] sm:$0xff]
        %v609 = vld [vmem:[%s255 + $0x918] sm:$0xff]
        %v610 = vld [vmem:[%s255 + $0x920] sm:$0xff]
        %v611 = vld [vmem:[%s255 + $0x928] sm:$0xff]
        %v612 = vld [vmem:[%s255 + $0x930] sm:$0xff]
        %v613 = vld [vmem:[%s255 + $0x938] sm:$0xff]
        %v614 = vld [vmem:[%s255 + $0x940] sm:$0xff]
        %v615 = vld [vmem:[%s255 + $0x948] sm:$0xff]
        %v616 = vld [vmem:[%s255 + $0x950] sm:$0xff]
        %v617 = vld [vmem:[%s255 + $0x958] sm:$0xff]
        %v618 = vld [vmem:[%s255 + $0x960] sm:$0xff]
        %v619 = vld [vmem:[%s255 + $0x968] sm:$0xff]
        %v620 = vld [vmem:[%s255 + $0x970] sm:$0xff]
        %v621 = vld [vmem:[%s255 + $0x978] sm:$0xff]
        %v622 = vld [vmem:[%s255 + $0x980] sm:$0xff]
        %v623 = vld [vmem:[%s255 + $0x988] sm:$0xff]
        %v624 = vld [vmem:[%s255 + $0x990] sm:$0xff]
        %v625 = vld [vmem:[%s255 + $0x998] sm:$0xff]
        %v626 = vld [vmem:[%s255 + $0x9a0] sm:$0xff]
        %v627 = vld [vmem:[%s255 + $0x9a8] sm:$0xff]
        %v628 = vld [vmem:[%s255 + $0x9b0] sm:$0xff]
        %v629 = vld [vmem:[%s255 + $0x9b8] sm:$0xff]
        %v630 = vld [vmem:[%s255 + $0x9c0] sm:$0xff]
        %v631 = vld [vmem:[%s255 + $0x9c8] sm:$0xff]
        %v632 = vld [vmem:[%s255 + $0x9d0] sm:$0xff]
        %v633 = vld [vmem:[%s255 + $0x9d8] sm:$0xff]
        %v634 = vld [vmem:[%s255 + $0x9e0] sm:$0xff]
        %v635 = vld [vmem:[%s255 + $0x9e8] sm:$0xff]
        %v636 = vld [vmem:[%s255 + $0x9f0] sm:$0xff]
        %v637 = vld [vmem:[%s255 + $0x9f8] sm:$0xff]
        %v638 = vld [vmem:[%s255 + $0xa00] sm:$0xff]
        %v639 = vld [vmem:[%s255 + $0xa08] sm:$0xff]
        %v640 = vld [vmem:[%s255 + $0xa10] sm:$0xff]
        %v641 = vld [vmem:[%s255 + $0xa18] sm:$0xff]
        %v642 = vld [vmem:[%s255 + $0xa20] sm:$0xff]
        %v643 = vld [vmem:[%s255 + $0xa28] sm:$0xff]
        %v644 = vld [vmem:[%s255 + $0xa30] sm:$0xff]
        %v645 = vld [vmem:[%s255 + $0xa38] sm:$0xff]
        %v646 = vld [vmem:[%s255 + $0xa40] sm:$0xff]
        %v647 = vld [vmem:[%s255 + $0xa48] sm:$0xff]
        %v648 = vld [vmem:[%s255 + $0xa50] sm:$0xff]
        %v649 = vld [vmem:[%s255 + $0xa58] sm:$0xff]
        %v650 = vld [vmem:[%s255 + $0xa60] sm:$0xff]
        %v651 = vld [vmem:[%s255 + $0xa68] sm:$0xff]
        %v652 = vld [vmem:[%s255 + $0xa70] sm:$0xff]
        %v653 = vld [vmem:[%s255 + $0xa78] sm:$0xff]
        %v654 = vld [vmem:[%s255 + $0xa80] sm:$0xff]
        %v655 = vld [vmem:[%s255 + $0xa88] sm:$0xff]
        %v656 = vld [vmem:[%s255 + $0xa90] sm:$0xff]
        %v657 = vld [vmem:[%s255 + $0xa98] sm:$0xff]
        %v658 = vld [vmem:[%s255 + $0xaa0] sm:$0xff]
        %v659 = vld [vmem:[%s255 + $0xaa8] sm:$0xff]
        %v660 = vld [vmem:[%s255 + $0xab0] sm:$0xff]
        %v661 = vld [vmem:[%s255 + $0xab8] sm:$0xff]
        %v662 = vld [vmem:[%s255 + $0xac0] sm:$0xff]
        %v663 = vld [vmem:[%s255 + $0xac8] sm:$0xff]
        %v664 = vld [vmem:[%s255 + $0xad0] sm:$0xff]
        %v665 = vld [vmem:[%s255 + $0xad8] sm:$0xff]
        %v666 = vld [vmem:[%s255 + $0xae0] sm:$0xff]
        %v667 = vld [vmem:[%s255 + $0xae8] sm:$0xff]
        %v668 = vld [vmem:[%s255 + $0xaf0] sm:$0xff]
        %v669 = vld [vmem:[%s255 + $0xaf8] sm:$0xff]
        %v670 = vld [vmem:[%s255 + $0xb00] sm:$0xff]
        %v671 = vld [vmem:[%s255 + $0xb08] sm:$0xff]
        %v672 = vld [vmem:[%s255 + $0xb10] sm:$0xff]
        %v673 = vld [vmem:[%s255 + $0xb18] sm:$0xff]
        %v674 = vld [vmem:[%s255 + $0xb20] sm:$0xff]
        %v675 = vld [vmem:[%s255 + $0xb28] sm:$0xff]
        %v676 = vld [vmem:[%s255 + $0xb30] sm:$0xff]
        %v677 = vld [vmem:[%s255 + $0xb38] sm:$0xff]
        %v678 = vld [vmem:[%s255 + $0xb40] sm:$0xff]
        %v679 = vld [vmem:[%s255 + $0xb48] sm:$0xff]
        %v680 = vld [vmem:[%s255 + $0xb50] sm:$0xff]
        %v681 = vld [vmem:[%s255 + $0xb58] sm:$0xff]
        %v682 = vld [vmem:[%s255 + $0xb60] sm:$0xff]
        %v683 = vld [vmem:[%s255 + $0xb68] sm:$0xff]
        %v684 = vld [vmem:[%s255 + $0xb70] sm:$0xff]
        %v685 = vld [vmem:[%s255 + $0xb78] sm:$0xff]
        %v686 = vld [vmem:[%s255 + $0xb80] sm:$0xff]
        %v687 = vld [vmem:[%s255 + $0xb88] sm:$0xff]
        %v688 = vld [vmem:[%s255 + $0xb90] sm:$0xff]
        %v689 = vld [vmem:[%s255 + $0xb98] sm:$0xff]
        %v690 = vld [vmem:[%s255 + $0xba0] sm:$0xff]
        %v691 = vld [vmem:[%s255 + $0xba8] sm:$0xff]
        %v692 = vld [vmem:[%s255 + $0xbb0] sm:$0xff]
        %v693 = vld [vmem:[%s255 + $0xbb8] sm:$0xff]
        %v694 = vld [vmem:[%s255 + $0xbc0] sm:$0xff]
        %v695 = vld [vmem:[%s255 + $0xbc8] sm:$0xff]
        %v696 = vld [vmem:[%s255 + $0xbd0] sm:$0xff]
        %v697 = vld [vmem:[%s255 + $0xbd8] sm:$0xff]
        %v698 = vld [vmem:[%s255 + $0xbe0] sm:$0xff]
        %v699 = vld [vmem:[%s255 + $0xbe8] sm:$0xff]
        %v700 = vld [vmem:[%s255 + $0xbf0] sm:$0xff]
        %v701 = vld [vmem:[%s255 + $0xbf8] sm:$0xff]
        %v702 = vld [vmem:[%s255 + $0xc00] sm:$0xff]
        %v703 = vld [vmem:[%s255 + $0xc08] sm:$0xff]
        %v704 = vld [vmem:[%s255 + $0xc10] sm:$0xff]
        %v705 = vld [vmem:[%s255 + $0xc18] sm:$0xff]
        %v706 = vld [vmem:[%s255 + $0xc20] sm:$0xff]
        %v707 = vld [vmem:[%s255 + $0xc28] sm:$0xff]
        %v708 = vld [vmem:[%s255 + $0xc30] sm:$0xff]
        %v709 = vld [vmem:[%s255 + $0xc38] sm:$0xff]
        %v710 = vld [vmem:[%s255 + $0xc40] sm:$0xff]
        %v711 = vld [vmem:[%s255 + $0xc48] sm:$0xff]
        %v712 = vld [vmem:[%s255 + $0xc50] sm:$0xff]
        %v713 = vld [vmem:[%s255 + $0xc58] sm:$0xff]
        %v714 = vld [vmem:[%s255 + $0xc60] sm:$0xff]
        %v715 = vld [vmem:[%s255 + $0xc68] sm:$0xff]
        %v716 = vld [vmem:[%s255 + $0xc70] sm:$0xff]
        %v717 = vld [vmem:[%s255 + $0xc78] sm:$0xff]
        %v718 = vld [vmem:[%s255 + $0xc80] sm:$0xff]
        %v719 = vld [vmem:[%s255 + $0xc88] sm:$0xff]
        %v720 = vld [vmem:[%s255 + $0xc90] sm:$0xff]
        %v721 = vld [vmem:[%s255 + $0xc98] sm:$0xff]
        %v722 = vld [vmem:[%s255 + $0xca0] sm:$0xff]
        %v723 = vld [vmem:[%s255 + $0xca8] sm:$0xff]
        %v724 = vld [vmem:[%s255 + $0xcb0] sm:$0xff]
        %v725 = vld [vmem:[%s255 + $0xcb8] sm:$0xff]
        %v726 = vld [vmem:[%s255 + $0xcc0] sm:$0xff]
        %v727 = vld [vmem:[%s255 + $0xcc8] sm:$0xff]
        %v728 = vld [vmem:[%s255 + $0xcd0] sm:$0xff]
        %v729 = vld [vmem:[%s255 + $0xcd8] sm:$0xff]
        %v730 = vld [vmem:[%s255 + $0xce0] sm:$0xff]
        %v731 = vld [vmem:[%s255 + $0xce8] sm:$0xff]
        %v732 = vld [vmem:[%s255 + $0xcf0] sm:$0xff]
        %v733 = vld [vmem:[%s255 + $0xcf8] sm:$0xff]
        %v734 = vld [vmem:[%s255 + $0xd00] sm:$0xff]
        %v735 = vld [vmem:[%s255 + $0xd08] sm:$0xff]
        %v736 = vld [vmem:[%s255 + $0xd10] sm:$0xff]
        %v737 = vld [vmem:[%s255 + $0xd18] sm:$0xff]
        %v738 = vld [vmem:[%s255 + $0xd20] sm:$0xff]
        %v739 = vld [vmem:[%s255 + $0xd28] sm:$0xff]
        %v740 = vld [vmem:[%s255 + $0xd30] sm:$0xff]
        %v741 = vld [vmem:[%s255 + $0xd38] sm:$0xff]
        %v742 = vld [vmem:[%s255 + $0xd40] sm:$0xff]
        %v743 = vld [vmem:[%s255 + $0xd48] sm:$0xff]
        %v744 = vld [vmem:[%s255 + $0xd50] sm:$0xff]
        %v745 = vld [vmem:[%s255 + $0xd58] sm:$0xff]
        %v746 = vld [vmem:[%s255 + $0xd60] sm:$0xff]
        %v747 = vld [vmem:[%s255 + $0xd68] sm:$0xff]
        %v748 = vld [vmem:[%s255 + $0xd70] sm:$0xff]
        %v749 = vld [vmem:[%s255 + $0xd78] sm:$0xff]
        %v750 = vld [vmem:[%s255 + $0xd80] sm:$0xff]
        %v751 = vld [vmem:[%s255 + $0xd88] sm:$0xff]
        %v752 = vld [vmem:[%s255 + $0xd90] sm:$0xff]
        %v753 = vld [vmem:[%s255 + $0xd98] sm:$0xff]
        %v754 = vld [vmem:[%s255 + $0xda0] sm:$0xff]
        %v755 = vld [vmem:[%s255 + $0xda8] sm:$0xff]
        %v756 = vld [vmem:[%s255 + $0xdb0] sm:$0xff]
        %v757 = vld [vmem:[%s255 + $0xdb8] sm:$0xff]
        %v758 = vld [vmem:[%s255 + $0xdc0] sm:$0xff]
        %v759 = vld [vmem:[%s255 + $0xdc8] sm:$0xff]
        %v760 = vld [vmem:[%s255 + $0xdd0] sm:$0xff]
        %v761 = vld [vmem:[%s255 + $0xdd8] sm:$0xff]
        %v762 = vld [vmem:[%s255 + $0xde0] sm:$0xff]
        %v763 = vld [vmem:[%s255 + $0xde8] sm:$0xff]
        %v764 = vld [vmem:[%s255 + $0xdf0] sm:$0xff]
        %v765 = vld [vmem:[%s255 + $0xdf8] sm:$0xff]
        %v766 = vld [vmem:[%s255 + $0xe00] sm:$0xff]
        %v767 = vld [vmem:[%s255 + $0xe08] sm:$0xff]
        %v768 = vld [vmem:[%s255 + $0xe10] sm:$0xff]
        %v769 = vld [vmem:[%s255 + $0xe18] sm:$0xff]
        %v770 = vld [vmem:[%s255 + $0xe20] sm:$0xff]
        %v771 = vld [vmem:[%s255 + $0xe28] sm:$0xff]
        %v772 = vld [vmem:[%s255 + $0xe30] sm:$0xff]
        %v773 = vld [vmem:[%s255 + $0xe38] sm:$0xff]
        %v774 = vld [vmem:[%s255 + $0xe40] sm:$0xff]
        %v775 = vld [vmem:[%s255 + $0xe48] sm:$0xff]
        %v776 = vld [vmem:[%s255 + $0xe50] sm:$0xff]
        %v777 = vld [vmem:[%s255 + $0xe58] sm:$0xff]
        %v778 = vld [vmem:[%s255 + $0xe60] sm:$0xff]
        %v779 = vld [vmem:[%s255 + $0xe68] sm:$0xff]
        %v780 = vld [vmem:[%s255 + $0xe70] sm:$0xff]
        %v781 = vld [vmem:[%s255 + $0xe78] sm:$0xff]
        %v782 = vld [vmem:[%s255 + $0xe80] sm:$0xff]
        %v783 = vld [vmem:[%s255 + $0xe88] sm:$0xff]
        %v784 = vld [vmem:[%s255 + $0xe90] sm:$0xff]
        %v785 = vld [vmem:[%s255 + $0xe98] sm:$0xff]
        %v786 = vld [vmem:[%s255 + $0xea0] sm:$0xff]
        %v787 = vld [vmem:[%s255 + $0xea8] sm:$0xff]
        %v788 = vld [vmem:[%s255 + $0xeb0] sm:$0xff]
        %v789 = vld [vmem:[%s255 + $0xeb8] sm:$0xff]
        %v790 = vld [vmem:[%s255 + $0xec0] sm:$0xff]
        %v791 = vld [vmem:[%s255 + $0xec8] sm:$0xff]
        %v792 = vld [vmem:[%s255 + $0xed0] sm:$0xff]
        %v793 = vld [vmem:[%s255 + $0xed8] sm:$0xff]
        %v794 = vld [vmem:[%s255 + $0xee0] sm:$0xff]
        %v795 = vld [vmem:[%s255 + $0xee8] sm:$0xff]
        %v796 = vld [vmem:[%s255 + $0xef0] sm:$0xff]
        %v797 = vld [vmem:[%s255 + $0xef8] sm:$0xff]
        %v798 = vld [vmem:[%s255 + $0xf00] sm:$0xff]
        %v799 = vld [vmem:[%s255 + $0xf08] sm:$0xff]
        %v800 = vld [vmem:[%s255 + $0xf10] sm:$0xff]
        %v801 = vld [vmem:[%s255 + $0xf18] sm:$0xff]
        %v802 = vld [vmem:[%s255 + $0xf20] sm:$0xff]
        %v803 = vld [vmem:[%s255 + $0xf28] sm:$0xff]
        %v804 = vld [vmem:[%s255 + $0xf30] sm:$0xff]
        %v805 = vld [vmem:[%s255 + $0xf38] sm:$0xff]
        %v806 = vld [vmem:[%s255 + $0xf40] sm:$0xff]
        %v807 = vld [vmem:[%s255 + $0xf48] sm:$0xff]
        %v808 = vld [vmem:[%s255 + $0xf50] sm:$0xff]
        %v809 = vld [vmem:[%s255 + $0xf58] sm:$0xff]
        %v810 = vld [vmem:[%s255 + $0xf60] sm:$0xff]
        %v811 = vld [vmem:[%s255 + $0xf68] sm:$0xff]
        %v812 = vld [vmem:[%s255 + $0xf70] sm:$0xff]
        %v813 = vld [vmem:[%s255 + $0xf78] sm:$0xff]
        %v814 = vld [vmem:[%s255 + $0xf80] sm:$0xff]
        %v815 = vld [vmem:[%s255 + $0xf88] sm:$0xff]
        %v816 = vld [vmem:[%s255 + $0xf90] sm:$0xff]
        %v817 = vld [vmem:[%s255 + $0xf98] sm:$0xff]
        %v818 = vld [vmem:[%s255 + $0xfa0] sm:$0xff]
        %v819 = vld [vmem:[%s255 + $0xfa8] sm:$0xff]
        %v820 = vld [vmem:[%s255 + $0xfb0] sm:$0xff]
        %v821 = vld [vmem:[%s255 + $0xfb8] sm:$0xff]
        %v822 = vld [vmem:[%s255 + $0xfc0] sm:$0xff]
        %v823 = vld [vmem:[%s255 + $0xfc8] sm:$0xff]
        %v824 = vld [vmem:[%s255 + $0xfd0] sm:$0xff]
        %v825 = vld [vmem:[%s255 + $0xfd8] sm:$0xff]
        %v826 = vld [vmem:[%s255 + $0xfe0] sm:$0xff]
        %v827 = vld [vmem:[%s255 + $0xfe8] sm:$0xff]
        %v828 = vld [vmem:[%s255 + $0xff0] sm:$0xff]
        %v829 = vld [vmem:[%s255 + $0xff8] sm:$0xff]
        %v830 = vunpack.c.l.s8.bf16 %v318
        %v831 = vunpack.c.l.s8.bf16 %v319
        %v832 = vunpack.c.l.s8.bf16 %v320
        %v833 = vunpack.c.l.s8.bf16 %v321
        %v834 = vunpack.c.l.s8.bf16 %v322
        %v835 = vunpack.c.l.s8.bf16 %v323
        %v836 = vunpack.c.l.s8.bf16 %v324
        %v837 = vunpack.c.l.s8.bf16 %v325
        %v838 = vunpack.c.l.s8.bf16 %v326
        %v839 = vunpack.c.l.s8.bf16 %v327
        %v840 = vunpack.c.l.s8.bf16 %v328
        %v841 = vunpack.c.l.s8.bf16 %v329
        %v842 = vunpack.c.l.s8.bf16 %v330
        %v843 = vunpack.c.l.s8.bf16 %v331
        %v844 = vunpack.c.l.s8.bf16 %v332
        %v845 = vunpack.c.l.s8.bf16 %v333
        %v846 = vunpack.c.h.s8.bf16 %v318
        %v847 = vunpack.c.h.s8.bf16 %v319
        %v848 = vunpack.c.h.s8.bf16 %v320
        %v849 = vunpack.c.h.s8.bf16 %v321
        %v850 = vunpack.c.h.s8.bf16 %v322
        %v851 = vunpack.c.h.s8.bf16 %v323
        %v852 = vunpack.c.h.s8.bf16 %v324
        %v853 = vunpack.c.h.s8.bf16 %v325
        %v854 = vunpack.c.h.s8.bf16 %v326
        %v855 = vunpack.c.h.s8.bf16 %v327
        %v856 = vunpack.c.h.s8.bf16 %v328
        %v857 = vunpack.c.h.s8.bf16 %v329
        %v858 = vunpack.c.h.s8.bf16 %v330
        %v859 = vunpack.c.h.s8.bf16 %v331
        %v860 = vunpack.c.h.s8.bf16 %v332
        %v861 = vunpack.c.h.s8.bf16 %v333
        %v862 = vunpack.c.l.s8.bf16 %v334
        %v863 = vunpack.c.l.s8.bf16 %v335
        %v864 = vunpack.c.l.s8.bf16 %v336
        %v865 = vunpack.c.l.s8.bf16 %v337
        %v866 = vunpack.c.l.s8.bf16 %v338
        %v867 = vunpack.c.l.s8.bf16 %v339
        %v868 = vunpack.c.l.s8.bf16 %v340
        %v869 = vunpack.c.l.s8.bf16 %v341
        %v870 = vunpack.c.l.s8.bf16 %v342
        %v871 = vunpack.c.l.s8.bf16 %v343
        %v872 = vunpack.c.l.s8.bf16 %v344
        %v873 = vunpack.c.l.s8.bf16 %v345
        %v874 = vunpack.c.l.s8.bf16 %v346
        %v875 = vunpack.c.l.s8.bf16 %v347
        %v876 = vunpack.c.l.s8.bf16 %v348
        %v877 = vunpack.c.l.s8.bf16 %v349
        %v878 = vunpack.c.h.s8.bf16 %v334
        %v879 = vunpack.c.h.s8.bf16 %v335
        %v880 = vunpack.c.h.s8.bf16 %v336
        %v881 = vunpack.c.h.s8.bf16 %v337
        %v882 = vunpack.c.h.s8.bf16 %v338
        %v883 = vunpack.c.h.s8.bf16 %v339
        %v884 = vunpack.c.h.s8.bf16 %v340
        %v885 = vunpack.c.h.s8.bf16 %v341
        %v886 = vunpack.c.h.s8.bf16 %v342
        %v887 = vunpack.c.h.s8.bf16 %v343
        %v888 = vunpack.c.h.s8.bf16 %v344
        %v889 = vunpack.c.h.s8.bf16 %v345
        %v890 = vunpack.c.h.s8.bf16 %v346
        %v891 = vunpack.c.h.s8.bf16 %v347
        %v892 = vunpack.c.h.s8.bf16 %v348
        %v893 = vunpack.c.h.s8.bf16 %v349
        %v894 = vunpack.c.l.s8.bf16 %v350
        %v895 = vunpack.c.l.s8.bf16 %v351
        %v896 = vunpack.c.l.s8.bf16 %v352
        %v897 = vunpack.c.l.s8.bf16 %v353
        %v898 = vunpack.c.l.s8.bf16 %v354
        %v899 = vunpack.c.l.s8.bf16 %v355
        %v900 = vunpack.c.l.s8.bf16 %v356
        %v901 = vunpack.c.l.s8.bf16 %v357
        %v902 = vunpack.c.l.s8.bf16 %v358
        %v903 = vunpack.c.l.s8.bf16 %v359
        %v904 = vunpack.c.l.s8.bf16 %v360
        %v905 = vunpack.c.l.s8.bf16 %v361
        %v906 = vunpack.c.l.s8.bf16 %v362
        %v907 = vunpack.c.l.s8.bf16 %v363
        %v908 = vunpack.c.l.s8.bf16 %v364
        %v909 = vunpack.c.l.s8.bf16 %v365
        %v910 = vunpack.c.h.s8.bf16 %v350
        %v911 = vunpack.c.h.s8.bf16 %v351
        %v912 = vunpack.c.h.s8.bf16 %v352
        %v913 = vunpack.c.h.s8.bf16 %v353
        %v914 = vunpack.c.h.s8.bf16 %v354
        %v915 = vunpack.c.h.s8.bf16 %v355
        %v916 = vunpack.c.h.s8.bf16 %v356
        %v917 = vunpack.c.h.s8.bf16 %v357
        %v918 = vunpack.c.h.s8.bf16 %v358
        %v919 = vunpack.c.h.s8.bf16 %v359
        %v920 = vunpack.c.h.s8.bf16 %v360
        %v921 = vunpack.c.h.s8.bf16 %v361
        %v922 = vunpack.c.h.s8.bf16 %v362
        %v923 = vunpack.c.h.s8.bf16 %v363
        %v924 = vunpack.c.h.s8.bf16 %v364
        %v925 = vunpack.c.h.s8.bf16 %v365
        %v926 = vunpack.c.l.s8.bf16 %v366
        %v927 = vunpack.c.l.s8.bf16 %v367
        %v928 = vunpack.c.l.s8.bf16 %v368
        %v929 = vunpack.c.l.s8.bf16 %v369
        %v930 = vunpack.c.l.s8.bf16 %v370
        %v931 = vunpack.c.l.s8.bf16 %v371
        %v932 = vunpack.c.l.s8.bf16 %v372
        %v933 = vunpack.c.l.s8.bf16 %v373
        %v934 = vunpack.c.l.s8.bf16 %v374
        %v935 = vunpack.c.l.s8.bf16 %v375
        %v936 = vunpack.c.l.s8.bf16 %v376
        %v937 = vunpack.c.l.s8.bf16 %v377
        %v938 = vunpack.c.l.s8.bf16 %v378
        %v939 = vunpack.c.l.s8.bf16 %v379
        %v940 = vunpack.c.l.s8.bf16 %v380
        %v941 = vunpack.c.l.s8.bf16 %v381
        %v942 = vunpack.c.h.s8.bf16 %v366
        %v943 = vunpack.c.h.s8.bf16 %v367
        %v944 = vunpack.c.h.s8.bf16 %v368
        %v945 = vunpack.c.h.s8.bf16 %v369
        %v946 = vunpack.c.h.s8.bf16 %v370
        %v947 = vunpack.c.h.s8.bf16 %v371
        %v948 = vunpack.c.h.s8.bf16 %v372
        %v949 = vunpack.c.h.s8.bf16 %v373
        %v950 = vunpack.c.h.s8.bf16 %v374
        %v951 = vunpack.c.h.s8.bf16 %v375
        %v952 = vunpack.c.h.s8.bf16 %v376
        %v953 = vunpack.c.h.s8.bf16 %v377
        %v954 = vunpack.c.h.s8.bf16 %v378
        %v955 = vunpack.c.h.s8.bf16 %v379
        %v956 = vunpack.c.h.s8.bf16 %v380
        %v957 = vunpack.c.h.s8.bf16 %v381
        %v958 = vunpack.c.l.s8.bf16 %v382
        %v959 = vunpack.c.l.s8.bf16 %v383
        %v960 = vunpack.c.l.s8.bf16 %v384
        %v961 = vunpack.c.l.s8.bf16 %v385
        %v962 = vunpack.c.l.s8.bf16 %v386
        %v963 = vunpack.c.l.s8.bf16 %v387
        %v964 = vunpack.c.l.s8.bf16 %v388
        %v965 = vunpack.c.l.s8.bf16 %v389
        %v966 = vunpack.c.l.s8.bf16 %v390
        %v967 = vunpack.c.l.s8.bf16 %v391
        %v968 = vunpack.c.l.s8.bf16 %v392
        %v969 = vunpack.c.l.s8.bf16 %v393
        %v970 = vunpack.c.l.s8.bf16 %v394
        %v971 = vunpack.c.l.s8.bf16 %v395
        %v972 = vunpack.c.l.s8.bf16 %v396
        %v973 = vunpack.c.l.s8.bf16 %v397
        %v974 = vunpack.c.h.s8.bf16 %v382
        %v975 = vunpack.c.h.s8.bf16 %v383
        %v976 = vunpack.c.h.s8.bf16 %v384
        %v977 = vunpack.c.h.s8.bf16 %v385
        %v978 = vunpack.c.h.s8.bf16 %v386
        %v979 = vunpack.c.h.s8.bf16 %v387
        %v980 = vunpack.c.h.s8.bf16 %v388
        %v981 = vunpack.c.h.s8.bf16 %v389
        %v982 = vunpack.c.h.s8.bf16 %v390
        %v983 = vunpack.c.h.s8.bf16 %v391
        %v984 = vunpack.c.h.s8.bf16 %v392
        %v985 = vunpack.c.h.s8.bf16 %v393
        %v986 = vunpack.c.h.s8.bf16 %v394
        %v987 = vunpack.c.h.s8.bf16 %v395
        %v988 = vunpack.c.h.s8.bf16 %v396
        %v989 = vunpack.c.h.s8.bf16 %v397
        %v990 = vunpack.c.l.s8.bf16 %v398
        %v991 = vunpack.c.l.s8.bf16 %v399
        %v992 = vunpack.c.l.s8.bf16 %v400
        %v993 = vunpack.c.l.s8.bf16 %v401
        %v994 = vunpack.c.l.s8.bf16 %v402
        %v995 = vunpack.c.l.s8.bf16 %v403
        %v996 = vunpack.c.l.s8.bf16 %v404
        %v997 = vunpack.c.l.s8.bf16 %v405
        %v998 = vunpack.c.l.s8.bf16 %v406
        %v999 = vunpack.c.l.s8.bf16 %v407
        %v1000 = vunpack.c.l.s8.bf16 %v408
        %v1001 = vunpack.c.l.s8.bf16 %v409
        %v1002 = vunpack.c.l.s8.bf16 %v410
        %v1003 = vunpack.c.l.s8.bf16 %v411
        %v1004 = vunpack.c.l.s8.bf16 %v412
        %v1005 = vunpack.c.l.s8.bf16 %v413
        %v1006 = vunpack.c.h.s8.bf16 %v398
        %v1007 = vunpack.c.h.s8.bf16 %v399
        %v1008 = vunpack.c.h.s8.bf16 %v400
        %v1009 = vunpack.c.h.s8.bf16 %v401
        %v1010 = vunpack.c.h.s8.bf16 %v402
        %v1011 = vunpack.c.h.s8.bf16 %v403
        %v1012 = vunpack.c.h.s8.bf16 %v404
        %v1013 = vunpack.c.h.s8.bf16 %v405
        %v1014 = vunpack.c.h.s8.bf16 %v406
        %v1015 = vunpack.c.h.s8.bf16 %v407
        %v1016 = vunpack.c.h.s8.bf16 %v408
        %v1017 = vunpack.c.h.s8.bf16 %v409
        %v1018 = vunpack.c.h.s8.bf16 %v410
        %v1019 = vunpack.c.h.s8.bf16 %v411
        %v1020 = vunpack.c.h.s8.bf16 %v412
        %v1021 = vunpack.c.h.s8.bf16 %v413
        %v1022 = vunpack.c.l.s8.bf16 %v414
        %v1023 = vunpack.c.l.s8.bf16 %v415
        %v1024 = vunpack.c.l.s8.bf16 %v416
        %v1025 = vunpack.c.l.s8.bf16 %v417
        %v1026 = vunpack.c.l.s8.bf16 %v418
        %v1027 = vunpack.c.l.s8.bf16 %v419
        %v1028 = vunpack.c.l.s8.bf16 %v420
        %v1029 = vunpack.c.l.s8.bf16 %v421
        %v1030 = vunpack.c.l.s8.bf16 %v422
        %v1031 = vunpack.c.l.s8.bf16 %v423
        %v1032 = vunpack.c.l.s8.bf16 %v424
        %v1033 = vunpack.c.l.s8.bf16 %v425
        %v1034 = vunpack.c.l.s8.bf16 %v426
        %v1035 = vunpack.c.l.s8.bf16 %v427
        %v1036 = vunpack.c.l.s8.bf16 %v428
        %v1037 = vunpack.c.l.s8.bf16 %v429
        %v1038 = vunpack.c.h.s8.bf16 %v414
        %v1039 = vunpack.c.h.s8.bf16 %v415
        %v1040 = vunpack.c.h.s8.bf16 %v416
        %v1041 = vunpack.c.h.s8.bf16 %v417
        %v1042 = vunpack.c.h.s8.bf16 %v418
        %v1043 = vunpack.c.h.s8.bf16 %v419
        %v1044 = vunpack.c.h.s8.bf16 %v420
        %v1045 = vunpack.c.h.s8.bf16 %v421
        %v1046 = vunpack.c.h.s8.bf16 %v422
        %v1047 = vunpack.c.h.s8.bf16 %v423
        %v1048 = vunpack.c.h.s8.bf16 %v424
        %v1049 = vunpack.c.h.s8.bf16 %v425
        %v1050 = vunpack.c.h.s8.bf16 %v426
        %v1051 = vunpack.c.h.s8.bf16 %v427
        %v1052 = vunpack.c.h.s8.bf16 %v428
        %v1053 = vunpack.c.h.s8.bf16 %v429
        %v1054 = vunpack.c.l.s8.bf16 %v430
        %v1055 = vunpack.c.l.s8.bf16 %v431
        %v1056 = vunpack.c.l.s8.bf16 %v432
        %v1057 = vunpack.c.l.s8.bf16 %v433
        %v1058 = vunpack.c.l.s8.bf16 %v434
        %v1059 = vunpack.c.l.s8.bf16 %v435
        %v1060 = vunpack.c.l.s8.bf16 %v436
        %v1061 = vunpack.c.l.s8.bf16 %v437
        %v1062 = vunpack.c.l.s8.bf16 %v438
        %v1063 = vunpack.c.l.s8.bf16 %v439
        %v1064 = vunpack.c.l.s8.bf16 %v440
        %v1065 = vunpack.c.l.s8.bf16 %v441
        %v1066 = vunpack.c.l.s8.bf16 %v442
        %v1067 = vunpack.c.l.s8.bf16 %v443
        %v1068 = vunpack.c.l.s8.bf16 %v444
        %v1069 = vunpack.c.l.s8.bf16 %v445
        %v1070 = vunpack.c.h.s8.bf16 %v430
        %v1071 = vunpack.c.h.s8.bf16 %v431
        %v1072 = vunpack.c.h.s8.bf16 %v432
        %v1073 = vunpack.c.h.s8.bf16 %v433
        %v1074 = vunpack.c.h.s8.bf16 %v434
        %v1075 = vunpack.c.h.s8.bf16 %v435
        %v1076 = vunpack.c.h.s8.bf16 %v436
        %v1077 = vunpack.c.h.s8.bf16 %v437
        %v1078 = vunpack.c.h.s8.bf16 %v438
        %v1079 = vunpack.c.h.s8.bf16 %v439
        %v1080 = vunpack.c.h.s8.bf16 %v440
        %v1081 = vunpack.c.h.s8.bf16 %v441
        %v1082 = vunpack.c.h.s8.bf16 %v442
        %v1083 = vunpack.c.h.s8.bf16 %v443
        %v1084 = vunpack.c.h.s8.bf16 %v444
        %v1085 = vunpack.c.h.s8.bf16 %v445
        %v1086 = vunpack.c.l.s8.bf16 %v446
        %v1087 = vunpack.c.l.s8.bf16 %v447
        %v1088 = vunpack.c.l.s8.bf16 %v448
        %v1089 = vunpack.c.l.s8.bf16 %v449
        %v1090 = vunpack.c.l.s8.bf16 %v450
        %v1091 = vunpack.c.l.s8.bf16 %v451
        %v1092 = vunpack.c.l.s8.bf16 %v452
        %v1093 = vunpack.c.l.s8.bf16 %v453
        %v1094 = vunpack.c.l.s8.bf16 %v454
        %v1095 = vunpack.c.l.s8.bf16 %v455
        %v1096 = vunpack.c.l.s8.bf16 %v456
        %v1097 = vunpack.c.l.s8.bf16 %v457
        %v1098 = vunpack.c.l.s8.bf16 %v458
        %v1099 = vunpack.c.l.s8.bf16 %v459
        %v1100 = vunpack.c.l.s8.bf16 %v460
        %v1101 = vunpack.c.l.s8.bf16 %v461
        %v1102 = vunpack.c.h.s8.bf16 %v446
        %v1103 = vunpack.c.h.s8.bf16 %v447
        %v1104 = vunpack.c.h.s8.bf16 %v448
        %v1105 = vunpack.c.h.s8.bf16 %v449
        %v1106 = vunpack.c.h.s8.bf16 %v450
        %v1107 = vunpack.c.h.s8.bf16 %v451
        %v1108 = vunpack.c.h.s8.bf16 %v452
        %v1109 = vunpack.c.h.s8.bf16 %v453
        %v1110 = vunpack.c.h.s8.bf16 %v454
        %v1111 = vunpack.c.h.s8.bf16 %v455
        %v1112 = vunpack.c.h.s8.bf16 %v456
        %v1113 = vunpack.c.h.s8.bf16 %v457
        %v1114 = vunpack.c.h.s8.bf16 %v458
        %v1115 = vunpack.c.h.s8.bf16 %v459
        %v1116 = vunpack.c.h.s8.bf16 %v460
        %v1117 = vunpack.c.h.s8.bf16 %v461
        %v1118 = vunpack.c.l.s8.bf16 %v462
        %v1119 = vunpack.c.l.s8.bf16 %v463
        %v1120 = vunpack.c.l.s8.bf16 %v464
        %v1121 = vunpack.c.l.s8.bf16 %v465
        %v1122 = vunpack.c.l.s8.bf16 %v466
        %v1123 = vunpack.c.l.s8.bf16 %v467
        %v1124 = vunpack.c.l.s8.bf16 %v468
        %v1125 = vunpack.c.l.s8.bf16 %v469
        %v1126 = vunpack.c.l.s8.bf16 %v470
        %v1127 = vunpack.c.l.s8.bf16 %v471
        %v1128 = vunpack.c.l.s8.bf16 %v472
        %v1129 = vunpack.c.l.s8.bf16 %v473
        %v1130 = vunpack.c.l.s8.bf16 %v474
        %v1131 = vunpack.c.l.s8.bf16 %v475
        %v1132 = vunpack.c.l.s8.bf16 %v476
        %v1133 = vunpack.c.l.s8.bf16 %v477
        %v1134 = vunpack.c.h.s8.bf16 %v462
        %v1135 = vunpack.c.h.s8.bf16 %v463
        %v1136 = vunpack.c.h.s8.bf16 %v464
        %v1137 = vunpack.c.h.s8.bf16 %v465
        %v1138 = vunpack.c.h.s8.bf16 %v466
        %v1139 = vunpack.c.h.s8.bf16 %v467
        %v1140 = vunpack.c.h.s8.bf16 %v468
        %v1141 = vunpack.c.h.s8.bf16 %v469
        %v1142 = vunpack.c.h.s8.bf16 %v470
        %v1143 = vunpack.c.h.s8.bf16 %v471
        %v1144 = vunpack.c.h.s8.bf16 %v472
        %v1145 = vunpack.c.h.s8.bf16 %v473
        %v1146 = vunpack.c.h.s8.bf16 %v474
        %v1147 = vunpack.c.h.s8.bf16 %v475
        %v1148 = vunpack.c.h.s8.bf16 %v476
        %v1149 = vunpack.c.h.s8.bf16 %v477
        %v1150 = vunpack.c.l.s8.bf16 %v478
        %v1151 = vunpack.c.l.s8.bf16 %v479
        %v1152 = vunpack.c.l.s8.bf16 %v480
        %v1153 = vunpack.c.l.s8.bf16 %v481
        %v1154 = vunpack.c.l.s8.bf16 %v482
        %v1155 = vunpack.c.l.s8.bf16 %v483
        %v1156 = vunpack.c.l.s8.bf16 %v484
        %v1157 = vunpack.c.l.s8.bf16 %v485
        %v1158 = vunpack.c.l.s8.bf16 %v486
        %v1159 = vunpack.c.l.s8.bf16 %v487
        %v1160 = vunpack.c.l.s8.bf16 %v488
        %v1161 = vunpack.c.l.s8.bf16 %v489
        %v1162 = vunpack.c.l.s8.bf16 %v490
        %v1163 = vunpack.c.l.s8.bf16 %v491
        %v1164 = vunpack.c.l.s8.bf16 %v492
        %v1165 = vunpack.c.l.s8.bf16 %v493
        %v1166 = vunpack.c.h.s8.bf16 %v478
        %v1167 = vunpack.c.h.s8.bf16 %v479
        %v1168 = vunpack.c.h.s8.bf16 %v480
        %v1169 = vunpack.c.h.s8.bf16 %v481
        %v1170 = vunpack.c.h.s8.bf16 %v482
        %v1171 = vunpack.c.h.s8.bf16 %v483
        %v1172 = vunpack.c.h.s8.bf16 %v484
        %v1173 = vunpack.c.h.s8.bf16 %v485
        %v1174 = vunpack.c.h.s8.bf16 %v486
        %v1175 = vunpack.c.h.s8.bf16 %v487
        %v1176 = vunpack.c.h.s8.bf16 %v488
        %v1177 = vunpack.c.h.s8.bf16 %v489
        %v1178 = vunpack.c.h.s8.bf16 %v490
        %v1179 = vunpack.c.h.s8.bf16 %v491
        %v1180 = vunpack.c.h.s8.bf16 %v492
        %v1181 = vunpack.c.h.s8.bf16 %v493
        %v1182 = vunpack.c.l.s8.bf16 %v494
        %v1183 = vunpack.c.l.s8.bf16 %v495
        %v1184 = vunpack.c.l.s8.bf16 %v496
        %v1185 = vunpack.c.l.s8.bf16 %v497
        %v1186 = vunpack.c.l.s8.bf16 %v498
        %v1187 = vunpack.c.l.s8.bf16 %v499
        %v1188 = vunpack.c.l.s8.bf16 %v500
        %v1189 = vunpack.c.l.s8.bf16 %v501
        %v1190 = vunpack.c.l.s8.bf16 %v502
        %v1191 = vunpack.c.l.s8.bf16 %v503
        %v1192 = vunpack.c.l.s8.bf16 %v504
        %v1193 = vunpack.c.l.s8.bf16 %v505
        %v1194 = vunpack.c.l.s8.bf16 %v506
        %v1195 = vunpack.c.l.s8.bf16 %v507
        %v1196 = vunpack.c.l.s8.bf16 %v508
        %v1197 = vunpack.c.l.s8.bf16 %v509
        %v1198 = vunpack.c.h.s8.bf16 %v494
        %v1199 = vunpack.c.h.s8.bf16 %v495
        %v1200 = vunpack.c.h.s8.bf16 %v496
        %v1201 = vunpack.c.h.s8.bf16 %v497
        %v1202 = vunpack.c.h.s8.bf16 %v498
        %v1203 = vunpack.c.h.s8.bf16 %v499
        %v1204 = vunpack.c.h.s8.bf16 %v500
        %v1205 = vunpack.c.h.s8.bf16 %v501
        %v1206 = vunpack.c.h.s8.bf16 %v502
        %v1207 = vunpack.c.h.s8.bf16 %v503
        %v1208 = vunpack.c.h.s8.bf16 %v504
        %v1209 = vunpack.c.h.s8.bf16 %v505
        %v1210 = vunpack.c.h.s8.bf16 %v506
        %v1211 = vunpack.c.h.s8.bf16 %v507
        %v1212 = vunpack.c.h.s8.bf16 %v508
        %v1213 = vunpack.c.h.s8.bf16 %v509
        %v1214 = vunpack.c.l.s8.bf16 %v510
        %v1215 = vunpack.c.l.s8.bf16 %v511
        %v1216 = vunpack.c.l.s8.bf16 %v512
        %v1217 = vunpack.c.l.s8.bf16 %v513
        %v1218 = vunpack.c.l.s8.bf16 %v514
        %v1219 = vunpack.c.l.s8.bf16 %v515
        %v1220 = vunpack.c.l.s8.bf16 %v516
        %v1221 = vunpack.c.l.s8.bf16 %v517
        %v1222 = vunpack.c.l.s8.bf16 %v518
        %v1223 = vunpack.c.l.s8.bf16 %v519
        %v1224 = vunpack.c.l.s8.bf16 %v520
        %v1225 = vunpack.c.l.s8.bf16 %v521
        %v1226 = vunpack.c.l.s8.bf16 %v522
        %v1227 = vunpack.c.l.s8.bf16 %v523
        %v1228 = vunpack.c.l.s8.bf16 %v524
        %v1229 = vunpack.c.l.s8.bf16 %v525
        %v1230 = vunpack.c.h.s8.bf16 %v510
        %v1231 = vunpack.c.h.s8.bf16 %v511
        %v1232 = vunpack.c.h.s8.bf16 %v512
        %v1233 = vunpack.c.h.s8.bf16 %v513
        %v1234 = vunpack.c.h.s8.bf16 %v514
        %v1235 = vunpack.c.h.s8.bf16 %v515
        %v1236 = vunpack.c.h.s8.bf16 %v516
        %v1237 = vunpack.c.h.s8.bf16 %v517
        %v1238 = vunpack.c.h.s8.bf16 %v518
        %v1239 = vunpack.c.h.s8.bf16 %v519
        %v1240 = vunpack.c.h.s8.bf16 %v520
        %v1241 = vunpack.c.h.s8.bf16 %v521
        %v1242 = vunpack.c.h.s8.bf16 %v522
        %v1243 = vunpack.c.h.s8.bf16 %v523
        %v1244 = vunpack.c.h.s8.bf16 %v524
        %v1245 = vunpack.c.h.s8.bf16 %v525
        %v1246 = vunpack.c.l.s8.bf16 %v526
        %v1247 = vunpack.c.l.s8.bf16 %v527
        %v1248 = vunpack.c.l.s8.bf16 %v528
        %v1249 = vunpack.c.l.s8.bf16 %v529
        %v1250 = vunpack.c.l.s8.bf16 %v530
        %v1251 = vunpack.c.l.s8.bf16 %v531
        %v1252 = vunpack.c.l.s8.bf16 %v532
        %v1253 = vunpack.c.l.s8.bf16 %v533
        %v1254 = vunpack.c.l.s8.bf16 %v534
        %v1255 = vunpack.c.l.s8.bf16 %v535
        %v1256 = vunpack.c.l.s8.bf16 %v536
        %v1257 = vunpack.c.l.s8.bf16 %v537
        %v1258 = vunpack.c.l.s8.bf16 %v538
        %v1259 = vunpack.c.l.s8.bf16 %v539
        %v1260 = vunpack.c.l.s8.bf16 %v540
        %v1261 = vunpack.c.l.s8.bf16 %v541
        %v1262 = vunpack.c.h.s8.bf16 %v526
        %v1263 = vunpack.c.h.s8.bf16 %v527
        %v1264 = vunpack.c.h.s8.bf16 %v528
        %v1265 = vunpack.c.h.s8.bf16 %v529
        %v1266 = vunpack.c.h.s8.bf16 %v530
        %v1267 = vunpack.c.h.s8.bf16 %v531
        %v1268 = vunpack.c.h.s8.bf16 %v532
        %v1269 = vunpack.c.h.s8.bf16 %v533
        %v1270 = vunpack.c.h.s8.bf16 %v534
        %v1271 = vunpack.c.h.s8.bf16 %v535
        %v1272 = vunpack.c.h.s8.bf16 %v536
        %v1273 = vunpack.c.h.s8.bf16 %v537
        %v1274 = vunpack.c.h.s8.bf16 %v538
        %v1275 = vunpack.c.h.s8.bf16 %v539
        %v1276 = vunpack.c.h.s8.bf16 %v540
        %v1277 = vunpack.c.h.s8.bf16 %v541
        %v1278 = vunpack.c.l.s8.bf16 %v542
        %v1279 = vunpack.c.l.s8.bf16 %v543
        %v1280 = vunpack.c.l.s8.bf16 %v544
        %v1281 = vunpack.c.l.s8.bf16 %v545
        %v1282 = vunpack.c.l.s8.bf16 %v546
        %v1283 = vunpack.c.l.s8.bf16 %v547
        %v1284 = vunpack.c.l.s8.bf16 %v548
        %v1285 = vunpack.c.l.s8.bf16 %v549
        %v1286 = vunpack.c.l.s8.bf16 %v550
        %v1287 = vunpack.c.l.s8.bf16 %v551
        %v1288 = vunpack.c.l.s8.bf16 %v552
        %v1289 = vunpack.c.l.s8.bf16 %v553
        %v1290 = vunpack.c.l.s8.bf16 %v554
        %v1291 = vunpack.c.l.s8.bf16 %v555
        %v1292 = vunpack.c.l.s8.bf16 %v556
        %v1293 = vunpack.c.l.s8.bf16 %v557
        %v1294 = vunpack.c.h.s8.bf16 %v542
        %v1295 = vunpack.c.h.s8.bf16 %v543
        %v1296 = vunpack.c.h.s8.bf16 %v544
        %v1297 = vunpack.c.h.s8.bf16 %v545
        %v1298 = vunpack.c.h.s8.bf16 %v546
        %v1299 = vunpack.c.h.s8.bf16 %v547
        %v1300 = vunpack.c.h.s8.bf16 %v548
        %v1301 = vunpack.c.h.s8.bf16 %v549
        %v1302 = vunpack.c.h.s8.bf16 %v550
        %v1303 = vunpack.c.h.s8.bf16 %v551
        %v1304 = vunpack.c.h.s8.bf16 %v552
        %v1305 = vunpack.c.h.s8.bf16 %v553
        %v1306 = vunpack.c.h.s8.bf16 %v554
        %v1307 = vunpack.c.h.s8.bf16 %v555
        %v1308 = vunpack.c.h.s8.bf16 %v556
        %v1309 = vunpack.c.h.s8.bf16 %v557
        %v1310 = vunpack.c.l.s8.bf16 %v558
        %v1311 = vunpack.c.l.s8.bf16 %v559
        %v1312 = vunpack.c.l.s8.bf16 %v560
        %v1313 = vunpack.c.l.s8.bf16 %v561
        %v1314 = vunpack.c.l.s8.bf16 %v562
        %v1315 = vunpack.c.l.s8.bf16 %v563
        %v1316 = vunpack.c.l.s8.bf16 %v564
        %v1317 = vunpack.c.l.s8.bf16 %v565
        %v1318 = vunpack.c.l.s8.bf16 %v566
        %v1319 = vunpack.c.l.s8.bf16 %v567
        %v1320 = vunpack.c.l.s8.bf16 %v568
        %v1321 = vunpack.c.l.s8.bf16 %v569
        %v1322 = vunpack.c.l.s8.bf16 %v570
        %v1323 = vunpack.c.l.s8.bf16 %v571
        %v1324 = vunpack.c.l.s8.bf16 %v572
        %v1325 = vunpack.c.l.s8.bf16 %v573
        %v1326 = vunpack.c.h.s8.bf16 %v558
        %v1327 = vunpack.c.h.s8.bf16 %v559
        %v1328 = vunpack.c.h.s8.bf16 %v560
        %v1329 = vunpack.c.h.s8.bf16 %v561
        %v1330 = vunpack.c.h.s8.bf16 %v562
        %v1331 = vunpack.c.h.s8.bf16 %v563
        %v1332 = vunpack.c.h.s8.bf16 %v564
        %v1333 = vunpack.c.h.s8.bf16 %v565
        %v1334 = vunpack.c.h.s8.bf16 %v566
        %v1335 = vunpack.c.h.s8.bf16 %v567
        %v1336 = vunpack.c.h.s8.bf16 %v568
        %v1337 = vunpack.c.h.s8.bf16 %v569
        %v1338 = vunpack.c.h.s8.bf16 %v570
        %v1339 = vunpack.c.h.s8.bf16 %v571
        %v1340 = vunpack.c.h.s8.bf16 %v572
        %v1341 = vunpack.c.h.s8.bf16 %v573
        %v1342 = vunpack.c.l.s8.bf16 %v574
        %v1343 = vunpack.c.l.s8.bf16 %v575
        %v1344 = vunpack.c.l.s8.bf16 %v576
        %v1345 = vunpack.c.l.s8.bf16 %v577
        %v1346 = vunpack.c.l.s8.bf16 %v578
        %v1347 = vunpack.c.l.s8.bf16 %v579
        %v1348 = vunpack.c.l.s8.bf16 %v580
        %v1349 = vunpack.c.l.s8.bf16 %v581
        %v1350 = vunpack.c.l.s8.bf16 %v582
        %v1351 = vunpack.c.l.s8.bf16 %v583
        %v1352 = vunpack.c.l.s8.bf16 %v584
        %v1353 = vunpack.c.l.s8.bf16 %v585
        %v1354 = vunpack.c.l.s8.bf16 %v586
        %v1355 = vunpack.c.l.s8.bf16 %v587
        %v1356 = vunpack.c.l.s8.bf16 %v588
        %v1357 = vunpack.c.l.s8.bf16 %v589
        %v1358 = vunpack.c.h.s8.bf16 %v574
        %v1359 = vunpack.c.h.s8.bf16 %v575
        %v1360 = vunpack.c.h.s8.bf16 %v576
        %v1361 = vunpack.c.h.s8.bf16 %v577
        %v1362 = vunpack.c.h.s8.bf16 %v578
        %v1363 = vunpack.c.h.s8.bf16 %v579
        %v1364 = vunpack.c.h.s8.bf16 %v580
        %v1365 = vunpack.c.h.s8.bf16 %v581
        %v1366 = vunpack.c.h.s8.bf16 %v582
        %v1367 = vunpack.c.h.s8.bf16 %v583
        %v1368 = vunpack.c.h.s8.bf16 %v584
        %v1369 = vunpack.c.h.s8.bf16 %v585
        %v1370 = vunpack.c.h.s8.bf16 %v586
        %v1371 = vunpack.c.h.s8.bf16 %v587
        %v1372 = vunpack.c.h.s8.bf16 %v588
        %v1373 = vunpack.c.h.s8.bf16 %v589
        %v1374 = vunpack.c.l.s8.bf16 %v590
        %v1375 = vunpack.c.l.s8.bf16 %v591
        %v1376 = vunpack.c.l.s8.bf16 %v592
        %v1377 = vunpack.c.l.s8.bf16 %v593
        %v1378 = vunpack.c.l.s8.bf16 %v594
        %v1379 = vunpack.c.l.s8.bf16 %v595
        %v1380 = vunpack.c.l.s8.bf16 %v596
        %v1381 = vunpack.c.l.s8.bf16 %v597
        %v1382 = vunpack.c.l.s8.bf16 %v598
        %v1383 = vunpack.c.l.s8.bf16 %v599
        %v1384 = vunpack.c.l.s8.bf16 %v600
        %v1385 = vunpack.c.l.s8.bf16 %v601
        %v1386 = vunpack.c.l.s8.bf16 %v602
        %v1387 = vunpack.c.l.s8.bf16 %v603
        %v1388 = vunpack.c.l.s8.bf16 %v604
        %v1389 = vunpack.c.l.s8.bf16 %v605
        %v1390 = vunpack.c.h.s8.bf16 %v590
        %v1391 = vunpack.c.h.s8.bf16 %v591
        %v1392 = vunpack.c.h.s8.bf16 %v592
        %v1393 = vunpack.c.h.s8.bf16 %v593
        %v1394 = vunpack.c.h.s8.bf16 %v594
        %v1395 = vunpack.c.h.s8.bf16 %v595
        %v1396 = vunpack.c.h.s8.bf16 %v596
        %v1397 = vunpack.c.h.s8.bf16 %v597
        %v1398 = vunpack.c.h.s8.bf16 %v598
        %v1399 = vunpack.c.h.s8.bf16 %v599
        %v1400 = vunpack.c.h.s8.bf16 %v600
        %v1401 = vunpack.c.h.s8.bf16 %v601
        %v1402 = vunpack.c.h.s8.bf16 %v602
        %v1403 = vunpack.c.h.s8.bf16 %v603
        %v1404 = vunpack.c.h.s8.bf16 %v604
        %v1405 = vunpack.c.h.s8.bf16 %v605
        %v1406 = vunpack.c.l.s8.bf16 %v606
        %v1407 = vunpack.c.l.s8.bf16 %v607
        %v1408 = vunpack.c.l.s8.bf16 %v608
        %v1409 = vunpack.c.l.s8.bf16 %v609
        %v1410 = vunpack.c.l.s8.bf16 %v610
        %v1411 = vunpack.c.l.s8.bf16 %v611
        %v1412 = vunpack.c.l.s8.bf16 %v612
        %v1413 = vunpack.c.l.s8.bf16 %v613
        %v1414 = vunpack.c.l.s8.bf16 %v614
        %v1415 = vunpack.c.l.s8.bf16 %v615
        %v1416 = vunpack.c.l.s8.bf16 %v616
        %v1417 = vunpack.c.l.s8.bf16 %v617
        %v1418 = vunpack.c.l.s8.bf16 %v618
        %v1419 = vunpack.c.l.s8.bf16 %v619
        %v1420 = vunpack.c.l.s8.bf16 %v620
        %v1421 = vunpack.c.l.s8.bf16 %v621
        %v1422 = vunpack.c.h.s8.bf16 %v606
        %v1423 = vunpack.c.h.s8.bf16 %v607
        %v1424 = vunpack.c.h.s8.bf16 %v608
        %v1425 = vunpack.c.h.s8.bf16 %v609
        %v1426 = vunpack.c.h.s8.bf16 %v610
        %v1427 = vunpack.c.h.s8.bf16 %v611
        %v1428 = vunpack.c.h.s8.bf16 %v612
        %v1429 = vunpack.c.h.s8.bf16 %v613
        %v1430 = vunpack.c.h.s8.bf16 %v614
        %v1431 = vunpack.c.h.s8.bf16 %v615
        %v1432 = vunpack.c.h.s8.bf16 %v616
        %v1433 = vunpack.c.h.s8.bf16 %v617
        %v1434 = vunpack.c.h.s8.bf16 %v618
        %v1435 = vunpack.c.h.s8.bf16 %v619
        %v1436 = vunpack.c.h.s8.bf16 %v620
        %v1437 = vunpack.c.h.s8.bf16 %v621
        %v1438 = vunpack.c.l.s8.bf16 %v622
        %v1439 = vunpack.c.l.s8.bf16 %v623
        %v1440 = vunpack.c.l.s8.bf16 %v624
        %v1441 = vunpack.c.l.s8.bf16 %v625
        %v1442 = vunpack.c.l.s8.bf16 %v626
        %v1443 = vunpack.c.l.s8.bf16 %v627
        %v1444 = vunpack.c.l.s8.bf16 %v628
        %v1445 = vunpack.c.l.s8.bf16 %v629
        %v1446 = vunpack.c.l.s8.bf16 %v630
        %v1447 = vunpack.c.l.s8.bf16 %v631
        %v1448 = vunpack.c.l.s8.bf16 %v632
        %v1449 = vunpack.c.l.s8.bf16 %v633
        %v1450 = vunpack.c.l.s8.bf16 %v634
        %v1451 = vunpack.c.l.s8.bf16 %v635
        %v1452 = vunpack.c.l.s8.bf16 %v636
        %v1453 = vunpack.c.l.s8.bf16 %v637
        %v1454 = vunpack.c.h.s8.bf16 %v622
        %v1455 = vunpack.c.h.s8.bf16 %v623
        %v1456 = vunpack.c.h.s8.bf16 %v624
        %v1457 = vunpack.c.h.s8.bf16 %v625
        %v1458 = vunpack.c.h.s8.bf16 %v626
        %v1459 = vunpack.c.h.s8.bf16 %v627
        %v1460 = vunpack.c.h.s8.bf16 %v628
        %v1461 = vunpack.c.h.s8.bf16 %v629
        %v1462 = vunpack.c.h.s8.bf16 %v630
        %v1463 = vunpack.c.h.s8.bf16 %v631
        %v1464 = vunpack.c.h.s8.bf16 %v632
        %v1465 = vunpack.c.h.s8.bf16 %v633
        %v1466 = vunpack.c.h.s8.bf16 %v634
        %v1467 = vunpack.c.h.s8.bf16 %v635
        %v1468 = vunpack.c.h.s8.bf16 %v636
        %v1469 = vunpack.c.h.s8.bf16 %v637
        %v1470 = vunpack.c.l.s8.bf16 %v638
        %v1471 = vunpack.c.l.s8.bf16 %v639
        %v1472 = vunpack.c.l.s8.bf16 %v640
        %v1473 = vunpack.c.l.s8.bf16 %v641
        %v1474 = vunpack.c.l.s8.bf16 %v642
        %v1475 = vunpack.c.l.s8.bf16 %v643
        %v1476 = vunpack.c.l.s8.bf16 %v644
        %v1477 = vunpack.c.l.s8.bf16 %v645
        %v1478 = vunpack.c.l.s8.bf16 %v646
        %v1479 = vunpack.c.l.s8.bf16 %v647
        %v1480 = vunpack.c.l.s8.bf16 %v648
        %v1481 = vunpack.c.l.s8.bf16 %v649
        %v1482 = vunpack.c.l.s8.bf16 %v650
        %v1483 = vunpack.c.l.s8.bf16 %v651
        %v1484 = vunpack.c.l.s8.bf16 %v652
        %v1485 = vunpack.c.l.s8.bf16 %v653
        %v1486 = vunpack.c.h.s8.bf16 %v638
        %v1487 = vunpack.c.h.s8.bf16 %v639
        %v1488 = vunpack.c.h.s8.bf16 %v640
        %v1489 = vunpack.c.h.s8.bf16 %v641
        %v1490 = vunpack.c.h.s8.bf16 %v642
        %v1491 = vunpack.c.h.s8.bf16 %v643
        %v1492 = vunpack.c.h.s8.bf16 %v644
        %v1493 = vunpack.c.h.s8.bf16 %v645
        %v1494 = vunpack.c.h.s8.bf16 %v646
        %v1495 = vunpack.c.h.s8.bf16 %v647
        %v1496 = vunpack.c.h.s8.bf16 %v648
        %v1497 = vunpack.c.h.s8.bf16 %v649
        %v1498 = vunpack.c.h.s8.bf16 %v650
        %v1499 = vunpack.c.h.s8.bf16 %v651
        %v1500 = vunpack.c.h.s8.bf16 %v652
        %v1501 = vunpack.c.h.s8.bf16 %v653
        %v1502 = vunpack.c.l.s8.bf16 %v654
        %v1503 = vunpack.c.l.s8.bf16 %v655
        %v1504 = vunpack.c.l.s8.bf16 %v656
        %v1505 = vunpack.c.l.s8.bf16 %v657
        %v1506 = vunpack.c.l.s8.bf16 %v658
        %v1507 = vunpack.c.l.s8.bf16 %v659
        %v1508 = vunpack.c.l.s8.bf16 %v660
        %v1509 = vunpack.c.l.s8.bf16 %v661
        %v1510 = vunpack.c.l.s8.bf16 %v662
        %v1511 = vunpack.c.l.s8.bf16 %v663
        %v1512 = vunpack.c.l.s8.bf16 %v664
        %v1513 = vunpack.c.l.s8.bf16 %v665
        %v1514 = vunpack.c.l.s8.bf16 %v666
        %v1515 = vunpack.c.l.s8.bf16 %v667
        %v1516 = vunpack.c.l.s8.bf16 %v668
        %v1517 = vunpack.c.l.s8.bf16 %v669
        %v1518 = vunpack.c.h.s8.bf16 %v654
        %v1519 = vunpack.c.h.s8.bf16 %v655
        %v1520 = vunpack.c.h.s8.bf16 %v656
        %v1521 = vunpack.c.h.s8.bf16 %v657
        %v1522 = vunpack.c.h.s8.bf16 %v658
        %v1523 = vunpack.c.h.s8.bf16 %v659
        %v1524 = vunpack.c.h.s8.bf16 %v660
        %v1525 = vunpack.c.h.s8.bf16 %v661
        %v1526 = vunpack.c.h.s8.bf16 %v662
        %v1527 = vunpack.c.h.s8.bf16 %v663
        %v1528 = vunpack.c.h.s8.bf16 %v664
        %v1529 = vunpack.c.h.s8.bf16 %v665
        %v1530 = vunpack.c.h.s8.bf16 %v666
        %v1531 = vunpack.c.h.s8.bf16 %v667
        %v1532 = vunpack.c.h.s8.bf16 %v668
        %v1533 = vunpack.c.h.s8.bf16 %v669
        %v1534 = vunpack.c.l.s8.bf16 %v670
        %v1535 = vunpack.c.l.s8.bf16 %v671
        %v1536 = vunpack.c.l.s8.bf16 %v672
        %v1537 = vunpack.c.l.s8.bf16 %v673
        %v1538 = vunpack.c.l.s8.bf16 %v674
        %v1539 = vunpack.c.l.s8.bf16 %v675
        %v1540 = vunpack.c.l.s8.bf16 %v676
        %v1541 = vunpack.c.l.s8.bf16 %v677
        %v1542 = vunpack.c.l.s8.bf16 %v678
        %v1543 = vunpack.c.l.s8.bf16 %v679
        %v1544 = vunpack.c.l.s8.bf16 %v680
        %v1545 = vunpack.c.l.s8.bf16 %v681
        %v1546 = vunpack.c.l.s8.bf16 %v682
        %v1547 = vunpack.c.l.s8.bf16 %v683
        %v1548 = vunpack.c.l.s8.bf16 %v684
        %v1549 = vunpack.c.l.s8.bf16 %v685
        %v1550 = vunpack.c.h.s8.bf16 %v670
        %v1551 = vunpack.c.h.s8.bf16 %v671
        %v1552 = vunpack.c.h.s8.bf16 %v672
        %v1553 = vunpack.c.h.s8.bf16 %v673
        %v1554 = vunpack.c.h.s8.bf16 %v674
        %v1555 = vunpack.c.h.s8.bf16 %v675
        %v1556 = vunpack.c.h.s8.bf16 %v676
        %v1557 = vunpack.c.h.s8.bf16 %v677
        %v1558 = vunpack.c.h.s8.bf16 %v678
        %v1559 = vunpack.c.h.s8.bf16 %v679
        %v1560 = vunpack.c.h.s8.bf16 %v680
        %v1561 = vunpack.c.h.s8.bf16 %v681
        %v1562 = vunpack.c.h.s8.bf16 %v682
        %v1563 = vunpack.c.h.s8.bf16 %v683
        %v1564 = vunpack.c.h.s8.bf16 %v684
        %v1565 = vunpack.c.h.s8.bf16 %v685
        %v1566 = vunpack.c.l.s8.bf16 %v686
        %v1567 = vunpack.c.l.s8.bf16 %v687
        %v1568 = vunpack.c.l.s8.bf16 %v688
        %v1569 = vunpack.c.l.s8.bf16 %v689
        %v1570 = vunpack.c.l.s8.bf16 %v690
        %v1571 = vunpack.c.l.s8.bf16 %v691
        %v1572 = vunpack.c.l.s8.bf16 %v692
        %v1573 = vunpack.c.l.s8.bf16 %v693
        %v1574 = vunpack.c.l.s8.bf16 %v694
        %v1575 = vunpack.c.l.s8.bf16 %v695
        %v1576 = vunpack.c.l.s8.bf16 %v696
        %v1577 = vunpack.c.l.s8.bf16 %v697
        %v1578 = vunpack.c.l.s8.bf16 %v698
        %v1579 = vunpack.c.l.s8.bf16 %v699
        %v1580 = vunpack.c.l.s8.bf16 %v700
        %v1581 = vunpack.c.l.s8.bf16 %v701
        %v1582 = vunpack.c.h.s8.bf16 %v686
        %v1583 = vunpack.c.h.s8.bf16 %v687
        %v1584 = vunpack.c.h.s8.bf16 %v688
        %v1585 = vunpack.c.h.s8.bf16 %v689
        %v1586 = vunpack.c.h.s8.bf16 %v690
        %v1587 = vunpack.c.h.s8.bf16 %v691
        %v1588 = vunpack.c.h.s8.bf16 %v692
        %v1589 = vunpack.c.h.s8.bf16 %v693
        %v1590 = vunpack.c.h.s8.bf16 %v694
        %v1591 = vunpack.c.h.s8.bf16 %v695
        %v1592 = vunpack.c.h.s8.bf16 %v696
        %v1593 = vunpack.c.h.s8.bf16 %v697
        %v1594 = vunpack.c.h.s8.bf16 %v698
        %v1595 = vunpack.c.h.s8.bf16 %v699
        %v1596 = vunpack.c.h.s8.bf16 %v700
        %v1597 = vunpack.c.h.s8.bf16 %v701
        %v1598 = vunpack.c.l.s8.bf16 %v702
        %v1599 = vunpack.c.l.s8.bf16 %v703
        %v1600 = vunpack.c.l.s8.bf16 %v704
        %v1601 = vunpack.c.l.s8.bf16 %v705
        %v1602 = vunpack.c.l.s8.bf16 %v706
        %v1603 = vunpack.c.l.s8.bf16 %v707
        %v1604 = vunpack.c.l.s8.bf16 %v708
        %v1605 = vunpack.c.l.s8.bf16 %v709
        %v1606 = vunpack.c.l.s8.bf16 %v710
        %v1607 = vunpack.c.l.s8.bf16 %v711
        %v1608 = vunpack.c.l.s8.bf16 %v712
        %v1609 = vunpack.c.l.s8.bf16 %v713
        %v1610 = vunpack.c.l.s8.bf16 %v714
        %v1611 = vunpack.c.l.s8.bf16 %v715
        %v1612 = vunpack.c.l.s8.bf16 %v716
        %v1613 = vunpack.c.l.s8.bf16 %v717
        %v1614 = vunpack.c.h.s8.bf16 %v702
        %v1615 = vunpack.c.h.s8.bf16 %v703
        %v1616 = vunpack.c.h.s8.bf16 %v704
        %v1617 = vunpack.c.h.s8.bf16 %v705
        %v1618 = vunpack.c.h.s8.bf16 %v706
        %v1619 = vunpack.c.h.s8.bf16 %v707
        %v1620 = vunpack.c.h.s8.bf16 %v708
        %v1621 = vunpack.c.h.s8.bf16 %v709
        %v1622 = vunpack.c.h.s8.bf16 %v710
        %v1623 = vunpack.c.h.s8.bf16 %v711
        %v1624 = vunpack.c.h.s8.bf16 %v712
        %v1625 = vunpack.c.h.s8.bf16 %v713
        %v1626 = vunpack.c.h.s8.bf16 %v714
        %v1627 = vunpack.c.h.s8.bf16 %v715
        %v1628 = vunpack.c.h.s8.bf16 %v716
        %v1629 = vunpack.c.h.s8.bf16 %v717
        %v1630 = vunpack.c.l.s8.bf16 %v718
        %v1631 = vunpack.c.l.s8.bf16 %v719
        %v1632 = vunpack.c.l.s8.bf16 %v720
        %v1633 = vunpack.c.l.s8.bf16 %v721
        %v1634 = vunpack.c.l.s8.bf16 %v722
        %v1635 = vunpack.c.l.s8.bf16 %v723
        %v1636 = vunpack.c.l.s8.bf16 %v724
        %v1637 = vunpack.c.l.s8.bf16 %v725
        %v1638 = vunpack.c.l.s8.bf16 %v726
        %v1639 = vunpack.c.l.s8.bf16 %v727
        %v1640 = vunpack.c.l.s8.bf16 %v728
        %v1641 = vunpack.c.l.s8.bf16 %v729
        %v1642 = vunpack.c.l.s8.bf16 %v730
        %v1643 = vunpack.c.l.s8.bf16 %v731
        %v1644 = vunpack.c.l.s8.bf16 %v732
        %v1645 = vunpack.c.l.s8.bf16 %v733
        %v1646 = vunpack.c.h.s8.bf16 %v718
        %v1647 = vunpack.c.h.s8.bf16 %v719
        %v1648 = vunpack.c.h.s8.bf16 %v720
        %v1649 = vunpack.c.h.s8.bf16 %v721
        %v1650 = vunpack.c.h.s8.bf16 %v722
        %v1651 = vunpack.c.h.s8.bf16 %v723
        %v1652 = vunpack.c.h.s8.bf16 %v724
        %v1653 = vunpack.c.h.s8.bf16 %v725
        %v1654 = vunpack.c.h.s8.bf16 %v726
        %v1655 = vunpack.c.h.s8.bf16 %v727
        %v1656 = vunpack.c.h.s8.bf16 %v728
        %v1657 = vunpack.c.h.s8.bf16 %v729
        %v1658 = vunpack.c.h.s8.bf16 %v730
        %v1659 = vunpack.c.h.s8.bf16 %v731
        %v1660 = vunpack.c.h.s8.bf16 %v732
        %v1661 = vunpack.c.h.s8.bf16 %v733
        %v1662 = vunpack.c.l.s8.bf16 %v734
        %v1663 = vunpack.c.l.s8.bf16 %v735
        %v1664 = vunpack.c.l.s8.bf16 %v736
        %v1665 = vunpack.c.l.s8.bf16 %v737
        %v1666 = vunpack.c.l.s8.bf16 %v738
        %v1667 = vunpack.c.l.s8.bf16 %v739
        %v1668 = vunpack.c.l.s8.bf16 %v740
        %v1669 = vunpack.c.l.s8.bf16 %v741
        %v1670 = vunpack.c.l.s8.bf16 %v742
        %v1671 = vunpack.c.l.s8.bf16 %v743
        %v1672 = vunpack.c.l.s8.bf16 %v744
        %v1673 = vunpack.c.l.s8.bf16 %v745
        %v1674 = vunpack.c.l.s8.bf16 %v746
        %v1675 = vunpack.c.l.s8.bf16 %v747
        %v1676 = vunpack.c.l.s8.bf16 %v748
        %v1677 = vunpack.c.l.s8.bf16 %v749
        %v1678 = vunpack.c.h.s8.bf16 %v734
        %v1679 = vunpack.c.h.s8.bf16 %v735
        %v1680 = vunpack.c.h.s8.bf16 %v736
        %v1681 = vunpack.c.h.s8.bf16 %v737
        %v1682 = vunpack.c.h.s8.bf16 %v738
        %v1683 = vunpack.c.h.s8.bf16 %v739
        %v1684 = vunpack.c.h.s8.bf16 %v740
        %v1685 = vunpack.c.h.s8.bf16 %v741
        %v1686 = vunpack.c.h.s8.bf16 %v742
        %v1687 = vunpack.c.h.s8.bf16 %v743
        %v1688 = vunpack.c.h.s8.bf16 %v744
        %v1689 = vunpack.c.h.s8.bf16 %v745
        %v1690 = vunpack.c.h.s8.bf16 %v746
        %v1691 = vunpack.c.h.s8.bf16 %v747
        %v1692 = vunpack.c.h.s8.bf16 %v748
        %v1693 = vunpack.c.h.s8.bf16 %v749
        %v1694 = vunpack.c.l.s8.bf16 %v750
        %v1695 = vunpack.c.l.s8.bf16 %v751
        %v1696 = vunpack.c.l.s8.bf16 %v752
        %v1697 = vunpack.c.l.s8.bf16 %v753
        %v1698 = vunpack.c.l.s8.bf16 %v754
        %v1699 = vunpack.c.l.s8.bf16 %v755
        %v1700 = vunpack.c.l.s8.bf16 %v756
        %v1701 = vunpack.c.l.s8.bf16 %v757
        %v1702 = vunpack.c.l.s8.bf16 %v758
        %v1703 = vunpack.c.l.s8.bf16 %v759
        %v1704 = vunpack.c.l.s8.bf16 %v760
        %v1705 = vunpack.c.l.s8.bf16 %v761
        %v1706 = vunpack.c.l.s8.bf16 %v762
        %v1707 = vunpack.c.l.s8.bf16 %v763
        %v1708 = vunpack.c.l.s8.bf16 %v764
        %v1709 = vunpack.c.l.s8.bf16 %v765
        %v1710 = vunpack.c.h.s8.bf16 %v750
        %v1711 = vunpack.c.h.s8.bf16 %v751
        %v1712 = vunpack.c.h.s8.bf16 %v752
        %v1713 = vunpack.c.h.s8.bf16 %v753
        %v1714 = vunpack.c.h.s8.bf16 %v754
        %v1715 = vunpack.c.h.s8.bf16 %v755
        %v1716 = vunpack.c.h.s8.bf16 %v756
        %v1717 = vunpack.c.h.s8.bf16 %v757
        %v1718 = vunpack.c.h.s8.bf16 %v758
        %v1719 = vunpack.c.h.s8.bf16 %v759
        %v1720 = vunpack.c.h.s8.bf16 %v760
        %v1721 = vunpack.c.h.s8.bf16 %v761
        %v1722 = vunpack.c.h.s8.bf16 %v762
        %v1723 = vunpack.c.h.s8.bf16 %v763
        %v1724 = vunpack.c.h.s8.bf16 %v764
        %v1725 = vunpack.c.h.s8.bf16 %v765
        %v1726 = vunpack.c.l.s8.bf16 %v766
        %v1727 = vunpack.c.l.s8.bf16 %v767
        %v1728 = vunpack.c.l.s8.bf16 %v768
        %v1729 = vunpack.c.l.s8.bf16 %v769
        %v1730 = vunpack.c.l.s8.bf16 %v770
        %v1731 = vunpack.c.l.s8.bf16 %v771
        %v1732 = vunpack.c.l.s8.bf16 %v772
        %v1733 = vunpack.c.l.s8.bf16 %v773
        %v1734 = vunpack.c.l.s8.bf16 %v774
        %v1735 = vunpack.c.l.s8.bf16 %v775
        %v1736 = vunpack.c.l.s8.bf16 %v776
        %v1737 = vunpack.c.l.s8.bf16 %v777
        %v1738 = vunpack.c.l.s8.bf16 %v778
        %v1739 = vunpack.c.l.s8.bf16 %v779
        %v1740 = vunpack.c.l.s8.bf16 %v780
        %v1741 = vunpack.c.l.s8.bf16 %v781
        %v1742 = vunpack.c.h.s8.bf16 %v766
        %v1743 = vunpack.c.h.s8.bf16 %v767
        %v1744 = vunpack.c.h.s8.bf16 %v768
        %v1745 = vunpack.c.h.s8.bf16 %v769
        %v1746 = vunpack.c.h.s8.bf16 %v770
        %v1747 = vunpack.c.h.s8.bf16 %v771
        %v1748 = vunpack.c.h.s8.bf16 %v772
        %v1749 = vunpack.c.h.s8.bf16 %v773
        %v1750 = vunpack.c.h.s8.bf16 %v774
        %v1751 = vunpack.c.h.s8.bf16 %v775
        %v1752 = vunpack.c.h.s8.bf16 %v776
        %v1753 = vunpack.c.h.s8.bf16 %v777
        %v1754 = vunpack.c.h.s8.bf16 %v778
        %v1755 = vunpack.c.h.s8.bf16 %v779
        %v1756 = vunpack.c.h.s8.bf16 %v780
        %v1757 = vunpack.c.h.s8.bf16 %v781
        %v1758 = vunpack.c.l.s8.bf16 %v782
        %v1759 = vunpack.c.l.s8.bf16 %v783
        %v1760 = vunpack.c.l.s8.bf16 %v784
        %v1761 = vunpack.c.l.s8.bf16 %v785
        %v1762 = vunpack.c.l.s8.bf16 %v786
        %v1763 = vunpack.c.l.s8.bf16 %v787
        %v1764 = vunpack.c.l.s8.bf16 %v788
        %v1765 = vunpack.c.l.s8.bf16 %v789
        %v1766 = vunpack.c.l.s8.bf16 %v790
        %v1767 = vunpack.c.l.s8.bf16 %v791
        %v1768 = vunpack.c.l.s8.bf16 %v792
        %v1769 = vunpack.c.l.s8.bf16 %v793
        %v1770 = vunpack.c.l.s8.bf16 %v794
        %v1771 = vunpack.c.l.s8.bf16 %v795
        %v1772 = vunpack.c.l.s8.bf16 %v796
        %v1773 = vunpack.c.l.s8.bf16 %v797
        %v1774 = vunpack.c.h.s8.bf16 %v782
        %v1775 = vunpack.c.h.s8.bf16 %v783
        %v1776 = vunpack.c.h.s8.bf16 %v784
        %v1777 = vunpack.c.h.s8.bf16 %v785
        %v1778 = vunpack.c.h.s8.bf16 %v786
        %v1779 = vunpack.c.h.s8.bf16 %v787
        %v1780 = vunpack.c.h.s8.bf16 %v788
        %v1781 = vunpack.c.h.s8.bf16 %v789
        %v1782 = vunpack.c.h.s8.bf16 %v790
        %v1783 = vunpack.c.h.s8.bf16 %v791
        %v1784 = vunpack.c.h.s8.bf16 %v792
        %v1785 = vunpack.c.h.s8.bf16 %v793
        %v1786 = vunpack.c.h.s8.bf16 %v794
        %v1787 = vunpack.c.h.s8.bf16 %v795
        %v1788 = vunpack.c.h.s8.bf16 %v796
        %v1789 = vunpack.c.h.s8.bf16 %v797
        %v1790 = vunpack.c.l.s8.bf16 %v798
        %v1791 = vunpack.c.l.s8.bf16 %v799
        %v1792 = vunpack.c.l.s8.bf16 %v800
        %v1793 = vunpack.c.l.s8.bf16 %v801
        %v1794 = vunpack.c.l.s8.bf16 %v802
        %v1795 = vunpack.c.l.s8.bf16 %v803
        %v1796 = vunpack.c.l.s8.bf16 %v804
        %v1797 = vunpack.c.l.s8.bf16 %v805
        %v1798 = vunpack.c.l.s8.bf16 %v806
        %v1799 = vunpack.c.l.s8.bf16 %v807
        %v1800 = vunpack.c.l.s8.bf16 %v808
        %v1801 = vunpack.c.l.s8.bf16 %v809
        %v1802 = vunpack.c.l.s8.bf16 %v810
        %v1803 = vunpack.c.l.s8.bf16 %v811
        %v1804 = vunpack.c.l.s8.bf16 %v812
        %v1805 = vunpack.c.l.s8.bf16 %v813
        %v1806 = vunpack.c.h.s8.bf16 %v798
        %v1807 = vunpack.c.h.s8.bf16 %v799
        %v1808 = vunpack.c.h.s8.bf16 %v800
        %v1809 = vunpack.c.h.s8.bf16 %v801
        %v1810 = vunpack.c.h.s8.bf16 %v802
        %v1811 = vunpack.c.h.s8.bf16 %v803
        %v1812 = vunpack.c.h.s8.bf16 %v804
        %v1813 = vunpack.c.h.s8.bf16 %v805
        %v1814 = vunpack.c.h.s8.bf16 %v806
        %v1815 = vunpack.c.h.s8.bf16 %v807
        %v1816 = vunpack.c.h.s8.bf16 %v808
        %v1817 = vunpack.c.h.s8.bf16 %v809
        %v1818 = vunpack.c.h.s8.bf16 %v810
        %v1819 = vunpack.c.h.s8.bf16 %v811
        %v1820 = vunpack.c.h.s8.bf16 %v812
        %v1821 = vunpack.c.h.s8.bf16 %v813
        %v1822 = vunpack.c.l.s8.bf16 %v814
        %v1823 = vunpack.c.l.s8.bf16 %v815
        %v1824 = vunpack.c.l.s8.bf16 %v816
        %v1825 = vunpack.c.l.s8.bf16 %v817
        %v1826 = vunpack.c.l.s8.bf16 %v818
        %v1827 = vunpack.c.l.s8.bf16 %v819
        %v1828 = vunpack.c.l.s8.bf16 %v820
        %v1829 = vunpack.c.l.s8.bf16 %v821
        %v1830 = vunpack.c.l.s8.bf16 %v822
        %v1831 = vunpack.c.l.s8.bf16 %v823
        %v1832 = vunpack.c.l.s8.bf16 %v824
        %v1833 = vunpack.c.l.s8.bf16 %v825
        %v1834 = vunpack.c.l.s8.bf16 %v826
        %v1835 = vunpack.c.l.s8.bf16 %v827
        %v1836 = vunpack.c.l.s8.bf16 %v828
        %v1837 = vunpack.c.l.s8.bf16 %v829
        %v1838 = vunpack.c.h.s8.bf16 %v814
        %v1839 = vunpack.c.h.s8.bf16 %v815
        %v1840 = vunpack.c.h.s8.bf16 %v816
        %v1841 = vunpack.c.h.s8.bf16 %v817
        %v1842 = vunpack.c.h.s8.bf16 %v818
        %v1843 = vunpack.c.h.s8.bf16 %v819
        %v1844 = vunpack.c.h.s8.bf16 %v820
        %v1845 = vunpack.c.h.s8.bf16 %v821
        %v1846 = vunpack.c.h.s8.bf16 %v822
        %v1847 = vunpack.c.h.s8.bf16 %v823
        %v1848 = vunpack.c.h.s8.bf16 %v824
        %v1849 = vunpack.c.h.s8.bf16 %v825
        %v1850 = vunpack.c.h.s8.bf16 %v826
        %v1851 = vunpack.c.h.s8.bf16 %v827
        %v1852 = vunpack.c.h.s8.bf16 %v828
        %v1853 = vunpack.c.h.s8.bf16 %v829
        %1854 = vmatprep.subr.bf16.mxu0 %v943
        %1855 = vmatpush1.bf16.msra.mxu0 %v942
        %1856 = vmatprep.subr.bf16.mxu0 %v927
        %1857 = vmatpush1.bf16.msra.mxu0 %v926
        %1858 = vmatprep.subr.bf16.mxu0 %v911
        %1859 = vmatpush1.bf16.msra.mxu0 %v910
        %1860 = vmatprep.subr.bf16.mxu0 %v895
        %1861 = vmatpush1.bf16.msra.mxu0 %v894
        %1862 = vmatprep.subr.bf16.mxu0 %v879
        %1863 = vmatpush1.bf16.msra.mxu0 %v878
        %1864 = vmatprep.subr.bf16.mxu0 %v863
        %1865 = vmatpush1.bf16.msra.mxu0 %v862
        %1866 = vmatprep.subr.bf16.mxu0 %v847
        %1867 = vmatpush1.bf16.msra.mxu0 %v846
        %1868 = vmatprep.subr.bf16.mxu0 %v831
        %1869 = vmatpush1.bf16.msra.mxu0 %v830
        %1870 = vmatprep.subr.bf16.mxu0 %v1071
        %1871 = vmatpush2.bf16.msra.mxu0 %v1070
        %1872 = vmatprep.subr.bf16.mxu0 %v1055
        %1873 = vmatpush2.bf16.msra.mxu0 %v1054
        %1874 = vmatprep.subr.bf16.mxu0 %v1039
        %1875 = vmatpush2.bf16.msra.mxu0 %v1038
        %1876 = vmatprep.subr.bf16.mxu0 %v1023
        %1877 = vmatpush2.bf16.msra.mxu0 %v1022
        %1878 = vmatprep.subr.bf16.mxu0 %v1007
        %1879 = vmatpush2.bf16.msra.mxu0 %v1006
        %1880 = vmatprep.subr.bf16.mxu0 %v991
        %1881 = vmatpush2.bf16.msra.mxu0 %v990
        %1882 = vmatprep.subr.bf16.mxu0 %v975
        %1883 = vmatpush2.bf16.msra.mxu0 %v974
        %1884 = vmatprep.subr.bf16.mxu0 %v959
        %1885 = vmatpush2.bf16.msra.mxu0 %v958
        %1886 = vmatprep.mubr.bf16.mxu0 %v311
        %1887 = vmatmul.mubr.bf16.gmra.mxu0 %v310
        %v1888 = vpop.f32.mrf.mxu0
        %v1889 = vadd.f32 0.0, %v1888
        %v1890 = vpop.f32.mrf.mxu0
        %v1891 = vadd.f32 0.0, %v1890
        %v1892 = vpop.f32.mrf.mxu0
        %v1893 = vpop.f32.mrf.mxu0
        %1894 = vdwg.mxu0
        %1895 = vmatprep.subr.bf16.mxu0 %v1199
        %1896 = vmatpush1.bf16.msra.mxu0 %v1198
        %1897 = vmatprep.subr.bf16.mxu0 %v1183
        %1898 = vmatpush1.bf16.msra.mxu0 %v1182
        %1899 = vmatprep.subr.bf16.mxu0 %v1167
        %1900 = vmatpush1.bf16.msra.mxu0 %v1166
        %1901 = vmatprep.subr.bf16.mxu0 %v1151
        %1902 = vmatpush1.bf16.msra.mxu0 %v1150
        %1903 = vmatprep.subr.bf16.mxu0 %v1135
        %1904 = vmatpush1.bf16.msra.mxu0 %v1134
        %1905 = vmatprep.subr.bf16.mxu0 %v1119
        %1906 = vmatpush1.bf16.msra.mxu0 %v1118
        %1907 = vmatprep.subr.bf16.mxu0 %v1103
        %1908 = vmatpush1.bf16.msra.mxu0 %v1102
        %1909 = vmatprep.subr.bf16.mxu0 %v1087
        %1910 = vmatpush1.bf16.msra.mxu0 %v1086
        %1911 = vmatprep.subr.bf16.mxu0 %v1327
        %1912 = vmatpush2.bf16.msra.mxu0 %v1326
        %1913 = vmatprep.subr.bf16.mxu0 %v1311
        %1914 = vmatpush2.bf16.msra.mxu0 %v1310
        %1915 = vmatprep.subr.bf16.mxu0 %v1295
        %1916 = vmatpush2.bf16.msra.mxu0 %v1294
        %1917 = vmatprep.subr.bf16.mxu0 %v1279
        %1918 = vmatpush2.bf16.msra.mxu0 %v1278
        %1919 = vmatprep.subr.bf16.mxu0 %v1263
        %1920 = vmatpush2.bf16.msra.mxu0 %v1262
        %1921 = vmatprep.subr.bf16.mxu0 %v1247
        %1922 = vmatpush2.bf16.msra.mxu0 %v1246
        %1923 = vmatprep.subr.bf16.mxu0 %v1231
        %1924 = vmatpush2.bf16.msra.mxu0 %v1230
        %1925 = vmatprep.subr.bf16.mxu0 %v1215
        %1926 = vmatpush2.bf16.msra.mxu0 %v1214
        %1927 = vmatprep.mubr.bf16.mxu0 %v313
        %1928 = vmatmul.mubr.bf16.gmra.mxu0 %v312
        %v1929 = vpop.f32.mrf.mxu0
        %v1930 = vadd.f32 %v1889, %v1929
        %v1931 = vpop.f32.mrf.mxu0
        %v1932 = vadd.f32 %v1891, %v1931
        %v1933 = vpop.f32.mrf.mxu0
        %v1934 = vpop.f32.mrf.mxu0
        %1935 = vdwg.mxu0
        %1936 = vmatprep.subr.bf16.mxu0 %v1455
        %1937 = vmatpush1.bf16.msra.mxu0 %v1454
        %1938 = vmatprep.subr.bf16.mxu0 %v1439
        %1939 = vmatpush1.bf16.msra.mxu0 %v1438
        %1940 = vmatprep.subr.bf16.mxu0 %v1423
        %1941 = vmatpush1.bf16.msra.mxu0 %v1422
        %1942 = vmatprep.subr.bf16.mxu0 %v1407
        %1943 = vmatpush1.bf16.msra.mxu0 %v1406
        %1944 = vmatprep.subr.bf16.mxu0 %v1391
        %1945 = vmatpush1.bf16.msra.mxu0 %v1390
        %1946 = vmatprep.subr.bf16.mxu0 %v1375
        %1947 = vmatpush1.bf16.msra.mxu0 %v1374
        %1948 = vmatprep.subr.bf16.mxu0 %v1359
        %1949 = vmatpush1.bf16.msra.mxu0 %v1358
        %1950 = vmatprep.subr.bf16.mxu0 %v1343
        %1951 = vmatpush1.bf16.msra.mxu0 %v1342
        %1952 = vmatprep.subr.bf16.mxu0 %v1583
        %1953 = vmatpush2.bf16.msra.mxu0 %v1582
        %1954 = vmatprep.subr.bf16.mxu0 %v1567
        %1955 = vmatpush2.bf16.msra.mxu0 %v1566
        %1956 = vmatprep.subr.bf16.mxu0 %v1551
        %1957 = vmatpush2.bf16.msra.mxu0 %v1550
        %1958 = vmatprep.subr.bf16.mxu0 %v1535
        %1959 = vmatpush2.bf16.msra.mxu0 %v1534
        %1960 = vmatprep.subr.bf16.mxu0 %v1519
        %1961 = vmatpush2.bf16.msra.mxu0 %v1518
        %1962 = vmatprep.subr.bf16.mxu0 %v1503
        %1963 = vmatpush2.bf16.msra.mxu0 %v1502
        %1964 = vmatprep.subr.bf16.mxu0 %v1487
        %1965 = vmatpush2.bf16.msra.mxu0 %v1486
        %1966 = vmatprep.subr.bf16.mxu0 %v1471
        %1967 = vmatpush2.bf16.msra.mxu0 %v1470
        %1968 = vmatprep.mubr.bf16.mxu0 %v315
        %1969 = vmatmul.mubr.bf16.gmra.mxu0 %v314
        %v1970 = vpop.f32.mrf.mxu0
        %v1971 = vadd.f32 %v1930, %v1970
        %v1972 = vpop.f32.mrf.mxu0
        %v1973 = vadd.f32 %v1932, %v1972
        %v1974 = vpop.f32.mrf.mxu0
        %v1975 = vpop.f32.mrf.mxu0
        %1976 = vdwg.mxu0
        %1977 = vmatprep.subr.bf16.mxu0 %v1711
        %1978 = vmatpush1.bf16.msra.mxu0 %v1710
        %1979 = vmatprep.subr.bf16.mxu0 %v1695
        %1980 = vmatpush1.bf16.msra.mxu0 %v1694
        %1981 = vmatprep.subr.bf16.mxu0 %v1679
        %1982 = vmatpush1.bf16.msra.mxu0 %v1678
        %1983 = vmatprep.subr.bf16.mxu0 %v1663
        %1984 = vmatpush1.bf16.msra.mxu0 %v1662
        %1985 = vmatprep.subr.bf16.mxu0 %v1647
        %1986 = vmatpush1.bf16.msra.mxu0 %v1646
        %1987 = vmatprep.subr.bf16.mxu0 %v1631
        %1988 = vmatpush1.bf16.msra.mxu0 %v1630
        %1989 = vmatprep.subr.bf16.mxu0 %v1615
        %1990 = vmatpush1.bf16.msra.mxu0 %v1614
        %1991 = vmatprep.subr.bf16.mxu0 %v1599
        %1992 = vmatpush1.bf16.msra.mxu0 %v1598
        %1993 = vmatprep.subr.bf16.mxu0 %v1839
        %1994 = vmatpush2.bf16.msra.mxu0 %v1838
        %1995 = vmatprep.subr.bf16.mxu0 %v1823
        %1996 = vmatpush2.bf16.msra.mxu0 %v1822
        %1997 = vmatprep.subr.bf16.mxu0 %v1807
        %1998 = vmatpush2.bf16.msra.mxu0 %v1806
        %1999 = vmatprep.subr.bf16.mxu0 %v1791
        %2000 = vmatpush2.bf16.msra.mxu0 %v1790
        %2001 = vmatprep.subr.bf16.mxu0 %v1775
        %2002 = vmatpush2.bf16.msra.mxu0 %v1774
        %2003 = vmatprep.subr.bf16.mxu0 %v1759
        %2004 = vmatpush2.bf16.msra.mxu0 %v1758
        %2005 = vmatprep.subr.bf16.mxu0 %v1743
        %2006 = vmatpush2.bf16.msra.mxu0 %v1742
        %2007 = vmatprep.subr.bf16.mxu0 %v1727
        %2008 = vmatpush2.bf16.msra.mxu0 %v1726
        %2009 = vmatprep.mubr.bf16.mxu0 %v317
        %2010 = vmatmul.mubr.bf16.gmra.mxu0 %v316
        %v2011 = vpop.f32.mrf.mxu0
        %v2012 = vadd.f32 %v1971, %v2011
        %v2013 = vpop.f32.mrf.mxu0
        %v2014 = vadd.f32 %v1973, %v2013
        %v2015 = vpop.f32.mrf.mxu0
        %v2016 = vpop.f32.mrf.mxu0
        %2017 = vdwg.mxu0
        %2018 = vmatprep.subr.bf16.mxu0 %v945
        %2019 = vmatpush1.bf16.msra.mxu0 %v944
        %2020 = vmatprep.subr.bf16.mxu0 %v929
        %2021 = vmatpush1.bf16.msra.mxu0 %v928
        %2022 = vmatprep.subr.bf16.mxu0 %v913
        %2023 = vmatpush1.bf16.msra.mxu0 %v912
        %2024 = vmatprep.subr.bf16.mxu0 %v897
        %2025 = vmatpush1.bf16.msra.mxu0 %v896
        %2026 = vmatprep.subr.bf16.mxu0 %v881
        %2027 = vmatpush1.bf16.msra.mxu0 %v880
        %2028 = vmatprep.subr.bf16.mxu0 %v865
        %2029 = vmatpush1.bf16.msra.mxu0 %v864
        %2030 = vmatprep.subr.bf16.mxu0 %v849
        %2031 = vmatpush1.bf16.msra.mxu0 %v848
        %2032 = vmatprep.subr.bf16.mxu0 %v833
        %2033 = vmatpush1.bf16.msra.mxu0 %v832
        %2034 = vmatprep.subr.bf16.mxu0 %v1073
        %2035 = vmatpush2.bf16.msra.mxu0 %v1072
        %2036 = vmatprep.subr.bf16.mxu0 %v1057
        %2037 = vmatpush2.bf16.msra.mxu0 %v1056
        %2038 = vmatprep.subr.bf16.mxu0 %v1041
        %2039 = vmatpush2.bf16.msra.mxu0 %v1040
        %2040 = vmatprep.subr.bf16.mxu0 %v1025
        %2041 = vmatpush2.bf16.msra.mxu0 %v1024
        %2042 = vmatprep.subr.bf16.mxu0 %v1009
        %2043 = vmatpush2.bf16.msra.mxu0 %v1008
        %2044 = vmatprep.subr.bf16.mxu0 %v993
        %2045 = vmatpush2.bf16.msra.mxu0 %v992
        %2046 = vmatprep.subr.bf16.mxu0 %v977
        %2047 = vmatpush2.bf16.msra.mxu0 %v976
        %2048 = vmatprep.subr.bf16.mxu0 %v961
        %2049 = vmatpush2.bf16.msra.mxu0 %v960
        %2050 = vmatprep.mubr.bf16.mxu0 %v311
        %2051 = vmatmul.mubr.bf16.gmra.mxu0 %v310
        %v2052 = vpop.f32.mrf.mxu0
        %v2053 = vadd.f32 0.0, %v2052
        %v2054 = vpop.f32.mrf.mxu0
        %v2055 = vadd.f32 0.0, %v2054
        %v2056 = vpop.f32.mrf.mxu0
        %v2057 = vpop.f32.mrf.mxu0
        %2058 = vdwg.mxu0
        %2059 = vmatprep.subr.bf16.mxu0 %v1201
        %2060 = vmatpush1.bf16.msra.mxu0 %v1200
        %2061 = vmatprep.subr.bf16.mxu0 %v1185
        %2062 = vmatpush1.bf16.msra.mxu0 %v1184
        %2063 = vmatprep.subr.bf16.mxu0 %v1169
        %2064 = vmatpush1.bf16.msra.mxu0 %v1168
        %2065 = vmatprep.subr.bf16.mxu0 %v1153
        %2066 = vmatpush1.bf16.msra.mxu0 %v1152
        %2067 = vmatprep.subr.bf16.mxu0 %v1137
        %2068 = vmatpush1.bf16.msra.mxu0 %v1136
        %2069 = vmatprep.subr.bf16.mxu0 %v1121
        %2070 = vmatpush1.bf16.msra.mxu0 %v1120
        %2071 = vmatprep.subr.bf16.mxu0 %v1105
        %2072 = vmatpush1.bf16.msra.mxu0 %v1104
        %2073 = vmatprep.subr.bf16.mxu0 %v1089
        %2074 = vmatpush1.bf16.msra.mxu0 %v1088
        %2075 = vmatprep.subr.bf16.mxu0 %v1329
        %2076 = vmatpush2.bf16.msra.mxu0 %v1328
        %2077 = vmatprep.subr.bf16.mxu0 %v1313
        %2078 = vmatpush2.bf16.msra.mxu0 %v1312
        %2079 = vmatprep.subr.bf16.mxu0 %v1297
        %2080 = vmatpush2.bf16.msra.mxu0 %v1296
        %2081 = vmatprep.subr.bf16.mxu0 %v1281
        %2082 = vmatpush2.bf16.msra.mxu0 %v1280
        %2083 = vmatprep.subr.bf16.mxu0 %v1265
        %2084 = vmatpush2.bf16.msra.mxu0 %v1264
        %2085 = vmatprep.subr.bf16.mxu0 %v1249
        %2086 = vmatpush2.bf16.msra.mxu0 %v1248
        %2087 = vmatprep.subr.bf16.mxu0 %v1233
        %2088 = vmatpush2.bf16.msra.mxu0 %v1232
        %2089 = vmatprep.subr.bf16.mxu0 %v1217
        %2090 = vmatpush2.bf16.msra.mxu0 %v1216
        %2091 = vmatprep.mubr.bf16.mxu0 %v313
        %2092 = vmatmul.mubr.bf16.gmra.mxu0 %v312
        %v2093 = vpop.f32.mrf.mxu0
        %v2094 = vadd.f32 %v2053, %v2093
        %v2095 = vpop.f32.mrf.mxu0
        %v2096 = vadd.f32 %v2055, %v2095
        %v2097 = vpop.f32.mrf.mxu0
        %v2098 = vpop.f32.mrf.mxu0
        %2099 = vdwg.mxu0
        %2100 = vmatprep.subr.bf16.mxu0 %v1457
        %2101 = vmatpush1.bf16.msra.mxu0 %v1456
        %2102 = vmatprep.subr.bf16.mxu0 %v1441
        %2103 = vmatpush1.bf16.msra.mxu0 %v1440
        %2104 = vmatprep.subr.bf16.mxu0 %v1425
        %2105 = vmatpush1.bf16.msra.mxu0 %v1424
        %2106 = vmatprep.subr.bf16.mxu0 %v1409
        %2107 = vmatpush1.bf16.msra.mxu0 %v1408
        %2108 = vmatprep.subr.bf16.mxu0 %v1393
        %2109 = vmatpush1.bf16.msra.mxu0 %v1392
        %2110 = vmatprep.subr.bf16.mxu0 %v1377
        %2111 = vmatpush1.bf16.msra.mxu0 %v1376
        %2112 = vmatprep.subr.bf16.mxu0 %v1361
        %2113 = vmatpush1.bf16.msra.mxu0 %v1360
        %2114 = vmatprep.subr.bf16.mxu0 %v1345
        %2115 = vmatpush1.bf16.msra.mxu0 %v1344
        %2116 = vmatprep.subr.bf16.mxu0 %v1585
        %2117 = vmatpush2.bf16.msra.mxu0 %v1584
        %2118 = vmatprep.subr.bf16.mxu0 %v1569
        %2119 = vmatpush2.bf16.msra.mxu0 %v1568
        %2120 = vmatprep.subr.bf16.mxu0 %v1553
        %2121 = vmatpush2.bf16.msra.mxu0 %v1552
        %2122 = vmatprep.subr.bf16.mxu0 %v1537
        %2123 = vmatpush2.bf16.msra.mxu0 %v1536
        %2124 = vmatprep.subr.bf16.mxu0 %v1521
        %2125 = vmatpush2.bf16.msra.mxu0 %v1520
        %2126 = vmatprep.subr.bf16.mxu0 %v1505
        %2127 = vmatpush2.bf16.msra.mxu0 %v1504
        %2128 = vmatprep.subr.bf16.mxu0 %v1489
        %2129 = vmatpush2.bf16.msra.mxu0 %v1488
        %2130 = vmatprep.subr.bf16.mxu0 %v1473
        %2131 = vmatpush2.bf16.msra.mxu0 %v1472
        %2132 = vmatprep.mubr.bf16.mxu0 %v315
        %2133 = vmatmul.mubr.bf16.gmra.mxu0 %v314
        %v2134 = vpop.f32.mrf.mxu0
        %v2135 = vadd.f32 %v2094, %v2134
        %v2136 = vpop.f32.mrf.mxu0
        %v2137 = vadd.f32 %v2096, %v2136
        %v2138 = vpop.f32.mrf.mxu0
        %v2139 = vpop.f32.mrf.mxu0
        %2140 = vdwg.mxu0
        %2141 = vmatprep.subr.bf16.mxu0 %v1713
        %2142 = vmatpush1.bf16.msra.mxu0 %v1712
        %2143 = vmatprep.subr.bf16.mxu0 %v1697
        %2144 = vmatpush1.bf16.msra.mxu0 %v1696
        %2145 = vmatprep.subr.bf16.mxu0 %v1681
        %2146 = vmatpush1.bf16.msra.mxu0 %v1680
        %2147 = vmatprep.subr.bf16.mxu0 %v1665
        %2148 = vmatpush1.bf16.msra.mxu0 %v1664
        %2149 = vmatprep.subr.bf16.mxu0 %v1649
        %2150 = vmatpush1.bf16.msra.mxu0 %v1648
        %2151 = vmatprep.subr.bf16.mxu0 %v1633
        %2152 = vmatpush1.bf16.msra.mxu0 %v1632
        %2153 = vmatprep.subr.bf16.mxu0 %v1617
        %2154 = vmatpush1.bf16.msra.mxu0 %v1616
        %2155 = vmatprep.subr.bf16.mxu0 %v1601
        %2156 = vmatpush1.bf16.msra.mxu0 %v1600
        %2157 = vmatprep.subr.bf16.mxu0 %v1841
        %2158 = vmatpush2.bf16.msra.mxu0 %v1840
        %2159 = vmatprep.subr.bf16.mxu0 %v1825
        %2160 = vmatpush2.bf16.msra.mxu0 %v1824
        %2161 = vmatprep.subr.bf16.mxu0 %v1809
        %2162 = vmatpush2.bf16.msra.mxu0 %v1808
        %2163 = vmatprep.subr.bf16.mxu0 %v1793
        %2164 = vmatpush2.bf16.msra.mxu0 %v1792
        %2165 = vmatprep.subr.bf16.mxu0 %v1777
        %2166 = vmatpush2.bf16.msra.mxu0 %v1776
        %2167 = vmatprep.subr.bf16.mxu0 %v1761
        %2168 = vmatpush2.bf16.msra.mxu0 %v1760
        %2169 = vmatprep.subr.bf16.mxu0 %v1745
        %2170 = vmatpush2.bf16.msra.mxu0 %v1744
        %2171 = vmatprep.subr.bf16.mxu0 %v1729
        %2172 = vmatpush2.bf16.msra.mxu0 %v1728
        %2173 = vmatprep.mubr.bf16.mxu0 %v317
        %2174 = vmatmul.mubr.bf16.gmra.mxu0 %v316
        %v2175 = vpop.f32.mrf.mxu0
        %v2176 = vadd.f32 %v2135, %v2175
        %v2177 = vpop.f32.mrf.mxu0
        %v2178 = vadd.f32 %v2137, %v2177
        %v2179 = vpop.f32.mrf.mxu0
        %v2180 = vpop.f32.mrf.mxu0
        %2181 = vdwg.mxu0
        %2182 = vmatprep.subr.bf16.mxu0 %v947
        %2183 = vmatpush1.bf16.msra.mxu0 %v946
        %2184 = vmatprep.subr.bf16.mxu0 %v931
        %2185 = vmatpush1.bf16.msra.mxu0 %v930
        %2186 = vmatprep.subr.bf16.mxu0 %v915
        %2187 = vmatpush1.bf16.msra.mxu0 %v914
        %2188 = vmatprep.subr.bf16.mxu0 %v899
        %2189 = vmatpush1.bf16.msra.mxu0 %v898
        %2190 = vmatprep.subr.bf16.mxu0 %v883
        %2191 = vmatpush1.bf16.msra.mxu0 %v882
        %2192 = vmatprep.subr.bf16.mxu0 %v867
        %2193 = vmatpush1.bf16.msra.mxu0 %v866
        %2194 = vmatprep.subr.bf16.mxu0 %v851
        %2195 = vmatpush1.bf16.msra.mxu0 %v850
        %2196 = vmatprep.subr.bf16.mxu0 %v835
        %2197 = vmatpush1.bf16.msra.mxu0 %v834
        %2198 = vmatprep.subr.bf16.mxu0 %v1075
        %2199 = vmatpush2.bf16.msra.mxu0 %v1074
        %2200 = vmatprep.subr.bf16.mxu0 %v1059
        %2201 = vmatpush2.bf16.msra.mxu0 %v1058
        %2202 = vmatprep.subr.bf16.mxu0 %v1043
        %2203 = vmatpush2.bf16.msra.mxu0 %v1042
        %2204 = vmatprep.subr.bf16.mxu0 %v1027
        %2205 = vmatpush2.bf16.msra.mxu0 %v1026
        %2206 = vmatprep.subr.bf16.mxu0 %v1011
        %2207 = vmatpush2.bf16.msra.mxu0 %v1010
        %2208 = vmatprep.subr.bf16.mxu0 %v995
        %2209 = vmatpush2.bf16.msra.mxu0 %v994
        %2210 = vmatprep.subr.bf16.mxu0 %v979
        %2211 = vmatpush2.bf16.msra.mxu0 %v978
        %2212 = vmatprep.subr.bf16.mxu0 %v963
        %2213 = vmatpush2.bf16.msra.mxu0 %v962
        %2214 = vmatprep.mubr.bf16.mxu0 %v311
        %2215 = vmatmul.mubr.bf16.gmra.mxu0 %v310
        %v2216 = vpop.f32.mrf.mxu0
        %v2217 = vadd.f32 0.0, %v2216
        %v2218 = vpop.f32.mrf.mxu0
        %v2219 = vadd.f32 0.0, %v2218
        %v2220 = vpop.f32.mrf.mxu0
        %v2221 = vpop.f32.mrf.mxu0
        %2222 = vdwg.mxu0
        %2223 = vmatprep.subr.bf16.mxu0 %v1203
        %2224 = vmatpush1.bf16.msra.mxu0 %v1202
        %2225 = vmatprep.subr.bf16.mxu0 %v1187
        %2226 = vmatpush1.bf16.msra.mxu0 %v1186
        %2227 = vmatprep.subr.bf16.mxu0 %v1171
        %2228 = vmatpush1.bf16.msra.mxu0 %v1170
        %2229 = vmatprep.subr.bf16.mxu0 %v1155
        %2230 = vmatpush1.bf16.msra.mxu0 %v1154
        %2231 = vmatprep.subr.bf16.mxu0 %v1139
        %2232 = vmatpush1.bf16.msra.mxu0 %v1138
        %2233 = vmatprep.subr.bf16.mxu0 %v1123
        %2234 = vmatpush1.bf16.msra.mxu0 %v1122
        %2235 = vmatprep.subr.bf16.mxu0 %v1107
        %2236 = vmatpush1.bf16.msra.mxu0 %v1106
        %2237 = vmatprep.subr.bf16.mxu0 %v1091
        %2238 = vmatpush1.bf16.msra.mxu0 %v1090
        %2239 = vmatprep.subr.bf16.mxu0 %v1331
        %2240 = vmatpush2.bf16.msra.mxu0 %v1330
        %2241 = vmatprep.subr.bf16.mxu0 %v1315
        %2242 = vmatpush2.bf16.msra.mxu0 %v1314
        %2243 = vmatprep.subr.bf16.mxu0 %v1299
        %2244 = vmatpush2.bf16.msra.mxu0 %v1298
        %2245 = vmatprep.subr.bf16.mxu0 %v1283
        %2246 = vmatpush2.bf16.msra.mxu0 %v1282
        %2247 = vmatprep.subr.bf16.mxu0 %v1267
        %2248 = vmatpush2.bf16.msra.mxu0 %v1266
        %2249 = vmatprep.subr.bf16.mxu0 %v1251
        %2250 = vmatpush2.bf16.msra.mxu0 %v1250
        %2251 = vmatprep.subr.bf16.mxu0 %v1235
        %2252 = vmatpush2.bf16.msra.mxu0 %v1234
        %2253 = vmatprep.subr.bf16.mxu0 %v1219
        %2254 = vmatpush2.bf16.msra.mxu0 %v1218
        %2255 = vmatprep.mubr.bf16.mxu0 %v313
        %2256 = vmatmul.mubr.bf16.gmra.mxu0 %v312
        %v2257 = vpop.f32.mrf.mxu0
        %v2258 = vadd.f32 %v2217, %v2257
        %v2259 = vpop.f32.mrf.mxu0
        %v2260 = vadd.f32 %v2219, %v2259
        %v2261 = vpop.f32.mrf.mxu0
        %v2262 = vpop.f32.mrf.mxu0
        %2263 = vdwg.mxu0
        %2264 = vmatprep.subr.bf16.mxu0 %v1459
        %2265 = vmatpush1.bf16.msra.mxu0 %v1458
        %2266 = vmatprep.subr.bf16.mxu0 %v1443
        %2267 = vmatpush1.bf16.msra.mxu0 %v1442
        %2268 = vmatprep.subr.bf16.mxu0 %v1427
        %2269 = vmatpush1.bf16.msra.mxu0 %v1426
        %2270 = vmatprep.subr.bf16.mxu0 %v1411
        %2271 = vmatpush1.bf16.msra.mxu0 %v1410
        %2272 = vmatprep.subr.bf16.mxu0 %v1395
        %2273 = vmatpush1.bf16.msra.mxu0 %v1394
        %2274 = vmatprep.subr.bf16.mxu0 %v1379
        %2275 = vmatpush1.bf16.msra.mxu0 %v1378
        %2276 = vmatprep.subr.bf16.mxu0 %v1363
        %2277 = vmatpush1.bf16.msra.mxu0 %v1362
        %2278 = vmatprep.subr.bf16.mxu0 %v1347
        %2279 = vmatpush1.bf16.msra.mxu0 %v1346
        %2280 = vmatprep.subr.bf16.mxu0 %v1587
        %2281 = vmatpush2.bf16.msra.mxu0 %v1586
        %2282 = vmatprep.subr.bf16.mxu0 %v1571
        %2283 = vmatpush2.bf16.msra.mxu0 %v1570
        %2284 = vmatprep.subr.bf16.mxu0 %v1555
        %2285 = vmatpush2.bf16.msra.mxu0 %v1554
        %2286 = vmatprep.subr.bf16.mxu0 %v1539
        %2287 = vmatpush2.bf16.msra.mxu0 %v1538
        %2288 = vmatprep.subr.bf16.mxu0 %v1523
        %2289 = vmatpush2.bf16.msra.mxu0 %v1522
        %2290 = vmatprep.subr.bf16.mxu0 %v1507
        %2291 = vmatpush2.bf16.msra.mxu0 %v1506
        %2292 = vmatprep.subr.bf16.mxu0 %v1491
        %2293 = vmatpush2.bf16.msra.mxu0 %v1490
        %2294 = vmatprep.subr.bf16.mxu0 %v1475
        %2295 = vmatpush2.bf16.msra.mxu0 %v1474
        %2296 = vmatprep.mubr.bf16.mxu0 %v315
        %2297 = vmatmul.mubr.bf16.gmra.mxu0 %v314
        %v2298 = vpop.f32.mrf.mxu0
        %v2299 = vadd.f32 %v2258, %v2298
        %v2300 = vpop.f32.mrf.mxu0
        %v2301 = vadd.f32 %v2260, %v2300
        %v2302 = vpop.f32.mrf.mxu0
        %v2303 = vpop.f32.mrf.mxu0
        %2304 = vdwg.mxu0
        %2305 = vmatprep.subr.bf16.mxu0 %v1715
        %2306 = vmatpush1.bf16.msra.mxu0 %v1714
        %2307 = vmatprep.subr.bf16.mxu0 %v1699
        %2308 = vmatpush1.bf16.msra.mxu0 %v1698
        %2309 = vmatprep.subr.bf16.mxu0 %v1683
        %2310 = vmatpush1.bf16.msra.mxu0 %v1682
        %2311 = vmatprep.subr.bf16.mxu0 %v1667
        %2312 = vmatpush1.bf16.msra.mxu0 %v1666
        %2313 = vmatprep.subr.bf16.mxu0 %v1651
        %2314 = vmatpush1.bf16.msra.mxu0 %v1650
        %2315 = vmatprep.subr.bf16.mxu0 %v1635
        %2316 = vmatpush1.bf16.msra.mxu0 %v1634
        %2317 = vmatprep.subr.bf16.mxu0 %v1619
        %2318 = vmatpush1.bf16.msra.mxu0 %v1618
        %2319 = vmatprep.subr.bf16.mxu0 %v1603
        %2320 = vmatpush1.bf16.msra.mxu0 %v1602
        %2321 = vmatprep.subr.bf16.mxu0 %v1843
        %2322 = vmatpush2.bf16.msra.mxu0 %v1842
        %2323 = vmatprep.subr.bf16.mxu0 %v1827
        %2324 = vmatpush2.bf16.msra.mxu0 %v1826
        %2325 = vmatprep.subr.bf16.mxu0 %v1811
        %2326 = vmatpush2.bf16.msra.mxu0 %v1810
        %2327 = vmatprep.subr.bf16.mxu0 %v1795
        %2328 = vmatpush2.bf16.msra.mxu0 %v1794
        %2329 = vmatprep.subr.bf16.mxu0 %v1779
        %2330 = vmatpush2.bf16.msra.mxu0 %v1778
        %2331 = vmatprep.subr.bf16.mxu0 %v1763
        %2332 = vmatpush2.bf16.msra.mxu0 %v1762
        %2333 = vmatprep.subr.bf16.mxu0 %v1747
        %2334 = vmatpush2.bf16.msra.mxu0 %v1746
        %2335 = vmatprep.subr.bf16.mxu0 %v1731
        %2336 = vmatpush2.bf16.msra.mxu0 %v1730
        %2337 = vmatprep.mubr.bf16.mxu0 %v317
        %2338 = vmatmul.mubr.bf16.gmra.mxu0 %v316
        %v2339 = vpop.f32.mrf.mxu0
        %v2340 = vadd.f32 %v2299, %v2339
        %v2341 = vpop.f32.mrf.mxu0
        %v2342 = vadd.f32 %v2301, %v2341
        %v2343 = vpop.f32.mrf.mxu0
        %v2344 = vpop.f32.mrf.mxu0
        %2345 = vdwg.mxu0
        %2346 = vmatprep.subr.bf16.mxu0 %v949
        %2347 = vmatpush1.bf16.msra.mxu0 %v948
        %2348 = vmatprep.subr.bf16.mxu0 %v933
        %2349 = vmatpush1.bf16.msra.mxu0 %v932
        %2350 = vmatprep.subr.bf16.mxu0 %v917
        %2351 = vmatpush1.bf16.msra.mxu0 %v916
        %2352 = vmatprep.subr.bf16.mxu0 %v901
        %2353 = vmatpush1.bf16.msra.mxu0 %v900
        %2354 = vmatprep.subr.bf16.mxu0 %v885
        %2355 = vmatpush1.bf16.msra.mxu0 %v884
        %2356 = vmatprep.subr.bf16.mxu0 %v869
        %2357 = vmatpush1.bf16.msra.mxu0 %v868
        %2358 = vmatprep.subr.bf16.mxu0 %v853
        %2359 = vmatpush1.bf16.msra.mxu0 %v852
        %2360 = vmatprep.subr.bf16.mxu0 %v837
        %2361 = vmatpush1.bf16.msra.mxu0 %v836
        %2362 = vmatprep.subr.bf16.mxu0 %v1077
        %2363 = vmatpush2.bf16.msra.mxu0 %v1076
        %2364 = vmatprep.subr.bf16.mxu0 %v1061
        %2365 = vmatpush2.bf16.msra.mxu0 %v1060
        %2366 = vmatprep.subr.bf16.mxu0 %v1045
        %2367 = vmatpush2.bf16.msra.mxu0 %v1044
        %2368 = vmatprep.subr.bf16.mxu0 %v1029
        %2369 = vmatpush2.bf16.msra.mxu0 %v1028
        %2370 = vmatprep.subr.bf16.mxu0 %v1013
        %2371 = vmatpush2.bf16.msra.mxu0 %v1012
        %2372 = vmatprep.subr.bf16.mxu0 %v997
        %2373 = vmatpush2.bf16.msra.mxu0 %v996
        %2374 = vmatprep.subr.bf16.mxu0 %v981
        %2375 = vmatpush2.bf16.msra.mxu0 %v980
        %2376 = vmatprep.subr.bf16.mxu0 %v965
        %2377 = vmatpush2.bf16.msra.mxu0 %v964
        %2378 = vmatprep.mubr.bf16.mxu0 %v311
        %2379 = vmatmul.mubr.bf16.gmra.mxu0 %v310
        %v2380 = vpop.f32.mrf.mxu0
        %v2381 = vadd.f32 0.0, %v2380
        %v2382 = vpop.f32.mrf.mxu0
        %v2383 = vadd.f32 0.0, %v2382
        %v2384 = vpop.f32.mrf.mxu0
        %v2385 = vpop.f32.mrf.mxu0
        %2386 = vdwg.mxu0
        %2387 = vmatprep.subr.bf16.mxu0 %v1205
        %2388 = vmatpush1.bf16.msra.mxu0 %v1204
        %2389 = vmatprep.subr.bf16.mxu0 %v1189
        %2390 = vmatpush1.bf16.msra.mxu0 %v1188
        %2391 = vmatprep.subr.bf16.mxu0 %v1173
        %2392 = vmatpush1.bf16.msra.mxu0 %v1172
        %2393 = vmatprep.subr.bf16.mxu0 %v1157
        %2394 = vmatpush1.bf16.msra.mxu0 %v1156
        %2395 = vmatprep.subr.bf16.mxu0 %v1141
        %2396 = vmatpush1.bf16.msra.mxu0 %v1140
        %2397 = vmatprep.subr.bf16.mxu0 %v1125
        %2398 = vmatpush1.bf16.msra.mxu0 %v1124
        %2399 = vmatprep.subr.bf16.mxu0 %v1109
        %2400 = vmatpush1.bf16.msra.mxu0 %v1108
        %2401 = vmatprep.subr.bf16.mxu0 %v1093
        %2402 = vmatpush1.bf16.msra.mxu0 %v1092
        %2403 = vmatprep.subr.bf16.mxu0 %v1333
        %2404 = vmatpush2.bf16.msra.mxu0 %v1332
        %2405 = vmatprep.subr.bf16.mxu0 %v1317
        %2406 = vmatpush2.bf16.msra.mxu0 %v1316
        %2407 = vmatprep.subr.bf16.mxu0 %v1301
        %2408 = vmatpush2.bf16.msra.mxu0 %v1300
        %2409 = vmatprep.subr.bf16.mxu0 %v1285
        %2410 = vmatpush2.bf16.msra.mxu0 %v1284
        %2411 = vmatprep.subr.bf16.mxu0 %v1269
        %2412 = vmatpush2.bf16.msra.mxu0 %v1268
        %2413 = vmatprep.subr.bf16.mxu0 %v1253
        %2414 = vmatpush2.bf16.msra.mxu0 %v1252
        %2415 = vmatprep.subr.bf16.mxu0 %v1237
        %2416 = vmatpush2.bf16.msra.mxu0 %v1236
        %2417 = vmatprep.subr.bf16.mxu0 %v1221
        %2418 = vmatpush2.bf16.msra.mxu0 %v1220
        %2419 = vmatprep.mubr.bf16.mxu0 %v313
        %2420 = vmatmul.mubr.bf16.gmra.mxu0 %v312
        %v2421 = vpop.f32.mrf.mxu0
        %v2422 = vadd.f32 %v2381, %v2421
        %v2423 = vpop.f32.mrf.mxu0
        %v2424 = vadd.f32 %v2383, %v2423
        %v2425 = vpop.f32.mrf.mxu0
        %v2426 = vpop.f32.mrf.mxu0
        %2427 = vdwg.mxu0
        %2428 = vmatprep.subr.bf16.mxu0 %v1461
        %2429 = vmatpush1.bf16.msra.mxu0 %v1460
        %2430 = vmatprep.subr.bf16.mxu0 %v1445
        %2431 = vmatpush1.bf16.msra.mxu0 %v1444
        %2432 = vmatprep.subr.bf16.mxu0 %v1429
        %2433 = vmatpush1.bf16.msra.mxu0 %v1428
        %2434 = vmatprep.subr.bf16.mxu0 %v1413
        %2435 = vmatpush1.bf16.msra.mxu0 %v1412
        %2436 = vmatprep.subr.bf16.mxu0 %v1397
        %2437 = vmatpush1.bf16.msra.mxu0 %v1396
        %2438 = vmatprep.subr.bf16.mxu0 %v1381
        %2439 = vmatpush1.bf16.msra.mxu0 %v1380
        %2440 = vmatprep.subr.bf16.mxu0 %v1365
        %2441 = vmatpush1.bf16.msra.mxu0 %v1364
        %2442 = vmatprep.subr.bf16.mxu0 %v1349
        %2443 = vmatpush1.bf16.msra.mxu0 %v1348
        %2444 = vmatprep.subr.bf16.mxu0 %v1589
        %2445 = vmatpush2.bf16.msra.mxu0 %v1588
        %2446 = vmatprep.subr.bf16.mxu0 %v1573
        %2447 = vmatpush2.bf16.msra.mxu0 %v1572
        %2448 = vmatprep.subr.bf16.mxu0 %v1557
        %2449 = vmatpush2.bf16.msra.mxu0 %v1556
        %2450 = vmatprep.subr.bf16.mxu0 %v1541
        %2451 = vmatpush2.bf16.msra.mxu0 %v1540
        %2452 = vmatprep.subr.bf16.mxu0 %v1525
        %2453 = vmatpush2.bf16.msra.mxu0 %v1524
        %2454 = vmatprep.subr.bf16.mxu0 %v1509
        %2455 = vmatpush2.bf16.msra.mxu0 %v1508
        %2456 = vmatprep.subr.bf16.mxu0 %v1493
        %2457 = vmatpush2.bf16.msra.mxu0 %v1492
        %2458 = vmatprep.subr.bf16.mxu0 %v1477
        %2459 = vmatpush2.bf16.msra.mxu0 %v1476
        %2460 = vmatprep.mubr.bf16.mxu0 %v315
        %2461 = vmatmul.mubr.bf16.gmra.mxu0 %v314
        %v2462 = vpop.f32.mrf.mxu0
        %v2463 = vadd.f32 %v2422, %v2462
        %v2464 = vpop.f32.mrf.mxu0
        %v2465 = vadd.f32 %v2424, %v2464
        %v2466 = vpop.f32.mrf.mxu0
        %v2467 = vpop.f32.mrf.mxu0
        %2468 = vdwg.mxu0
        %2469 = vmatprep.subr.bf16.mxu0 %v1717
        %2470 = vmatpush1.bf16.msra.mxu0 %v1716
        %2471 = vmatprep.subr.bf16.mxu0 %v1701
        %2472 = vmatpush1.bf16.msra.mxu0 %v1700
        %2473 = vmatprep.subr.bf16.mxu0 %v1685
        %2474 = vmatpush1.bf16.msra.mxu0 %v1684
        %2475 = vmatprep.subr.bf16.mxu0 %v1669
        %2476 = vmatpush1.bf16.msra.mxu0 %v1668
        %2477 = vmatprep.subr.bf16.mxu0 %v1653
        %2478 = vmatpush1.bf16.msra.mxu0 %v1652
        %2479 = vmatprep.subr.bf16.mxu0 %v1637
        %2480 = vmatpush1.bf16.msra.mxu0 %v1636
        %2481 = vmatprep.subr.bf16.mxu0 %v1621
        %2482 = vmatpush1.bf16.msra.mxu0 %v1620
        %2483 = vmatprep.subr.bf16.mxu0 %v1605
        %2484 = vmatpush1.bf16.msra.mxu0 %v1604
        %2485 = vmatprep.subr.bf16.mxu0 %v1845
        %2486 = vmatpush2.bf16.msra.mxu0 %v1844
        %2487 = vmatprep.subr.bf16.mxu0 %v1829
        %2488 = vmatpush2.bf16.msra.mxu0 %v1828
        %2489 = vmatprep.subr.bf16.mxu0 %v1813
        %2490 = vmatpush2.bf16.msra.mxu0 %v1812
        %2491 = vmatprep.subr.bf16.mxu0 %v1797
        %2492 = vmatpush2.bf16.msra.mxu0 %v1796
        %2493 = vmatprep.subr.bf16.mxu0 %v1781
        %2494 = vmatpush2.bf16.msra.mxu0 %v1780
        %2495 = vmatprep.subr.bf16.mxu0 %v1765
        %2496 = vmatpush2.bf16.msra.mxu0 %v1764
        %2497 = vmatprep.subr.bf16.mxu0 %v1749
        %2498 = vmatpush2.bf16.msra.mxu0 %v1748
        %2499 = vmatprep.subr.bf16.mxu0 %v1733
        %2500 = vmatpush2.bf16.msra.mxu0 %v1732
        %2501 = vmatprep.mubr.bf16.mxu0 %v317
        %2502 = vmatmul.mubr.bf16.gmra.mxu0 %v316
        %v2503 = vpop.f32.mrf.mxu0
        %v2504 = vadd.f32 %v2463, %v2503
        %v2505 = vpop.f32.mrf.mxu0
        %v2506 = vadd.f32 %v2465, %v2505
        %v2507 = vpop.f32.mrf.mxu0
        %v2508 = vpop.f32.mrf.mxu0
        %2509 = vdwg.mxu0
        %2510 = vmatprep.subr.bf16.mxu0 %v951
        %2511 = vmatpush1.bf16.msra.mxu0 %v950
        %2512 = vmatprep.subr.bf16.mxu0 %v935
        %2513 = vmatpush1.bf16.msra.mxu0 %v934
        %2514 = vmatprep.subr.bf16.mxu0 %v919
        %2515 = vmatpush1.bf16.msra.mxu0 %v918
        %2516 = vmatprep.subr.bf16.mxu0 %v903
        %2517 = vmatpush1.bf16.msra.mxu0 %v902
        %2518 = vmatprep.subr.bf16.mxu0 %v887
        %2519 = vmatpush1.bf16.msra.mxu0 %v886
        %2520 = vmatprep.subr.bf16.mxu0 %v871
        %2521 = vmatpush1.bf16.msra.mxu0 %v870
        %2522 = vmatprep.subr.bf16.mxu0 %v855
        %2523 = vmatpush1.bf16.msra.mxu0 %v854
        %2524 = vmatprep.subr.bf16.mxu0 %v839
        %2525 = vmatpush1.bf16.msra.mxu0 %v838
        %2526 = vmatprep.subr.bf16.mxu0 %v1079
        %2527 = vmatpush2.bf16.msra.mxu0 %v1078
        %2528 = vmatprep.subr.bf16.mxu0 %v1063
        %2529 = vmatpush2.bf16.msra.mxu0 %v1062
        %2530 = vmatprep.subr.bf16.mxu0 %v1047
        %2531 = vmatpush2.bf16.msra.mxu0 %v1046
        %2532 = vmatprep.subr.bf16.mxu0 %v1031
        %2533 = vmatpush2.bf16.msra.mxu0 %v1030
        %2534 = vmatprep.subr.bf16.mxu0 %v1015
        %2535 = vmatpush2.bf16.msra.mxu0 %v1014
        %2536 = vmatprep.subr.bf16.mxu0 %v999
        %2537 = vmatpush2.bf16.msra.mxu0 %v998
        %2538 = vmatprep.subr.bf16.mxu0 %v983
        %2539 = vmatpush2.bf16.msra.mxu0 %v982
        %2540 = vmatprep.subr.bf16.mxu0 %v967
        %2541 = vmatpush2.bf16.msra.mxu0 %v966
        %2542 = vmatprep.mubr.bf16.mxu0 %v311
        %2543 = vmatmul.mubr.bf16.gmra.mxu0 %v310
        %v2544 = vpop.f32.mrf.mxu0
        %v2545 = vadd.f32 0.0, %v2544
        %v2546 = vpop.f32.mrf.mxu0
        %v2547 = vadd.f32 0.0, %v2546
        %v2548 = vpop.f32.mrf.mxu0
        %v2549 = vpop.f32.mrf.mxu0
        %2550 = vdwg.mxu0
        %2551 = vmatprep.subr.bf16.mxu0 %v1207
        %2552 = vmatpush1.bf16.msra.mxu0 %v1206
        %2553 = vmatprep.subr.bf16.mxu0 %v1191
        %2554 = vmatpush1.bf16.msra.mxu0 %v1190
        %2555 = vmatprep.subr.bf16.mxu0 %v1175
        %2556 = vmatpush1.bf16.msra.mxu0 %v1174
        %2557 = vmatprep.subr.bf16.mxu0 %v1159
        %2558 = vmatpush1.bf16.msra.mxu0 %v1158
        %2559 = vmatprep.subr.bf16.mxu0 %v1143
        %2560 = vmatpush1.bf16.msra.mxu0 %v1142
        %2561 = vmatprep.subr.bf16.mxu0 %v1127
        %2562 = vmatpush1.bf16.msra.mxu0 %v1126
        %2563 = vmatprep.subr.bf16.mxu0 %v1111
        %2564 = vmatpush1.bf16.msra.mxu0 %v1110
        %2565 = vmatprep.subr.bf16.mxu0 %v1095
        %2566 = vmatpush1.bf16.msra.mxu0 %v1094
        %2567 = vmatprep.subr.bf16.mxu0 %v1335
        %2568 = vmatpush2.bf16.msra.mxu0 %v1334
        %2569 = vmatprep.subr.bf16.mxu0 %v1319
        %2570 = vmatpush2.bf16.msra.mxu0 %v1318
        %2571 = vmatprep.subr.bf16.mxu0 %v1303
        %2572 = vmatpush2.bf16.msra.mxu0 %v1302
        %2573 = vmatprep.subr.bf16.mxu0 %v1287
        %2574 = vmatpush2.bf16.msra.mxu0 %v1286
        %2575 = vmatprep.subr.bf16.mxu0 %v1271
        %2576 = vmatpush2.bf16.msra.mxu0 %v1270
        %2577 = vmatprep.subr.bf16.mxu0 %v1255
        %2578 = vmatpush2.bf16.msra.mxu0 %v1254
        %2579 = vmatprep.subr.bf16.mxu0 %v1239
        %2580 = vmatpush2.bf16.msra.mxu0 %v1238
        %2581 = vmatprep.subr.bf16.mxu0 %v1223
        %2582 = vmatpush2.bf16.msra.mxu0 %v1222
        %2583 = vmatprep.mubr.bf16.mxu0 %v313
        %2584 = vmatmul.mubr.bf16.gmra.mxu0 %v312
        %v2585 = vpop.f32.mrf.mxu0
        %v2586 = vadd.f32 %v2545, %v2585
        %v2587 = vpop.f32.mrf.mxu0
        %v2588 = vadd.f32 %v2547, %v2587
        %v2589 = vpop.f32.mrf.mxu0
        %v2590 = vpop.f32.mrf.mxu0
        %2591 = vdwg.mxu0
        %2592 = vmatprep.subr.bf16.mxu0 %v1463
        %2593 = vmatpush1.bf16.msra.mxu0 %v1462
        %2594 = vmatprep.subr.bf16.mxu0 %v1447
        %2595 = vmatpush1.bf16.msra.mxu0 %v1446
        %2596 = vmatprep.subr.bf16.mxu0 %v1431
        %2597 = vmatpush1.bf16.msra.mxu0 %v1430
        %2598 = vmatprep.subr.bf16.mxu0 %v1415
        %2599 = vmatpush1.bf16.msra.mxu0 %v1414
        %2600 = vmatprep.subr.bf16.mxu0 %v1399
        %2601 = vmatpush1.bf16.msra.mxu0 %v1398
        %2602 = vmatprep.subr.bf16.mxu0 %v1383
        %2603 = vmatpush1.bf16.msra.mxu0 %v1382
        %2604 = vmatprep.subr.bf16.mxu0 %v1367
        %2605 = vmatpush1.bf16.msra.mxu0 %v1366
        %2606 = vmatprep.subr.bf16.mxu0 %v1351
        %2607 = vmatpush1.bf16.msra.mxu0 %v1350
        %2608 = vmatprep.subr.bf16.mxu0 %v1591
        %2609 = vmatpush2.bf16.msra.mxu0 %v1590
        %2610 = vmatprep.subr.bf16.mxu0 %v1575
        %2611 = vmatpush2.bf16.msra.mxu0 %v1574
        %2612 = vmatprep.subr.bf16.mxu0 %v1559
        %2613 = vmatpush2.bf16.msra.mxu0 %v1558
        %2614 = vmatprep.subr.bf16.mxu0 %v1543
        %2615 = vmatpush2.bf16.msra.mxu0 %v1542
        %2616 = vmatprep.subr.bf16.mxu0 %v1527
        %2617 = vmatpush2.bf16.msra.mxu0 %v1526
        %2618 = vmatprep.subr.bf16.mxu0 %v1511
        %2619 = vmatpush2.bf16.msra.mxu0 %v1510
        %2620 = vmatprep.subr.bf16.mxu0 %v1495
        %2621 = vmatpush2.bf16.msra.mxu0 %v1494
        %2622 = vmatprep.subr.bf16.mxu0 %v1479
        %2623 = vmatpush2.bf16.msra.mxu0 %v1478
        %2624 = vmatprep.mubr.bf16.mxu0 %v315
        %2625 = vmatmul.mubr.bf16.gmra.mxu0 %v314
        %v2626 = vpop.f32.mrf.mxu0
        %v2627 = vadd.f32 %v2586, %v2626
        %v2628 = vpop.f32.mrf.mxu0
        %v2629 = vadd.f32 %v2588, %v2628
        %v2630 = vpop.f32.mrf.mxu0
        %v2631 = vpop.f32.mrf.mxu0
        %2632 = vdwg.mxu0
        %2633 = vmatprep.subr.bf16.mxu0 %v1719
        %2634 = vmatpush1.bf16.msra.mxu0 %v1718
        %2635 = vmatprep.subr.bf16.mxu0 %v1703
        %2636 = vmatpush1.bf16.msra.mxu0 %v1702
        %2637 = vmatprep.subr.bf16.mxu0 %v1687
        %2638 = vmatpush1.bf16.msra.mxu0 %v1686
        %2639 = vmatprep.subr.bf16.mxu0 %v1671
        %2640 = vmatpush1.bf16.msra.mxu0 %v1670
        %2641 = vmatprep.subr.bf16.mxu0 %v1655
        %2642 = vmatpush1.bf16.msra.mxu0 %v1654
        %2643 = vmatprep.subr.bf16.mxu0 %v1639
        %2644 = vmatpush1.bf16.msra.mxu0 %v1638
        %2645 = vmatprep.subr.bf16.mxu0 %v1623
        %2646 = vmatpush1.bf16.msra.mxu0 %v1622
        %2647 = vmatprep.subr.bf16.mxu0 %v1607
        %2648 = vmatpush1.bf16.msra.mxu0 %v1606
        %2649 = vmatprep.subr.bf16.mxu0 %v1847
        %2650 = vmatpush2.bf16.msra.mxu0 %v1846
        %2651 = vmatprep.subr.bf16.mxu0 %v1831
        %2652 = vmatpush2.bf16.msra.mxu0 %v1830
        %2653 = vmatprep.subr.bf16.mxu0 %v1815
        %2654 = vmatpush2.bf16.msra.mxu0 %v1814
        %2655 = vmatprep.subr.bf16.mxu0 %v1799
        %2656 = vmatpush2.bf16.msra.mxu0 %v1798
        %2657 = vmatprep.subr.bf16.mxu0 %v1783
        %2658 = vmatpush2.bf16.msra.mxu0 %v1782
        %2659 = vmatprep.subr.bf16.mxu0 %v1767
        %2660 = vmatpush2.bf16.msra.mxu0 %v1766
        %2661 = vmatprep.subr.bf16.mxu0 %v1751
        %2662 = vmatpush2.bf16.msra.mxu0 %v1750
        %2663 = vmatprep.subr.bf16.mxu0 %v1735
        %2664 = vmatpush2.bf16.msra.mxu0 %v1734
        %2665 = vmatprep.mubr.bf16.mxu0 %v317
        %2666 = vmatmul.mubr.bf16.gmra.mxu0 %v316
        %v2667 = vpop.f32.mrf.mxu0
        %v2668 = vadd.f32 %v2627, %v2667
        %v2669 = vpop.f32.mrf.mxu0
        %v2670 = vadd.f32 %v2629, %v2669
        %v2671 = vpop.f32.mrf.mxu0
        %v2672 = vpop.f32.mrf.mxu0
        %2673 = vdwg.mxu0
        %2674 = vmatprep.subr.bf16.mxu0 %v953
        %2675 = vmatpush1.bf16.msra.mxu0 %v952
        %2676 = vmatprep.subr.bf16.mxu0 %v937
        %2677 = vmatpush1.bf16.msra.mxu0 %v936
        %2678 = vmatprep.subr.bf16.mxu0 %v921
        %2679 = vmatpush1.bf16.msra.mxu0 %v920
        %2680 = vmatprep.subr.bf16.mxu0 %v905
        %2681 = vmatpush1.bf16.msra.mxu0 %v904
        %2682 = vmatprep.subr.bf16.mxu0 %v889
        %2683 = vmatpush1.bf16.msra.mxu0 %v888
        %2684 = vmatprep.subr.bf16.mxu0 %v873
        %2685 = vmatpush1.bf16.msra.mxu0 %v872
        %2686 = vmatprep.subr.bf16.mxu0 %v857
        %2687 = vmatpush1.bf16.msra.mxu0 %v856
        %2688 = vmatprep.subr.bf16.mxu0 %v841
        %2689 = vmatpush1.bf16.msra.mxu0 %v840
        %2690 = vmatprep.subr.bf16.mxu0 %v1081
        %2691 = vmatpush2.bf16.msra.mxu0 %v1080
        %2692 = vmatprep.subr.bf16.mxu0 %v1065
        %2693 = vmatpush2.bf16.msra.mxu0 %v1064
        %2694 = vmatprep.subr.bf16.mxu0 %v1049
        %2695 = vmatpush2.bf16.msra.mxu0 %v1048
        %2696 = vmatprep.subr.bf16.mxu0 %v1033
        %2697 = vmatpush2.bf16.msra.mxu0 %v1032
        %2698 = vmatprep.subr.bf16.mxu0 %v1017
        %2699 = vmatpush2.bf16.msra.mxu0 %v1016
        %2700 = vmatprep.subr.bf16.mxu0 %v1001
        %2701 = vmatpush2.bf16.msra.mxu0 %v1000
        %2702 = vmatprep.subr.bf16.mxu0 %v985
        %2703 = vmatpush2.bf16.msra.mxu0 %v984
        %2704 = vmatprep.subr.bf16.mxu0 %v969
        %2705 = vmatpush2.bf16.msra.mxu0 %v968
        %2706 = vmatprep.mubr.bf16.mxu0 %v311
        %2707 = vmatmul.mubr.bf16.gmra.mxu0 %v310
        %v2708 = vpop.f32.mrf.mxu0
        %v2709 = vadd.f32 0.0, %v2708
        %v2710 = vpop.f32.mrf.mxu0
        %v2711 = vadd.f32 0.0, %v2710
        %v2712 = vpop.f32.mrf.mxu0
        %v2713 = vpop.f32.mrf.mxu0
        %2714 = vdwg.mxu0
        %2715 = vmatprep.subr.bf16.mxu0 %v1209
        %2716 = vmatpush1.bf16.msra.mxu0 %v1208
        %2717 = vmatprep.subr.bf16.mxu0 %v1193
        %2718 = vmatpush1.bf16.msra.mxu0 %v1192
        %2719 = vmatprep.subr.bf16.mxu0 %v1177
        %2720 = vmatpush1.bf16.msra.mxu0 %v1176
        %2721 = vmatprep.subr.bf16.mxu0 %v1161
        %2722 = vmatpush1.bf16.msra.mxu0 %v1160
        %2723 = vmatprep.subr.bf16.mxu0 %v1145
        %2724 = vmatpush1.bf16.msra.mxu0 %v1144
        %2725 = vmatprep.subr.bf16.mxu0 %v1129
        %2726 = vmatpush1.bf16.msra.mxu0 %v1128
        %2727 = vmatprep.subr.bf16.mxu0 %v1113
        %2728 = vmatpush1.bf16.msra.mxu0 %v1112
        %2729 = vmatprep.subr.bf16.mxu0 %v1097
        %2730 = vmatpush1.bf16.msra.mxu0 %v1096
        %2731 = vmatprep.subr.bf16.mxu0 %v1337
        %2732 = vmatpush2.bf16.msra.mxu0 %v1336
        %2733 = vmatprep.subr.bf16.mxu0 %v1321
        %2734 = vmatpush2.bf16.msra.mxu0 %v1320
        %2735 = vmatprep.subr.bf16.mxu0 %v1305
        %2736 = vmatpush2.bf16.msra.mxu0 %v1304
        %2737 = vmatprep.subr.bf16.mxu0 %v1289
        %2738 = vmatpush2.bf16.msra.mxu0 %v1288
        %2739 = vmatprep.subr.bf16.mxu0 %v1273
        %2740 = vmatpush2.bf16.msra.mxu0 %v1272
        %2741 = vmatprep.subr.bf16.mxu0 %v1257
        %2742 = vmatpush2.bf16.msra.mxu0 %v1256
        %2743 = vmatprep.subr.bf16.mxu0 %v1241
        %2744 = vmatpush2.bf16.msra.mxu0 %v1240
        %2745 = vmatprep.subr.bf16.mxu0 %v1225
        %2746 = vmatpush2.bf16.msra.mxu0 %v1224
        %2747 = vmatprep.mubr.bf16.mxu0 %v313
        %2748 = vmatmul.mubr.bf16.gmra.mxu0 %v312
        %v2749 = vpop.f32.mrf.mxu0
        %v2750 = vadd.f32 %v2709, %v2749
        %v2751 = vpop.f32.mrf.mxu0
        %v2752 = vadd.f32 %v2711, %v2751
        %v2753 = vpop.f32.mrf.mxu0
        %v2754 = vpop.f32.mrf.mxu0
        %2755 = vdwg.mxu0
        %2756 = vmatprep.subr.bf16.mxu0 %v1465
        %2757 = vmatpush1.bf16.msra.mxu0 %v1464
        %2758 = vmatprep.subr.bf16.mxu0 %v1449
        %2759 = vmatpush1.bf16.msra.mxu0 %v1448
        %2760 = vmatprep.subr.bf16.mxu0 %v1433
        %2761 = vmatpush1.bf16.msra.mxu0 %v1432
        %2762 = vmatprep.subr.bf16.mxu0 %v1417
        %2763 = vmatpush1.bf16.msra.mxu0 %v1416
        %2764 = vmatprep.subr.bf16.mxu0 %v1401
        %2765 = vmatpush1.bf16.msra.mxu0 %v1400
        %2766 = vmatprep.subr.bf16.mxu0 %v1385
        %2767 = vmatpush1.bf16.msra.mxu0 %v1384
        %2768 = vmatprep.subr.bf16.mxu0 %v1369
        %2769 = vmatpush1.bf16.msra.mxu0 %v1368
        %2770 = vmatprep.subr.bf16.mxu0 %v1353
        %2771 = vmatpush1.bf16.msra.mxu0 %v1352
        %2772 = vmatprep.subr.bf16.mxu0 %v1593
        %2773 = vmatpush2.bf16.msra.mxu0 %v1592
        %2774 = vmatprep.subr.bf16.mxu0 %v1577
        %2775 = vmatpush2.bf16.msra.mxu0 %v1576
        %2776 = vmatprep.subr.bf16.mxu0 %v1561
        %2777 = vmatpush2.bf16.msra.mxu0 %v1560
        %2778 = vmatprep.subr.bf16.mxu0 %v1545
        %2779 = vmatpush2.bf16.msra.mxu0 %v1544
        %2780 = vmatprep.subr.bf16.mxu0 %v1529
        %2781 = vmatpush2.bf16.msra.mxu0 %v1528
        %2782 = vmatprep.subr.bf16.mxu0 %v1513
        %2783 = vmatpush2.bf16.msra.mxu0 %v1512
        %2784 = vmatprep.subr.bf16.mxu0 %v1497
        %2785 = vmatpush2.bf16.msra.mxu0 %v1496
        %2786 = vmatprep.subr.bf16.mxu0 %v1481
        %2787 = vmatpush2.bf16.msra.mxu0 %v1480
        %2788 = vmatprep.mubr.bf16.mxu0 %v315
        %2789 = vmatmul.mubr.bf16.gmra.mxu0 %v314
        %v2790 = vpop.f32.mrf.mxu0
        %v2791 = vadd.f32 %v2750, %v2790
        %v2792 = vpop.f32.mrf.mxu0
        %v2793 = vadd.f32 %v2752, %v2792
        %v2794 = vpop.f32.mrf.mxu0
        %v2795 = vpop.f32.mrf.mxu0
        %2796 = vdwg.mxu0
        %2797 = vmatprep.subr.bf16.mxu0 %v1721
        %2798 = vmatpush1.bf16.msra.mxu0 %v1720
        %2799 = vmatprep.subr.bf16.mxu0 %v1705
        %2800 = vmatpush1.bf16.msra.mxu0 %v1704
        %2801 = vmatprep.subr.bf16.mxu0 %v1689
        %2802 = vmatpush1.bf16.msra.mxu0 %v1688
        %2803 = vmatprep.subr.bf16.mxu0 %v1673
        %2804 = vmatpush1.bf16.msra.mxu0 %v1672
        %2805 = vmatprep.subr.bf16.mxu0 %v1657
        %2806 = vmatpush1.bf16.msra.mxu0 %v1656
        %2807 = vmatprep.subr.bf16.mxu0 %v1641
        %2808 = vmatpush1.bf16.msra.mxu0 %v1640
        %2809 = vmatprep.subr.bf16.mxu0 %v1625
        %2810 = vmatpush1.bf16.msra.mxu0 %v1624
        %2811 = vmatprep.subr.bf16.mxu0 %v1609
        %2812 = vmatpush1.bf16.msra.mxu0 %v1608
        %2813 = vmatprep.subr.bf16.mxu0 %v1849
        %2814 = vmatpush2.bf16.msra.mxu0 %v1848
        %2815 = vmatprep.subr.bf16.mxu0 %v1833
        %2816 = vmatpush2.bf16.msra.mxu0 %v1832
        %2817 = vmatprep.subr.bf16.mxu0 %v1817
        %2818 = vmatpush2.bf16.msra.mxu0 %v1816
        %2819 = vmatprep.subr.bf16.mxu0 %v1801
        %2820 = vmatpush2.bf16.msra.mxu0 %v1800
        %2821 = vmatprep.subr.bf16.mxu0 %v1785
        %2822 = vmatpush2.bf16.msra.mxu0 %v1784
        %2823 = vmatprep.subr.bf16.mxu0 %v1769
        %2824 = vmatpush2.bf16.msra.mxu0 %v1768
        %2825 = vmatprep.subr.bf16.mxu0 %v1753
        %2826 = vmatpush2.bf16.msra.mxu0 %v1752
        %2827 = vmatprep.subr.bf16.mxu0 %v1737
        %2828 = vmatpush2.bf16.msra.mxu0 %v1736
        %2829 = vmatprep.mubr.bf16.mxu0 %v317
        %2830 = vmatmul.mubr.bf16.gmra.mxu0 %v316
        %v2831 = vpop.f32.mrf.mxu0
        %v2832 = vadd.f32 %v2791, %v2831
        %v2833 = vpop.f32.mrf.mxu0
        %v2834 = vadd.f32 %v2793, %v2833
        %v2835 = vpop.f32.mrf.mxu0
        %v2836 = vpop.f32.mrf.mxu0
        %2837 = vdwg.mxu0
        %2838 = vmatprep.subr.bf16.mxu0 %v955
        %2839 = vmatpush1.bf16.msra.mxu0 %v954
        %2840 = vmatprep.subr.bf16.mxu0 %v939
        %2841 = vmatpush1.bf16.msra.mxu0 %v938
        %2842 = vmatprep.subr.bf16.mxu0 %v923
        %2843 = vmatpush1.bf16.msra.mxu0 %v922
        %2844 = vmatprep.subr.bf16.mxu0 %v907
        %2845 = vmatpush1.bf16.msra.mxu0 %v906
        %2846 = vmatprep.subr.bf16.mxu0 %v891
        %2847 = vmatpush1.bf16.msra.mxu0 %v890
        %2848 = vmatprep.subr.bf16.mxu0 %v875
        %2849 = vmatpush1.bf16.msra.mxu0 %v874
        %2850 = vmatprep.subr.bf16.mxu0 %v859
        %2851 = vmatpush1.bf16.msra.mxu0 %v858
        %2852 = vmatprep.subr.bf16.mxu0 %v843
        %2853 = vmatpush1.bf16.msra.mxu0 %v842
        %2854 = vmatprep.subr.bf16.mxu0 %v1083
        %2855 = vmatpush2.bf16.msra.mxu0 %v1082
        %2856 = vmatprep.subr.bf16.mxu0 %v1067
        %2857 = vmatpush2.bf16.msra.mxu0 %v1066
        %2858 = vmatprep.subr.bf16.mxu0 %v1051
        %2859 = vmatpush2.bf16.msra.mxu0 %v1050
        %2860 = vmatprep.subr.bf16.mxu0 %v1035
        %2861 = vmatpush2.bf16.msra.mxu0 %v1034
        %2862 = vmatprep.subr.bf16.mxu0 %v1019
        %2863 = vmatpush2.bf16.msra.mxu0 %v1018
        %2864 = vmatprep.subr.bf16.mxu0 %v1003
        %2865 = vmatpush2.bf16.msra.mxu0 %v1002
        %2866 = vmatprep.subr.bf16.mxu0 %v987
        %2867 = vmatpush2.bf16.msra.mxu0 %v986
        %2868 = vmatprep.subr.bf16.mxu0 %v971
        %2869 = vmatpush2.bf16.msra.mxu0 %v970
        %2870 = vmatprep.mubr.bf16.mxu0 %v311
        %2871 = vmatmul.mubr.bf16.gmra.mxu0 %v310
        %v2872 = vpop.f32.mrf.mxu0
        %v2873 = vadd.f32 0.0, %v2872
        %v2874 = vpop.f32.mrf.mxu0
        %v2875 = vadd.f32 0.0, %v2874
        %v2876 = vpop.f32.mrf.mxu0
        %v2877 = vpop.f32.mrf.mxu0
        %2878 = vdwg.mxu0
        %2879 = vmatprep.subr.bf16.mxu0 %v1211
        %2880 = vmatpush1.bf16.msra.mxu0 %v1210
        %2881 = vmatprep.subr.bf16.mxu0 %v1195
        %2882 = vmatpush1.bf16.msra.mxu0 %v1194
        %2883 = vmatprep.subr.bf16.mxu0 %v1179
        %2884 = vmatpush1.bf16.msra.mxu0 %v1178
        %2885 = vmatprep.subr.bf16.mxu0 %v1163
        %2886 = vmatpush1.bf16.msra.mxu0 %v1162
        %2887 = vmatprep.subr.bf16.mxu0 %v1147
        %2888 = vmatpush1.bf16.msra.mxu0 %v1146
        %2889 = vmatprep.subr.bf16.mxu0 %v1131
        %2890 = vmatpush1.bf16.msra.mxu0 %v1130
        %2891 = vmatprep.subr.bf16.mxu0 %v1115
        %2892 = vmatpush1.bf16.msra.mxu0 %v1114
        %2893 = vmatprep.subr.bf16.mxu0 %v1099
        %2894 = vmatpush1.bf16.msra.mxu0 %v1098
        %2895 = vmatprep.subr.bf16.mxu0 %v1339
        %2896 = vmatpush2.bf16.msra.mxu0 %v1338
        %2897 = vmatprep.subr.bf16.mxu0 %v1323
        %2898 = vmatpush2.bf16.msra.mxu0 %v1322
        %2899 = vmatprep.subr.bf16.mxu0 %v1307
        %2900 = vmatpush2.bf16.msra.mxu0 %v1306
        %2901 = vmatprep.subr.bf16.mxu0 %v1291
        %2902 = vmatpush2.bf16.msra.mxu0 %v1290
        %2903 = vmatprep.subr.bf16.mxu0 %v1275
        %2904 = vmatpush2.bf16.msra.mxu0 %v1274
        %2905 = vmatprep.subr.bf16.mxu0 %v1259
        %2906 = vmatpush2.bf16.msra.mxu0 %v1258
        %2907 = vmatprep.subr.bf16.mxu0 %v1243
        %2908 = vmatpush2.bf16.msra.mxu0 %v1242
        %2909 = vmatprep.subr.bf16.mxu0 %v1227
        %2910 = vmatpush2.bf16.msra.mxu0 %v1226
        %2911 = vmatprep.mubr.bf16.mxu0 %v313
        %2912 = vmatmul.mubr.bf16.gmra.mxu0 %v312
        %v2913 = vpop.f32.mrf.mxu0
        %v2914 = vadd.f32 %v2873, %v2913
        %v2915 = vpop.f32.mrf.mxu0
        %v2916 = vadd.f32 %v2875, %v2915
        %v2917 = vpop.f32.mrf.mxu0
        %v2918 = vpop.f32.mrf.mxu0
        %2919 = vdwg.mxu0
        %2920 = vmatprep.subr.bf16.mxu0 %v1467
        %2921 = vmatpush1.bf16.msra.mxu0 %v1466
        %2922 = vmatprep.subr.bf16.mxu0 %v1451
        %2923 = vmatpush1.bf16.msra.mxu0 %v1450
        %2924 = vmatprep.subr.bf16.mxu0 %v1435
        %2925 = vmatpush1.bf16.msra.mxu0 %v1434
        %2926 = vmatprep.subr.bf16.mxu0 %v1419
        %2927 = vmatpush1.bf16.msra.mxu0 %v1418
        %2928 = vmatprep.subr.bf16.mxu0 %v1403
        %2929 = vmatpush1.bf16.msra.mxu0 %v1402
        %2930 = vmatprep.subr.bf16.mxu0 %v1387
        %2931 = vmatpush1.bf16.msra.mxu0 %v1386
        %2932 = vmatprep.subr.bf16.mxu0 %v1371
        %2933 = vmatpush1.bf16.msra.mxu0 %v1370
        %2934 = vmatprep.subr.bf16.mxu0 %v1355
        %2935 = vmatpush1.bf16.msra.mxu0 %v1354
        %2936 = vmatprep.subr.bf16.mxu0 %v1595
        %2937 = vmatpush2.bf16.msra.mxu0 %v1594
        %2938 = vmatprep.subr.bf16.mxu0 %v1579
        %2939 = vmatpush2.bf16.msra.mxu0 %v1578
        %2940 = vmatprep.subr.bf16.mxu0 %v1563
        %2941 = vmatpush2.bf16.msra.mxu0 %v1562
        %2942 = vmatprep.subr.bf16.mxu0 %v1547
        %2943 = vmatpush2.bf16.msra.mxu0 %v1546
        %2944 = vmatprep.subr.bf16.mxu0 %v1531
        %2945 = vmatpush2.bf16.msra.mxu0 %v1530
        %2946 = vmatprep.subr.bf16.mxu0 %v1515
        %2947 = vmatpush2.bf16.msra.mxu0 %v1514
        %2948 = vmatprep.subr.bf16.mxu0 %v1499
        %2949 = vmatpush2.bf16.msra.mxu0 %v1498
        %2950 = vmatprep.subr.bf16.mxu0 %v1483
        %2951 = vmatpush2.bf16.msra.mxu0 %v1482
        %2952 = vmatprep.mubr.bf16.mxu0 %v315
        %2953 = vmatmul.mubr.bf16.gmra.mxu0 %v314
        %v2954 = vpop.f32.mrf.mxu0
        %v2955 = vadd.f32 %v2914, %v2954
        %v2956 = vpop.f32.mrf.mxu0
        %v2957 = vadd.f32 %v2916, %v2956
        %v2958 = vpop.f32.mrf.mxu0
        %v2959 = vpop.f32.mrf.mxu0
        %2960 = vdwg.mxu0
        %2961 = vmatprep.subr.bf16.mxu0 %v1723
        %2962 = vmatpush1.bf16.msra.mxu0 %v1722
        %2963 = vmatprep.subr.bf16.mxu0 %v1707
        %2964 = vmatpush1.bf16.msra.mxu0 %v1706
        %2965 = vmatprep.subr.bf16.mxu0 %v1691
        %2966 = vmatpush1.bf16.msra.mxu0 %v1690
        %2967 = vmatprep.subr.bf16.mxu0 %v1675
        %2968 = vmatpush1.bf16.msra.mxu0 %v1674
        %2969 = vmatprep.subr.bf16.mxu0 %v1659
        %2970 = vmatpush1.bf16.msra.mxu0 %v1658
        %2971 = vmatprep.subr.bf16.mxu0 %v1643
        %2972 = vmatpush1.bf16.msra.mxu0 %v1642
        %2973 = vmatprep.subr.bf16.mxu0 %v1627
        %2974 = vmatpush1.bf16.msra.mxu0 %v1626
        %2975 = vmatprep.subr.bf16.mxu0 %v1611
        %2976 = vmatpush1.bf16.msra.mxu0 %v1610
        %2977 = vmatprep.subr.bf16.mxu0 %v1851
        %2978 = vmatpush2.bf16.msra.mxu0 %v1850
        %2979 = vmatprep.subr.bf16.mxu0 %v1835
        %2980 = vmatpush2.bf16.msra.mxu0 %v1834
        %2981 = vmatprep.subr.bf16.mxu0 %v1819
        %2982 = vmatpush2.bf16.msra.mxu0 %v1818
        %2983 = vmatprep.subr.bf16.mxu0 %v1803
        %2984 = vmatpush2.bf16.msra.mxu0 %v1802
        %2985 = vmatprep.subr.bf16.mxu0 %v1787
        %2986 = vmatpush2.bf16.msra.mxu0 %v1786
        %2987 = vmatprep.subr.bf16.mxu0 %v1771
        %2988 = vmatpush2.bf16.msra.mxu0 %v1770
        %2989 = vmatprep.subr.bf16.mxu0 %v1755
        %2990 = vmatpush2.bf16.msra.mxu0 %v1754
        %2991 = vmatprep.subr.bf16.mxu0 %v1739
        %2992 = vmatpush2.bf16.msra.mxu0 %v1738
        %2993 = vmatprep.mubr.bf16.mxu0 %v317
        %2994 = vmatmul.mubr.bf16.gmra.mxu0 %v316
        %v2995 = vpop.f32.mrf.mxu0
        %v2996 = vadd.f32 %v2955, %v2995
        %v2997 = vpop.f32.mrf.mxu0
        %v2998 = vadd.f32 %v2957, %v2997
        %v2999 = vpop.f32.mrf.mxu0
        %v3000 = vpop.f32.mrf.mxu0
        %3001 = vdwg.mxu0
        %3002 = vmatprep.subr.bf16.mxu0 %v957
        %3003 = vmatpush1.bf16.msra.mxu0 %v956
        %3004 = vmatprep.subr.bf16.mxu0 %v941
        %3005 = vmatpush1.bf16.msra.mxu0 %v940
        %3006 = vmatprep.subr.bf16.mxu0 %v925
        %3007 = vmatpush1.bf16.msra.mxu0 %v924
        %3008 = vmatprep.subr.bf16.mxu0 %v909
        %3009 = vmatpush1.bf16.msra.mxu0 %v908
        %3010 = vmatprep.subr.bf16.mxu0 %v893
        %3011 = vmatpush1.bf16.msra.mxu0 %v892
        %3012 = vmatprep.subr.bf16.mxu0 %v877
        %3013 = vmatpush1.bf16.msra.mxu0 %v876
        %3014 = vmatprep.subr.bf16.mxu0 %v861
        %3015 = vmatpush1.bf16.msra.mxu0 %v860
        %3016 = vmatprep.subr.bf16.mxu0 %v845
        %3017 = vmatpush1.bf16.msra.mxu0 %v844
        %3018 = vmatprep.subr.bf16.mxu0 %v1085
        %3019 = vmatpush2.bf16.msra.mxu0 %v1084
        %3020 = vmatprep.subr.bf16.mxu0 %v1069
        %3021 = vmatpush2.bf16.msra.mxu0 %v1068
        %3022 = vmatprep.subr.bf16.mxu0 %v1053
        %3023 = vmatpush2.bf16.msra.mxu0 %v1052
        %3024 = vmatprep.subr.bf16.mxu0 %v1037
        %3025 = vmatpush2.bf16.msra.mxu0 %v1036
        %3026 = vmatprep.subr.bf16.mxu0 %v1021
        %3027 = vmatpush2.bf16.msra.mxu0 %v1020
        %3028 = vmatprep.subr.bf16.mxu0 %v1005
        %3029 = vmatpush2.bf16.msra.mxu0 %v1004
        %3030 = vmatprep.subr.bf16.mxu0 %v989
        %3031 = vmatpush2.bf16.msra.mxu0 %v988
        %3032 = vmatprep.subr.bf16.mxu0 %v973
        %3033 = vmatpush2.bf16.msra.mxu0 %v972
        %3034 = vmatprep.mubr.bf16.mxu0 %v311
        %3035 = vmatmul.mubr.bf16.gmra.mxu0 %v310
        %v3036 = vpop.f32.mrf.mxu0
        %v3037 = vadd.f32 0.0, %v3036
        %v3038 = vpop.f32.mrf.mxu0
        %v3039 = vadd.f32 0.0, %v3038
        %v3040 = vpop.f32.mrf.mxu0
        %v3041 = vpop.f32.mrf.mxu0
        %3042 = vdwg.mxu0
        %3043 = vmatprep.subr.bf16.mxu0 %v1213
        %3044 = vmatpush1.bf16.msra.mxu0 %v1212
        %3045 = vmatprep.subr.bf16.mxu0 %v1197
        %3046 = vmatpush1.bf16.msra.mxu0 %v1196
        %3047 = vmatprep.subr.bf16.mxu0 %v1181
        %3048 = vmatpush1.bf16.msra.mxu0 %v1180
        %3049 = vmatprep.subr.bf16.mxu0 %v1165
        %3050 = vmatpush1.bf16.msra.mxu0 %v1164
        %3051 = vmatprep.subr.bf16.mxu0 %v1149
        %3052 = vmatpush1.bf16.msra.mxu0 %v1148
        %3053 = vmatprep.subr.bf16.mxu0 %v1133
        %3054 = vmatpush1.bf16.msra.mxu0 %v1132
        %3055 = vmatprep.subr.bf16.mxu0 %v1117
        %3056 = vmatpush1.bf16.msra.mxu0 %v1116
        %3057 = vmatprep.subr.bf16.mxu0 %v1101
        %3058 = vmatpush1.bf16.msra.mxu0 %v1100
        %3059 = vmatprep.subr.bf16.mxu0 %v1341
        %3060 = vmatpush2.bf16.msra.mxu0 %v1340
        %3061 = vmatprep.subr.bf16.mxu0 %v1325
        %3062 = vmatpush2.bf16.msra.mxu0 %v1324
        %3063 = vmatprep.subr.bf16.mxu0 %v1309
        %3064 = vmatpush2.bf16.msra.mxu0 %v1308
        %3065 = vmatprep.subr.bf16.mxu0 %v1293
        %3066 = vmatpush2.bf16.msra.mxu0 %v1292
        %3067 = vmatprep.subr.bf16.mxu0 %v1277
        %3068 = vmatpush2.bf16.msra.mxu0 %v1276
        %3069 = vmatprep.subr.bf16.mxu0 %v1261
        %3070 = vmatpush2.bf16.msra.mxu0 %v1260
        %3071 = vmatprep.subr.bf16.mxu0 %v1245
        %3072 = vmatpush2.bf16.msra.mxu0 %v1244
        %3073 = vmatprep.subr.bf16.mxu0 %v1229
        %3074 = vmatpush2.bf16.msra.mxu0 %v1228
        %3075 = vmatprep.mubr.bf16.mxu0 %v313
        %3076 = vmatmul.mubr.bf16.gmra.mxu0 %v312
        %v3077 = vpop.f32.mrf.mxu0
        %v3078 = vadd.f32 %v3037, %v3077
        %v3079 = vpop.f32.mrf.mxu0
        %v3080 = vadd.f32 %v3039, %v3079
        %v3081 = vpop.f32.mrf.mxu0
        %v3082 = vpop.f32.mrf.mxu0
        %3083 = vdwg.mxu0
        %3084 = vmatprep.subr.bf16.mxu0 %v1469
        %3085 = vmatpush1.bf16.msra.mxu0 %v1468
        %3086 = vmatprep.subr.bf16.mxu0 %v1453
        %3087 = vmatpush1.bf16.msra.mxu0 %v1452
        %3088 = vmatprep.subr.bf16.mxu0 %v1437
        %3089 = vmatpush1.bf16.msra.mxu0 %v1436
        %3090 = vmatprep.subr.bf16.mxu0 %v1421
        %3091 = vmatpush1.bf16.msra.mxu0 %v1420
        %3092 = vmatprep.subr.bf16.mxu0 %v1405
        %3093 = vmatpush1.bf16.msra.mxu0 %v1404
        %3094 = vmatprep.subr.bf16.mxu0 %v1389
        %3095 = vmatpush1.bf16.msra.mxu0 %v1388
        %3096 = vmatprep.subr.bf16.mxu0 %v1373
        %3097 = vmatpush1.bf16.msra.mxu0 %v1372
        %3098 = vmatprep.subr.bf16.mxu0 %v1357
        %3099 = vmatpush1.bf16.msra.mxu0 %v1356
        %3100 = vmatprep.subr.bf16.mxu0 %v1597
        %3101 = vmatpush2.bf16.msra.mxu0 %v1596
        %3102 = vmatprep.subr.bf16.mxu0 %v1581
        %3103 = vmatpush2.bf16.msra.mxu0 %v1580
        %3104 = vmatprep.subr.bf16.mxu0 %v1565
        %3105 = vmatpush2.bf16.msra.mxu0 %v1564
        %3106 = vmatprep.subr.bf16.mxu0 %v1549
        %3107 = vmatpush2.bf16.msra.mxu0 %v1548
        %3108 = vmatprep.subr.bf16.mxu0 %v1533
        %3109 = vmatpush2.bf16.msra.mxu0 %v1532
        %3110 = vmatprep.subr.bf16.mxu0 %v1517
        %3111 = vmatpush2.bf16.msra.mxu0 %v1516
        %3112 = vmatprep.subr.bf16.mxu0 %v1501
        %3113 = vmatpush2.bf16.msra.mxu0 %v1500
        %3114 = vmatprep.subr.bf16.mxu0 %v1485
        %3115 = vmatpush2.bf16.msra.mxu0 %v1484
        %3116 = vmatprep.mubr.bf16.mxu0 %v315
        %3117 = vmatmul.mubr.bf16.gmra.mxu0 %v314
        %v3118 = vpop.f32.mrf.mxu0
        %v3119 = vadd.f32 %v3078, %v3118
        %v3120 = vpop.f32.mrf.mxu0
        %v3121 = vadd.f32 %v3080, %v3120
        %v3122 = vpop.f32.mrf.mxu0
        %v3123 = vpop.f32.mrf.mxu0
        %3124 = vdwg.mxu0
        %3125 = vmatprep.subr.bf16.mxu0 %v1725
        %3126 = vmatpush1.bf16.msra.mxu0 %v1724
        %3127 = vmatprep.subr.bf16.mxu0 %v1709
        %3128 = vmatpush1.bf16.msra.mxu0 %v1708
        %3129 = vmatprep.subr.bf16.mxu0 %v1693
        %3130 = vmatpush1.bf16.msra.mxu0 %v1692
        %3131 = vmatprep.subr.bf16.mxu0 %v1677
        %3132 = vmatpush1.bf16.msra.mxu0 %v1676
        %3133 = vmatprep.subr.bf16.mxu0 %v1661
        %3134 = vmatpush1.bf16.msra.mxu0 %v1660
        %3135 = vmatprep.subr.bf16.mxu0 %v1645
        %3136 = vmatpush1.bf16.msra.mxu0 %v1644
        %3137 = vmatprep.subr.bf16.mxu0 %v1629
        %3138 = vmatpush1.bf16.msra.mxu0 %v1628
        %3139 = vmatprep.subr.bf16.mxu0 %v1613
        %3140 = vmatpush1.bf16.msra.mxu0 %v1612
        %3141 = vmatprep.subr.bf16.mxu0 %v1853
        %3142 = vmatpush2.bf16.msra.mxu0 %v1852
        %3143 = vmatprep.subr.bf16.mxu0 %v1837
        %3144 = vmatpush2.bf16.msra.mxu0 %v1836
        %3145 = vmatprep.subr.bf16.mxu0 %v1821
        %3146 = vmatpush2.bf16.msra.mxu0 %v1820
        %3147 = vmatprep.subr.bf16.mxu0 %v1805
        %3148 = vmatpush2.bf16.msra.mxu0 %v1804
        %3149 = vmatprep.subr.bf16.mxu0 %v1789
        %3150 = vmatpush2.bf16.msra.mxu0 %v1788
        %3151 = vmatprep.subr.bf16.mxu0 %v1773
        %3152 = vmatpush2.bf16.msra.mxu0 %v1772
        %3153 = vmatprep.subr.bf16.mxu0 %v1757
        %3154 = vmatpush2.bf16.msra.mxu0 %v1756
        %3155 = vmatprep.subr.bf16.mxu0 %v1741
        %3156 = vmatpush2.bf16.msra.mxu0 %v1740
        %3157 = vmatprep.mubr.bf16.mxu0 %v317
        %3158 = vmatmul.mubr.bf16.gmra.mxu0 %v316
        %v3159 = vpop.f32.mrf.mxu0
        %v3160 = vadd.f32 %v3119, %v3159
        %v3161 = vpop.f32.mrf.mxu0
        %v3162 = vadd.f32 %v3121, %v3161
        %v3163 = vpop.f32.mrf.mxu0
        %v3164 = vpop.f32.mrf.mxu0
        %3165 = vdwg.mxu0
        %v3166 = vmax.f32 %v2012, 0.0
        %v3167 = vmax.f32 %v2014, 0.0
        %v3168 = vmax.f32 %v2176, 0.0
        %v3169 = vmax.f32 %v2178, 0.0
        %v3170 = vmax.f32 %v2340, 0.0
        %v3171 = vmax.f32 %v2342, 0.0
        %v3172 = vmax.f32 %v2504, 0.0
        %v3173 = vmax.f32 %v2506, 0.0
        %v3174 = vmax.f32 %v2668, 0.0
        %v3175 = vmax.f32 %v2670, 0.0
        %v3176 = vmax.f32 %v2832, 0.0
        %v3177 = vmax.f32 %v2834, 0.0
        %v3178 = vmax.f32 %v2996, 0.0
        %v3179 = vmax.f32 %v2998, 0.0
        %v3180 = vmax.f32 %v3160, 0.0
        %v3181 = vmax.f32 %v3162, 0.0
        %v3182 = vpack.c.bf16 %v3166, %v3166
        %v3183 = vpack.c.bf16 %v3167, %v3167
        %v3184 = vpack.c.bf16 %v3168, %v3168
        %v3185 = vpack.c.bf16 %v3169, %v3169
        %v3186 = vpack.c.bf16 %v3170, %v3170
        %v3187 = vpack.c.bf16 %v3171, %v3171
        %v3188 = vpack.c.bf16 %v3172, %v3172
        %v3189 = vpack.c.bf16 %v3173, %v3173
        %v3190 = vpack.c.bf16 %v3174, %v3174
        %v3191 = vpack.c.bf16 %v3175, %v3175
        %v3192 = vpack.c.bf16 %v3176, %v3176
        %v3193 = vpack.c.bf16 %v3177, %v3177
        %v3194 = vpack.c.bf16 %v3178, %v3178
        %v3195 = vpack.c.bf16 %v3179, %v3179
        %v3196 = vpack.c.bf16 %v3180, %v3180
        %v3197 = vpack.c.bf16 %v3181, %v3181
        %v3198 = vld [vmem:[%s264] sm:$0xff]
        %v3199 = vld [vmem:[%s264 + $0x8] sm:$0xff]
        %v3200 = vld [vmem:[%s264 + $0x10] sm:$0xff]
        %v3201 = vld [vmem:[%s264 + $0x18] sm:$0xff]
        %v3202 = vld [vmem:[%s264 + $0x20] sm:$0xff]
        %v3203 = vld [vmem:[%s264 + $0x28] sm:$0xff]
        %v3204 = vld [vmem:[%s264 + $0x30] sm:$0xff]
        %v3205 = vld [vmem:[%s264 + $0x38] sm:$0xff]
        %v3206 = vld [vmem:[%s264 + $0x40] sm:$0xff]
        %v3207 = vld [vmem:[%s264 + $0x48] sm:$0xff]
        %v3208 = vld [vmem:[%s264 + $0x50] sm:$0xff]
        %v3209 = vld [vmem:[%s264 + $0x58] sm:$0xff]
        %v3210 = vld [vmem:[%s264 + $0x60] sm:$0xff]
        %v3211 = vld [vmem:[%s264 + $0x68] sm:$0xff]
        %v3212 = vld [vmem:[%s264 + $0x70] sm:$0xff]
        %v3213 = vld [vmem:[%s264 + $0x78] sm:$0xff]
        %v3214 = vld [vmem:[%s264 + $0x80] sm:$0xff]
        %v3215 = vld [vmem:[%s264 + $0x88] sm:$0xff]
        %v3216 = vld [vmem:[%s264 + $0x90] sm:$0xff]
        %v3217 = vld [vmem:[%s264 + $0x98] sm:$0xff]
        %v3218 = vld [vmem:[%s264 + $0xa0] sm:$0xff]
        %v3219 = vld [vmem:[%s264 + $0xa8] sm:$0xff]
        %v3220 = vld [vmem:[%s264 + $0xb0] sm:$0xff]
        %v3221 = vld [vmem:[%s264 + $0xb8] sm:$0xff]
        %v3222 = vld [vmem:[%s264 + $0xc0] sm:$0xff]
        %v3223 = vld [vmem:[%s264 + $0xc8] sm:$0xff]
        %v3224 = vld [vmem:[%s264 + $0xd0] sm:$0xff]
        %v3225 = vld [vmem:[%s264 + $0xd8] sm:$0xff]
        %v3226 = vld [vmem:[%s264 + $0xe0] sm:$0xff]
        %v3227 = vld [vmem:[%s264 + $0xe8] sm:$0xff]
        %v3228 = vld [vmem:[%s264 + $0xf0] sm:$0xff]
        %v3229 = vld [vmem:[%s264 + $0xf8] sm:$0xff]
        %v3230 = vld [vmem:[%s264 + $0x100] sm:$0xff]
        %v3231 = vld [vmem:[%s264 + $0x108] sm:$0xff]
        %v3232 = vld [vmem:[%s264 + $0x110] sm:$0xff]
        %v3233 = vld [vmem:[%s264 + $0x118] sm:$0xff]
        %v3234 = vld [vmem:[%s264 + $0x120] sm:$0xff]
        %v3235 = vld [vmem:[%s264 + $0x128] sm:$0xff]
        %v3236 = vld [vmem:[%s264 + $0x130] sm:$0xff]
        %v3237 = vld [vmem:[%s264 + $0x138] sm:$0xff]
        %v3238 = vld [vmem:[%s264 + $0x140] sm:$0xff]
        %v3239 = vld [vmem:[%s264 + $0x148] sm:$0xff]
        %v3240 = vld [vmem:[%s264 + $0x150] sm:$0xff]
        %v3241 = vld [vmem:[%s264 + $0x158] sm:$0xff]
        %v3242 = vld [vmem:[%s264 + $0x160] sm:$0xff]
        %v3243 = vld [vmem:[%s264 + $0x168] sm:$0xff]
        %v3244 = vld [vmem:[%s264 + $0x170] sm:$0xff]
        %v3245 = vld [vmem:[%s264 + $0x178] sm:$0xff]
        %v3246 = vld [vmem:[%s264 + $0x180] sm:$0xff]
        %v3247 = vld [vmem:[%s264 + $0x188] sm:$0xff]
        %v3248 = vld [vmem:[%s264 + $0x190] sm:$0xff]
        %v3249 = vld [vmem:[%s264 + $0x198] sm:$0xff]
        %v3250 = vld [vmem:[%s264 + $0x1a0] sm:$0xff]
        %v3251 = vld [vmem:[%s264 + $0x1a8] sm:$0xff]
        %v3252 = vld [vmem:[%s264 + $0x1b0] sm:$0xff]
        %v3253 = vld [vmem:[%s264 + $0x1b8] sm:$0xff]
        %v3254 = vld [vmem:[%s264 + $0x1c0] sm:$0xff]
        %v3255 = vld [vmem:[%s264 + $0x1c8] sm:$0xff]
        %v3256 = vld [vmem:[%s264 + $0x1d0] sm:$0xff]
        %v3257 = vld [vmem:[%s264 + $0x1d8] sm:$0xff]
        %v3258 = vld [vmem:[%s264 + $0x1e0] sm:$0xff]
        %v3259 = vld [vmem:[%s264 + $0x1e8] sm:$0xff]
        %v3260 = vld [vmem:[%s264 + $0x1f0] sm:$0xff]
        %v3261 = vld [vmem:[%s264 + $0x1f8] sm:$0xff]
        %v3262 = vld [vmem:[%s264 + $0x200] sm:$0xff]
        %v3263 = vld [vmem:[%s264 + $0x208] sm:$0xff]
        %v3264 = vld [vmem:[%s264 + $0x210] sm:$0xff]
        %v3265 = vld [vmem:[%s264 + $0x218] sm:$0xff]
        %v3266 = vld [vmem:[%s264 + $0x220] sm:$0xff]
        %v3267 = vld [vmem:[%s264 + $0x228] sm:$0xff]
        %v3268 = vld [vmem:[%s264 + $0x230] sm:$0xff]
        %v3269 = vld [vmem:[%s264 + $0x238] sm:$0xff]
        %v3270 = vld [vmem:[%s264 + $0x240] sm:$0xff]
        %v3271 = vld [vmem:[%s264 + $0x248] sm:$0xff]
        %v3272 = vld [vmem:[%s264 + $0x250] sm:$0xff]
        %v3273 = vld [vmem:[%s264 + $0x258] sm:$0xff]
        %v3274 = vld [vmem:[%s264 + $0x260] sm:$0xff]
        %v3275 = vld [vmem:[%s264 + $0x268] sm:$0xff]
        %v3276 = vld [vmem:[%s264 + $0x270] sm:$0xff]
        %v3277 = vld [vmem:[%s264 + $0x278] sm:$0xff]
        %v3278 = vld [vmem:[%s264 + $0x280] sm:$0xff]
        %v3279 = vld [vmem:[%s264 + $0x288] sm:$0xff]
        %v3280 = vld [vmem:[%s264 + $0x290] sm:$0xff]
        %v3281 = vld [vmem:[%s264 + $0x298] sm:$0xff]
        %v3282 = vld [vmem:[%s264 + $0x2a0] sm:$0xff]
        %v3283 = vld [vmem:[%s264 + $0x2a8] sm:$0xff]
        %v3284 = vld [vmem:[%s264 + $0x2b0] sm:$0xff]
        %v3285 = vld [vmem:[%s264 + $0x2b8] sm:$0xff]
        %v3286 = vld [vmem:[%s264 + $0x2c0] sm:$0xff]
        %v3287 = vld [vmem:[%s264 + $0x2c8] sm:$0xff]
        %v3288 = vld [vmem:[%s264 + $0x2d0] sm:$0xff]
        %v3289 = vld [vmem:[%s264 + $0x2d8] sm:$0xff]
        %v3290 = vld [vmem:[%s264 + $0x2e0] sm:$0xff]
        %v3291 = vld [vmem:[%s264 + $0x2e8] sm:$0xff]
        %v3292 = vld [vmem:[%s264 + $0x2f0] sm:$0xff]
        %v3293 = vld [vmem:[%s264 + $0x2f8] sm:$0xff]
        %v3294 = vld [vmem:[%s264 + $0x300] sm:$0xff]
        %v3295 = vld [vmem:[%s264 + $0x308] sm:$0xff]
        %v3296 = vld [vmem:[%s264 + $0x310] sm:$0xff]
        %v3297 = vld [vmem:[%s264 + $0x318] sm:$0xff]
        %v3298 = vld [vmem:[%s264 + $0x320] sm:$0xff]
        %v3299 = vld [vmem:[%s264 + $0x328] sm:$0xff]
        %v3300 = vld [vmem:[%s264 + $0x330] sm:$0xff]
        %v3301 = vld [vmem:[%s264 + $0x338] sm:$0xff]
        %v3302 = vld [vmem:[%s264 + $0x340] sm:$0xff]
        %v3303 = vld [vmem:[%s264 + $0x348] sm:$0xff]
        %v3304 = vld [vmem:[%s264 + $0x350] sm:$0xff]
        %v3305 = vld [vmem:[%s264 + $0x358] sm:$0xff]
        %v3306 = vld [vmem:[%s264 + $0x360] sm:$0xff]
        %v3307 = vld [vmem:[%s264 + $0x368] sm:$0xff]
        %v3308 = vld [vmem:[%s264 + $0x370] sm:$0xff]
        %v3309 = vld [vmem:[%s264 + $0x378] sm:$0xff]
        %v3310 = vld [vmem:[%s264 + $0x380] sm:$0xff]
        %v3311 = vld [vmem:[%s264 + $0x388] sm:$0xff]
        %v3312 = vld [vmem:[%s264 + $0x390] sm:$0xff]
        %v3313 = vld [vmem:[%s264 + $0x398] sm:$0xff]
        %v3314 = vld [vmem:[%s264 + $0x3a0] sm:$0xff]
        %v3315 = vld [vmem:[%s264 + $0x3a8] sm:$0xff]
        %v3316 = vld [vmem:[%s264 + $0x3b0] sm:$0xff]
        %v3317 = vld [vmem:[%s264 + $0x3b8] sm:$0xff]
        %v3318 = vld [vmem:[%s264 + $0x3c0] sm:$0xff]
        %v3319 = vld [vmem:[%s264 + $0x3c8] sm:$0xff]
        %v3320 = vld [vmem:[%s264 + $0x3d0] sm:$0xff]
        %v3321 = vld [vmem:[%s264 + $0x3d8] sm:$0xff]
        %v3322 = vld [vmem:[%s264 + $0x3e0] sm:$0xff]
        %v3323 = vld [vmem:[%s264 + $0x3e8] sm:$0xff]
        %v3324 = vld [vmem:[%s264 + $0x3f0] sm:$0xff]
        %v3325 = vld [vmem:[%s264 + $0x3f8] sm:$0xff]
        %v3326 = vld [vmem:[%s264 + $0x400] sm:$0xff]
        %v3327 = vld [vmem:[%s264 + $0x408] sm:$0xff]
        %v3328 = vld [vmem:[%s264 + $0x410] sm:$0xff]
        %v3329 = vld [vmem:[%s264 + $0x418] sm:$0xff]
        %v3330 = vld [vmem:[%s264 + $0x420] sm:$0xff]
        %v3331 = vld [vmem:[%s264 + $0x428] sm:$0xff]
        %v3332 = vld [vmem:[%s264 + $0x430] sm:$0xff]
        %v3333 = vld [vmem:[%s264 + $0x438] sm:$0xff]
        %v3334 = vld [vmem:[%s264 + $0x440] sm:$0xff]
        %v3335 = vld [vmem:[%s264 + $0x448] sm:$0xff]
        %v3336 = vld [vmem:[%s264 + $0x450] sm:$0xff]
        %v3337 = vld [vmem:[%s264 + $0x458] sm:$0xff]
        %v3338 = vld [vmem:[%s264 + $0x460] sm:$0xff]
        %v3339 = vld [vmem:[%s264 + $0x468] sm:$0xff]
        %v3340 = vld [vmem:[%s264 + $0x470] sm:$0xff]
        %v3341 = vld [vmem:[%s264 + $0x478] sm:$0xff]
        %v3342 = vld [vmem:[%s264 + $0x480] sm:$0xff]
        %v3343 = vld [vmem:[%s264 + $0x488] sm:$0xff]
        %v3344 = vld [vmem:[%s264 + $0x490] sm:$0xff]
        %v3345 = vld [vmem:[%s264 + $0x498] sm:$0xff]
        %v3346 = vld [vmem:[%s264 + $0x4a0] sm:$0xff]
        %v3347 = vld [vmem:[%s264 + $0x4a8] sm:$0xff]
        %v3348 = vld [vmem:[%s264 + $0x4b0] sm:$0xff]
        %v3349 = vld [vmem:[%s264 + $0x4b8] sm:$0xff]
        %v3350 = vld [vmem:[%s264 + $0x4c0] sm:$0xff]
        %v3351 = vld [vmem:[%s264 + $0x4c8] sm:$0xff]
        %v3352 = vld [vmem:[%s264 + $0x4d0] sm:$0xff]
        %v3353 = vld [vmem:[%s264 + $0x4d8] sm:$0xff]
        %v3354 = vld [vmem:[%s264 + $0x4e0] sm:$0xff]
        %v3355 = vld [vmem:[%s264 + $0x4e8] sm:$0xff]
        %v3356 = vld [vmem:[%s264 + $0x4f0] sm:$0xff]
        %v3357 = vld [vmem:[%s264 + $0x4f8] sm:$0xff]
        %v3358 = vld [vmem:[%s264 + $0x500] sm:$0xff]
        %v3359 = vld [vmem:[%s264 + $0x508] sm:$0xff]
        %v3360 = vld [vmem:[%s264 + $0x510] sm:$0xff]
        %v3361 = vld [vmem:[%s264 + $0x518] sm:$0xff]
        %v3362 = vld [vmem:[%s264 + $0x520] sm:$0xff]
        %v3363 = vld [vmem:[%s264 + $0x528] sm:$0xff]
        %v3364 = vld [vmem:[%s264 + $0x530] sm:$0xff]
        %v3365 = vld [vmem:[%s264 + $0x538] sm:$0xff]
        %v3366 = vld [vmem:[%s264 + $0x540] sm:$0xff]
        %v3367 = vld [vmem:[%s264 + $0x548] sm:$0xff]
        %v3368 = vld [vmem:[%s264 + $0x550] sm:$0xff]
        %v3369 = vld [vmem:[%s264 + $0x558] sm:$0xff]
        %v3370 = vld [vmem:[%s264 + $0x560] sm:$0xff]
        %v3371 = vld [vmem:[%s264 + $0x568] sm:$0xff]
        %v3372 = vld [vmem:[%s264 + $0x570] sm:$0xff]
        %v3373 = vld [vmem:[%s264 + $0x578] sm:$0xff]
        %v3374 = vld [vmem:[%s264 + $0x580] sm:$0xff]
        %v3375 = vld [vmem:[%s264 + $0x588] sm:$0xff]
        %v3376 = vld [vmem:[%s264 + $0x590] sm:$0xff]
        %v3377 = vld [vmem:[%s264 + $0x598] sm:$0xff]
        %v3378 = vld [vmem:[%s264 + $0x5a0] sm:$0xff]
        %v3379 = vld [vmem:[%s264 + $0x5a8] sm:$0xff]
        %v3380 = vld [vmem:[%s264 + $0x5b0] sm:$0xff]
        %v3381 = vld [vmem:[%s264 + $0x5b8] sm:$0xff]
        %v3382 = vld [vmem:[%s264 + $0x5c0] sm:$0xff]
        %v3383 = vld [vmem:[%s264 + $0x5c8] sm:$0xff]
        %v3384 = vld [vmem:[%s264 + $0x5d0] sm:$0xff]
        %v3385 = vld [vmem:[%s264 + $0x5d8] sm:$0xff]
        %v3386 = vld [vmem:[%s264 + $0x5e0] sm:$0xff]
        %v3387 = vld [vmem:[%s264 + $0x5e8] sm:$0xff]
        %v3388 = vld [vmem:[%s264 + $0x5f0] sm:$0xff]
        %v3389 = vld [vmem:[%s264 + $0x5f8] sm:$0xff]
        %v3390 = vld [vmem:[%s264 + $0x600] sm:$0xff]
        %v3391 = vld [vmem:[%s264 + $0x608] sm:$0xff]
        %v3392 = vld [vmem:[%s264 + $0x610] sm:$0xff]
        %v3393 = vld [vmem:[%s264 + $0x618] sm:$0xff]
        %v3394 = vld [vmem:[%s264 + $0x620] sm:$0xff]
        %v3395 = vld [vmem:[%s264 + $0x628] sm:$0xff]
        %v3396 = vld [vmem:[%s264 + $0x630] sm:$0xff]
        %v3397 = vld [vmem:[%s264 + $0x638] sm:$0xff]
        %v3398 = vld [vmem:[%s264 + $0x640] sm:$0xff]
        %v3399 = vld [vmem:[%s264 + $0x648] sm:$0xff]
        %v3400 = vld [vmem:[%s264 + $0x650] sm:$0xff]
        %v3401 = vld [vmem:[%s264 + $0x658] sm:$0xff]
        %v3402 = vld [vmem:[%s264 + $0x660] sm:$0xff]
        %v3403 = vld [vmem:[%s264 + $0x668] sm:$0xff]
        %v3404 = vld [vmem:[%s264 + $0x670] sm:$0xff]
        %v3405 = vld [vmem:[%s264 + $0x678] sm:$0xff]
        %v3406 = vld [vmem:[%s264 + $0x680] sm:$0xff]
        %v3407 = vld [vmem:[%s264 + $0x688] sm:$0xff]
        %v3408 = vld [vmem:[%s264 + $0x690] sm:$0xff]
        %v3409 = vld [vmem:[%s264 + $0x698] sm:$0xff]
        %v3410 = vld [vmem:[%s264 + $0x6a0] sm:$0xff]
        %v3411 = vld [vmem:[%s264 + $0x6a8] sm:$0xff]
        %v3412 = vld [vmem:[%s264 + $0x6b0] sm:$0xff]
        %v3413 = vld [vmem:[%s264 + $0x6b8] sm:$0xff]
        %v3414 = vld [vmem:[%s264 + $0x6c0] sm:$0xff]
        %v3415 = vld [vmem:[%s264 + $0x6c8] sm:$0xff]
        %v3416 = vld [vmem:[%s264 + $0x6d0] sm:$0xff]
        %v3417 = vld [vmem:[%s264 + $0x6d8] sm:$0xff]
        %v3418 = vld [vmem:[%s264 + $0x6e0] sm:$0xff]
        %v3419 = vld [vmem:[%s264 + $0x6e8] sm:$0xff]
        %v3420 = vld [vmem:[%s264 + $0x6f0] sm:$0xff]
        %v3421 = vld [vmem:[%s264 + $0x6f8] sm:$0xff]
        %v3422 = vld [vmem:[%s264 + $0x700] sm:$0xff]
        %v3423 = vld [vmem:[%s264 + $0x708] sm:$0xff]
        %v3424 = vld [vmem:[%s264 + $0x710] sm:$0xff]
        %v3425 = vld [vmem:[%s264 + $0x718] sm:$0xff]
        %v3426 = vld [vmem:[%s264 + $0x720] sm:$0xff]
        %v3427 = vld [vmem:[%s264 + $0x728] sm:$0xff]
        %v3428 = vld [vmem:[%s264 + $0x730] sm:$0xff]
        %v3429 = vld [vmem:[%s264 + $0x738] sm:$0xff]
        %v3430 = vld [vmem:[%s264 + $0x740] sm:$0xff]
        %v3431 = vld [vmem:[%s264 + $0x748] sm:$0xff]
        %v3432 = vld [vmem:[%s264 + $0x750] sm:$0xff]
        %v3433 = vld [vmem:[%s264 + $0x758] sm:$0xff]
        %v3434 = vld [vmem:[%s264 + $0x760] sm:$0xff]
        %v3435 = vld [vmem:[%s264 + $0x768] sm:$0xff]
        %v3436 = vld [vmem:[%s264 + $0x770] sm:$0xff]
        %v3437 = vld [vmem:[%s264 + $0x778] sm:$0xff]
        %v3438 = vld [vmem:[%s264 + $0x780] sm:$0xff]
        %v3439 = vld [vmem:[%s264 + $0x788] sm:$0xff]
        %v3440 = vld [vmem:[%s264 + $0x790] sm:$0xff]
        %v3441 = vld [vmem:[%s264 + $0x798] sm:$0xff]
        %v3442 = vld [vmem:[%s264 + $0x7a0] sm:$0xff]
        %v3443 = vld [vmem:[%s264 + $0x7a8] sm:$0xff]
        %v3444 = vld [vmem:[%s264 + $0x7b0] sm:$0xff]
        %v3445 = vld [vmem:[%s264 + $0x7b8] sm:$0xff]
        %v3446 = vld [vmem:[%s264 + $0x7c0] sm:$0xff]
        %v3447 = vld [vmem:[%s264 + $0x7c8] sm:$0xff]
        %v3448 = vld [vmem:[%s264 + $0x7d0] sm:$0xff]
        %v3449 = vld [vmem:[%s264 + $0x7d8] sm:$0xff]
        %v3450 = vld [vmem:[%s264 + $0x7e0] sm:$0xff]
        %v3451 = vld [vmem:[%s264 + $0x7e8] sm:$0xff]
        %v3452 = vld [vmem:[%s264 + $0x7f0] sm:$0xff]
        %v3453 = vld [vmem:[%s264 + $0x7f8] sm:$0xff]
        %v3454 = vld [vmem:[%s264 + $0x800] sm:$0xff]
        %v3455 = vld [vmem:[%s264 + $0x808] sm:$0xff]
        %v3456 = vld [vmem:[%s264 + $0x810] sm:$0xff]
        %v3457 = vld [vmem:[%s264 + $0x818] sm:$0xff]
        %v3458 = vld [vmem:[%s264 + $0x820] sm:$0xff]
        %v3459 = vld [vmem:[%s264 + $0x828] sm:$0xff]
        %v3460 = vld [vmem:[%s264 + $0x830] sm:$0xff]
        %v3461 = vld [vmem:[%s264 + $0x838] sm:$0xff]
        %v3462 = vld [vmem:[%s264 + $0x840] sm:$0xff]
        %v3463 = vld [vmem:[%s264 + $0x848] sm:$0xff]
        %v3464 = vld [vmem:[%s264 + $0x850] sm:$0xff]
        %v3465 = vld [vmem:[%s264 + $0x858] sm:$0xff]
        %v3466 = vld [vmem:[%s264 + $0x860] sm:$0xff]
        %v3467 = vld [vmem:[%s264 + $0x868] sm:$0xff]
        %v3468 = vld [vmem:[%s264 + $0x870] sm:$0xff]
        %v3469 = vld [vmem:[%s264 + $0x878] sm:$0xff]
        %v3470 = vld [vmem:[%s264 + $0x880] sm:$0xff]
        %v3471 = vld [vmem:[%s264 + $0x888] sm:$0xff]
        %v3472 = vld [vmem:[%s264 + $0x890] sm:$0xff]
        %v3473 = vld [vmem:[%s264 + $0x898] sm:$0xff]
        %v3474 = vld [vmem:[%s264 + $0x8a0] sm:$0xff]
        %v3475 = vld [vmem:[%s264 + $0x8a8] sm:$0xff]
        %v3476 = vld [vmem:[%s264 + $0x8b0] sm:$0xff]
        %v3477 = vld [vmem:[%s264 + $0x8b8] sm:$0xff]
        %v3478 = vld [vmem:[%s264 + $0x8c0] sm:$0xff]
        %v3479 = vld [vmem:[%s264 + $0x8c8] sm:$0xff]
        %v3480 = vld [vmem:[%s264 + $0x8d0] sm:$0xff]
        %v3481 = vld [vmem:[%s264 + $0x8d8] sm:$0xff]
        %v3482 = vld [vmem:[%s264 + $0x8e0] sm:$0xff]
        %v3483 = vld [vmem:[%s264 + $0x8e8] sm:$0xff]
        %v3484 = vld [vmem:[%s264 + $0x8f0] sm:$0xff]
        %v3485 = vld [vmem:[%s264 + $0x8f8] sm:$0xff]
        %v3486 = vld [vmem:[%s264 + $0x900] sm:$0xff]
        %v3487 = vld [vmem:[%s264 + $0x908] sm:$0xff]
        %v3488 = vld [vmem:[%s264 + $0x910] sm:$0xff]
        %v3489 = vld [vmem:[%s264 + $0x918] sm:$0xff]
        %v3490 = vld [vmem:[%s264 + $0x920] sm:$0xff]
        %v3491 = vld [vmem:[%s264 + $0x928] sm:$0xff]
        %v3492 = vld [vmem:[%s264 + $0x930] sm:$0xff]
        %v3493 = vld [vmem:[%s264 + $0x938] sm:$0xff]
        %v3494 = vld [vmem:[%s264 + $0x940] sm:$0xff]
        %v3495 = vld [vmem:[%s264 + $0x948] sm:$0xff]
        %v3496 = vld [vmem:[%s264 + $0x950] sm:$0xff]
        %v3497 = vld [vmem:[%s264 + $0x958] sm:$0xff]
        %v3498 = vld [vmem:[%s264 + $0x960] sm:$0xff]
        %v3499 = vld [vmem:[%s264 + $0x968] sm:$0xff]
        %v3500 = vld [vmem:[%s264 + $0x970] sm:$0xff]
        %v3501 = vld [vmem:[%s264 + $0x978] sm:$0xff]
        %v3502 = vld [vmem:[%s264 + $0x980] sm:$0xff]
        %v3503 = vld [vmem:[%s264 + $0x988] sm:$0xff]
        %v3504 = vld [vmem:[%s264 + $0x990] sm:$0xff]
        %v3505 = vld [vmem:[%s264 + $0x998] sm:$0xff]
        %v3506 = vld [vmem:[%s264 + $0x9a0] sm:$0xff]
        %v3507 = vld [vmem:[%s264 + $0x9a8] sm:$0xff]
        %v3508 = vld [vmem:[%s264 + $0x9b0] sm:$0xff]
        %v3509 = vld [vmem:[%s264 + $0x9b8] sm:$0xff]
        %v3510 = vld [vmem:[%s264 + $0x9c0] sm:$0xff]
        %v3511 = vld [vmem:[%s264 + $0x9c8] sm:$0xff]
        %v3512 = vld [vmem:[%s264 + $0x9d0] sm:$0xff]
        %v3513 = vld [vmem:[%s264 + $0x9d8] sm:$0xff]
        %v3514 = vld [vmem:[%s264 + $0x9e0] sm:$0xff]
        %v3515 = vld [vmem:[%s264 + $0x9e8] sm:$0xff]
        %v3516 = vld [vmem:[%s264 + $0x9f0] sm:$0xff]
        %v3517 = vld [vmem:[%s264 + $0x9f8] sm:$0xff]
        %v3518 = vld [vmem:[%s264 + $0xa00] sm:$0xff]
        %v3519 = vld [vmem:[%s264 + $0xa08] sm:$0xff]
        %v3520 = vld [vmem:[%s264 + $0xa10] sm:$0xff]
        %v3521 = vld [vmem:[%s264 + $0xa18] sm:$0xff]
        %v3522 = vld [vmem:[%s264 + $0xa20] sm:$0xff]
        %v3523 = vld [vmem:[%s264 + $0xa28] sm:$0xff]
        %v3524 = vld [vmem:[%s264 + $0xa30] sm:$0xff]
        %v3525 = vld [vmem:[%s264 + $0xa38] sm:$0xff]
        %v3526 = vld [vmem:[%s264 + $0xa40] sm:$0xff]
        %v3527 = vld [vmem:[%s264 + $0xa48] sm:$0xff]
        %v3528 = vld [vmem:[%s264 + $0xa50] sm:$0xff]
        %v3529 = vld [vmem:[%s264 + $0xa58] sm:$0xff]
        %v3530 = vld [vmem:[%s264 + $0xa60] sm:$0xff]
        %v3531 = vld [vmem:[%s264 + $0xa68] sm:$0xff]
        %v3532 = vld [vmem:[%s264 + $0xa70] sm:$0xff]
        %v3533 = vld [vmem:[%s264 + $0xa78] sm:$0xff]
        %v3534 = vld [vmem:[%s264 + $0xa80] sm:$0xff]
        %v3535 = vld [vmem:[%s264 + $0xa88] sm:$0xff]
        %v3536 = vld [vmem:[%s264 + $0xa90] sm:$0xff]
        %v3537 = vld [vmem:[%s264 + $0xa98] sm:$0xff]
        %v3538 = vld [vmem:[%s264 + $0xaa0] sm:$0xff]
        %v3539 = vld [vmem:[%s264 + $0xaa8] sm:$0xff]
        %v3540 = vld [vmem:[%s264 + $0xab0] sm:$0xff]
        %v3541 = vld [vmem:[%s264 + $0xab8] sm:$0xff]
        %v3542 = vld [vmem:[%s264 + $0xac0] sm:$0xff]
        %v3543 = vld [vmem:[%s264 + $0xac8] sm:$0xff]
        %v3544 = vld [vmem:[%s264 + $0xad0] sm:$0xff]
        %v3545 = vld [vmem:[%s264 + $0xad8] sm:$0xff]
        %v3546 = vld [vmem:[%s264 + $0xae0] sm:$0xff]
        %v3547 = vld [vmem:[%s264 + $0xae8] sm:$0xff]
        %v3548 = vld [vmem:[%s264 + $0xaf0] sm:$0xff]
        %v3549 = vld [vmem:[%s264 + $0xaf8] sm:$0xff]
        %v3550 = vld [vmem:[%s264 + $0xb00] sm:$0xff]
        %v3551 = vld [vmem:[%s264 + $0xb08] sm:$0xff]
        %v3552 = vld [vmem:[%s264 + $0xb10] sm:$0xff]
        %v3553 = vld [vmem:[%s264 + $0xb18] sm:$0xff]
        %v3554 = vld [vmem:[%s264 + $0xb20] sm:$0xff]
        %v3555 = vld [vmem:[%s264 + $0xb28] sm:$0xff]
        %v3556 = vld [vmem:[%s264 + $0xb30] sm:$0xff]
        %v3557 = vld [vmem:[%s264 + $0xb38] sm:$0xff]
        %v3558 = vld [vmem:[%s264 + $0xb40] sm:$0xff]
        %v3559 = vld [vmem:[%s264 + $0xb48] sm:$0xff]
        %v3560 = vld [vmem:[%s264 + $0xb50] sm:$0xff]
        %v3561 = vld [vmem:[%s264 + $0xb58] sm:$0xff]
        %v3562 = vld [vmem:[%s264 + $0xb60] sm:$0xff]
        %v3563 = vld [vmem:[%s264 + $0xb68] sm:$0xff]
        %v3564 = vld [vmem:[%s264 + $0xb70] sm:$0xff]
        %v3565 = vld [vmem:[%s264 + $0xb78] sm:$0xff]
        %v3566 = vld [vmem:[%s264 + $0xb80] sm:$0xff]
        %v3567 = vld [vmem:[%s264 + $0xb88] sm:$0xff]
        %v3568 = vld [vmem:[%s264 + $0xb90] sm:$0xff]
        %v3569 = vld [vmem:[%s264 + $0xb98] sm:$0xff]
        %v3570 = vld [vmem:[%s264 + $0xba0] sm:$0xff]
        %v3571 = vld [vmem:[%s264 + $0xba8] sm:$0xff]
        %v3572 = vld [vmem:[%s264 + $0xbb0] sm:$0xff]
        %v3573 = vld [vmem:[%s264 + $0xbb8] sm:$0xff]
        %v3574 = vld [vmem:[%s264 + $0xbc0] sm:$0xff]
        %v3575 = vld [vmem:[%s264 + $0xbc8] sm:$0xff]
        %v3576 = vld [vmem:[%s264 + $0xbd0] sm:$0xff]
        %v3577 = vld [vmem:[%s264 + $0xbd8] sm:$0xff]
        %v3578 = vld [vmem:[%s264 + $0xbe0] sm:$0xff]
        %v3579 = vld [vmem:[%s264 + $0xbe8] sm:$0xff]
        %v3580 = vld [vmem:[%s264 + $0xbf0] sm:$0xff]
        %v3581 = vld [vmem:[%s264 + $0xbf8] sm:$0xff]
        %v3582 = vld [vmem:[%s264 + $0xc00] sm:$0xff]
        %v3583 = vld [vmem:[%s264 + $0xc08] sm:$0xff]
        %v3584 = vld [vmem:[%s264 + $0xc10] sm:$0xff]
        %v3585 = vld [vmem:[%s264 + $0xc18] sm:$0xff]
        %v3586 = vld [vmem:[%s264 + $0xc20] sm:$0xff]
        %v3587 = vld [vmem:[%s264 + $0xc28] sm:$0xff]
        %v3588 = vld [vmem:[%s264 + $0xc30] sm:$0xff]
        %v3589 = vld [vmem:[%s264 + $0xc38] sm:$0xff]
        %v3590 = vld [vmem:[%s264 + $0xc40] sm:$0xff]
        %v3591 = vld [vmem:[%s264 + $0xc48] sm:$0xff]
        %v3592 = vld [vmem:[%s264 + $0xc50] sm:$0xff]
        %v3593 = vld [vmem:[%s264 + $0xc58] sm:$0xff]
        %v3594 = vld [vmem:[%s264 + $0xc60] sm:$0xff]
        %v3595 = vld [vmem:[%s264 + $0xc68] sm:$0xff]
        %v3596 = vld [vmem:[%s264 + $0xc70] sm:$0xff]
        %v3597 = vld [vmem:[%s264 + $0xc78] sm:$0xff]
        %v3598 = vld [vmem:[%s264 + $0xc80] sm:$0xff]
        %v3599 = vld [vmem:[%s264 + $0xc88] sm:$0xff]
        %v3600 = vld [vmem:[%s264 + $0xc90] sm:$0xff]
        %v3601 = vld [vmem:[%s264 + $0xc98] sm:$0xff]
        %v3602 = vld [vmem:[%s264 + $0xca0] sm:$0xff]
        %v3603 = vld [vmem:[%s264 + $0xca8] sm:$0xff]
        %v3604 = vld [vmem:[%s264 + $0xcb0] sm:$0xff]
        %v3605 = vld [vmem:[%s264 + $0xcb8] sm:$0xff]
        %v3606 = vld [vmem:[%s264 + $0xcc0] sm:$0xff]
        %v3607 = vld [vmem:[%s264 + $0xcc8] sm:$0xff]
        %v3608 = vld [vmem:[%s264 + $0xcd0] sm:$0xff]
        %v3609 = vld [vmem:[%s264 + $0xcd8] sm:$0xff]
        %v3610 = vld [vmem:[%s264 + $0xce0] sm:$0xff]
        %v3611 = vld [vmem:[%s264 + $0xce8] sm:$0xff]
        %v3612 = vld [vmem:[%s264 + $0xcf0] sm:$0xff]
        %v3613 = vld [vmem:[%s264 + $0xcf8] sm:$0xff]
        %v3614 = vld [vmem:[%s264 + $0xd00] sm:$0xff]
        %v3615 = vld [vmem:[%s264 + $0xd08] sm:$0xff]
        %v3616 = vld [vmem:[%s264 + $0xd10] sm:$0xff]
        %v3617 = vld [vmem:[%s264 + $0xd18] sm:$0xff]
        %v3618 = vld [vmem:[%s264 + $0xd20] sm:$0xff]
        %v3619 = vld [vmem:[%s264 + $0xd28] sm:$0xff]
        %v3620 = vld [vmem:[%s264 + $0xd30] sm:$0xff]
        %v3621 = vld [vmem:[%s264 + $0xd38] sm:$0xff]
        %v3622 = vld [vmem:[%s264 + $0xd40] sm:$0xff]
        %v3623 = vld [vmem:[%s264 + $0xd48] sm:$0xff]
        %v3624 = vld [vmem:[%s264 + $0xd50] sm:$0xff]
        %v3625 = vld [vmem:[%s264 + $0xd58] sm:$0xff]
        %v3626 = vld [vmem:[%s264 + $0xd60] sm:$0xff]
        %v3627 = vld [vmem:[%s264 + $0xd68] sm:$0xff]
        %v3628 = vld [vmem:[%s264 + $0xd70] sm:$0xff]
        %v3629 = vld [vmem:[%s264 + $0xd78] sm:$0xff]
        %v3630 = vld [vmem:[%s264 + $0xd80] sm:$0xff]
        %v3631 = vld [vmem:[%s264 + $0xd88] sm:$0xff]
        %v3632 = vld [vmem:[%s264 + $0xd90] sm:$0xff]
        %v3633 = vld [vmem:[%s264 + $0xd98] sm:$0xff]
        %v3634 = vld [vmem:[%s264 + $0xda0] sm:$0xff]
        %v3635 = vld [vmem:[%s264 + $0xda8] sm:$0xff]
        %v3636 = vld [vmem:[%s264 + $0xdb0] sm:$0xff]
        %v3637 = vld [vmem:[%s264 + $0xdb8] sm:$0xff]
        %v3638 = vld [vmem:[%s264 + $0xdc0] sm:$0xff]
        %v3639 = vld [vmem:[%s264 + $0xdc8] sm:$0xff]
        %v3640 = vld [vmem:[%s264 + $0xdd0] sm:$0xff]
        %v3641 = vld [vmem:[%s264 + $0xdd8] sm:$0xff]
        %v3642 = vld [vmem:[%s264 + $0xde0] sm:$0xff]
        %v3643 = vld [vmem:[%s264 + $0xde8] sm:$0xff]
        %v3644 = vld [vmem:[%s264 + $0xdf0] sm:$0xff]
        %v3645 = vld [vmem:[%s264 + $0xdf8] sm:$0xff]
        %v3646 = vld [vmem:[%s264 + $0xe00] sm:$0xff]
        %v3647 = vld [vmem:[%s264 + $0xe08] sm:$0xff]
        %v3648 = vld [vmem:[%s264 + $0xe10] sm:$0xff]
        %v3649 = vld [vmem:[%s264 + $0xe18] sm:$0xff]
        %v3650 = vld [vmem:[%s264 + $0xe20] sm:$0xff]
        %v3651 = vld [vmem:[%s264 + $0xe28] sm:$0xff]
        %v3652 = vld [vmem:[%s264 + $0xe30] sm:$0xff]
        %v3653 = vld [vmem:[%s264 + $0xe38] sm:$0xff]
        %v3654 = vld [vmem:[%s264 + $0xe40] sm:$0xff]
        %v3655 = vld [vmem:[%s264 + $0xe48] sm:$0xff]
        %v3656 = vld [vmem:[%s264 + $0xe50] sm:$0xff]
        %v3657 = vld [vmem:[%s264 + $0xe58] sm:$0xff]
        %v3658 = vld [vmem:[%s264 + $0xe60] sm:$0xff]
        %v3659 = vld [vmem:[%s264 + $0xe68] sm:$0xff]
        %v3660 = vld [vmem:[%s264 + $0xe70] sm:$0xff]
        %v3661 = vld [vmem:[%s264 + $0xe78] sm:$0xff]
        %v3662 = vld [vmem:[%s264 + $0xe80] sm:$0xff]
        %v3663 = vld [vmem:[%s264 + $0xe88] sm:$0xff]
        %v3664 = vld [vmem:[%s264 + $0xe90] sm:$0xff]
        %v3665 = vld [vmem:[%s264 + $0xe98] sm:$0xff]
        %v3666 = vld [vmem:[%s264 + $0xea0] sm:$0xff]
        %v3667 = vld [vmem:[%s264 + $0xea8] sm:$0xff]
        %v3668 = vld [vmem:[%s264 + $0xeb0] sm:$0xff]
        %v3669 = vld [vmem:[%s264 + $0xeb8] sm:$0xff]
        %v3670 = vld [vmem:[%s264 + $0xec0] sm:$0xff]
        %v3671 = vld [vmem:[%s264 + $0xec8] sm:$0xff]
        %v3672 = vld [vmem:[%s264 + $0xed0] sm:$0xff]
        %v3673 = vld [vmem:[%s264 + $0xed8] sm:$0xff]
        %v3674 = vld [vmem:[%s264 + $0xee0] sm:$0xff]
        %v3675 = vld [vmem:[%s264 + $0xee8] sm:$0xff]
        %v3676 = vld [vmem:[%s264 + $0xef0] sm:$0xff]
        %v3677 = vld [vmem:[%s264 + $0xef8] sm:$0xff]
        %v3678 = vld [vmem:[%s264 + $0xf00] sm:$0xff]
        %v3679 = vld [vmem:[%s264 + $0xf08] sm:$0xff]
        %v3680 = vld [vmem:[%s264 + $0xf10] sm:$0xff]
        %v3681 = vld [vmem:[%s264 + $0xf18] sm:$0xff]
        %v3682 = vld [vmem:[%s264 + $0xf20] sm:$0xff]
        %v3683 = vld [vmem:[%s264 + $0xf28] sm:$0xff]
        %v3684 = vld [vmem:[%s264 + $0xf30] sm:$0xff]
        %v3685 = vld [vmem:[%s264 + $0xf38] sm:$0xff]
        %v3686 = vld [vmem:[%s264 + $0xf40] sm:$0xff]
        %v3687 = vld [vmem:[%s264 + $0xf48] sm:$0xff]
        %v3688 = vld [vmem:[%s264 + $0xf50] sm:$0xff]
        %v3689 = vld [vmem:[%s264 + $0xf58] sm:$0xff]
        %v3690 = vld [vmem:[%s264 + $0xf60] sm:$0xff]
        %v3691 = vld [vmem:[%s264 + $0xf68] sm:$0xff]
        %v3692 = vld [vmem:[%s264 + $0xf70] sm:$0xff]
        %v3693 = vld [vmem:[%s264 + $0xf78] sm:$0xff]
        %v3694 = vld [vmem:[%s264 + $0xf80] sm:$0xff]
        %v3695 = vld [vmem:[%s264 + $0xf88] sm:$0xff]
        %v3696 = vld [vmem:[%s264 + $0xf90] sm:$0xff]
        %v3697 = vld [vmem:[%s264 + $0xf98] sm:$0xff]
        %v3698 = vld [vmem:[%s264 + $0xfa0] sm:$0xff]
        %v3699 = vld [vmem:[%s264 + $0xfa8] sm:$0xff]
        %v3700 = vld [vmem:[%s264 + $0xfb0] sm:$0xff]
        %v3701 = vld [vmem:[%s264 + $0xfb8] sm:$0xff]
        %v3702 = vld [vmem:[%s264 + $0xfc0] sm:$0xff]
        %v3703 = vld [vmem:[%s264 + $0xfc8] sm:$0xff]
        %v3704 = vld [vmem:[%s264 + $0xfd0] sm:$0xff]
        %v3705 = vld [vmem:[%s264 + $0xfd8] sm:$0xff]
        %v3706 = vld [vmem:[%s264 + $0xfe0] sm:$0xff]
        %v3707 = vld [vmem:[%s264 + $0xfe8] sm:$0xff]
        %v3708 = vld [vmem:[%s264 + $0xff0] sm:$0xff]
        %v3709 = vld [vmem:[%s264 + $0xff8] sm:$0xff]
        %v3710 = vunpack.c.l.s8.bf16 %v3198
        %v3711 = vunpack.c.l.s8.bf16 %v3199
        %v3712 = vunpack.c.l.s8.bf16 %v3200
        %v3713 = vunpack.c.l.s8.bf16 %v3201
        %v3714 = vunpack.c.l.s8.bf16 %v3202
        %v3715 = vunpack.c.l.s8.bf16 %v3203
        %v3716 = vunpack.c.l.s8.bf16 %v3204
        %v3717 = vunpack.c.l.s8.bf16 %v3205
        %v3718 = vunpack.c.h.s8.bf16 %v3198
        %v3719 = vunpack.c.h.s8.bf16 %v3199
        %v3720 = vunpack.c.h.s8.bf16 %v3200
        %v3721 = vunpack.c.h.s8.bf16 %v3201
        %v3722 = vunpack.c.h.s8.bf16 %v3202
        %v3723 = vunpack.c.h.s8.bf16 %v3203
        %v3724 = vunpack.c.h.s8.bf16 %v3204
        %v3725 = vunpack.c.h.s8.bf16 %v3205
        %v3726 = vunpack.c.l.s8.bf16 %v3206
        %v3727 = vunpack.c.l.s8.bf16 %v3207
        %v3728 = vunpack.c.l.s8.bf16 %v3208
        %v3729 = vunpack.c.l.s8.bf16 %v3209
        %v3730 = vunpack.c.l.s8.bf16 %v3210
        %v3731 = vunpack.c.l.s8.bf16 %v3211
        %v3732 = vunpack.c.l.s8.bf16 %v3212
        %v3733 = vunpack.c.l.s8.bf16 %v3213
        %v3734 = vunpack.c.h.s8.bf16 %v3206
        %v3735 = vunpack.c.h.s8.bf16 %v3207
        %v3736 = vunpack.c.h.s8.bf16 %v3208
        %v3737 = vunpack.c.h.s8.bf16 %v3209
        %v3738 = vunpack.c.h.s8.bf16 %v3210
        %v3739 = vunpack.c.h.s8.bf16 %v3211
        %v3740 = vunpack.c.h.s8.bf16 %v3212
        %v3741 = vunpack.c.h.s8.bf16 %v3213
        %v3742 = vunpack.c.l.s8.bf16 %v3214
        %v3743 = vunpack.c.l.s8.bf16 %v3215
        %v3744 = vunpack.c.l.s8.bf16 %v3216
        %v3745 = vunpack.c.l.s8.bf16 %v3217
        %v3746 = vunpack.c.l.s8.bf16 %v3218
        %v3747 = vunpack.c.l.s8.bf16 %v3219
        %v3748 = vunpack.c.l.s8.bf16 %v3220
        %v3749 = vunpack.c.l.s8.bf16 %v3221
        %v3750 = vunpack.c.h.s8.bf16 %v3214
        %v3751 = vunpack.c.h.s8.bf16 %v3215
        %v3752 = vunpack.c.h.s8.bf16 %v3216
        %v3753 = vunpack.c.h.s8.bf16 %v3217
        %v3754 = vunpack.c.h.s8.bf16 %v3218
        %v3755 = vunpack.c.h.s8.bf16 %v3219
        %v3756 = vunpack.c.h.s8.bf16 %v3220
        %v3757 = vunpack.c.h.s8.bf16 %v3221
        %v3758 = vunpack.c.l.s8.bf16 %v3222
        %v3759 = vunpack.c.l.s8.bf16 %v3223
        %v3760 = vunpack.c.l.s8.bf16 %v3224
        %v3761 = vunpack.c.l.s8.bf16 %v3225
        %v3762 = vunpack.c.l.s8.bf16 %v3226
        %v3763 = vunpack.c.l.s8.bf16 %v3227
        %v3764 = vunpack.c.l.s8.bf16 %v3228
        %v3765 = vunpack.c.l.s8.bf16 %v3229
        %v3766 = vunpack.c.h.s8.bf16 %v3222
        %v3767 = vunpack.c.h.s8.bf16 %v3223
        %v3768 = vunpack.c.h.s8.bf16 %v3224
        %v3769 = vunpack.c.h.s8.bf16 %v3225
        %v3770 = vunpack.c.h.s8.bf16 %v3226
        %v3771 = vunpack.c.h.s8.bf16 %v3227
        %v3772 = vunpack.c.h.s8.bf16 %v3228
        %v3773 = vunpack.c.h.s8.bf16 %v3229
        %v3774 = vunpack.c.l.s8.bf16 %v3230
        %v3775 = vunpack.c.l.s8.bf16 %v3231
        %v3776 = vunpack.c.l.s8.bf16 %v3232
        %v3777 = vunpack.c.l.s8.bf16 %v3233
        %v3778 = vunpack.c.l.s8.bf16 %v3234
        %v3779 = vunpack.c.l.s8.bf16 %v3235
        %v3780 = vunpack.c.l.s8.bf16 %v3236
        %v3781 = vunpack.c.l.s8.bf16 %v3237
        %v3782 = vunpack.c.h.s8.bf16 %v3230
        %v3783 = vunpack.c.h.s8.bf16 %v3231
        %v3784 = vunpack.c.h.s8.bf16 %v3232
        %v3785 = vunpack.c.h.s8.bf16 %v3233
        %v3786 = vunpack.c.h.s8.bf16 %v3234
        %v3787 = vunpack.c.h.s8.bf16 %v3235
        %v3788 = vunpack.c.h.s8.bf16 %v3236
        %v3789 = vunpack.c.h.s8.bf16 %v3237
        %v3790 = vunpack.c.l.s8.bf16 %v3238
        %v3791 = vunpack.c.l.s8.bf16 %v3239
        %v3792 = vunpack.c.l.s8.bf16 %v3240
        %v3793 = vunpack.c.l.s8.bf16 %v3241
        %v3794 = vunpack.c.l.s8.bf16 %v3242
        %v3795 = vunpack.c.l.s8.bf16 %v3243
        %v3796 = vunpack.c.l.s8.bf16 %v3244
        %v3797 = vunpack.c.l.s8.bf16 %v3245
        %v3798 = vunpack.c.h.s8.bf16 %v3238
        %v3799 = vunpack.c.h.s8.bf16 %v3239
        %v3800 = vunpack.c.h.s8.bf16 %v3240
        %v3801 = vunpack.c.h.s8.bf16 %v3241
        %v3802 = vunpack.c.h.s8.bf16 %v3242
        %v3803 = vunpack.c.h.s8.bf16 %v3243
        %v3804 = vunpack.c.h.s8.bf16 %v3244
        %v3805 = vunpack.c.h.s8.bf16 %v3245
        %v3806 = vunpack.c.l.s8.bf16 %v3246
        %v3807 = vunpack.c.l.s8.bf16 %v3247
        %v3808 = vunpack.c.l.s8.bf16 %v3248
        %v3809 = vunpack.c.l.s8.bf16 %v3249
        %v3810 = vunpack.c.l.s8.bf16 %v3250
        %v3811 = vunpack.c.l.s8.bf16 %v3251
        %v3812 = vunpack.c.l.s8.bf16 %v3252
        %v3813 = vunpack.c.l.s8.bf16 %v3253
        %v3814 = vunpack.c.h.s8.bf16 %v3246
        %v3815 = vunpack.c.h.s8.bf16 %v3247
        %v3816 = vunpack.c.h.s8.bf16 %v3248
        %v3817 = vunpack.c.h.s8.bf16 %v3249
        %v3818 = vunpack.c.h.s8.bf16 %v3250
        %v3819 = vunpack.c.h.s8.bf16 %v3251
        %v3820 = vunpack.c.h.s8.bf16 %v3252
        %v3821 = vunpack.c.h.s8.bf16 %v3253
        %v3822 = vunpack.c.l.s8.bf16 %v3254
        %v3823 = vunpack.c.l.s8.bf16 %v3255
        %v3824 = vunpack.c.l.s8.bf16 %v3256
        %v3825 = vunpack.c.l.s8.bf16 %v3257
        %v3826 = vunpack.c.l.s8.bf16 %v3258
        %v3827 = vunpack.c.l.s8.bf16 %v3259
        %v3828 = vunpack.c.l.s8.bf16 %v3260
        %v3829 = vunpack.c.l.s8.bf16 %v3261
        %v3830 = vunpack.c.h.s8.bf16 %v3254
        %v3831 = vunpack.c.h.s8.bf16 %v3255
        %v3832 = vunpack.c.h.s8.bf16 %v3256
        %v3833 = vunpack.c.h.s8.bf16 %v3257
        %v3834 = vunpack.c.h.s8.bf16 %v3258
        %v3835 = vunpack.c.h.s8.bf16 %v3259
        %v3836 = vunpack.c.h.s8.bf16 %v3260
        %v3837 = vunpack.c.h.s8.bf16 %v3261
        %v3838 = vunpack.c.l.s8.bf16 %v3262
        %v3839 = vunpack.c.l.s8.bf16 %v3263
        %v3840 = vunpack.c.l.s8.bf16 %v3264
        %v3841 = vunpack.c.l.s8.bf16 %v3265
        %v3842 = vunpack.c.l.s8.bf16 %v3266
        %v3843 = vunpack.c.l.s8.bf16 %v3267
        %v3844 = vunpack.c.l.s8.bf16 %v3268
        %v3845 = vunpack.c.l.s8.bf16 %v3269
        %v3846 = vunpack.c.h.s8.bf16 %v3262
        %v3847 = vunpack.c.h.s8.bf16 %v3263
        %v3848 = vunpack.c.h.s8.bf16 %v3264
        %v3849 = vunpack.c.h.s8.bf16 %v3265
        %v3850 = vunpack.c.h.s8.bf16 %v3266
        %v3851 = vunpack.c.h.s8.bf16 %v3267
        %v3852 = vunpack.c.h.s8.bf16 %v3268
        %v3853 = vunpack.c.h.s8.bf16 %v3269
        %v3854 = vunpack.c.l.s8.bf16 %v3270
        %v3855 = vunpack.c.l.s8.bf16 %v3271
        %v3856 = vunpack.c.l.s8.bf16 %v3272
        %v3857 = vunpack.c.l.s8.bf16 %v3273
        %v3858 = vunpack.c.l.s8.bf16 %v3274
        %v3859 = vunpack.c.l.s8.bf16 %v3275
        %v3860 = vunpack.c.l.s8.bf16 %v3276
        %v3861 = vunpack.c.l.s8.bf16 %v3277
        %v3862 = vunpack.c.h.s8.bf16 %v3270
        %v3863 = vunpack.c.h.s8.bf16 %v3271
        %v3864 = vunpack.c.h.s8.bf16 %v3272
        %v3865 = vunpack.c.h.s8.bf16 %v3273
        %v3866 = vunpack.c.h.s8.bf16 %v3274
        %v3867 = vunpack.c.h.s8.bf16 %v3275
        %v3868 = vunpack.c.h.s8.bf16 %v3276
        %v3869 = vunpack.c.h.s8.bf16 %v3277
        %v3870 = vunpack.c.l.s8.bf16 %v3278
        %v3871 = vunpack.c.l.s8.bf16 %v3279
        %v3872 = vunpack.c.l.s8.bf16 %v3280
        %v3873 = vunpack.c.l.s8.bf16 %v3281
        %v3874 = vunpack.c.l.s8.bf16 %v3282
        %v3875 = vunpack.c.l.s8.bf16 %v3283
        %v3876 = vunpack.c.l.s8.bf16 %v3284
        %v3877 = vunpack.c.l.s8.bf16 %v3285
        %v3878 = vunpack.c.h.s8.bf16 %v3278
        %v3879 = vunpack.c.h.s8.bf16 %v3279
        %v3880 = vunpack.c.h.s8.bf16 %v3280
        %v3881 = vunpack.c.h.s8.bf16 %v3281
        %v3882 = vunpack.c.h.s8.bf16 %v3282
        %v3883 = vunpack.c.h.s8.bf16 %v3283
        %v3884 = vunpack.c.h.s8.bf16 %v3284
        %v3885 = vunpack.c.h.s8.bf16 %v3285
        %v3886 = vunpack.c.l.s8.bf16 %v3286
        %v3887 = vunpack.c.l.s8.bf16 %v3287
        %v3888 = vunpack.c.l.s8.bf16 %v3288
        %v3889 = vunpack.c.l.s8.bf16 %v3289
        %v3890 = vunpack.c.l.s8.bf16 %v3290
        %v3891 = vunpack.c.l.s8.bf16 %v3291
        %v3892 = vunpack.c.l.s8.bf16 %v3292
        %v3893 = vunpack.c.l.s8.bf16 %v3293
        %v3894 = vunpack.c.h.s8.bf16 %v3286
        %v3895 = vunpack.c.h.s8.bf16 %v3287
        %v3896 = vunpack.c.h.s8.bf16 %v3288
        %v3897 = vunpack.c.h.s8.bf16 %v3289
        %v3898 = vunpack.c.h.s8.bf16 %v3290
        %v3899 = vunpack.c.h.s8.bf16 %v3291
        %v3900 = vunpack.c.h.s8.bf16 %v3292
        %v3901 = vunpack.c.h.s8.bf16 %v3293
        %v3902 = vunpack.c.l.s8.bf16 %v3294
        %v3903 = vunpack.c.l.s8.bf16 %v3295
        %v3904 = vunpack.c.l.s8.bf16 %v3296
        %v3905 = vunpack.c.l.s8.bf16 %v3297
        %v3906 = vunpack.c.l.s8.bf16 %v3298
        %v3907 = vunpack.c.l.s8.bf16 %v3299
        %v3908 = vunpack.c.l.s8.bf16 %v3300
        %v3909 = vunpack.c.l.s8.bf16 %v3301
        %v3910 = vunpack.c.h.s8.bf16 %v3294
        %v3911 = vunpack.c.h.s8.bf16 %v3295
        %v3912 = vunpack.c.h.s8.bf16 %v3296
        %v3913 = vunpack.c.h.s8.bf16 %v3297
        %v3914 = vunpack.c.h.s8.bf16 %v3298
        %v3915 = vunpack.c.h.s8.bf16 %v3299
        %v3916 = vunpack.c.h.s8.bf16 %v3300
        %v3917 = vunpack.c.h.s8.bf16 %v3301
        %v3918 = vunpack.c.l.s8.bf16 %v3302
        %v3919 = vunpack.c.l.s8.bf16 %v3303
        %v3920 = vunpack.c.l.s8.bf16 %v3304
        %v3921 = vunpack.c.l.s8.bf16 %v3305
        %v3922 = vunpack.c.l.s8.bf16 %v3306
        %v3923 = vunpack.c.l.s8.bf16 %v3307
        %v3924 = vunpack.c.l.s8.bf16 %v3308
        %v3925 = vunpack.c.l.s8.bf16 %v3309
        %v3926 = vunpack.c.h.s8.bf16 %v3302
        %v3927 = vunpack.c.h.s8.bf16 %v3303
        %v3928 = vunpack.c.h.s8.bf16 %v3304
        %v3929 = vunpack.c.h.s8.bf16 %v3305
        %v3930 = vunpack.c.h.s8.bf16 %v3306
        %v3931 = vunpack.c.h.s8.bf16 %v3307
        %v3932 = vunpack.c.h.s8.bf16 %v3308
        %v3933 = vunpack.c.h.s8.bf16 %v3309
        %v3934 = vunpack.c.l.s8.bf16 %v3310
        %v3935 = vunpack.c.l.s8.bf16 %v3311
        %v3936 = vunpack.c.l.s8.bf16 %v3312
        %v3937 = vunpack.c.l.s8.bf16 %v3313
        %v3938 = vunpack.c.l.s8.bf16 %v3314
        %v3939 = vunpack.c.l.s8.bf16 %v3315
        %v3940 = vunpack.c.l.s8.bf16 %v3316
        %v3941 = vunpack.c.l.s8.bf16 %v3317
        %v3942 = vunpack.c.h.s8.bf16 %v3310
        %v3943 = vunpack.c.h.s8.bf16 %v3311
        %v3944 = vunpack.c.h.s8.bf16 %v3312
        %v3945 = vunpack.c.h.s8.bf16 %v3313
        %v3946 = vunpack.c.h.s8.bf16 %v3314
        %v3947 = vunpack.c.h.s8.bf16 %v3315
        %v3948 = vunpack.c.h.s8.bf16 %v3316
        %v3949 = vunpack.c.h.s8.bf16 %v3317
        %v3950 = vunpack.c.l.s8.bf16 %v3318
        %v3951 = vunpack.c.l.s8.bf16 %v3319
        %v3952 = vunpack.c.l.s8.bf16 %v3320
        %v3953 = vunpack.c.l.s8.bf16 %v3321
        %v3954 = vunpack.c.l.s8.bf16 %v3322
        %v3955 = vunpack.c.l.s8.bf16 %v3323
        %v3956 = vunpack.c.l.s8.bf16 %v3324
        %v3957 = vunpack.c.l.s8.bf16 %v3325
        %v3958 = vunpack.c.h.s8.bf16 %v3318
        %v3959 = vunpack.c.h.s8.bf16 %v3319
        %v3960 = vunpack.c.h.s8.bf16 %v3320
        %v3961 = vunpack.c.h.s8.bf16 %v3321
        %v3962 = vunpack.c.h.s8.bf16 %v3322
        %v3963 = vunpack.c.h.s8.bf16 %v3323
        %v3964 = vunpack.c.h.s8.bf16 %v3324
        %v3965 = vunpack.c.h.s8.bf16 %v3325
        %v3966 = vunpack.c.l.s8.bf16 %v3326
        %v3967 = vunpack.c.l.s8.bf16 %v3327
        %v3968 = vunpack.c.l.s8.bf16 %v3328
        %v3969 = vunpack.c.l.s8.bf16 %v3329
        %v3970 = vunpack.c.l.s8.bf16 %v3330
        %v3971 = vunpack.c.l.s8.bf16 %v3331
        %v3972 = vunpack.c.l.s8.bf16 %v3332
        %v3973 = vunpack.c.l.s8.bf16 %v3333
        %v3974 = vunpack.c.h.s8.bf16 %v3326
        %v3975 = vunpack.c.h.s8.bf16 %v3327
        %v3976 = vunpack.c.h.s8.bf16 %v3328
        %v3977 = vunpack.c.h.s8.bf16 %v3329
        %v3978 = vunpack.c.h.s8.bf16 %v3330
        %v3979 = vunpack.c.h.s8.bf16 %v3331
        %v3980 = vunpack.c.h.s8.bf16 %v3332
        %v3981 = vunpack.c.h.s8.bf16 %v3333
        %v3982 = vunpack.c.l.s8.bf16 %v3334
        %v3983 = vunpack.c.l.s8.bf16 %v3335
        %v3984 = vunpack.c.l.s8.bf16 %v3336
        %v3985 = vunpack.c.l.s8.bf16 %v3337
        %v3986 = vunpack.c.l.s8.bf16 %v3338
        %v3987 = vunpack.c.l.s8.bf16 %v3339
        %v3988 = vunpack.c.l.s8.bf16 %v3340
        %v3989 = vunpack.c.l.s8.bf16 %v3341
        %v3990 = vunpack.c.h.s8.bf16 %v3334
        %v3991 = vunpack.c.h.s8.bf16 %v3335
        %v3992 = vunpack.c.h.s8.bf16 %v3336
        %v3993 = vunpack.c.h.s8.bf16 %v3337
        %v3994 = vunpack.c.h.s8.bf16 %v3338
        %v3995 = vunpack.c.h.s8.bf16 %v3339
        %v3996 = vunpack.c.h.s8.bf16 %v3340
        %v3997 = vunpack.c.h.s8.bf16 %v3341
        %v3998 = vunpack.c.l.s8.bf16 %v3342
        %v3999 = vunpack.c.l.s8.bf16 %v3343
        %v4000 = vunpack.c.l.s8.bf16 %v3344
        %v4001 = vunpack.c.l.s8.bf16 %v3345
        %v4002 = vunpack.c.l.s8.bf16 %v3346
        %v4003 = vunpack.c.l.s8.bf16 %v3347
        %v4004 = vunpack.c.l.s8.bf16 %v3348
        %v4005 = vunpack.c.l.s8.bf16 %v3349
        %v4006 = vunpack.c.h.s8.bf16 %v3342
        %v4007 = vunpack.c.h.s8.bf16 %v3343
        %v4008 = vunpack.c.h.s8.bf16 %v3344
        %v4009 = vunpack.c.h.s8.bf16 %v3345
        %v4010 = vunpack.c.h.s8.bf16 %v3346
        %v4011 = vunpack.c.h.s8.bf16 %v3347
        %v4012 = vunpack.c.h.s8.bf16 %v3348
        %v4013 = vunpack.c.h.s8.bf16 %v3349
        %v4014 = vunpack.c.l.s8.bf16 %v3350
        %v4015 = vunpack.c.l.s8.bf16 %v3351
        %v4016 = vunpack.c.l.s8.bf16 %v3352
        %v4017 = vunpack.c.l.s8.bf16 %v3353
        %v4018 = vunpack.c.l.s8.bf16 %v3354
        %v4019 = vunpack.c.l.s8.bf16 %v3355
        %v4020 = vunpack.c.l.s8.bf16 %v3356
        %v4021 = vunpack.c.l.s8.bf16 %v3357
        %v4022 = vunpack.c.h.s8.bf16 %v3350
        %v4023 = vunpack.c.h.s8.bf16 %v3351
        %v4024 = vunpack.c.h.s8.bf16 %v3352
        %v4025 = vunpack.c.h.s8.bf16 %v3353
        %v4026 = vunpack.c.h.s8.bf16 %v3354
        %v4027 = vunpack.c.h.s8.bf16 %v3355
        %v4028 = vunpack.c.h.s8.bf16 %v3356
        %v4029 = vunpack.c.h.s8.bf16 %v3357
        %v4030 = vunpack.c.l.s8.bf16 %v3358
        %v4031 = vunpack.c.l.s8.bf16 %v3359
        %v4032 = vunpack.c.l.s8.bf16 %v3360
        %v4033 = vunpack.c.l.s8.bf16 %v3361
        %v4034 = vunpack.c.l.s8.bf16 %v3362
        %v4035 = vunpack.c.l.s8.bf16 %v3363
        %v4036 = vunpack.c.l.s8.bf16 %v3364
        %v4037 = vunpack.c.l.s8.bf16 %v3365
        %v4038 = vunpack.c.h.s8.bf16 %v3358
        %v4039 = vunpack.c.h.s8.bf16 %v3359
        %v4040 = vunpack.c.h.s8.bf16 %v3360
        %v4041 = vunpack.c.h.s8.bf16 %v3361
        %v4042 = vunpack.c.h.s8.bf16 %v3362
        %v4043 = vunpack.c.h.s8.bf16 %v3363
        %v4044 = vunpack.c.h.s8.bf16 %v3364
        %v4045 = vunpack.c.h.s8.bf16 %v3365
        %v4046 = vunpack.c.l.s8.bf16 %v3366
        %v4047 = vunpack.c.l.s8.bf16 %v3367
        %v4048 = vunpack.c.l.s8.bf16 %v3368
        %v4049 = vunpack.c.l.s8.bf16 %v3369
        %v4050 = vunpack.c.l.s8.bf16 %v3370
        %v4051 = vunpack.c.l.s8.bf16 %v3371
        %v4052 = vunpack.c.l.s8.bf16 %v3372
        %v4053 = vunpack.c.l.s8.bf16 %v3373
        %v4054 = vunpack.c.h.s8.bf16 %v3366
        %v4055 = vunpack.c.h.s8.bf16 %v3367
        %v4056 = vunpack.c.h.s8.bf16 %v3368
        %v4057 = vunpack.c.h.s8.bf16 %v3369
        %v4058 = vunpack.c.h.s8.bf16 %v3370
        %v4059 = vunpack.c.h.s8.bf16 %v3371
        %v4060 = vunpack.c.h.s8.bf16 %v3372
        %v4061 = vunpack.c.h.s8.bf16 %v3373
        %v4062 = vunpack.c.l.s8.bf16 %v3374
        %v4063 = vunpack.c.l.s8.bf16 %v3375
        %v4064 = vunpack.c.l.s8.bf16 %v3376
        %v4065 = vunpack.c.l.s8.bf16 %v3377
        %v4066 = vunpack.c.l.s8.bf16 %v3378
        %v4067 = vunpack.c.l.s8.bf16 %v3379
        %v4068 = vunpack.c.l.s8.bf16 %v3380
        %v4069 = vunpack.c.l.s8.bf16 %v3381
        %v4070 = vunpack.c.h.s8.bf16 %v3374
        %v4071 = vunpack.c.h.s8.bf16 %v3375
        %v4072 = vunpack.c.h.s8.bf16 %v3376
        %v4073 = vunpack.c.h.s8.bf16 %v3377
        %v4074 = vunpack.c.h.s8.bf16 %v3378
        %v4075 = vunpack.c.h.s8.bf16 %v3379
        %v4076 = vunpack.c.h.s8.bf16 %v3380
        %v4077 = vunpack.c.h.s8.bf16 %v3381
        %v4078 = vunpack.c.l.s8.bf16 %v3382
        %v4079 = vunpack.c.l.s8.bf16 %v3383
        %v4080 = vunpack.c.l.s8.bf16 %v3384
        %v4081 = vunpack.c.l.s8.bf16 %v3385
        %v4082 = vunpack.c.l.s8.bf16 %v3386
        %v4083 = vunpack.c.l.s8.bf16 %v3387
        %v4084 = vunpack.c.l.s8.bf16 %v3388
        %v4085 = vunpack.c.l.s8.bf16 %v3389
        %v4086 = vunpack.c.h.s8.bf16 %v3382
        %v4087 = vunpack.c.h.s8.bf16 %v3383
        %v4088 = vunpack.c.h.s8.bf16 %v3384
        %v4089 = vunpack.c.h.s8.bf16 %v3385
        %v4090 = vunpack.c.h.s8.bf16 %v3386
        %v4091 = vunpack.c.h.s8.bf16 %v3387
        %v4092 = vunpack.c.h.s8.bf16 %v3388
        %v4093 = vunpack.c.h.s8.bf16 %v3389
        %v4094 = vunpack.c.l.s8.bf16 %v3390
        %v4095 = vunpack.c.l.s8.bf16 %v3391
        %v4096 = vunpack.c.l.s8.bf16 %v3392
        %v4097 = vunpack.c.l.s8.bf16 %v3393
        %v4098 = vunpack.c.l.s8.bf16 %v3394
        %v4099 = vunpack.c.l.s8.bf16 %v3395
        %v4100 = vunpack.c.l.s8.bf16 %v3396
        %v4101 = vunpack.c.l.s8.bf16 %v3397
        %v4102 = vunpack.c.h.s8.bf16 %v3390
        %v4103 = vunpack.c.h.s8.bf16 %v3391
        %v4104 = vunpack.c.h.s8.bf16 %v3392
        %v4105 = vunpack.c.h.s8.bf16 %v3393
        %v4106 = vunpack.c.h.s8.bf16 %v3394
        %v4107 = vunpack.c.h.s8.bf16 %v3395
        %v4108 = vunpack.c.h.s8.bf16 %v3396
        %v4109 = vunpack.c.h.s8.bf16 %v3397
        %v4110 = vunpack.c.l.s8.bf16 %v3398
        %v4111 = vunpack.c.l.s8.bf16 %v3399
        %v4112 = vunpack.c.l.s8.bf16 %v3400
        %v4113 = vunpack.c.l.s8.bf16 %v3401
        %v4114 = vunpack.c.l.s8.bf16 %v3402
        %v4115 = vunpack.c.l.s8.bf16 %v3403
        %v4116 = vunpack.c.l.s8.bf16 %v3404
        %v4117 = vunpack.c.l.s8.bf16 %v3405
        %v4118 = vunpack.c.h.s8.bf16 %v3398
        %v4119 = vunpack.c.h.s8.bf16 %v3399
        %v4120 = vunpack.c.h.s8.bf16 %v3400
        %v4121 = vunpack.c.h.s8.bf16 %v3401
        %v4122 = vunpack.c.h.s8.bf16 %v3402
        %v4123 = vunpack.c.h.s8.bf16 %v3403
        %v4124 = vunpack.c.h.s8.bf16 %v3404
        %v4125 = vunpack.c.h.s8.bf16 %v3405
        %v4126 = vunpack.c.l.s8.bf16 %v3406
        %v4127 = vunpack.c.l.s8.bf16 %v3407
        %v4128 = vunpack.c.l.s8.bf16 %v3408
        %v4129 = vunpack.c.l.s8.bf16 %v3409
        %v4130 = vunpack.c.l.s8.bf16 %v3410
        %v4131 = vunpack.c.l.s8.bf16 %v3411
        %v4132 = vunpack.c.l.s8.bf16 %v3412
        %v4133 = vunpack.c.l.s8.bf16 %v3413
        %v4134 = vunpack.c.h.s8.bf16 %v3406
        %v4135 = vunpack.c.h.s8.bf16 %v3407
        %v4136 = vunpack.c.h.s8.bf16 %v3408
        %v4137 = vunpack.c.h.s8.bf16 %v3409
        %v4138 = vunpack.c.h.s8.bf16 %v3410
        %v4139 = vunpack.c.h.s8.bf16 %v3411
        %v4140 = vunpack.c.h.s8.bf16 %v3412
        %v4141 = vunpack.c.h.s8.bf16 %v3413
        %v4142 = vunpack.c.l.s8.bf16 %v3414
        %v4143 = vunpack.c.l.s8.bf16 %v3415
        %v4144 = vunpack.c.l.s8.bf16 %v3416
        %v4145 = vunpack.c.l.s8.bf16 %v3417
        %v4146 = vunpack.c.l.s8.bf16 %v3418
        %v4147 = vunpack.c.l.s8.bf16 %v3419
        %v4148 = vunpack.c.l.s8.bf16 %v3420
        %v4149 = vunpack.c.l.s8.bf16 %v3421
        %v4150 = vunpack.c.h.s8.bf16 %v3414
        %v4151 = vunpack.c.h.s8.bf16 %v3415
        %v4152 = vunpack.c.h.s8.bf16 %v3416
        %v4153 = vunpack.c.h.s8.bf16 %v3417
        %v4154 = vunpack.c.h.s8.bf16 %v3418
        %v4155 = vunpack.c.h.s8.bf16 %v3419
        %v4156 = vunpack.c.h.s8.bf16 %v3420
        %v4157 = vunpack.c.h.s8.bf16 %v3421
        %v4158 = vunpack.c.l.s8.bf16 %v3422
        %v4159 = vunpack.c.l.s8.bf16 %v3423
        %v4160 = vunpack.c.l.s8.bf16 %v3424
        %v4161 = vunpack.c.l.s8.bf16 %v3425
        %v4162 = vunpack.c.l.s8.bf16 %v3426
        %v4163 = vunpack.c.l.s8.bf16 %v3427
        %v4164 = vunpack.c.l.s8.bf16 %v3428
        %v4165 = vunpack.c.l.s8.bf16 %v3429
        %v4166 = vunpack.c.h.s8.bf16 %v3422
        %v4167 = vunpack.c.h.s8.bf16 %v3423
        %v4168 = vunpack.c.h.s8.bf16 %v3424
        %v4169 = vunpack.c.h.s8.bf16 %v3425
        %v4170 = vunpack.c.h.s8.bf16 %v3426
        %v4171 = vunpack.c.h.s8.bf16 %v3427
        %v4172 = vunpack.c.h.s8.bf16 %v3428
        %v4173 = vunpack.c.h.s8.bf16 %v3429
        %v4174 = vunpack.c.l.s8.bf16 %v3430
        %v4175 = vunpack.c.l.s8.bf16 %v3431
        %v4176 = vunpack.c.l.s8.bf16 %v3432
        %v4177 = vunpack.c.l.s8.bf16 %v3433
        %v4178 = vunpack.c.l.s8.bf16 %v3434
        %v4179 = vunpack.c.l.s8.bf16 %v3435
        %v4180 = vunpack.c.l.s8.bf16 %v3436
        %v4181 = vunpack.c.l.s8.bf16 %v3437
        %v4182 = vunpack.c.h.s8.bf16 %v3430
        %v4183 = vunpack.c.h.s8.bf16 %v3431
        %v4184 = vunpack.c.h.s8.bf16 %v3432
        %v4185 = vunpack.c.h.s8.bf16 %v3433
        %v4186 = vunpack.c.h.s8.bf16 %v3434
        %v4187 = vunpack.c.h.s8.bf16 %v3435
        %v4188 = vunpack.c.h.s8.bf16 %v3436
        %v4189 = vunpack.c.h.s8.bf16 %v3437
        %v4190 = vunpack.c.l.s8.bf16 %v3438
        %v4191 = vunpack.c.l.s8.bf16 %v3439
        %v4192 = vunpack.c.l.s8.bf16 %v3440
        %v4193 = vunpack.c.l.s8.bf16 %v3441
        %v4194 = vunpack.c.l.s8.bf16 %v3442
        %v4195 = vunpack.c.l.s8.bf16 %v3443
        %v4196 = vunpack.c.l.s8.bf16 %v3444
        %v4197 = vunpack.c.l.s8.bf16 %v3445
        %v4198 = vunpack.c.h.s8.bf16 %v3438
        %v4199 = vunpack.c.h.s8.bf16 %v3439
        %v4200 = vunpack.c.h.s8.bf16 %v3440
        %v4201 = vunpack.c.h.s8.bf16 %v3441
        %v4202 = vunpack.c.h.s8.bf16 %v3442
        %v4203 = vunpack.c.h.s8.bf16 %v3443
        %v4204 = vunpack.c.h.s8.bf16 %v3444
        %v4205 = vunpack.c.h.s8.bf16 %v3445
        %v4206 = vunpack.c.l.s8.bf16 %v3446
        %v4207 = vunpack.c.l.s8.bf16 %v3447
        %v4208 = vunpack.c.l.s8.bf16 %v3448
        %v4209 = vunpack.c.l.s8.bf16 %v3449
        %v4210 = vunpack.c.l.s8.bf16 %v3450
        %v4211 = vunpack.c.l.s8.bf16 %v3451
        %v4212 = vunpack.c.l.s8.bf16 %v3452
        %v4213 = vunpack.c.l.s8.bf16 %v3453
        %v4214 = vunpack.c.h.s8.bf16 %v3446
        %v4215 = vunpack.c.h.s8.bf16 %v3447
        %v4216 = vunpack.c.h.s8.bf16 %v3448
        %v4217 = vunpack.c.h.s8.bf16 %v3449
        %v4218 = vunpack.c.h.s8.bf16 %v3450
        %v4219 = vunpack.c.h.s8.bf16 %v3451
        %v4220 = vunpack.c.h.s8.bf16 %v3452
        %v4221 = vunpack.c.h.s8.bf16 %v3453
        %v4222 = vunpack.c.l.s8.bf16 %v3454
        %v4223 = vunpack.c.l.s8.bf16 %v3455
        %v4224 = vunpack.c.l.s8.bf16 %v3456
        %v4225 = vunpack.c.l.s8.bf16 %v3457
        %v4226 = vunpack.c.l.s8.bf16 %v3458
        %v4227 = vunpack.c.l.s8.bf16 %v3459
        %v4228 = vunpack.c.l.s8.bf16 %v3460
        %v4229 = vunpack.c.l.s8.bf16 %v3461
        %v4230 = vunpack.c.h.s8.bf16 %v3454
        %v4231 = vunpack.c.h.s8.bf16 %v3455
        %v4232 = vunpack.c.h.s8.bf16 %v3456
        %v4233 = vunpack.c.h.s8.bf16 %v3457
        %v4234 = vunpack.c.h.s8.bf16 %v3458
        %v4235 = vunpack.c.h.s8.bf16 %v3459
        %v4236 = vunpack.c.h.s8.bf16 %v3460
        %v4237 = vunpack.c.h.s8.bf16 %v3461
        %v4238 = vunpack.c.l.s8.bf16 %v3462
        %v4239 = vunpack.c.l.s8.bf16 %v3463
        %v4240 = vunpack.c.l.s8.bf16 %v3464
        %v4241 = vunpack.c.l.s8.bf16 %v3465
        %v4242 = vunpack.c.l.s8.bf16 %v3466
        %v4243 = vunpack.c.l.s8.bf16 %v3467
        %v4244 = vunpack.c.l.s8.bf16 %v3468
        %v4245 = vunpack.c.l.s8.bf16 %v3469
        %v4246 = vunpack.c.h.s8.bf16 %v3462
        %v4247 = vunpack.c.h.s8.bf16 %v3463
        %v4248 = vunpack.c.h.s8.bf16 %v3464
        %v4249 = vunpack.c.h.s8.bf16 %v3465
        %v4250 = vunpack.c.h.s8.bf16 %v3466
        %v4251 = vunpack.c.h.s8.bf16 %v3467
        %v4252 = vunpack.c.h.s8.bf16 %v3468
        %v4253 = vunpack.c.h.s8.bf16 %v3469
        %v4254 = vunpack.c.l.s8.bf16 %v3470
        %v4255 = vunpack.c.l.s8.bf16 %v3471
        %v4256 = vunpack.c.l.s8.bf16 %v3472
        %v4257 = vunpack.c.l.s8.bf16 %v3473
        %v4258 = vunpack.c.l.s8.bf16 %v3474
        %v4259 = vunpack.c.l.s8.bf16 %v3475
        %v4260 = vunpack.c.l.s8.bf16 %v3476
        %v4261 = vunpack.c.l.s8.bf16 %v3477
        %v4262 = vunpack.c.h.s8.bf16 %v3470
        %v4263 = vunpack.c.h.s8.bf16 %v3471
        %v4264 = vunpack.c.h.s8.bf16 %v3472
        %v4265 = vunpack.c.h.s8.bf16 %v3473
        %v4266 = vunpack.c.h.s8.bf16 %v3474
        %v4267 = vunpack.c.h.s8.bf16 %v3475
        %v4268 = vunpack.c.h.s8.bf16 %v3476
        %v4269 = vunpack.c.h.s8.bf16 %v3477
        %v4270 = vunpack.c.l.s8.bf16 %v3478
        %v4271 = vunpack.c.l.s8.bf16 %v3479
        %v4272 = vunpack.c.l.s8.bf16 %v3480
        %v4273 = vunpack.c.l.s8.bf16 %v3481
        %v4274 = vunpack.c.l.s8.bf16 %v3482
        %v4275 = vunpack.c.l.s8.bf16 %v3483
        %v4276 = vunpack.c.l.s8.bf16 %v3484
        %v4277 = vunpack.c.l.s8.bf16 %v3485
        %v4278 = vunpack.c.h.s8.bf16 %v3478
        %v4279 = vunpack.c.h.s8.bf16 %v3479
        %v4280 = vunpack.c.h.s8.bf16 %v3480
        %v4281 = vunpack.c.h.s8.bf16 %v3481
        %v4282 = vunpack.c.h.s8.bf16 %v3482
        %v4283 = vunpack.c.h.s8.bf16 %v3483
        %v4284 = vunpack.c.h.s8.bf16 %v3484
        %v4285 = vunpack.c.h.s8.bf16 %v3485
        %v4286 = vunpack.c.l.s8.bf16 %v3486
        %v4287 = vunpack.c.l.s8.bf16 %v3487
        %v4288 = vunpack.c.l.s8.bf16 %v3488
        %v4289 = vunpack.c.l.s8.bf16 %v3489
        %v4290 = vunpack.c.l.s8.bf16 %v3490
        %v4291 = vunpack.c.l.s8.bf16 %v3491
        %v4292 = vunpack.c.l.s8.bf16 %v3492
        %v4293 = vunpack.c.l.s8.bf16 %v3493
        %v4294 = vunpack.c.h.s8.bf16 %v3486
        %v4295 = vunpack.c.h.s8.bf16 %v3487
        %v4296 = vunpack.c.h.s8.bf16 %v3488
        %v4297 = vunpack.c.h.s8.bf16 %v3489
        %v4298 = vunpack.c.h.s8.bf16 %v3490
        %v4299 = vunpack.c.h.s8.bf16 %v3491
        %v4300 = vunpack.c.h.s8.bf16 %v3492
        %v4301 = vunpack.c.h.s8.bf16 %v3493
        %v4302 = vunpack.c.l.s8.bf16 %v3494
        %v4303 = vunpack.c.l.s8.bf16 %v3495
        %v4304 = vunpack.c.l.s8.bf16 %v3496
        %v4305 = vunpack.c.l.s8.bf16 %v3497
        %v4306 = vunpack.c.l.s8.bf16 %v3498
        %v4307 = vunpack.c.l.s8.bf16 %v3499
        %v4308 = vunpack.c.l.s8.bf16 %v3500
        %v4309 = vunpack.c.l.s8.bf16 %v3501
        %v4310 = vunpack.c.h.s8.bf16 %v3494
        %v4311 = vunpack.c.h.s8.bf16 %v3495
        %v4312 = vunpack.c.h.s8.bf16 %v3496
        %v4313 = vunpack.c.h.s8.bf16 %v3497
        %v4314 = vunpack.c.h.s8.bf16 %v3498
        %v4315 = vunpack.c.h.s8.bf16 %v3499
        %v4316 = vunpack.c.h.s8.bf16 %v3500
        %v4317 = vunpack.c.h.s8.bf16 %v3501
        %v4318 = vunpack.c.l.s8.bf16 %v3502
        %v4319 = vunpack.c.l.s8.bf16 %v3503
        %v4320 = vunpack.c.l.s8.bf16 %v3504
        %v4321 = vunpack.c.l.s8.bf16 %v3505
        %v4322 = vunpack.c.l.s8.bf16 %v3506
        %v4323 = vunpack.c.l.s8.bf16 %v3507
        %v4324 = vunpack.c.l.s8.bf16 %v3508
        %v4325 = vunpack.c.l.s8.bf16 %v3509
        %v4326 = vunpack.c.h.s8.bf16 %v3502
        %v4327 = vunpack.c.h.s8.bf16 %v3503
        %v4328 = vunpack.c.h.s8.bf16 %v3504
        %v4329 = vunpack.c.h.s8.bf16 %v3505
        %v4330 = vunpack.c.h.s8.bf16 %v3506
        %v4331 = vunpack.c.h.s8.bf16 %v3507
        %v4332 = vunpack.c.h.s8.bf16 %v3508
        %v4333 = vunpack.c.h.s8.bf16 %v3509
        %v4334 = vunpack.c.l.s8.bf16 %v3510
        %v4335 = vunpack.c.l.s8.bf16 %v3511
        %v4336 = vunpack.c.l.s8.bf16 %v3512
        %v4337 = vunpack.c.l.s8.bf16 %v3513
        %v4338 = vunpack.c.l.s8.bf16 %v3514
        %v4339 = vunpack.c.l.s8.bf16 %v3515
        %v4340 = vunpack.c.l.s8.bf16 %v3516
        %v4341 = vunpack.c.l.s8.bf16 %v3517
        %v4342 = vunpack.c.h.s8.bf16 %v3510
        %v4343 = vunpack.c.h.s8.bf16 %v3511
        %v4344 = vunpack.c.h.s8.bf16 %v3512
        %v4345 = vunpack.c.h.s8.bf16 %v3513
        %v4346 = vunpack.c.h.s8.bf16 %v3514
        %v4347 = vunpack.c.h.s8.bf16 %v3515
        %v4348 = vunpack.c.h.s8.bf16 %v3516
        %v4349 = vunpack.c.h.s8.bf16 %v3517
        %v4350 = vunpack.c.l.s8.bf16 %v3518
        %v4351 = vunpack.c.l.s8.bf16 %v3519
        %v4352 = vunpack.c.l.s8.bf16 %v3520
        %v4353 = vunpack.c.l.s8.bf16 %v3521
        %v4354 = vunpack.c.l.s8.bf16 %v3522
        %v4355 = vunpack.c.l.s8.bf16 %v3523
        %v4356 = vunpack.c.l.s8.bf16 %v3524
        %v4357 = vunpack.c.l.s8.bf16 %v3525
        %v4358 = vunpack.c.h.s8.bf16 %v3518
        %v4359 = vunpack.c.h.s8.bf16 %v3519
        %v4360 = vunpack.c.h.s8.bf16 %v3520
        %v4361 = vunpack.c.h.s8.bf16 %v3521
        %v4362 = vunpack.c.h.s8.bf16 %v3522
        %v4363 = vunpack.c.h.s8.bf16 %v3523
        %v4364 = vunpack.c.h.s8.bf16 %v3524
        %v4365 = vunpack.c.h.s8.bf16 %v3525
        %v4366 = vunpack.c.l.s8.bf16 %v3526
        %v4367 = vunpack.c.l.s8.bf16 %v3527
        %v4368 = vunpack.c.l.s8.bf16 %v3528
        %v4369 = vunpack.c.l.s8.bf16 %v3529
        %v4370 = vunpack.c.l.s8.bf16 %v3530
        %v4371 = vunpack.c.l.s8.bf16 %v3531
        %v4372 = vunpack.c.l.s8.bf16 %v3532
        %v4373 = vunpack.c.l.s8.bf16 %v3533
        %v4374 = vunpack.c.h.s8.bf16 %v3526
        %v4375 = vunpack.c.h.s8.bf16 %v3527
        %v4376 = vunpack.c.h.s8.bf16 %v3528
        %v4377 = vunpack.c.h.s8.bf16 %v3529
        %v4378 = vunpack.c.h.s8.bf16 %v3530
        %v4379 = vunpack.c.h.s8.bf16 %v3531
        %v4380 = vunpack.c.h.s8.bf16 %v3532
        %v4381 = vunpack.c.h.s8.bf16 %v3533
        %v4382 = vunpack.c.l.s8.bf16 %v3534
        %v4383 = vunpack.c.l.s8.bf16 %v3535
        %v4384 = vunpack.c.l.s8.bf16 %v3536
        %v4385 = vunpack.c.l.s8.bf16 %v3537
        %v4386 = vunpack.c.l.s8.bf16 %v3538
        %v4387 = vunpack.c.l.s8.bf16 %v3539
        %v4388 = vunpack.c.l.s8.bf16 %v3540
        %v4389 = vunpack.c.l.s8.bf16 %v3541
        %v4390 = vunpack.c.h.s8.bf16 %v3534
        %v4391 = vunpack.c.h.s8.bf16 %v3535
        %v4392 = vunpack.c.h.s8.bf16 %v3536
        %v4393 = vunpack.c.h.s8.bf16 %v3537
        %v4394 = vunpack.c.h.s8.bf16 %v3538
        %v4395 = vunpack.c.h.s8.bf16 %v3539
        %v4396 = vunpack.c.h.s8.bf16 %v3540
        %v4397 = vunpack.c.h.s8.bf16 %v3541
        %v4398 = vunpack.c.l.s8.bf16 %v3542
        %v4399 = vunpack.c.l.s8.bf16 %v3543
        %v4400 = vunpack.c.l.s8.bf16 %v3544
        %v4401 = vunpack.c.l.s8.bf16 %v3545
        %v4402 = vunpack.c.l.s8.bf16 %v3546
        %v4403 = vunpack.c.l.s8.bf16 %v3547
        %v4404 = vunpack.c.l.s8.bf16 %v3548
        %v4405 = vunpack.c.l.s8.bf16 %v3549
        %v4406 = vunpack.c.h.s8.bf16 %v3542
        %v4407 = vunpack.c.h.s8.bf16 %v3543
        %v4408 = vunpack.c.h.s8.bf16 %v3544
        %v4409 = vunpack.c.h.s8.bf16 %v3545
        %v4410 = vunpack.c.h.s8.bf16 %v3546
        %v4411 = vunpack.c.h.s8.bf16 %v3547
        %v4412 = vunpack.c.h.s8.bf16 %v3548
        %v4413 = vunpack.c.h.s8.bf16 %v3549
        %v4414 = vunpack.c.l.s8.bf16 %v3550
        %v4415 = vunpack.c.l.s8.bf16 %v3551
        %v4416 = vunpack.c.l.s8.bf16 %v3552
        %v4417 = vunpack.c.l.s8.bf16 %v3553
        %v4418 = vunpack.c.l.s8.bf16 %v3554
        %v4419 = vunpack.c.l.s8.bf16 %v3555
        %v4420 = vunpack.c.l.s8.bf16 %v3556
        %v4421 = vunpack.c.l.s8.bf16 %v3557
        %v4422 = vunpack.c.h.s8.bf16 %v3550
        %v4423 = vunpack.c.h.s8.bf16 %v3551
        %v4424 = vunpack.c.h.s8.bf16 %v3552
        %v4425 = vunpack.c.h.s8.bf16 %v3553
        %v4426 = vunpack.c.h.s8.bf16 %v3554
        %v4427 = vunpack.c.h.s8.bf16 %v3555
        %v4428 = vunpack.c.h.s8.bf16 %v3556
        %v4429 = vunpack.c.h.s8.bf16 %v3557
        %v4430 = vunpack.c.l.s8.bf16 %v3558
        %v4431 = vunpack.c.l.s8.bf16 %v3559
        %v4432 = vunpack.c.l.s8.bf16 %v3560
        %v4433 = vunpack.c.l.s8.bf16 %v3561
        %v4434 = vunpack.c.l.s8.bf16 %v3562
        %v4435 = vunpack.c.l.s8.bf16 %v3563
        %v4436 = vunpack.c.l.s8.bf16 %v3564
        %v4437 = vunpack.c.l.s8.bf16 %v3565
        %v4438 = vunpack.c.h.s8.bf16 %v3558
        %v4439 = vunpack.c.h.s8.bf16 %v3559
        %v4440 = vunpack.c.h.s8.bf16 %v3560
        %v4441 = vunpack.c.h.s8.bf16 %v3561
        %v4442 = vunpack.c.h.s8.bf16 %v3562
        %v4443 = vunpack.c.h.s8.bf16 %v3563
        %v4444 = vunpack.c.h.s8.bf16 %v3564
        %v4445 = vunpack.c.h.s8.bf16 %v3565
        %v4446 = vunpack.c.l.s8.bf16 %v3566
        %v4447 = vunpack.c.l.s8.bf16 %v3567
        %v4448 = vunpack.c.l.s8.bf16 %v3568
        %v4449 = vunpack.c.l.s8.bf16 %v3569
        %v4450 = vunpack.c.l.s8.bf16 %v3570
        %v4451 = vunpack.c.l.s8.bf16 %v3571
        %v4452 = vunpack.c.l.s8.bf16 %v3572
        %v4453 = vunpack.c.l.s8.bf16 %v3573
        %v4454 = vunpack.c.h.s8.bf16 %v3566
        %v4455 = vunpack.c.h.s8.bf16 %v3567
        %v4456 = vunpack.c.h.s8.bf16 %v3568
        %v4457 = vunpack.c.h.s8.bf16 %v3569
        %v4458 = vunpack.c.h.s8.bf16 %v3570
        %v4459 = vunpack.c.h.s8.bf16 %v3571
        %v4460 = vunpack.c.h.s8.bf16 %v3572
        %v4461 = vunpack.c.h.s8.bf16 %v3573
        %v4462 = vunpack.c.l.s8.bf16 %v3574
        %v4463 = vunpack.c.l.s8.bf16 %v3575
        %v4464 = vunpack.c.l.s8.bf16 %v3576
        %v4465 = vunpack.c.l.s8.bf16 %v3577
        %v4466 = vunpack.c.l.s8.bf16 %v3578
        %v4467 = vunpack.c.l.s8.bf16 %v3579
        %v4468 = vunpack.c.l.s8.bf16 %v3580
        %v4469 = vunpack.c.l.s8.bf16 %v3581
        %v4470 = vunpack.c.h.s8.bf16 %v3574
        %v4471 = vunpack.c.h.s8.bf16 %v3575
        %v4472 = vunpack.c.h.s8.bf16 %v3576
        %v4473 = vunpack.c.h.s8.bf16 %v3577
        %v4474 = vunpack.c.h.s8.bf16 %v3578
        %v4475 = vunpack.c.h.s8.bf16 %v3579
        %v4476 = vunpack.c.h.s8.bf16 %v3580
        %v4477 = vunpack.c.h.s8.bf16 %v3581
        %v4478 = vunpack.c.l.s8.bf16 %v3582
        %v4479 = vunpack.c.l.s8.bf16 %v3583
        %v4480 = vunpack.c.l.s8.bf16 %v3584
        %v4481 = vunpack.c.l.s8.bf16 %v3585
        %v4482 = vunpack.c.l.s8.bf16 %v3586
        %v4483 = vunpack.c.l.s8.bf16 %v3587
        %v4484 = vunpack.c.l.s8.bf16 %v3588
        %v4485 = vunpack.c.l.s8.bf16 %v3589
        %v4486 = vunpack.c.h.s8.bf16 %v3582
        %v4487 = vunpack.c.h.s8.bf16 %v3583
        %v4488 = vunpack.c.h.s8.bf16 %v3584
        %v4489 = vunpack.c.h.s8.bf16 %v3585
        %v4490 = vunpack.c.h.s8.bf16 %v3586
        %v4491 = vunpack.c.h.s8.bf16 %v3587
        %v4492 = vunpack.c.h.s8.bf16 %v3588
        %v4493 = vunpack.c.h.s8.bf16 %v3589
        %v4494 = vunpack.c.l.s8.bf16 %v3590
        %v4495 = vunpack.c.l.s8.bf16 %v3591
        %v4496 = vunpack.c.l.s8.bf16 %v3592
        %v4497 = vunpack.c.l.s8.bf16 %v3593
        %v4498 = vunpack.c.l.s8.bf16 %v3594
        %v4499 = vunpack.c.l.s8.bf16 %v3595
        %v4500 = vunpack.c.l.s8.bf16 %v3596
        %v4501 = vunpack.c.l.s8.bf16 %v3597
        %v4502 = vunpack.c.h.s8.bf16 %v3590
        %v4503 = vunpack.c.h.s8.bf16 %v3591
        %v4504 = vunpack.c.h.s8.bf16 %v3592
        %v4505 = vunpack.c.h.s8.bf16 %v3593
        %v4506 = vunpack.c.h.s8.bf16 %v3594
        %v4507 = vunpack.c.h.s8.bf16 %v3595
        %v4508 = vunpack.c.h.s8.bf16 %v3596
        %v4509 = vunpack.c.h.s8.bf16 %v3597
        %v4510 = vunpack.c.l.s8.bf16 %v3598
        %v4511 = vunpack.c.l.s8.bf16 %v3599
        %v4512 = vunpack.c.l.s8.bf16 %v3600
        %v4513 = vunpack.c.l.s8.bf16 %v3601
        %v4514 = vunpack.c.l.s8.bf16 %v3602
        %v4515 = vunpack.c.l.s8.bf16 %v3603
        %v4516 = vunpack.c.l.s8.bf16 %v3604
        %v4517 = vunpack.c.l.s8.bf16 %v3605
        %v4518 = vunpack.c.h.s8.bf16 %v3598
        %v4519 = vunpack.c.h.s8.bf16 %v3599
        %v4520 = vunpack.c.h.s8.bf16 %v3600
        %v4521 = vunpack.c.h.s8.bf16 %v3601
        %v4522 = vunpack.c.h.s8.bf16 %v3602
        %v4523 = vunpack.c.h.s8.bf16 %v3603
        %v4524 = vunpack.c.h.s8.bf16 %v3604
        %v4525 = vunpack.c.h.s8.bf16 %v3605
        %v4526 = vunpack.c.l.s8.bf16 %v3606
        %v4527 = vunpack.c.l.s8.bf16 %v3607
        %v4528 = vunpack.c.l.s8.bf16 %v3608
        %v4529 = vunpack.c.l.s8.bf16 %v3609
        %v4530 = vunpack.c.l.s8.bf16 %v3610
        %v4531 = vunpack.c.l.s8.bf16 %v3611
        %v4532 = vunpack.c.l.s8.bf16 %v3612
        %v4533 = vunpack.c.l.s8.bf16 %v3613
        %v4534 = vunpack.c.h.s8.bf16 %v3606
        %v4535 = vunpack.c.h.s8.bf16 %v3607
        %v4536 = vunpack.c.h.s8.bf16 %v3608
        %v4537 = vunpack.c.h.s8.bf16 %v3609
        %v4538 = vunpack.c.h.s8.bf16 %v3610
        %v4539 = vunpack.c.h.s8.bf16 %v3611
        %v4540 = vunpack.c.h.s8.bf16 %v3612
        %v4541 = vunpack.c.h.s8.bf16 %v3613
        %v4542 = vunpack.c.l.s8.bf16 %v3614
        %v4543 = vunpack.c.l.s8.bf16 %v3615
        %v4544 = vunpack.c.l.s8.bf16 %v3616
        %v4545 = vunpack.c.l.s8.bf16 %v3617
        %v4546 = vunpack.c.l.s8.bf16 %v3618
        %v4547 = vunpack.c.l.s8.bf16 %v3619
        %v4548 = vunpack.c.l.s8.bf16 %v3620
        %v4549 = vunpack.c.l.s8.bf16 %v3621
        %v4550 = vunpack.c.h.s8.bf16 %v3614
        %v4551 = vunpack.c.h.s8.bf16 %v3615
        %v4552 = vunpack.c.h.s8.bf16 %v3616
        %v4553 = vunpack.c.h.s8.bf16 %v3617
        %v4554 = vunpack.c.h.s8.bf16 %v3618
        %v4555 = vunpack.c.h.s8.bf16 %v3619
        %v4556 = vunpack.c.h.s8.bf16 %v3620
        %v4557 = vunpack.c.h.s8.bf16 %v3621
        %v4558 = vunpack.c.l.s8.bf16 %v3622
        %v4559 = vunpack.c.l.s8.bf16 %v3623
        %v4560 = vunpack.c.l.s8.bf16 %v3624
        %v4561 = vunpack.c.l.s8.bf16 %v3625
        %v4562 = vunpack.c.l.s8.bf16 %v3626
        %v4563 = vunpack.c.l.s8.bf16 %v3627
        %v4564 = vunpack.c.l.s8.bf16 %v3628
        %v4565 = vunpack.c.l.s8.bf16 %v3629
        %v4566 = vunpack.c.h.s8.bf16 %v3622
        %v4567 = vunpack.c.h.s8.bf16 %v3623
        %v4568 = vunpack.c.h.s8.bf16 %v3624
        %v4569 = vunpack.c.h.s8.bf16 %v3625
        %v4570 = vunpack.c.h.s8.bf16 %v3626
        %v4571 = vunpack.c.h.s8.bf16 %v3627
        %v4572 = vunpack.c.h.s8.bf16 %v3628
        %v4573 = vunpack.c.h.s8.bf16 %v3629
        %v4574 = vunpack.c.l.s8.bf16 %v3630
        %v4575 = vunpack.c.l.s8.bf16 %v3631
        %v4576 = vunpack.c.l.s8.bf16 %v3632
        %v4577 = vunpack.c.l.s8.bf16 %v3633
        %v4578 = vunpack.c.l.s8.bf16 %v3634
        %v4579 = vunpack.c.l.s8.bf16 %v3635
        %v4580 = vunpack.c.l.s8.bf16 %v3636
        %v4581 = vunpack.c.l.s8.bf16 %v3637
        %v4582 = vunpack.c.h.s8.bf16 %v3630
        %v4583 = vunpack.c.h.s8.bf16 %v3631
        %v4584 = vunpack.c.h.s8.bf16 %v3632
        %v4585 = vunpack.c.h.s8.bf16 %v3633
        %v4586 = vunpack.c.h.s8.bf16 %v3634
        %v4587 = vunpack.c.h.s8.bf16 %v3635
        %v4588 = vunpack.c.h.s8.bf16 %v3636
        %v4589 = vunpack.c.h.s8.bf16 %v3637
        %v4590 = vunpack.c.l.s8.bf16 %v3638
        %v4591 = vunpack.c.l.s8.bf16 %v3639
        %v4592 = vunpack.c.l.s8.bf16 %v3640
        %v4593 = vunpack.c.l.s8.bf16 %v3641
        %v4594 = vunpack.c.l.s8.bf16 %v3642
        %v4595 = vunpack.c.l.s8.bf16 %v3643
        %v4596 = vunpack.c.l.s8.bf16 %v3644
        %v4597 = vunpack.c.l.s8.bf16 %v3645
        %v4598 = vunpack.c.h.s8.bf16 %v3638
        %v4599 = vunpack.c.h.s8.bf16 %v3639
        %v4600 = vunpack.c.h.s8.bf16 %v3640
        %v4601 = vunpack.c.h.s8.bf16 %v3641
        %v4602 = vunpack.c.h.s8.bf16 %v3642
        %v4603 = vunpack.c.h.s8.bf16 %v3643
        %v4604 = vunpack.c.h.s8.bf16 %v3644
        %v4605 = vunpack.c.h.s8.bf16 %v3645
        %v4606 = vunpack.c.l.s8.bf16 %v3646
        %v4607 = vunpack.c.l.s8.bf16 %v3647
        %v4608 = vunpack.c.l.s8.bf16 %v3648
        %v4609 = vunpack.c.l.s8.bf16 %v3649
        %v4610 = vunpack.c.l.s8.bf16 %v3650
        %v4611 = vunpack.c.l.s8.bf16 %v3651
        %v4612 = vunpack.c.l.s8.bf16 %v3652
        %v4613 = vunpack.c.l.s8.bf16 %v3653
        %v4614 = vunpack.c.h.s8.bf16 %v3646
        %v4615 = vunpack.c.h.s8.bf16 %v3647
        %v4616 = vunpack.c.h.s8.bf16 %v3648
        %v4617 = vunpack.c.h.s8.bf16 %v3649
        %v4618 = vunpack.c.h.s8.bf16 %v3650
        %v4619 = vunpack.c.h.s8.bf16 %v3651
        %v4620 = vunpack.c.h.s8.bf16 %v3652
        %v4621 = vunpack.c.h.s8.bf16 %v3653
        %v4622 = vunpack.c.l.s8.bf16 %v3654
        %v4623 = vunpack.c.l.s8.bf16 %v3655
        %v4624 = vunpack.c.l.s8.bf16 %v3656
        %v4625 = vunpack.c.l.s8.bf16 %v3657
        %v4626 = vunpack.c.l.s8.bf16 %v3658
        %v4627 = vunpack.c.l.s8.bf16 %v3659
        %v4628 = vunpack.c.l.s8.bf16 %v3660
        %v4629 = vunpack.c.l.s8.bf16 %v3661
        %v4630 = vunpack.c.h.s8.bf16 %v3654
        %v4631 = vunpack.c.h.s8.bf16 %v3655
        %v4632 = vunpack.c.h.s8.bf16 %v3656
        %v4633 = vunpack.c.h.s8.bf16 %v3657
        %v4634 = vunpack.c.h.s8.bf16 %v3658
        %v4635 = vunpack.c.h.s8.bf16 %v3659
        %v4636 = vunpack.c.h.s8.bf16 %v3660
        %v4637 = vunpack.c.h.s8.bf16 %v3661
        %v4638 = vunpack.c.l.s8.bf16 %v3662
        %v4639 = vunpack.c.l.s8.bf16 %v3663
        %v4640 = vunpack.c.l.s8.bf16 %v3664
        %v4641 = vunpack.c.l.s8.bf16 %v3665
        %v4642 = vunpack.c.l.s8.bf16 %v3666
        %v4643 = vunpack.c.l.s8.bf16 %v3667
        %v4644 = vunpack.c.l.s8.bf16 %v3668
        %v4645 = vunpack.c.l.s8.bf16 %v3669
        %v4646 = vunpack.c.h.s8.bf16 %v3662
        %v4647 = vunpack.c.h.s8.bf16 %v3663
        %v4648 = vunpack.c.h.s8.bf16 %v3664
        %v4649 = vunpack.c.h.s8.bf16 %v3665
        %v4650 = vunpack.c.h.s8.bf16 %v3666
        %v4651 = vunpack.c.h.s8.bf16 %v3667
        %v4652 = vunpack.c.h.s8.bf16 %v3668
        %v4653 = vunpack.c.h.s8.bf16 %v3669
        %v4654 = vunpack.c.l.s8.bf16 %v3670
        %v4655 = vunpack.c.l.s8.bf16 %v3671
        %v4656 = vunpack.c.l.s8.bf16 %v3672
        %v4657 = vunpack.c.l.s8.bf16 %v3673
        %v4658 = vunpack.c.l.s8.bf16 %v3674
        %v4659 = vunpack.c.l.s8.bf16 %v3675
        %v4660 = vunpack.c.l.s8.bf16 %v3676
        %v4661 = vunpack.c.l.s8.bf16 %v3677
        %v4662 = vunpack.c.h.s8.bf16 %v3670
        %v4663 = vunpack.c.h.s8.bf16 %v3671
        %v4664 = vunpack.c.h.s8.bf16 %v3672
        %v4665 = vunpack.c.h.s8.bf16 %v3673
        %v4666 = vunpack.c.h.s8.bf16 %v3674
        %v4667 = vunpack.c.h.s8.bf16 %v3675
        %v4668 = vunpack.c.h.s8.bf16 %v3676
        %v4669 = vunpack.c.h.s8.bf16 %v3677
        %v4670 = vunpack.c.l.s8.bf16 %v3678
        %v4671 = vunpack.c.l.s8.bf16 %v3679
        %v4672 = vunpack.c.l.s8.bf16 %v3680
        %v4673 = vunpack.c.l.s8.bf16 %v3681
        %v4674 = vunpack.c.l.s8.bf16 %v3682
        %v4675 = vunpack.c.l.s8.bf16 %v3683
        %v4676 = vunpack.c.l.s8.bf16 %v3684
        %v4677 = vunpack.c.l.s8.bf16 %v3685
        %v4678 = vunpack.c.h.s8.bf16 %v3678
        %v4679 = vunpack.c.h.s8.bf16 %v3679
        %v4680 = vunpack.c.h.s8.bf16 %v3680
        %v4681 = vunpack.c.h.s8.bf16 %v3681
        %v4682 = vunpack.c.h.s8.bf16 %v3682
        %v4683 = vunpack.c.h.s8.bf16 %v3683
        %v4684 = vunpack.c.h.s8.bf16 %v3684
        %v4685 = vunpack.c.h.s8.bf16 %v3685
        %v4686 = vunpack.c.l.s8.bf16 %v3686
        %v4687 = vunpack.c.l.s8.bf16 %v3687
        %v4688 = vunpack.c.l.s8.bf16 %v3688
        %v4689 = vunpack.c.l.s8.bf16 %v3689
        %v4690 = vunpack.c.l.s8.bf16 %v3690
        %v4691 = vunpack.c.l.s8.bf16 %v3691
        %v4692 = vunpack.c.l.s8.bf16 %v3692
        %v4693 = vunpack.c.l.s8.bf16 %v3693
        %v4694 = vunpack.c.h.s8.bf16 %v3686
        %v4695 = vunpack.c.h.s8.bf16 %v3687
        %v4696 = vunpack.c.h.s8.bf16 %v3688
        %v4697 = vunpack.c.h.s8.bf16 %v3689
        %v4698 = vunpack.c.h.s8.bf16 %v3690
        %v4699 = vunpack.c.h.s8.bf16 %v3691
        %v4700 = vunpack.c.h.s8.bf16 %v3692
        %v4701 = vunpack.c.h.s8.bf16 %v3693
        %v4702 = vunpack.c.l.s8.bf16 %v3694
        %v4703 = vunpack.c.l.s8.bf16 %v3695
        %v4704 = vunpack.c.l.s8.bf16 %v3696
        %v4705 = vunpack.c.l.s8.bf16 %v3697
        %v4706 = vunpack.c.l.s8.bf16 %v3698
        %v4707 = vunpack.c.l.s8.bf16 %v3699
        %v4708 = vunpack.c.l.s8.bf16 %v3700
        %v4709 = vunpack.c.l.s8.bf16 %v3701
        %v4710 = vunpack.c.h.s8.bf16 %v3694
        %v4711 = vunpack.c.h.s8.bf16 %v3695
        %v4712 = vunpack.c.h.s8.bf16 %v3696
        %v4713 = vunpack.c.h.s8.bf16 %v3697
        %v4714 = vunpack.c.h.s8.bf16 %v3698
        %v4715 = vunpack.c.h.s8.bf16 %v3699
        %v4716 = vunpack.c.h.s8.bf16 %v3700
        %v4717 = vunpack.c.h.s8.bf16 %v3701
        %v4718 = vunpack.c.l.s8.bf16 %v3702
        %v4719 = vunpack.c.l.s8.bf16 %v3703
        %v4720 = vunpack.c.l.s8.bf16 %v3704
        %v4721 = vunpack.c.l.s8.bf16 %v3705
        %v4722 = vunpack.c.l.s8.bf16 %v3706
        %v4723 = vunpack.c.l.s8.bf16 %v3707
        %v4724 = vunpack.c.l.s8.bf16 %v3708
        %v4725 = vunpack.c.l.s8.bf16 %v3709
        %v4726 = vunpack.c.h.s8.bf16 %v3702
        %v4727 = vunpack.c.h.s8.bf16 %v3703
        %v4728 = vunpack.c.h.s8.bf16 %v3704
        %v4729 = vunpack.c.h.s8.bf16 %v3705
        %v4730 = vunpack.c.h.s8.bf16 %v3706
        %v4731 = vunpack.c.h.s8.bf16 %v3707
        %v4732 = vunpack.c.h.s8.bf16 %v3708
        %v4733 = vunpack.c.h.s8.bf16 %v3709
        %4734 = vmatprep.subr.bf16.mxu0 %v3767
        %4735 = vmatpush1.bf16.msra.mxu0 %v3766
        %4736 = vmatprep.subr.bf16.mxu0 %v3759
        %4737 = vmatpush1.bf16.msra.mxu0 %v3758
        %4738 = vmatprep.subr.bf16.mxu0 %v3751
        %4739 = vmatpush1.bf16.msra.mxu0 %v3750
        %4740 = vmatprep.subr.bf16.mxu0 %v3743
        %4741 = vmatpush1.bf16.msra.mxu0 %v3742
        %4742 = vmatprep.subr.bf16.mxu0 %v3735
        %4743 = vmatpush1.bf16.msra.mxu0 %v3734
        %4744 = vmatprep.subr.bf16.mxu0 %v3727
        %4745 = vmatpush1.bf16.msra.mxu0 %v3726
        %4746 = vmatprep.subr.bf16.mxu0 %v3719
        %4747 = vmatpush1.bf16.msra.mxu0 %v3718
        %4748 = vmatprep.subr.bf16.mxu0 %v3711
        %4749 = vmatpush1.bf16.msra.mxu0 %v3710
        %4750 = vmatprep.subr.bf16.mxu0 %v3831
        %4751 = vmatpush2.bf16.msra.mxu0 %v3830
        %4752 = vmatprep.subr.bf16.mxu0 %v3823
        %4753 = vmatpush2.bf16.msra.mxu0 %v3822
        %4754 = vmatprep.subr.bf16.mxu0 %v3815
        %4755 = vmatpush2.bf16.msra.mxu0 %v3814
        %4756 = vmatprep.subr.bf16.mxu0 %v3807
        %4757 = vmatpush2.bf16.msra.mxu0 %v3806
        %4758 = vmatprep.subr.bf16.mxu0 %v3799
        %4759 = vmatpush2.bf16.msra.mxu0 %v3798
        %4760 = vmatprep.subr.bf16.mxu0 %v3791
        %4761 = vmatpush2.bf16.msra.mxu0 %v3790
        %4762 = vmatprep.subr.bf16.mxu0 %v3783
        %4763 = vmatpush2.bf16.msra.mxu0 %v3782
        %4764 = vmatprep.subr.bf16.mxu0 %v3775
        %4765 = vmatpush2.bf16.msra.mxu0 %v3774
        %4766 = vmatprep.mubr.bf16.mxu0 %v3183
        %4767 = vmatmul.mubr.bf16.gmra.mxu0 %v3182
        %v4768 = vpop.f32.mrf.mxu0
        %v4769 = vadd.f32 0.0, %v4768
        %v4770 = vpop.f32.mrf.mxu0
        %v4771 = vadd.f32 0.0, %v4770
        %v4772 = vpop.f32.mrf.mxu0
        %v4773 = vpop.f32.mrf.mxu0
        %4774 = vdwg.mxu0
        %4775 = vmatprep.subr.bf16.mxu0 %v3895
        %4776 = vmatpush1.bf16.msra.mxu0 %v3894
        %4777 = vmatprep.subr.bf16.mxu0 %v3887
        %4778 = vmatpush1.bf16.msra.mxu0 %v3886
        %4779 = vmatprep.subr.bf16.mxu0 %v3879
        %4780 = vmatpush1.bf16.msra.mxu0 %v3878
        %4781 = vmatprep.subr.bf16.mxu0 %v3871
        %4782 = vmatpush1.bf16.msra.mxu0 %v3870
        %4783 = vmatprep.subr.bf16.mxu0 %v3863
        %4784 = vmatpush1.bf16.msra.mxu0 %v3862
        %4785 = vmatprep.subr.bf16.mxu0 %v3855
        %4786 = vmatpush1.bf16.msra.mxu0 %v3854
        %4787 = vmatprep.subr.bf16.mxu0 %v3847
        %4788 = vmatpush1.bf16.msra.mxu0 %v3846
        %4789 = vmatprep.subr.bf16.mxu0 %v3839
        %4790 = vmatpush1.bf16.msra.mxu0 %v3838
        %4791 = vmatprep.subr.bf16.mxu0 %v3959
        %4792 = vmatpush2.bf16.msra.mxu0 %v3958
        %4793 = vmatprep.subr.bf16.mxu0 %v3951
        %4794 = vmatpush2.bf16.msra.mxu0 %v3950
        %4795 = vmatprep.subr.bf16.mxu0 %v3943
        %4796 = vmatpush2.bf16.msra.mxu0 %v3942
        %4797 = vmatprep.subr.bf16.mxu0 %v3935
        %4798 = vmatpush2.bf16.msra.mxu0 %v3934
        %4799 = vmatprep.subr.bf16.mxu0 %v3927
        %4800 = vmatpush2.bf16.msra.mxu0 %v3926
        %4801 = vmatprep.subr.bf16.mxu0 %v3919
        %4802 = vmatpush2.bf16.msra.mxu0 %v3918
        %4803 = vmatprep.subr.bf16.mxu0 %v3911
        %4804 = vmatpush2.bf16.msra.mxu0 %v3910
        %4805 = vmatprep.subr.bf16.mxu0 %v3903
        %4806 = vmatpush2.bf16.msra.mxu0 %v3902
        %4807 = vmatprep.mubr.bf16.mxu0 %v3185
        %4808 = vmatmul.mubr.bf16.gmra.mxu0 %v3184
        %v4809 = vpop.f32.mrf.mxu0
        %v4810 = vadd.f32 %v4769, %v4809
        %v4811 = vpop.f32.mrf.mxu0
        %v4812 = vadd.f32 %v4771, %v4811
        %v4813 = vpop.f32.mrf.mxu0
        %v4814 = vpop.f32.mrf.mxu0
        %4815 = vdwg.mxu0
        %4816 = vmatprep.subr.bf16.mxu0 %v4023
        %4817 = vmatpush1.bf16.msra.mxu0 %v4022
        %4818 = vmatprep.subr.bf16.mxu0 %v4015
        %4819 = vmatpush1.bf16.msra.mxu0 %v4014
        %4820 = vmatprep.subr.bf16.mxu0 %v4007
        %4821 = vmatpush1.bf16.msra.mxu0 %v4006
        %4822 = vmatprep.subr.bf16.mxu0 %v3999
        %4823 = vmatpush1.bf16.msra.mxu0 %v3998
        %4824 = vmatprep.subr.bf16.mxu0 %v3991
        %4825 = vmatpush1.bf16.msra.mxu0 %v3990
        %4826 = vmatprep.subr.bf16.mxu0 %v3983
        %4827 = vmatpush1.bf16.msra.mxu0 %v3982
        %4828 = vmatprep.subr.bf16.mxu0 %v3975
        %4829 = vmatpush1.bf16.msra.mxu0 %v3974
        %4830 = vmatprep.subr.bf16.mxu0 %v3967
        %4831 = vmatpush1.bf16.msra.mxu0 %v3966
        %4832 = vmatprep.subr.bf16.mxu0 %v4087
        %4833 = vmatpush2.bf16.msra.mxu0 %v4086
        %4834 = vmatprep.subr.bf16.mxu0 %v4079
        %4835 = vmatpush2.bf16.msra.mxu0 %v4078
        %4836 = vmatprep.subr.bf16.mxu0 %v4071
        %4837 = vmatpush2.bf16.msra.mxu0 %v4070
        %4838 = vmatprep.subr.bf16.mxu0 %v4063
        %4839 = vmatpush2.bf16.msra.mxu0 %v4062
        %4840 = vmatprep.subr.bf16.mxu0 %v4055
        %4841 = vmatpush2.bf16.msra.mxu0 %v4054
        %4842 = vmatprep.subr.bf16.mxu0 %v4047
        %4843 = vmatpush2.bf16.msra.mxu0 %v4046
        %4844 = vmatprep.subr.bf16.mxu0 %v4039
        %4845 = vmatpush2.bf16.msra.mxu0 %v4038
        %4846 = vmatprep.subr.bf16.mxu0 %v4031
        %4847 = vmatpush2.bf16.msra.mxu0 %v4030
        %4848 = vmatprep.mubr.bf16.mxu0 %v3187
        %4849 = vmatmul.mubr.bf16.gmra.mxu0 %v3186
        %v4850 = vpop.f32.mrf.mxu0
        %v4851 = vadd.f32 %v4810, %v4850
        %v4852 = vpop.f32.mrf.mxu0
        %v4853 = vadd.f32 %v4812, %v4852
        %v4854 = vpop.f32.mrf.mxu0
        %v4855 = vpop.f32.mrf.mxu0
        %4856 = vdwg.mxu0
        %4857 = vmatprep.subr.bf16.mxu0 %v4151
        %4858 = vmatpush1.bf16.msra.mxu0 %v4150
        %4859 = vmatprep.subr.bf16.mxu0 %v4143
        %4860 = vmatpush1.bf16.msra.mxu0 %v4142
        %4861 = vmatprep.subr.bf16.mxu0 %v4135
        %4862 = vmatpush1.bf16.msra.mxu0 %v4134
        %4863 = vmatprep.subr.bf16.mxu0 %v4127
        %4864 = vmatpush1.bf16.msra.mxu0 %v4126
        %4865 = vmatprep.subr.bf16.mxu0 %v4119
        %4866 = vmatpush1.bf16.msra.mxu0 %v4118
        %4867 = vmatprep.subr.bf16.mxu0 %v4111
        %4868 = vmatpush1.bf16.msra.mxu0 %v4110
        %4869 = vmatprep.subr.bf16.mxu0 %v4103
        %4870 = vmatpush1.bf16.msra.mxu0 %v4102
        %4871 = vmatprep.subr.bf16.mxu0 %v4095
        %4872 = vmatpush1.bf16.msra.mxu0 %v4094
        %4873 = vmatprep.subr.bf16.mxu0 %v4215
        %4874 = vmatpush2.bf16.msra.mxu0 %v4214
        %4875 = vmatprep.subr.bf16.mxu0 %v4207
        %4876 = vmatpush2.bf16.msra.mxu0 %v4206
        %4877 = vmatprep.subr.bf16.mxu0 %v4199
        %4878 = vmatpush2.bf16.msra.mxu0 %v4198
        %4879 = vmatprep.subr.bf16.mxu0 %v4191
        %4880 = vmatpush2.bf16.msra.mxu0 %v4190
        %4881 = vmatprep.subr.bf16.mxu0 %v4183
        %4882 = vmatpush2.bf16.msra.mxu0 %v4182
        %4883 = vmatprep.subr.bf16.mxu0 %v4175
        %4884 = vmatpush2.bf16.msra.mxu0 %v4174
        %4885 = vmatprep.subr.bf16.mxu0 %v4167
        %4886 = vmatpush2.bf16.msra.mxu0 %v4166
        %4887 = vmatprep.subr.bf16.mxu0 %v4159
        %4888 = vmatpush2.bf16.msra.mxu0 %v4158
        %4889 = vmatprep.mubr.bf16.mxu0 %v3189
        %4890 = vmatmul.mubr.bf16.gmra.mxu0 %v3188
        %v4891 = vpop.f32.mrf.mxu0
        %v4892 = vadd.f32 %v4851, %v4891
        %v4893 = vpop.f32.mrf.mxu0
        %v4894 = vadd.f32 %v4853, %v4893
        %v4895 = vpop.f32.mrf.mxu0
        %v4896 = vpop.f32.mrf.mxu0
        %4897 = vdwg.mxu0
        %4898 = vmatprep.subr.bf16.mxu0 %v4279
        %4899 = vmatpush1.bf16.msra.mxu0 %v4278
        %4900 = vmatprep.subr.bf16.mxu0 %v4271
        %4901 = vmatpush1.bf16.msra.mxu0 %v4270
        %4902 = vmatprep.subr.bf16.mxu0 %v4263
        %4903 = vmatpush1.bf16.msra.mxu0 %v4262
        %4904 = vmatprep.subr.bf16.mxu0 %v4255
        %4905 = vmatpush1.bf16.msra.mxu0 %v4254
        %4906 = vmatprep.subr.bf16.mxu0 %v4247
        %4907 = vmatpush1.bf16.msra.mxu0 %v4246
        %4908 = vmatprep.subr.bf16.mxu0 %v4239
        %4909 = vmatpush1.bf16.msra.mxu0 %v4238
        %4910 = vmatprep.subr.bf16.mxu0 %v4231
        %4911 = vmatpush1.bf16.msra.mxu0 %v4230
        %4912 = vmatprep.subr.bf16.mxu0 %v4223
        %4913 = vmatpush1.bf16.msra.mxu0 %v4222
        %4914 = vmatprep.subr.bf16.mxu0 %v4343
        %4915 = vmatpush2.bf16.msra.mxu0 %v4342
        %4916 = vmatprep.subr.bf16.mxu0 %v4335
        %4917 = vmatpush2.bf16.msra.mxu0 %v4334
        %4918 = vmatprep.subr.bf16.mxu0 %v4327
        %4919 = vmatpush2.bf16.msra.mxu0 %v4326
        %4920 = vmatprep.subr.bf16.mxu0 %v4319
        %4921 = vmatpush2.bf16.msra.mxu0 %v4318
        %4922 = vmatprep.subr.bf16.mxu0 %v4311
        %4923 = vmatpush2.bf16.msra.mxu0 %v4310
        %4924 = vmatprep.subr.bf16.mxu0 %v4303
        %4925 = vmatpush2.bf16.msra.mxu0 %v4302
        %4926 = vmatprep.subr.bf16.mxu0 %v4295
        %4927 = vmatpush2.bf16.msra.mxu0 %v4294
        %4928 = vmatprep.subr.bf16.mxu0 %v4287
        %4929 = vmatpush2.bf16.msra.mxu0 %v4286
        %4930 = vmatprep.mubr.bf16.mxu0 %v3191
        %4931 = vmatmul.mubr.bf16.gmra.mxu0 %v3190
        %v4932 = vpop.f32.mrf.mxu0
        %v4933 = vadd.f32 %v4892, %v4932
        %v4934 = vpop.f32.mrf.mxu0
        %v4935 = vadd.f32 %v4894, %v4934
        %v4936 = vpop.f32.mrf.mxu0
        %v4937 = vpop.f32.mrf.mxu0
        %4938 = vdwg.mxu0
        %4939 = vmatprep.subr.bf16.mxu0 %v4407
        %4940 = vmatpush1.bf16.msra.mxu0 %v4406
        %4941 = vmatprep.subr.bf16.mxu0 %v4399
        %4942 = vmatpush1.bf16.msra.mxu0 %v4398
        %4943 = vmatprep.subr.bf16.mxu0 %v4391
        %4944 = vmatpush1.bf16.msra.mxu0 %v4390
        %4945 = vmatprep.subr.bf16.mxu0 %v4383
        %4946 = vmatpush1.bf16.msra.mxu0 %v4382
        %4947 = vmatprep.subr.bf16.mxu0 %v4375
        %4948 = vmatpush1.bf16.msra.mxu0 %v4374
        %4949 = vmatprep.subr.bf16.mxu0 %v4367
        %4950 = vmatpush1.bf16.msra.mxu0 %v4366
        %4951 = vmatprep.subr.bf16.mxu0 %v4359
        %4952 = vmatpush1.bf16.msra.mxu0 %v4358
        %4953 = vmatprep.subr.bf16.mxu0 %v4351
        %4954 = vmatpush1.bf16.msra.mxu0 %v4350
        %4955 = vmatprep.subr.bf16.mxu0 %v4471
        %4956 = vmatpush2.bf16.msra.mxu0 %v4470
        %4957 = vmatprep.subr.bf16.mxu0 %v4463
        %4958 = vmatpush2.bf16.msra.mxu0 %v4462
        %4959 = vmatprep.subr.bf16.mxu0 %v4455
        %4960 = vmatpush2.bf16.msra.mxu0 %v4454
        %4961 = vmatprep.subr.bf16.mxu0 %v4447
        %4962 = vmatpush2.bf16.msra.mxu0 %v4446
        %4963 = vmatprep.subr.bf16.mxu0 %v4439
        %4964 = vmatpush2.bf16.msra.mxu0 %v4438
        %4965 = vmatprep.subr.bf16.mxu0 %v4431
        %4966 = vmatpush2.bf16.msra.mxu0 %v4430
        %4967 = vmatprep.subr.bf16.mxu0 %v4423
        %4968 = vmatpush2.bf16.msra.mxu0 %v4422
        %4969 = vmatprep.subr.bf16.mxu0 %v4415
        %4970 = vmatpush2.bf16.msra.mxu0 %v4414
        %4971 = vmatprep.mubr.bf16.mxu0 %v3193
        %4972 = vmatmul.mubr.bf16.gmra.mxu0 %v3192
        %v4973 = vpop.f32.mrf.mxu0
        %v4974 = vadd.f32 %v4933, %v4973
        %v4975 = vpop.f32.mrf.mxu0
        %v4976 = vadd.f32 %v4935, %v4975
        %v4977 = vpop.f32.mrf.mxu0
        %v4978 = vpop.f32.mrf.mxu0
        %4979 = vdwg.mxu0
        %4980 = vmatprep.subr.bf16.mxu0 %v4535
        %4981 = vmatpush1.bf16.msra.mxu0 %v4534
        %4982 = vmatprep.subr.bf16.mxu0 %v4527
        %4983 = vmatpush1.bf16.msra.mxu0 %v4526
        %4984 = vmatprep.subr.bf16.mxu0 %v4519
        %4985 = vmatpush1.bf16.msra.mxu0 %v4518
        %4986 = vmatprep.subr.bf16.mxu0 %v4511
        %4987 = vmatpush1.bf16.msra.mxu0 %v4510
        %4988 = vmatprep.subr.bf16.mxu0 %v4503
        %4989 = vmatpush1.bf16.msra.mxu0 %v4502
        %4990 = vmatprep.subr.bf16.mxu0 %v4495
        %4991 = vmatpush1.bf16.msra.mxu0 %v4494
        %4992 = vmatprep.subr.bf16.mxu0 %v4487
        %4993 = vmatpush1.bf16.msra.mxu0 %v4486
        %4994 = vmatprep.subr.bf16.mxu0 %v4479
        %4995 = vmatpush1.bf16.msra.mxu0 %v4478
        %4996 = vmatprep.subr.bf16.mxu0 %v4599
        %4997 = vmatpush2.bf16.msra.mxu0 %v4598
        %4998 = vmatprep.subr.bf16.mxu0 %v4591
        %4999 = vmatpush2.bf16.msra.mxu0 %v4590
        %5000 = vmatprep.subr.bf16.mxu0 %v4583
        %5001 = vmatpush2.bf16.msra.mxu0 %v4582
        %5002 = vmatprep.subr.bf16.mxu0 %v4575
        %5003 = vmatpush2.bf16.msra.mxu0 %v4574
        %5004 = vmatprep.subr.bf16.mxu0 %v4567
        %5005 = vmatpush2.bf16.msra.mxu0 %v4566
        %5006 = vmatprep.subr.bf16.mxu0 %v4559
        %5007 = vmatpush2.bf16.msra.mxu0 %v4558
        %5008 = vmatprep.subr.bf16.mxu0 %v4551
        %5009 = vmatpush2.bf16.msra.mxu0 %v4550
        %5010 = vmatprep.subr.bf16.mxu0 %v4543
        %5011 = vmatpush2.bf16.msra.mxu0 %v4542
        %5012 = vmatprep.mubr.bf16.mxu0 %v3195
        %5013 = vmatmul.mubr.bf16.gmra.mxu0 %v3194
        %v5014 = vpop.f32.mrf.mxu0
        %v5015 = vadd.f32 %v4974, %v5014
        %v5016 = vpop.f32.mrf.mxu0
        %v5017 = vadd.f32 %v4976, %v5016
        %v5018 = vpop.f32.mrf.mxu0
        %v5019 = vpop.f32.mrf.mxu0
        %5020 = vdwg.mxu0
        %5021 = vmatprep.subr.bf16.mxu0 %v4663
        %5022 = vmatpush1.bf16.msra.mxu0 %v4662
        %5023 = vmatprep.subr.bf16.mxu0 %v4655
        %5024 = vmatpush1.bf16.msra.mxu0 %v4654
        %5025 = vmatprep.subr.bf16.mxu0 %v4647
        %5026 = vmatpush1.bf16.msra.mxu0 %v4646
        %5027 = vmatprep.subr.bf16.mxu0 %v4639
        %5028 = vmatpush1.bf16.msra.mxu0 %v4638
        %5029 = vmatprep.subr.bf16.mxu0 %v4631
        %5030 = vmatpush1.bf16.msra.mxu0 %v4630
        %5031 = vmatprep.subr.bf16.mxu0 %v4623
        %5032 = vmatpush1.bf16.msra.mxu0 %v4622
        %5033 = vmatprep.subr.bf16.mxu0 %v4615
        %5034 = vmatpush1.bf16.msra.mxu0 %v4614
        %5035 = vmatprep.subr.bf16.mxu0 %v4607
        %5036 = vmatpush1.bf16.msra.mxu0 %v4606
        %5037 = vmatprep.subr.bf16.mxu0 %v4727
        %5038 = vmatpush2.bf16.msra.mxu0 %v4726
        %5039 = vmatprep.subr.bf16.mxu0 %v4719
        %5040 = vmatpush2.bf16.msra.mxu0 %v4718
        %5041 = vmatprep.subr.bf16.mxu0 %v4711
        %5042 = vmatpush2.bf16.msra.mxu0 %v4710
        %5043 = vmatprep.subr.bf16.mxu0 %v4703
        %5044 = vmatpush2.bf16.msra.mxu0 %v4702
        %5045 = vmatprep.subr.bf16.mxu0 %v4695
        %5046 = vmatpush2.bf16.msra.mxu0 %v4694
        %5047 = vmatprep.subr.bf16.mxu0 %v4687
        %5048 = vmatpush2.bf16.msra.mxu0 %v4686
        %5049 = vmatprep.subr.bf16.mxu0 %v4679
        %5050 = vmatpush2.bf16.msra.mxu0 %v4678
        %5051 = vmatprep.subr.bf16.mxu0 %v4671
        %5052 = vmatpush2.bf16.msra.mxu0 %v4670
        %5053 = vmatprep.mubr.bf16.mxu0 %v3197
        %5054 = vmatmul.mubr.bf16.gmra.mxu0 %v3196
        %v5055 = vpop.f32.mrf.mxu0
        %v5056 = vadd.f32 %v5015, %v5055
        %v5057 = vpop.f32.mrf.mxu0
        %v5058 = vadd.f32 %v5017, %v5057
        %v5059 = vpop.f32.mrf.mxu0
        %v5060 = vpop.f32.mrf.mxu0
        %5061 = vdwg.mxu0
        %5062 = vmatprep.subr.bf16.mxu0 %v3769
        %5063 = vmatpush1.bf16.msra.mxu0 %v3768
        %5064 = vmatprep.subr.bf16.mxu0 %v3761
        %5065 = vmatpush1.bf16.msra.mxu0 %v3760
        %5066 = vmatprep.subr.bf16.mxu0 %v3753
        %5067 = vmatpush1.bf16.msra.mxu0 %v3752
        %5068 = vmatprep.subr.bf16.mxu0 %v3745
        %5069 = vmatpush1.bf16.msra.mxu0 %v3744
        %5070 = vmatprep.subr.bf16.mxu0 %v3737
        %5071 = vmatpush1.bf16.msra.mxu0 %v3736
        %5072 = vmatprep.subr.bf16.mxu0 %v3729
        %5073 = vmatpush1.bf16.msra.mxu0 %v3728
        %5074 = vmatprep.subr.bf16.mxu0 %v3721
        %5075 = vmatpush1.bf16.msra.mxu0 %v3720
        %5076 = vmatprep.subr.bf16.mxu0 %v3713
        %5077 = vmatpush1.bf16.msra.mxu0 %v3712
        %5078 = vmatprep.subr.bf16.mxu0 %v3833
        %5079 = vmatpush2.bf16.msra.mxu0 %v3832
        %5080 = vmatprep.subr.bf16.mxu0 %v3825
        %5081 = vmatpush2.bf16.msra.mxu0 %v3824
        %5082 = vmatprep.subr.bf16.mxu0 %v3817
        %5083 = vmatpush2.bf16.msra.mxu0 %v3816
        %5084 = vmatprep.subr.bf16.mxu0 %v3809
        %5085 = vmatpush2.bf16.msra.mxu0 %v3808
        %5086 = vmatprep.subr.bf16.mxu0 %v3801
        %5087 = vmatpush2.bf16.msra.mxu0 %v3800
        %5088 = vmatprep.subr.bf16.mxu0 %v3793
        %5089 = vmatpush2.bf16.msra.mxu0 %v3792
        %5090 = vmatprep.subr.bf16.mxu0 %v3785
        %5091 = vmatpush2.bf16.msra.mxu0 %v3784
        %5092 = vmatprep.subr.bf16.mxu0 %v3777
        %5093 = vmatpush2.bf16.msra.mxu0 %v3776
        %5094 = vmatprep.mubr.bf16.mxu0 %v3183
        %5095 = vmatmul.mubr.bf16.gmra.mxu0 %v3182
        %v5096 = vpop.f32.mrf.mxu0
        %v5097 = vadd.f32 0.0, %v5096
        %v5098 = vpop.f32.mrf.mxu0
        %v5099 = vadd.f32 0.0, %v5098
        %v5100 = vpop.f32.mrf.mxu0
        %v5101 = vpop.f32.mrf.mxu0
        %5102 = vdwg.mxu0
        %5103 = vmatprep.subr.bf16.mxu0 %v3897
        %5104 = vmatpush1.bf16.msra.mxu0 %v3896
        %5105 = vmatprep.subr.bf16.mxu0 %v3889
        %5106 = vmatpush1.bf16.msra.mxu0 %v3888
        %5107 = vmatprep.subr.bf16.mxu0 %v3881
        %5108 = vmatpush1.bf16.msra.mxu0 %v3880
        %5109 = vmatprep.subr.bf16.mxu0 %v3873
        %5110 = vmatpush1.bf16.msra.mxu0 %v3872
        %5111 = vmatprep.subr.bf16.mxu0 %v3865
        %5112 = vmatpush1.bf16.msra.mxu0 %v3864
        %5113 = vmatprep.subr.bf16.mxu0 %v3857
        %5114 = vmatpush1.bf16.msra.mxu0 %v3856
        %5115 = vmatprep.subr.bf16.mxu0 %v3849
        %5116 = vmatpush1.bf16.msra.mxu0 %v3848
        %5117 = vmatprep.subr.bf16.mxu0 %v3841
        %5118 = vmatpush1.bf16.msra.mxu0 %v3840
        %5119 = vmatprep.subr.bf16.mxu0 %v3961
        %5120 = vmatpush2.bf16.msra.mxu0 %v3960
        %5121 = vmatprep.subr.bf16.mxu0 %v3953
        %5122 = vmatpush2.bf16.msra.mxu0 %v3952
        %5123 = vmatprep.subr.bf16.mxu0 %v3945
        %5124 = vmatpush2.bf16.msra.mxu0 %v3944
        %5125 = vmatprep.subr.bf16.mxu0 %v3937
        %5126 = vmatpush2.bf16.msra.mxu0 %v3936
        %5127 = vmatprep.subr.bf16.mxu0 %v3929
        %5128 = vmatpush2.bf16.msra.mxu0 %v3928
        %5129 = vmatprep.subr.bf16.mxu0 %v3921
        %5130 = vmatpush2.bf16.msra.mxu0 %v3920
        %5131 = vmatprep.subr.bf16.mxu0 %v3913
        %5132 = vmatpush2.bf16.msra.mxu0 %v3912
        %5133 = vmatprep.subr.bf16.mxu0 %v3905
        %5134 = vmatpush2.bf16.msra.mxu0 %v3904
        %5135 = vmatprep.mubr.bf16.mxu0 %v3185
        %5136 = vmatmul.mubr.bf16.gmra.mxu0 %v3184
        %v5137 = vpop.f32.mrf.mxu0
        %v5138 = vadd.f32 %v5097, %v5137
        %v5139 = vpop.f32.mrf.mxu0
        %v5140 = vadd.f32 %v5099, %v5139
        %v5141 = vpop.f32.mrf.mxu0
        %v5142 = vpop.f32.mrf.mxu0
        %5143 = vdwg.mxu0
        %5144 = vmatprep.subr.bf16.mxu0 %v4025
        %5145 = vmatpush1.bf16.msra.mxu0 %v4024
        %5146 = vmatprep.subr.bf16.mxu0 %v4017
        %5147 = vmatpush1.bf16.msra.mxu0 %v4016
        %5148 = vmatprep.subr.bf16.mxu0 %v4009
        %5149 = vmatpush1.bf16.msra.mxu0 %v4008
        %5150 = vmatprep.subr.bf16.mxu0 %v4001
        %5151 = vmatpush1.bf16.msra.mxu0 %v4000
        %5152 = vmatprep.subr.bf16.mxu0 %v3993
        %5153 = vmatpush1.bf16.msra.mxu0 %v3992
        %5154 = vmatprep.subr.bf16.mxu0 %v3985
        %5155 = vmatpush1.bf16.msra.mxu0 %v3984
        %5156 = vmatprep.subr.bf16.mxu0 %v3977
        %5157 = vmatpush1.bf16.msra.mxu0 %v3976
        %5158 = vmatprep.subr.bf16.mxu0 %v3969
        %5159 = vmatpush1.bf16.msra.mxu0 %v3968
        %5160 = vmatprep.subr.bf16.mxu0 %v4089
        %5161 = vmatpush2.bf16.msra.mxu0 %v4088
        %5162 = vmatprep.subr.bf16.mxu0 %v4081
        %5163 = vmatpush2.bf16.msra.mxu0 %v4080
        %5164 = vmatprep.subr.bf16.mxu0 %v4073
        %5165 = vmatpush2.bf16.msra.mxu0 %v4072
        %5166 = vmatprep.subr.bf16.mxu0 %v4065
        %5167 = vmatpush2.bf16.msra.mxu0 %v4064
        %5168 = vmatprep.subr.bf16.mxu0 %v4057
        %5169 = vmatpush2.bf16.msra.mxu0 %v4056
        %5170 = vmatprep.subr.bf16.mxu0 %v4049
        %5171 = vmatpush2.bf16.msra.mxu0 %v4048
        %5172 = vmatprep.subr.bf16.mxu0 %v4041
        %5173 = vmatpush2.bf16.msra.mxu0 %v4040
        %5174 = vmatprep.subr.bf16.mxu0 %v4033
        %5175 = vmatpush2.bf16.msra.mxu0 %v4032
        %5176 = vmatprep.mubr.bf16.mxu0 %v3187
        %5177 = vmatmul.mubr.bf16.gmra.mxu0 %v3186
        %v5178 = vpop.f32.mrf.mxu0
        %v5179 = vadd.f32 %v5138, %v5178
        %v5180 = vpop.f32.mrf.mxu0
        %v5181 = vadd.f32 %v5140, %v5180
        %v5182 = vpop.f32.mrf.mxu0
        %v5183 = vpop.f32.mrf.mxu0
        %5184 = vdwg.mxu0
        %5185 = vmatprep.subr.bf16.mxu0 %v4153
        %5186 = vmatpush1.bf16.msra.mxu0 %v4152
        %5187 = vmatprep.subr.bf16.mxu0 %v4145
        %5188 = vmatpush1.bf16.msra.mxu0 %v4144
        %5189 = vmatprep.subr.bf16.mxu0 %v4137
        %5190 = vmatpush1.bf16.msra.mxu0 %v4136
        %5191 = vmatprep.subr.bf16.mxu0 %v4129
        %5192 = vmatpush1.bf16.msra.mxu0 %v4128
        %5193 = vmatprep.subr.bf16.mxu0 %v4121
        %5194 = vmatpush1.bf16.msra.mxu0 %v4120
        %5195 = vmatprep.subr.bf16.mxu0 %v4113
        %5196 = vmatpush1.bf16.msra.mxu0 %v4112
        %5197 = vmatprep.subr.bf16.mxu0 %v4105
        %5198 = vmatpush1.bf16.msra.mxu0 %v4104
        %5199 = vmatprep.subr.bf16.mxu0 %v4097
        %5200 = vmatpush1.bf16.msra.mxu0 %v4096
        %5201 = vmatprep.subr.bf16.mxu0 %v4217
        %5202 = vmatpush2.bf16.msra.mxu0 %v4216
        %5203 = vmatprep.subr.bf16.mxu0 %v4209
        %5204 = vmatpush2.bf16.msra.mxu0 %v4208
        %5205 = vmatprep.subr.bf16.mxu0 %v4201
        %5206 = vmatpush2.bf16.msra.mxu0 %v4200
        %5207 = vmatprep.subr.bf16.mxu0 %v4193
        %5208 = vmatpush2.bf16.msra.mxu0 %v4192
        %5209 = vmatprep.subr.bf16.mxu0 %v4185
        %5210 = vmatpush2.bf16.msra.mxu0 %v4184
        %5211 = vmatprep.subr.bf16.mxu0 %v4177
        %5212 = vmatpush2.bf16.msra.mxu0 %v4176
        %5213 = vmatprep.subr.bf16.mxu0 %v4169
        %5214 = vmatpush2.bf16.msra.mxu0 %v4168
        %5215 = vmatprep.subr.bf16.mxu0 %v4161
        %5216 = vmatpush2.bf16.msra.mxu0 %v4160
        %5217 = vmatprep.mubr.bf16.mxu0 %v3189
        %5218 = vmatmul.mubr.bf16.gmra.mxu0 %v3188
        %v5219 = vpop.f32.mrf.mxu0
        %v5220 = vadd.f32 %v5179, %v5219
        %v5221 = vpop.f32.mrf.mxu0
        %v5222 = vadd.f32 %v5181, %v5221
        %v5223 = vpop.f32.mrf.mxu0
        %v5224 = vpop.f32.mrf.mxu0
        %5225 = vdwg.mxu0
        %5226 = vmatprep.subr.bf16.mxu0 %v4281
        %5227 = vmatpush1.bf16.msra.mxu0 %v4280
        %5228 = vmatprep.subr.bf16.mxu0 %v4273
        %5229 = vmatpush1.bf16.msra.mxu0 %v4272
        %5230 = vmatprep.subr.bf16.mxu0 %v4265
        %5231 = vmatpush1.bf16.msra.mxu0 %v4264
        %5232 = vmatprep.subr.bf16.mxu0 %v4257
        %5233 = vmatpush1.bf16.msra.mxu0 %v4256
        %5234 = vmatprep.subr.bf16.mxu0 %v4249
        %5235 = vmatpush1.bf16.msra.mxu0 %v4248
        %5236 = vmatprep.subr.bf16.mxu0 %v4241
        %5237 = vmatpush1.bf16.msra.mxu0 %v4240
        %5238 = vmatprep.subr.bf16.mxu0 %v4233
        %5239 = vmatpush1.bf16.msra.mxu0 %v4232
        %5240 = vmatprep.subr.bf16.mxu0 %v4225
        %5241 = vmatpush1.bf16.msra.mxu0 %v4224
        %5242 = vmatprep.subr.bf16.mxu0 %v4345
        %5243 = vmatpush2.bf16.msra.mxu0 %v4344
        %5244 = vmatprep.subr.bf16.mxu0 %v4337
        %5245 = vmatpush2.bf16.msra.mxu0 %v4336
        %5246 = vmatprep.subr.bf16.mxu0 %v4329
        %5247 = vmatpush2.bf16.msra.mxu0 %v4328
        %5248 = vmatprep.subr.bf16.mxu0 %v4321
        %5249 = vmatpush2.bf16.msra.mxu0 %v4320
        %5250 = vmatprep.subr.bf16.mxu0 %v4313
        %5251 = vmatpush2.bf16.msra.mxu0 %v4312
        %5252 = vmatprep.subr.bf16.mxu0 %v4305
        %5253 = vmatpush2.bf16.msra.mxu0 %v4304
        %5254 = vmatprep.subr.bf16.mxu0 %v4297
        %5255 = vmatpush2.bf16.msra.mxu0 %v4296
        %5256 = vmatprep.subr.bf16.mxu0 %v4289
        %5257 = vmatpush2.bf16.msra.mxu0 %v4288
        %5258 = vmatprep.mubr.bf16.mxu0 %v3191
        %5259 = vmatmul.mubr.bf16.gmra.mxu0 %v3190
        %v5260 = vpop.f32.mrf.mxu0
        %v5261 = vadd.f32 %v5220, %v5260
        %v5262 = vpop.f32.mrf.mxu0
        %v5263 = vadd.f32 %v5222, %v5262
        %v5264 = vpop.f32.mrf.mxu0
        %v5265 = vpop.f32.mrf.mxu0
        %5266 = vdwg.mxu0
        %5267 = vmatprep.subr.bf16.mxu0 %v4409
        %5268 = vmatpush1.bf16.msra.mxu0 %v4408
        %5269 = vmatprep.subr.bf16.mxu0 %v4401
        %5270 = vmatpush1.bf16.msra.mxu0 %v4400
        %5271 = vmatprep.subr.bf16.mxu0 %v4393
        %5272 = vmatpush1.bf16.msra.mxu0 %v4392
        %5273 = vmatprep.subr.bf16.mxu0 %v4385
        %5274 = vmatpush1.bf16.msra.mxu0 %v4384
        %5275 = vmatprep.subr.bf16.mxu0 %v4377
        %5276 = vmatpush1.bf16.msra.mxu0 %v4376
        %5277 = vmatprep.subr.bf16.mxu0 %v4369
        %5278 = vmatpush1.bf16.msra.mxu0 %v4368
        %5279 = vmatprep.subr.bf16.mxu0 %v4361
        %5280 = vmatpush1.bf16.msra.mxu0 %v4360
        %5281 = vmatprep.subr.bf16.mxu0 %v4353
        %5282 = vmatpush1.bf16.msra.mxu0 %v4352
        %5283 = vmatprep.subr.bf16.mxu0 %v4473
        %5284 = vmatpush2.bf16.msra.mxu0 %v4472
        %5285 = vmatprep.subr.bf16.mxu0 %v4465
        %5286 = vmatpush2.bf16.msra.mxu0 %v4464
        %5287 = vmatprep.subr.bf16.mxu0 %v4457
        %5288 = vmatpush2.bf16.msra.mxu0 %v4456
        %5289 = vmatprep.subr.bf16.mxu0 %v4449
        %5290 = vmatpush2.bf16.msra.mxu0 %v4448
        %5291 = vmatprep.subr.bf16.mxu0 %v4441
        %5292 = vmatpush2.bf16.msra.mxu0 %v4440
        %5293 = vmatprep.subr.bf16.mxu0 %v4433
        %5294 = vmatpush2.bf16.msra.mxu0 %v4432
        %5295 = vmatprep.subr.bf16.mxu0 %v4425
        %5296 = vmatpush2.bf16.msra.mxu0 %v4424
        %5297 = vmatprep.subr.bf16.mxu0 %v4417
        %5298 = vmatpush2.bf16.msra.mxu0 %v4416
        %5299 = vmatprep.mubr.bf16.mxu0 %v3193
        %5300 = vmatmul.mubr.bf16.gmra.mxu0 %v3192
        %v5301 = vpop.f32.mrf.mxu0
        %v5302 = vadd.f32 %v5261, %v5301
        %v5303 = vpop.f32.mrf.mxu0
        %v5304 = vadd.f32 %v5263, %v5303
        %v5305 = vpop.f32.mrf.mxu0
        %v5306 = vpop.f32.mrf.mxu0
        %5307 = vdwg.mxu0
        %5308 = vmatprep.subr.bf16.mxu0 %v4537
        %5309 = vmatpush1.bf16.msra.mxu0 %v4536
        %5310 = vmatprep.subr.bf16.mxu0 %v4529
        %5311 = vmatpush1.bf16.msra.mxu0 %v4528
        %5312 = vmatprep.subr.bf16.mxu0 %v4521
        %5313 = vmatpush1.bf16.msra.mxu0 %v4520
        %5314 = vmatprep.subr.bf16.mxu0 %v4513
        %5315 = vmatpush1.bf16.msra.mxu0 %v4512
        %5316 = vmatprep.subr.bf16.mxu0 %v4505
        %5317 = vmatpush1.bf16.msra.mxu0 %v4504
        %5318 = vmatprep.subr.bf16.mxu0 %v4497
        %5319 = vmatpush1.bf16.msra.mxu0 %v4496
        %5320 = vmatprep.subr.bf16.mxu0 %v4489
        %5321 = vmatpush1.bf16.msra.mxu0 %v4488
        %5322 = vmatprep.subr.bf16.mxu0 %v4481
        %5323 = vmatpush1.bf16.msra.mxu0 %v4480
        %5324 = vmatprep.subr.bf16.mxu0 %v4601
        %5325 = vmatpush2.bf16.msra.mxu0 %v4600
        %5326 = vmatprep.subr.bf16.mxu0 %v4593
        %5327 = vmatpush2.bf16.msra.mxu0 %v4592
        %5328 = vmatprep.subr.bf16.mxu0 %v4585
        %5329 = vmatpush2.bf16.msra.mxu0 %v4584
        %5330 = vmatprep.subr.bf16.mxu0 %v4577
        %5331 = vmatpush2.bf16.msra.mxu0 %v4576
        %5332 = vmatprep.subr.bf16.mxu0 %v4569
        %5333 = vmatpush2.bf16.msra.mxu0 %v4568
        %5334 = vmatprep.subr.bf16.mxu0 %v4561
        %5335 = vmatpush2.bf16.msra.mxu0 %v4560
        %5336 = vmatprep.subr.bf16.mxu0 %v4553
        %5337 = vmatpush2.bf16.msra.mxu0 %v4552
        %5338 = vmatprep.subr.bf16.mxu0 %v4545
        %5339 = vmatpush2.bf16.msra.mxu0 %v4544
        %5340 = vmatprep.mubr.bf16.mxu0 %v3195
        %5341 = vmatmul.mubr.bf16.gmra.mxu0 %v3194
        %v5342 = vpop.f32.mrf.mxu0
        %v5343 = vadd.f32 %v5302, %v5342
        %v5344 = vpop.f32.mrf.mxu0
        %v5345 = vadd.f32 %v5304, %v5344
        %v5346 = vpop.f32.mrf.mxu0
        %v5347 = vpop.f32.mrf.mxu0
        %5348 = vdwg.mxu0
        %5349 = vmatprep.subr.bf16.mxu0 %v4665
        %5350 = vmatpush1.bf16.msra.mxu0 %v4664
        %5351 = vmatprep.subr.bf16.mxu0 %v4657
        %5352 = vmatpush1.bf16.msra.mxu0 %v4656
        %5353 = vmatprep.subr.bf16.mxu0 %v4649
        %5354 = vmatpush1.bf16.msra.mxu0 %v4648
        %5355 = vmatprep.subr.bf16.mxu0 %v4641
        %5356 = vmatpush1.bf16.msra.mxu0 %v4640
        %5357 = vmatprep.subr.bf16.mxu0 %v4633
        %5358 = vmatpush1.bf16.msra.mxu0 %v4632
        %5359 = vmatprep.subr.bf16.mxu0 %v4625
        %5360 = vmatpush1.bf16.msra.mxu0 %v4624
        %5361 = vmatprep.subr.bf16.mxu0 %v4617
        %5362 = vmatpush1.bf16.msra.mxu0 %v4616
        %5363 = vmatprep.subr.bf16.mxu0 %v4609
        %5364 = vmatpush1.bf16.msra.mxu0 %v4608
        %5365 = vmatprep.subr.bf16.mxu0 %v4729
        %5366 = vmatpush2.bf16.msra.mxu0 %v4728
        %5367 = vmatprep.subr.bf16.mxu0 %v4721
        %5368 = vmatpush2.bf16.msra.mxu0 %v4720
        %5369 = vmatprep.subr.bf16.mxu0 %v4713
        %5370 = vmatpush2.bf16.msra.mxu0 %v4712
        %5371 = vmatprep.subr.bf16.mxu0 %v4705
        %5372 = vmatpush2.bf16.msra.mxu0 %v4704
        %5373 = vmatprep.subr.bf16.mxu0 %v4697
        %5374 = vmatpush2.bf16.msra.mxu0 %v4696
        %5375 = vmatprep.subr.bf16.mxu0 %v4689
        %5376 = vmatpush2.bf16.msra.mxu0 %v4688
        %5377 = vmatprep.subr.bf16.mxu0 %v4681
        %5378 = vmatpush2.bf16.msra.mxu0 %v4680
        %5379 = vmatprep.subr.bf16.mxu0 %v4673
        %5380 = vmatpush2.bf16.msra.mxu0 %v4672
        %5381 = vmatprep.mubr.bf16.mxu0 %v3197
        %5382 = vmatmul.mubr.bf16.gmra.mxu0 %v3196
        %v5383 = vpop.f32.mrf.mxu0
        %v5384 = vadd.f32 %v5343, %v5383
        %v5385 = vpop.f32.mrf.mxu0
        %v5386 = vadd.f32 %v5345, %v5385
        %v5387 = vpop.f32.mrf.mxu0
        %v5388 = vpop.f32.mrf.mxu0
        %5389 = vdwg.mxu0
        %5390 = vmatprep.subr.bf16.mxu0 %v3771
        %5391 = vmatpush1.bf16.msra.mxu0 %v3770
        %5392 = vmatprep.subr.bf16.mxu0 %v3763
        %5393 = vmatpush1.bf16.msra.mxu0 %v3762
        %5394 = vmatprep.subr.bf16.mxu0 %v3755
        %5395 = vmatpush1.bf16.msra.mxu0 %v3754
        %5396 = vmatprep.subr.bf16.mxu0 %v3747
        %5397 = vmatpush1.bf16.msra.mxu0 %v3746
        %5398 = vmatprep.subr.bf16.mxu0 %v3739
        %5399 = vmatpush1.bf16.msra.mxu0 %v3738
        %5400 = vmatprep.subr.bf16.mxu0 %v3731
        %5401 = vmatpush1.bf16.msra.mxu0 %v3730
        %5402 = vmatprep.subr.bf16.mxu0 %v3723
        %5403 = vmatpush1.bf16.msra.mxu0 %v3722
        %5404 = vmatprep.subr.bf16.mxu0 %v3715
        %5405 = vmatpush1.bf16.msra.mxu0 %v3714
        %5406 = vmatprep.subr.bf16.mxu0 %v3835
        %5407 = vmatpush2.bf16.msra.mxu0 %v3834
        %5408 = vmatprep.subr.bf16.mxu0 %v3827
        %5409 = vmatpush2.bf16.msra.mxu0 %v3826
        %5410 = vmatprep.subr.bf16.mxu0 %v3819
        %5411 = vmatpush2.bf16.msra.mxu0 %v3818
        %5412 = vmatprep.subr.bf16.mxu0 %v3811
        %5413 = vmatpush2.bf16.msra.mxu0 %v3810
        %5414 = vmatprep.subr.bf16.mxu0 %v3803
        %5415 = vmatpush2.bf16.msra.mxu0 %v3802
        %5416 = vmatprep.subr.bf16.mxu0 %v3795
        %5417 = vmatpush2.bf16.msra.mxu0 %v3794
        %5418 = vmatprep.subr.bf16.mxu0 %v3787
        %5419 = vmatpush2.bf16.msra.mxu0 %v3786
        %5420 = vmatprep.subr.bf16.mxu0 %v3779
        %5421 = vmatpush2.bf16.msra.mxu0 %v3778
        %5422 = vmatprep.mubr.bf16.mxu0 %v3183
        %5423 = vmatmul.mubr.bf16.gmra.mxu0 %v3182
        %v5424 = vpop.f32.mrf.mxu0
        %v5425 = vadd.f32 0.0, %v5424
        %v5426 = vpop.f32.mrf.mxu0
        %v5427 = vadd.f32 0.0, %v5426
        %v5428 = vpop.f32.mrf.mxu0
        %v5429 = vpop.f32.mrf.mxu0
        %5430 = vdwg.mxu0
        %5431 = vmatprep.subr.bf16.mxu0 %v3899
        %5432 = vmatpush1.bf16.msra.mxu0 %v3898
        %5433 = vmatprep.subr.bf16.mxu0 %v3891
        %5434 = vmatpush1.bf16.msra.mxu0 %v3890
        %5435 = vmatprep.subr.bf16.mxu0 %v3883
        %5436 = vmatpush1.bf16.msra.mxu0 %v3882
        %5437 = vmatprep.subr.bf16.mxu0 %v3875
        %5438 = vmatpush1.bf16.msra.mxu0 %v3874
        %5439 = vmatprep.subr.bf16.mxu0 %v3867
        %5440 = vmatpush1.bf16.msra.mxu0 %v3866
        %5441 = vmatprep.subr.bf16.mxu0 %v3859
        %5442 = vmatpush1.bf16.msra.mxu0 %v3858
        %5443 = vmatprep.subr.bf16.mxu0 %v3851
        %5444 = vmatpush1.bf16.msra.mxu0 %v3850
        %5445 = vmatprep.subr.bf16.mxu0 %v3843
        %5446 = vmatpush1.bf16.msra.mxu0 %v3842
        %5447 = vmatprep.subr.bf16.mxu0 %v3963
        %5448 = vmatpush2.bf16.msra.mxu0 %v3962
        %5449 = vmatprep.subr.bf16.mxu0 %v3955
        %5450 = vmatpush2.bf16.msra.mxu0 %v3954
        %5451 = vmatprep.subr.bf16.mxu0 %v3947
        %5452 = vmatpush2.bf16.msra.mxu0 %v3946
        %5453 = vmatprep.subr.bf16.mxu0 %v3939
        %5454 = vmatpush2.bf16.msra.mxu0 %v3938
        %5455 = vmatprep.subr.bf16.mxu0 %v3931
        %5456 = vmatpush2.bf16.msra.mxu0 %v3930
        %5457 = vmatprep.subr.bf16.mxu0 %v3923
        %5458 = vmatpush2.bf16.msra.mxu0 %v3922
        %5459 = vmatprep.subr.bf16.mxu0 %v3915
        %5460 = vmatpush2.bf16.msra.mxu0 %v3914
        %5461 = vmatprep.subr.bf16.mxu0 %v3907
        %5462 = vmatpush2.bf16.msra.mxu0 %v3906
        %5463 = vmatprep.mubr.bf16.mxu0 %v3185
        %5464 = vmatmul.mubr.bf16.gmra.mxu0 %v3184
        %v5465 = vpop.f32.mrf.mxu0
        %v5466 = vadd.f32 %v5425, %v5465
        %v5467 = vpop.f32.mrf.mxu0
        %v5468 = vadd.f32 %v5427, %v5467
        %v5469 = vpop.f32.mrf.mxu0
        %v5470 = vpop.f32.mrf.mxu0
        %5471 = vdwg.mxu0
        %5472 = vmatprep.subr.bf16.mxu0 %v4027
        %5473 = vmatpush1.bf16.msra.mxu0 %v4026
        %5474 = vmatprep.subr.bf16.mxu0 %v4019
        %5475 = vmatpush1.bf16.msra.mxu0 %v4018
        %5476 = vmatprep.subr.bf16.mxu0 %v4011
        %5477 = vmatpush1.bf16.msra.mxu0 %v4010
        %5478 = vmatprep.subr.bf16.mxu0 %v4003
        %5479 = vmatpush1.bf16.msra.mxu0 %v4002
        %5480 = vmatprep.subr.bf16.mxu0 %v3995
        %5481 = vmatpush1.bf16.msra.mxu0 %v3994
        %5482 = vmatprep.subr.bf16.mxu0 %v3987
        %5483 = vmatpush1.bf16.msra.mxu0 %v3986
        %5484 = vmatprep.subr.bf16.mxu0 %v3979
        %5485 = vmatpush1.bf16.msra.mxu0 %v3978
        %5486 = vmatprep.subr.bf16.mxu0 %v3971
        %5487 = vmatpush1.bf16.msra.mxu0 %v3970
        %5488 = vmatprep.subr.bf16.mxu0 %v4091
        %5489 = vmatpush2.bf16.msra.mxu0 %v4090
        %5490 = vmatprep.subr.bf16.mxu0 %v4083
        %5491 = vmatpush2.bf16.msra.mxu0 %v4082
        %5492 = vmatprep.subr.bf16.mxu0 %v4075
        %5493 = vmatpush2.bf16.msra.mxu0 %v4074
        %5494 = vmatprep.subr.bf16.mxu0 %v4067
        %5495 = vmatpush2.bf16.msra.mxu0 %v4066
        %5496 = vmatprep.subr.bf16.mxu0 %v4059
        %5497 = vmatpush2.bf16.msra.mxu0 %v4058
        %5498 = vmatprep.subr.bf16.mxu0 %v4051
        %5499 = vmatpush2.bf16.msra.mxu0 %v4050
        %5500 = vmatprep.subr.bf16.mxu0 %v4043
        %5501 = vmatpush2.bf16.msra.mxu0 %v4042
        %5502 = vmatprep.subr.bf16.mxu0 %v4035
        %5503 = vmatpush2.bf16.msra.mxu0 %v4034
        %5504 = vmatprep.mubr.bf16.mxu0 %v3187
        %5505 = vmatmul.mubr.bf16.gmra.mxu0 %v3186
        %v5506 = vpop.f32.mrf.mxu0
        %v5507 = vadd.f32 %v5466, %v5506
        %v5508 = vpop.f32.mrf.mxu0
        %v5509 = vadd.f32 %v5468, %v5508
        %v5510 = vpop.f32.mrf.mxu0
        %v5511 = vpop.f32.mrf.mxu0
        %5512 = vdwg.mxu0
        %5513 = vmatprep.subr.bf16.mxu0 %v4155
        %5514 = vmatpush1.bf16.msra.mxu0 %v4154
        %5515 = vmatprep.subr.bf16.mxu0 %v4147
        %5516 = vmatpush1.bf16.msra.mxu0 %v4146
        %5517 = vmatprep.subr.bf16.mxu0 %v4139
        %5518 = vmatpush1.bf16.msra.mxu0 %v4138
        %5519 = vmatprep.subr.bf16.mxu0 %v4131
        %5520 = vmatpush1.bf16.msra.mxu0 %v4130
        %5521 = vmatprep.subr.bf16.mxu0 %v4123
        %5522 = vmatpush1.bf16.msra.mxu0 %v4122
        %5523 = vmatprep.subr.bf16.mxu0 %v4115
        %5524 = vmatpush1.bf16.msra.mxu0 %v4114
        %5525 = vmatprep.subr.bf16.mxu0 %v4107
        %5526 = vmatpush1.bf16.msra.mxu0 %v4106
        %5527 = vmatprep.subr.bf16.mxu0 %v4099
        %5528 = vmatpush1.bf16.msra.mxu0 %v4098
        %5529 = vmatprep.subr.bf16.mxu0 %v4219
        %5530 = vmatpush2.bf16.msra.mxu0 %v4218
        %5531 = vmatprep.subr.bf16.mxu0 %v4211
        %5532 = vmatpush2.bf16.msra.mxu0 %v4210
        %5533 = vmatprep.subr.bf16.mxu0 %v4203
        %5534 = vmatpush2.bf16.msra.mxu0 %v4202
        %5535 = vmatprep.subr.bf16.mxu0 %v4195
        %5536 = vmatpush2.bf16.msra.mxu0 %v4194
        %5537 = vmatprep.subr.bf16.mxu0 %v4187
        %5538 = vmatpush2.bf16.msra.mxu0 %v4186
        %5539 = vmatprep.subr.bf16.mxu0 %v4179
        %5540 = vmatpush2.bf16.msra.mxu0 %v4178
        %5541 = vmatprep.subr.bf16.mxu0 %v4171
        %5542 = vmatpush2.bf16.msra.mxu0 %v4170
        %5543 = vmatprep.subr.bf16.mxu0 %v4163
        %5544 = vmatpush2.bf16.msra.mxu0 %v4162
        %5545 = vmatprep.mubr.bf16.mxu0 %v3189
        %5546 = vmatmul.mubr.bf16.gmra.mxu0 %v3188
        %v5547 = vpop.f32.mrf.mxu0
        %v5548 = vadd.f32 %v5507, %v5547
        %v5549 = vpop.f32.mrf.mxu0
        %v5550 = vadd.f32 %v5509, %v5549
        %v5551 = vpop.f32.mrf.mxu0
        %v5552 = vpop.f32.mrf.mxu0
        %5553 = vdwg.mxu0
        %5554 = vmatprep.subr.bf16.mxu0 %v4283
        %5555 = vmatpush1.bf16.msra.mxu0 %v4282
        %5556 = vmatprep.subr.bf16.mxu0 %v4275
        %5557 = vmatpush1.bf16.msra.mxu0 %v4274
        %5558 = vmatprep.subr.bf16.mxu0 %v4267
        %5559 = vmatpush1.bf16.msra.mxu0 %v4266
        %5560 = vmatprep.subr.bf16.mxu0 %v4259
        %5561 = vmatpush1.bf16.msra.mxu0 %v4258
        %5562 = vmatprep.subr.bf16.mxu0 %v4251
        %5563 = vmatpush1.bf16.msra.mxu0 %v4250
        %5564 = vmatprep.subr.bf16.mxu0 %v4243
        %5565 = vmatpush1.bf16.msra.mxu0 %v4242
        %5566 = vmatprep.subr.bf16.mxu0 %v4235
        %5567 = vmatpush1.bf16.msra.mxu0 %v4234
        %5568 = vmatprep.subr.bf16.mxu0 %v4227
        %5569 = vmatpush1.bf16.msra.mxu0 %v4226
        %5570 = vmatprep.subr.bf16.mxu0 %v4347
        %5571 = vmatpush2.bf16.msra.mxu0 %v4346
        %5572 = vmatprep.subr.bf16.mxu0 %v4339
        %5573 = vmatpush2.bf16.msra.mxu0 %v4338
        %5574 = vmatprep.subr.bf16.mxu0 %v4331
        %5575 = vmatpush2.bf16.msra.mxu0 %v4330
        %5576 = vmatprep.subr.bf16.mxu0 %v4323
        %5577 = vmatpush2.bf16.msra.mxu0 %v4322
        %5578 = vmatprep.subr.bf16.mxu0 %v4315
        %5579 = vmatpush2.bf16.msra.mxu0 %v4314
        %5580 = vmatprep.subr.bf16.mxu0 %v4307
        %5581 = vmatpush2.bf16.msra.mxu0 %v4306
        %5582 = vmatprep.subr.bf16.mxu0 %v4299
        %5583 = vmatpush2.bf16.msra.mxu0 %v4298
        %5584 = vmatprep.subr.bf16.mxu0 %v4291
        %5585 = vmatpush2.bf16.msra.mxu0 %v4290
        %5586 = vmatprep.mubr.bf16.mxu0 %v3191
        %5587 = vmatmul.mubr.bf16.gmra.mxu0 %v3190
        %v5588 = vpop.f32.mrf.mxu0
        %v5589 = vadd.f32 %v5548, %v5588
        %v5590 = vpop.f32.mrf.mxu0
        %v5591 = vadd.f32 %v5550, %v5590
        %v5592 = vpop.f32.mrf.mxu0
        %v5593 = vpop.f32.mrf.mxu0
        %5594 = vdwg.mxu0
        %5595 = vmatprep.subr.bf16.mxu0 %v4411
        %5596 = vmatpush1.bf16.msra.mxu0 %v4410
        %5597 = vmatprep.subr.bf16.mxu0 %v4403
        %5598 = vmatpush1.bf16.msra.mxu0 %v4402
        %5599 = vmatprep.subr.bf16.mxu0 %v4395
        %5600 = vmatpush1.bf16.msra.mxu0 %v4394
        %5601 = vmatprep.subr.bf16.mxu0 %v4387
        %5602 = vmatpush1.bf16.msra.mxu0 %v4386
        %5603 = vmatprep.subr.bf16.mxu0 %v4379
        %5604 = vmatpush1.bf16.msra.mxu0 %v4378
        %5605 = vmatprep.subr.bf16.mxu0 %v4371
        %5606 = vmatpush1.bf16.msra.mxu0 %v4370
        %5607 = vmatprep.subr.bf16.mxu0 %v4363
        %5608 = vmatpush1.bf16.msra.mxu0 %v4362
        %5609 = vmatprep.subr.bf16.mxu0 %v4355
        %5610 = vmatpush1.bf16.msra.mxu0 %v4354
        %5611 = vmatprep.subr.bf16.mxu0 %v4475
        %5612 = vmatpush2.bf16.msra.mxu0 %v4474
        %5613 = vmatprep.subr.bf16.mxu0 %v4467
        %5614 = vmatpush2.bf16.msra.mxu0 %v4466
        %5615 = vmatprep.subr.bf16.mxu0 %v4459
        %5616 = vmatpush2.bf16.msra.mxu0 %v4458
        %5617 = vmatprep.subr.bf16.mxu0 %v4451
        %5618 = vmatpush2.bf16.msra.mxu0 %v4450
        %5619 = vmatprep.subr.bf16.mxu0 %v4443
        %5620 = vmatpush2.bf16.msra.mxu0 %v4442
        %5621 = vmatprep.subr.bf16.mxu0 %v4435
        %5622 = vmatpush2.bf16.msra.mxu0 %v4434
        %5623 = vmatprep.subr.bf16.mxu0 %v4427
        %5624 = vmatpush2.bf16.msra.mxu0 %v4426
        %5625 = vmatprep.subr.bf16.mxu0 %v4419
        %5626 = vmatpush2.bf16.msra.mxu0 %v4418
        %5627 = vmatprep.mubr.bf16.mxu0 %v3193
        %5628 = vmatmul.mubr.bf16.gmra.mxu0 %v3192
        %v5629 = vpop.f32.mrf.mxu0
        %v5630 = vadd.f32 %v5589, %v5629
        %v5631 = vpop.f32.mrf.mxu0
        %v5632 = vadd.f32 %v5591, %v5631
        %v5633 = vpop.f32.mrf.mxu0
        %v5634 = vpop.f32.mrf.mxu0
        %5635 = vdwg.mxu0
        %5636 = vmatprep.subr.bf16.mxu0 %v4539
        %5637 = vmatpush1.bf16.msra.mxu0 %v4538
        %5638 = vmatprep.subr.bf16.mxu0 %v4531
        %5639 = vmatpush1.bf16.msra.mxu0 %v4530
        %5640 = vmatprep.subr.bf16.mxu0 %v4523
        %5641 = vmatpush1.bf16.msra.mxu0 %v4522
        %5642 = vmatprep.subr.bf16.mxu0 %v4515
        %5643 = vmatpush1.bf16.msra.mxu0 %v4514
        %5644 = vmatprep.subr.bf16.mxu0 %v4507
        %5645 = vmatpush1.bf16.msra.mxu0 %v4506
        %5646 = vmatprep.subr.bf16.mxu0 %v4499
        %5647 = vmatpush1.bf16.msra.mxu0 %v4498
        %5648 = vmatprep.subr.bf16.mxu0 %v4491
        %5649 = vmatpush1.bf16.msra.mxu0 %v4490
        %5650 = vmatprep.subr.bf16.mxu0 %v4483
        %5651 = vmatpush1.bf16.msra.mxu0 %v4482
        %5652 = vmatprep.subr.bf16.mxu0 %v4603
        %5653 = vmatpush2.bf16.msra.mxu0 %v4602
        %5654 = vmatprep.subr.bf16.mxu0 %v4595
        %5655 = vmatpush2.bf16.msra.mxu0 %v4594
        %5656 = vmatprep.subr.bf16.mxu0 %v4587
        %5657 = vmatpush2.bf16.msra.mxu0 %v4586
        %5658 = vmatprep.subr.bf16.mxu0 %v4579
        %5659 = vmatpush2.bf16.msra.mxu0 %v4578
        %5660 = vmatprep.subr.bf16.mxu0 %v4571
        %5661 = vmatpush2.bf16.msra.mxu0 %v4570
        %5662 = vmatprep.subr.bf16.mxu0 %v4563
        %5663 = vmatpush2.bf16.msra.mxu0 %v4562
        %5664 = vmatprep.subr.bf16.mxu0 %v4555
        %5665 = vmatpush2.bf16.msra.mxu0 %v4554
        %5666 = vmatprep.subr.bf16.mxu0 %v4547
        %5667 = vmatpush2.bf16.msra.mxu0 %v4546
        %5668 = vmatprep.mubr.bf16.mxu0 %v3195
        %5669 = vmatmul.mubr.bf16.gmra.mxu0 %v3194
        %v5670 = vpop.f32.mrf.mxu0
        %v5671 = vadd.f32 %v5630, %v5670
        %v5672 = vpop.f32.mrf.mxu0
        %v5673 = vadd.f32 %v5632, %v5672
        %v5674 = vpop.f32.mrf.mxu0
        %v5675 = vpop.f32.mrf.mxu0
        %5676 = vdwg.mxu0
        %5677 = vmatprep.subr.bf16.mxu0 %v4667
        %5678 = vmatpush1.bf16.msra.mxu0 %v4666
        %5679 = vmatprep.subr.bf16.mxu0 %v4659
        %5680 = vmatpush1.bf16.msra.mxu0 %v4658
        %5681 = vmatprep.subr.bf16.mxu0 %v4651
        %5682 = vmatpush1.bf16.msra.mxu0 %v4650
        %5683 = vmatprep.subr.bf16.mxu0 %v4643
        %5684 = vmatpush1.bf16.msra.mxu0 %v4642
        %5685 = vmatprep.subr.bf16.mxu0 %v4635
        %5686 = vmatpush1.bf16.msra.mxu0 %v4634
        %5687 = vmatprep.subr.bf16.mxu0 %v4627
        %5688 = vmatpush1.bf16.msra.mxu0 %v4626
        %5689 = vmatprep.subr.bf16.mxu0 %v4619
        %5690 = vmatpush1.bf16.msra.mxu0 %v4618
        %5691 = vmatprep.subr.bf16.mxu0 %v4611
        %5692 = vmatpush1.bf16.msra.mxu0 %v4610
        %5693 = vmatprep.subr.bf16.mxu0 %v4731
        %5694 = vmatpush2.bf16.msra.mxu0 %v4730
        %5695 = vmatprep.subr.bf16.mxu0 %v4723
        %5696 = vmatpush2.bf16.msra.mxu0 %v4722
        %5697 = vmatprep.subr.bf16.mxu0 %v4715
        %5698 = vmatpush2.bf16.msra.mxu0 %v4714
        %5699 = vmatprep.subr.bf16.mxu0 %v4707
        %5700 = vmatpush2.bf16.msra.mxu0 %v4706
        %5701 = vmatprep.subr.bf16.mxu0 %v4699
        %5702 = vmatpush2.bf16.msra.mxu0 %v4698
        %5703 = vmatprep.subr.bf16.mxu0 %v4691
        %5704 = vmatpush2.bf16.msra.mxu0 %v4690
        %5705 = vmatprep.subr.bf16.mxu0 %v4683
        %5706 = vmatpush2.bf16.msra.mxu0 %v4682
        %5707 = vmatprep.subr.bf16.mxu0 %v4675
        %5708 = vmatpush2.bf16.msra.mxu0 %v4674
        %5709 = vmatprep.mubr.bf16.mxu0 %v3197
        %5710 = vmatmul.mubr.bf16.gmra.mxu0 %v3196
        %v5711 = vpop.f32.mrf.mxu0
        %v5712 = vadd.f32 %v5671, %v5711
        %v5713 = vpop.f32.mrf.mxu0
        %v5714 = vadd.f32 %v5673, %v5713
        %v5715 = vpop.f32.mrf.mxu0
        %v5716 = vpop.f32.mrf.mxu0
        %5717 = vdwg.mxu0
        %5718 = vmatprep.subr.bf16.mxu0 %v3773
        %5719 = vmatpush1.bf16.msra.mxu0 %v3772
        %5720 = vmatprep.subr.bf16.mxu0 %v3765
        %5721 = vmatpush1.bf16.msra.mxu0 %v3764
        %5722 = vmatprep.subr.bf16.mxu0 %v3757
        %5723 = vmatpush1.bf16.msra.mxu0 %v3756
        %5724 = vmatprep.subr.bf16.mxu0 %v3749
        %5725 = vmatpush1.bf16.msra.mxu0 %v3748
        %5726 = vmatprep.subr.bf16.mxu0 %v3741
        %5727 = vmatpush1.bf16.msra.mxu0 %v3740
        %5728 = vmatprep.subr.bf16.mxu0 %v3733
        %5729 = vmatpush1.bf16.msra.mxu0 %v3732
        %5730 = vmatprep.subr.bf16.mxu0 %v3725
        %5731 = vmatpush1.bf16.msra.mxu0 %v3724
        %5732 = vmatprep.subr.bf16.mxu0 %v3717
        %5733 = vmatpush1.bf16.msra.mxu0 %v3716
        %5734 = vmatprep.subr.bf16.mxu0 %v3837
        %5735 = vmatpush2.bf16.msra.mxu0 %v3836
        %5736 = vmatprep.subr.bf16.mxu0 %v3829
        %5737 = vmatpush2.bf16.msra.mxu0 %v3828
        %5738 = vmatprep.subr.bf16.mxu0 %v3821
        %5739 = vmatpush2.bf16.msra.mxu0 %v3820
        %5740 = vmatprep.subr.bf16.mxu0 %v3813
        %5741 = vmatpush2.bf16.msra.mxu0 %v3812
        %5742 = vmatprep.subr.bf16.mxu0 %v3805
        %5743 = vmatpush2.bf16.msra.mxu0 %v3804
        %5744 = vmatprep.subr.bf16.mxu0 %v3797
        %5745 = vmatpush2.bf16.msra.mxu0 %v3796
        %5746 = vmatprep.subr.bf16.mxu0 %v3789
        %5747 = vmatpush2.bf16.msra.mxu0 %v3788
        %5748 = vmatprep.subr.bf16.mxu0 %v3781
        %5749 = vmatpush2.bf16.msra.mxu0 %v3780
        %5750 = vmatprep.mubr.bf16.mxu0 %v3183
        %5751 = vmatmul.mubr.bf16.gmra.mxu0 %v3182
        %v5752 = vpop.f32.mrf.mxu0
        %v5753 = vadd.f32 0.0, %v5752
        %v5754 = vpop.f32.mrf.mxu0
        %v5755 = vadd.f32 0.0, %v5754
        %v5756 = vpop.f32.mrf.mxu0
        %v5757 = vpop.f32.mrf.mxu0
        %5758 = vdwg.mxu0
        %5759 = vmatprep.subr.bf16.mxu0 %v3901
        %5760 = vmatpush1.bf16.msra.mxu0 %v3900
        %5761 = vmatprep.subr.bf16.mxu0 %v3893
        %5762 = vmatpush1.bf16.msra.mxu0 %v3892
        %5763 = vmatprep.subr.bf16.mxu0 %v3885
        %5764 = vmatpush1.bf16.msra.mxu0 %v3884
        %5765 = vmatprep.subr.bf16.mxu0 %v3877
        %5766 = vmatpush1.bf16.msra.mxu0 %v3876
        %5767 = vmatprep.subr.bf16.mxu0 %v3869
        %5768 = vmatpush1.bf16.msra.mxu0 %v3868
        %5769 = vmatprep.subr.bf16.mxu0 %v3861
        %5770 = vmatpush1.bf16.msra.mxu0 %v3860
        %5771 = vmatprep.subr.bf16.mxu0 %v3853
        %5772 = vmatpush1.bf16.msra.mxu0 %v3852
        %5773 = vmatprep.subr.bf16.mxu0 %v3845
        %5774 = vmatpush1.bf16.msra.mxu0 %v3844
        %5775 = vmatprep.subr.bf16.mxu0 %v3965
        %5776 = vmatpush2.bf16.msra.mxu0 %v3964
        %5777 = vmatprep.subr.bf16.mxu0 %v3957
        %5778 = vmatpush2.bf16.msra.mxu0 %v3956
        %5779 = vmatprep.subr.bf16.mxu0 %v3949
        %5780 = vmatpush2.bf16.msra.mxu0 %v3948
        %5781 = vmatprep.subr.bf16.mxu0 %v3941
        %5782 = vmatpush2.bf16.msra.mxu0 %v3940
        %5783 = vmatprep.subr.bf16.mxu0 %v3933
        %5784 = vmatpush2.bf16.msra.mxu0 %v3932
        %5785 = vmatprep.subr.bf16.mxu0 %v3925
        %5786 = vmatpush2.bf16.msra.mxu0 %v3924
        %5787 = vmatprep.subr.bf16.mxu0 %v3917
        %5788 = vmatpush2.bf16.msra.mxu0 %v3916
        %5789 = vmatprep.subr.bf16.mxu0 %v3909
        %5790 = vmatpush2.bf16.msra.mxu0 %v3908
        %5791 = vmatprep.mubr.bf16.mxu0 %v3185
        %5792 = vmatmul.mubr.bf16.gmra.mxu0 %v3184
        %v5793 = vpop.f32.mrf.mxu0
        %v5794 = vadd.f32 %v5753, %v5793
        %v5795 = vpop.f32.mrf.mxu0
        %v5796 = vadd.f32 %v5755, %v5795
        %v5797 = vpop.f32.mrf.mxu0
        %v5798 = vpop.f32.mrf.mxu0
        %5799 = vdwg.mxu0
        %5800 = vmatprep.subr.bf16.mxu0 %v4029
        %5801 = vmatpush1.bf16.msra.mxu0 %v4028
        %5802 = vmatprep.subr.bf16.mxu0 %v4021
        %5803 = vmatpush1.bf16.msra.mxu0 %v4020
        %5804 = vmatprep.subr.bf16.mxu0 %v4013
        %5805 = vmatpush1.bf16.msra.mxu0 %v4012
        %5806 = vmatprep.subr.bf16.mxu0 %v4005
        %5807 = vmatpush1.bf16.msra.mxu0 %v4004
        %5808 = vmatprep.subr.bf16.mxu0 %v3997
        %5809 = vmatpush1.bf16.msra.mxu0 %v3996
        %5810 = vmatprep.subr.bf16.mxu0 %v3989
        %5811 = vmatpush1.bf16.msra.mxu0 %v3988
        %5812 = vmatprep.subr.bf16.mxu0 %v3981
        %5813 = vmatpush1.bf16.msra.mxu0 %v3980
        %5814 = vmatprep.subr.bf16.mxu0 %v3973
        %5815 = vmatpush1.bf16.msra.mxu0 %v3972
        %5816 = vmatprep.subr.bf16.mxu0 %v4093
        %5817 = vmatpush2.bf16.msra.mxu0 %v4092
        %5818 = vmatprep.subr.bf16.mxu0 %v4085
        %5819 = vmatpush2.bf16.msra.mxu0 %v4084
        %5820 = vmatprep.subr.bf16.mxu0 %v4077
        %5821 = vmatpush2.bf16.msra.mxu0 %v4076
        %5822 = vmatprep.subr.bf16.mxu0 %v4069
        %5823 = vmatpush2.bf16.msra.mxu0 %v4068
        %5824 = vmatprep.subr.bf16.mxu0 %v4061
        %5825 = vmatpush2.bf16.msra.mxu0 %v4060
        %5826 = vmatprep.subr.bf16.mxu0 %v4053
        %5827 = vmatpush2.bf16.msra.mxu0 %v4052
        %5828 = vmatprep.subr.bf16.mxu0 %v4045
        %5829 = vmatpush2.bf16.msra.mxu0 %v4044
        %5830 = vmatprep.subr.bf16.mxu0 %v4037
        %5831 = vmatpush2.bf16.msra.mxu0 %v4036
        %5832 = vmatprep.mubr.bf16.mxu0 %v3187
        %5833 = vmatmul.mubr.bf16.gmra.mxu0 %v3186
        %v5834 = vpop.f32.mrf.mxu0
        %v5835 = vadd.f32 %v5794, %v5834
        %v5836 = vpop.f32.mrf.mxu0
        %v5837 = vadd.f32 %v5796, %v5836
        %v5838 = vpop.f32.mrf.mxu0
        %v5839 = vpop.f32.mrf.mxu0
        %5840 = vdwg.mxu0
        %5841 = vmatprep.subr.bf16.mxu0 %v4157
        %5842 = vmatpush1.bf16.msra.mxu0 %v4156
        %5843 = vmatprep.subr.bf16.mxu0 %v4149
        %5844 = vmatpush1.bf16.msra.mxu0 %v4148
        %5845 = vmatprep.subr.bf16.mxu0 %v4141
        %5846 = vmatpush1.bf16.msra.mxu0 %v4140
        %5847 = vmatprep.subr.bf16.mxu0 %v4133
        %5848 = vmatpush1.bf16.msra.mxu0 %v4132
        %5849 = vmatprep.subr.bf16.mxu0 %v4125
        %5850 = vmatpush1.bf16.msra.mxu0 %v4124
        %5851 = vmatprep.subr.bf16.mxu0 %v4117
        %5852 = vmatpush1.bf16.msra.mxu0 %v4116
        %5853 = vmatprep.subr.bf16.mxu0 %v4109
        %5854 = vmatpush1.bf16.msra.mxu0 %v4108
        %5855 = vmatprep.subr.bf16.mxu0 %v4101
        %5856 = vmatpush1.bf16.msra.mxu0 %v4100
        %5857 = vmatprep.subr.bf16.mxu0 %v4221
        %5858 = vmatpush2.bf16.msra.mxu0 %v4220
        %5859 = vmatprep.subr.bf16.mxu0 %v4213
        %5860 = vmatpush2.bf16.msra.mxu0 %v4212
        %5861 = vmatprep.subr.bf16.mxu0 %v4205
        %5862 = vmatpush2.bf16.msra.mxu0 %v4204
        %5863 = vmatprep.subr.bf16.mxu0 %v4197
        %5864 = vmatpush2.bf16.msra.mxu0 %v4196
        %5865 = vmatprep.subr.bf16.mxu0 %v4189
        %5866 = vmatpush2.bf16.msra.mxu0 %v4188
        %5867 = vmatprep.subr.bf16.mxu0 %v4181
        %5868 = vmatpush2.bf16.msra.mxu0 %v4180
        %5869 = vmatprep.subr.bf16.mxu0 %v4173
        %5870 = vmatpush2.bf16.msra.mxu0 %v4172
        %5871 = vmatprep.subr.bf16.mxu0 %v4165
        %5872 = vmatpush2.bf16.msra.mxu0 %v4164
        %5873 = vmatprep.mubr.bf16.mxu0 %v3189
        %5874 = vmatmul.mubr.bf16.gmra.mxu0 %v3188
        %v5875 = vpop.f32.mrf.mxu0
        %v5876 = vadd.f32 %v5835, %v5875
        %v5877 = vpop.f32.mrf.mxu0
        %v5878 = vadd.f32 %v5837, %v5877
        %v5879 = vpop.f32.mrf.mxu0
        %v5880 = vpop.f32.mrf.mxu0
        %5881 = vdwg.mxu0
        %5882 = vmatprep.subr.bf16.mxu0 %v4285
        %5883 = vmatpush1.bf16.msra.mxu0 %v4284
        %5884 = vmatprep.subr.bf16.mxu0 %v4277
        %5885 = vmatpush1.bf16.msra.mxu0 %v4276
        %5886 = vmatprep.subr.bf16.mxu0 %v4269
        %5887 = vmatpush1.bf16.msra.mxu0 %v4268
        %5888 = vmatprep.subr.bf16.mxu0 %v4261
        %5889 = vmatpush1.bf16.msra.mxu0 %v4260
        %5890 = vmatprep.subr.bf16.mxu0 %v4253
        %5891 = vmatpush1.bf16.msra.mxu0 %v4252
        %5892 = vmatprep.subr.bf16.mxu0 %v4245
        %5893 = vmatpush1.bf16.msra.mxu0 %v4244
        %5894 = vmatprep.subr.bf16.mxu0 %v4237
        %5895 = vmatpush1.bf16.msra.mxu0 %v4236
        %5896 = vmatprep.subr.bf16.mxu0 %v4229
        %5897 = vmatpush1.bf16.msra.mxu0 %v4228
        %5898 = vmatprep.subr.bf16.mxu0 %v4349
        %5899 = vmatpush2.bf16.msra.mxu0 %v4348
        %5900 = vmatprep.subr.bf16.mxu0 %v4341
        %5901 = vmatpush2.bf16.msra.mxu0 %v4340
        %5902 = vmatprep.subr.bf16.mxu0 %v4333
        %5903 = vmatpush2.bf16.msra.mxu0 %v4332
        %5904 = vmatprep.subr.bf16.mxu0 %v4325
        %5905 = vmatpush2.bf16.msra.mxu0 %v4324
        %5906 = vmatprep.subr.bf16.mxu0 %v4317
        %5907 = vmatpush2.bf16.msra.mxu0 %v4316
        %5908 = vmatprep.subr.bf16.mxu0 %v4309
        %5909 = vmatpush2.bf16.msra.mxu0 %v4308
        %5910 = vmatprep.subr.bf16.mxu0 %v4301
        %5911 = vmatpush2.bf16.msra.mxu0 %v4300
        %5912 = vmatprep.subr.bf16.mxu0 %v4293
        %5913 = vmatpush2.bf16.msra.mxu0 %v4292
        %5914 = vmatprep.mubr.bf16.mxu0 %v3191
        %5915 = vmatmul.mubr.bf16.gmra.mxu0 %v3190
        %v5916 = vpop.f32.mrf.mxu0
        %v5917 = vadd.f32 %v5876, %v5916
        %v5918 = vpop.f32.mrf.mxu0
        %v5919 = vadd.f32 %v5878, %v5918
        %v5920 = vpop.f32.mrf.mxu0
        %v5921 = vpop.f32.mrf.mxu0
        %5922 = vdwg.mxu0
        %5923 = vmatprep.subr.bf16.mxu0 %v4413
        %5924 = vmatpush1.bf16.msra.mxu0 %v4412
        %5925 = vmatprep.subr.bf16.mxu0 %v4405
        %5926 = vmatpush1.bf16.msra.mxu0 %v4404
        %5927 = vmatprep.subr.bf16.mxu0 %v4397
        %5928 = vmatpush1.bf16.msra.mxu0 %v4396
        %5929 = vmatprep.subr.bf16.mxu0 %v4389
        %5930 = vmatpush1.bf16.msra.mxu0 %v4388
        %5931 = vmatprep.subr.bf16.mxu0 %v4381
        %5932 = vmatpush1.bf16.msra.mxu0 %v4380
        %5933 = vmatprep.subr.bf16.mxu0 %v4373
        %5934 = vmatpush1.bf16.msra.mxu0 %v4372
        %5935 = vmatprep.subr.bf16.mxu0 %v4365
        %5936 = vmatpush1.bf16.msra.mxu0 %v4364
        %5937 = vmatprep.subr.bf16.mxu0 %v4357
        %5938 = vmatpush1.bf16.msra.mxu0 %v4356
        %5939 = vmatprep.subr.bf16.mxu0 %v4477
        %5940 = vmatpush2.bf16.msra.mxu0 %v4476
        %5941 = vmatprep.subr.bf16.mxu0 %v4469
        %5942 = vmatpush2.bf16.msra.mxu0 %v4468
        %5943 = vmatprep.subr.bf16.mxu0 %v4461
        %5944 = vmatpush2.bf16.msra.mxu0 %v4460
        %5945 = vmatprep.subr.bf16.mxu0 %v4453
        %5946 = vmatpush2.bf16.msra.mxu0 %v4452
        %5947 = vmatprep.subr.bf16.mxu0 %v4445
        %5948 = vmatpush2.bf16.msra.mxu0 %v4444
        %5949 = vmatprep.subr.bf16.mxu0 %v4437
        %5950 = vmatpush2.bf16.msra.mxu0 %v4436
        %5951 = vmatprep.subr.bf16.mxu0 %v4429
        %5952 = vmatpush2.bf16.msra.mxu0 %v4428
        %5953 = vmatprep.subr.bf16.mxu0 %v4421
        %5954 = vmatpush2.bf16.msra.mxu0 %v4420
        %5955 = vmatprep.mubr.bf16.mxu0 %v3193
        %5956 = vmatmul.mubr.bf16.gmra.mxu0 %v3192
        %v5957 = vpop.f32.mrf.mxu0
        %v5958 = vadd.f32 %v5917, %v5957
        %v5959 = vpop.f32.mrf.mxu0
        %v5960 = vadd.f32 %v5919, %v5959
        %v5961 = vpop.f32.mrf.mxu0
        %v5962 = vpop.f32.mrf.mxu0
        %5963 = vdwg.mxu0
        %5964 = vmatprep.subr.bf16.mxu0 %v4541
        %5965 = vmatpush1.bf16.msra.mxu0 %v4540
        %5966 = vmatprep.subr.bf16.mxu0 %v4533
        %5967 = vmatpush1.bf16.msra.mxu0 %v4532
        %5968 = vmatprep.subr.bf16.mxu0 %v4525
        %5969 = vmatpush1.bf16.msra.mxu0 %v4524
        %5970 = vmatprep.subr.bf16.mxu0 %v4517
        %5971 = vmatpush1.bf16.msra.mxu0 %v4516
        %5972 = vmatprep.subr.bf16.mxu0 %v4509
        %5973 = vmatpush1.bf16.msra.mxu0 %v4508
        %5974 = vmatprep.subr.bf16.mxu0 %v4501
        %5975 = vmatpush1.bf16.msra.mxu0 %v4500
        %5976 = vmatprep.subr.bf16.mxu0 %v4493
        %5977 = vmatpush1.bf16.msra.mxu0 %v4492
        %5978 = vmatprep.subr.bf16.mxu0 %v4485
        %5979 = vmatpush1.bf16.msra.mxu0 %v4484
        %5980 = vmatprep.subr.bf16.mxu0 %v4605
        %5981 = vmatpush2.bf16.msra.mxu0 %v4604
        %5982 = vmatprep.subr.bf16.mxu0 %v4597
        %5983 = vmatpush2.bf16.msra.mxu0 %v4596
        %5984 = vmatprep.subr.bf16.mxu0 %v4589
        %5985 = vmatpush2.bf16.msra.mxu0 %v4588
        %5986 = vmatprep.subr.bf16.mxu0 %v4581
        %5987 = vmatpush2.bf16.msra.mxu0 %v4580
        %5988 = vmatprep.subr.bf16.mxu0 %v4573
        %5989 = vmatpush2.bf16.msra.mxu0 %v4572
        %5990 = vmatprep.subr.bf16.mxu0 %v4565
        %5991 = vmatpush2.bf16.msra.mxu0 %v4564
        %5992 = vmatprep.subr.bf16.mxu0 %v4557
        %5993 = vmatpush2.bf16.msra.mxu0 %v4556
        %5994 = vmatprep.subr.bf16.mxu0 %v4549
        %5995 = vmatpush2.bf16.msra.mxu0 %v4548
        %5996 = vmatprep.mubr.bf16.mxu0 %v3195
        %5997 = vmatmul.mubr.bf16.gmra.mxu0 %v3194
        %v5998 = vpop.f32.mrf.mxu0
        %v5999 = vadd.f32 %v5958, %v5998
        %v6000 = vpop.f32.mrf.mxu0
        %v6001 = vadd.f32 %v5960, %v6000
        %v6002 = vpop.f32.mrf.mxu0
        %v6003 = vpop.f32.mrf.mxu0
        %6004 = vdwg.mxu0
        %6005 = vmatprep.subr.bf16.mxu0 %v4669
        %6006 = vmatpush1.bf16.msra.mxu0 %v4668
        %6007 = vmatprep.subr.bf16.mxu0 %v4661
        %6008 = vmatpush1.bf16.msra.mxu0 %v4660
        %6009 = vmatprep.subr.bf16.mxu0 %v4653
        %6010 = vmatpush1.bf16.msra.mxu0 %v4652
        %6011 = vmatprep.subr.bf16.mxu0 %v4645
        %6012 = vmatpush1.bf16.msra.mxu0 %v4644
        %6013 = vmatprep.subr.bf16.mxu0 %v4637
        %6014 = vmatpush1.bf16.msra.mxu0 %v4636
        %6015 = vmatprep.subr.bf16.mxu0 %v4629
        %6016 = vmatpush1.bf16.msra.mxu0 %v4628
        %6017 = vmatprep.subr.bf16.mxu0 %v4621
        %6018 = vmatpush1.bf16.msra.mxu0 %v4620
        %6019 = vmatprep.subr.bf16.mxu0 %v4613
        %6020 = vmatpush1.bf16.msra.mxu0 %v4612
        %6021 = vmatprep.subr.bf16.mxu0 %v4733
        %6022 = vmatpush2.bf16.msra.mxu0 %v4732
        %6023 = vmatprep.subr.bf16.mxu0 %v4725
        %6024 = vmatpush2.bf16.msra.mxu0 %v4724
        %6025 = vmatprep.subr.bf16.mxu0 %v4717
        %6026 = vmatpush2.bf16.msra.mxu0 %v4716
        %6027 = vmatprep.subr.bf16.mxu0 %v4709
        %6028 = vmatpush2.bf16.msra.mxu0 %v4708
        %6029 = vmatprep.subr.bf16.mxu0 %v4701
        %6030 = vmatpush2.bf16.msra.mxu0 %v4700
        %6031 = vmatprep.subr.bf16.mxu0 %v4693
        %6032 = vmatpush2.bf16.msra.mxu0 %v4692
        %6033 = vmatprep.subr.bf16.mxu0 %v4685
        %6034 = vmatpush2.bf16.msra.mxu0 %v4684
        %6035 = vmatprep.subr.bf16.mxu0 %v4677
        %6036 = vmatpush2.bf16.msra.mxu0 %v4676
        %6037 = vmatprep.mubr.bf16.mxu0 %v3197
        %6038 = vmatmul.mubr.bf16.gmra.mxu0 %v3196
        %v6039 = vpop.f32.mrf.mxu0
        %v6040 = vadd.f32 %v5999, %v6039
        %v6041 = vpop.f32.mrf.mxu0
        %v6042 = vadd.f32 %v6001, %v6041
        %v6043 = vpop.f32.mrf.mxu0
        %v6044 = vpop.f32.mrf.mxu0
        %6045 = vdwg.mxu0
        %v6046 = vld [vmem:[#allocation8] sm:$0xff]
        %v6048 = vlaneseq
        %v6049 = vshrl.u32 %v6048, 7
        %v6050 = vsub.s32 0, %v6049
        %v6051 = vrot.slane %v6046, %v6050
        %v6052 = vlaneseq
        %v6053 = vshrl.u32 %v6052, 7
        %v6054 = vsub.s32 1, %v6053
        %v6055 = vrot.slane %v6046, %v6054
        %v6056 = vlaneseq
        %v6057 = vshrl.u32 %v6056, 7
        %v6058 = vsub.s32 2, %v6057
        %v6059 = vrot.slane %v6046, %v6058
        %v6060 = vlaneseq
        %v6061 = vshrl.u32 %v6060, 7
        %v6062 = vsub.s32 3, %v6061
        %v6063 = vrot.slane %v6046, %v6062
        %v6064 = vlaneseq
        %v6065 = vshrl.u32 %v6064, 7
        %v6066 = vsub.s32 4, %v6065
        %v6067 = vrot.slane %v6046, %v6066
        %v6068 = vlaneseq
        %v6069 = vshrl.u32 %v6068, 7
        %v6070 = vsub.s32 5, %v6069
        %v6071 = vrot.slane %v6046, %v6070
        %v6072 = vlaneseq
        %v6073 = vshrl.u32 %v6072, 7
        %v6074 = vsub.s32 6, %v6073
        %v6075 = vrot.slane %v6046, %v6074
        %v6076 = vlaneseq
        %v6077 = vshrl.u32 %v6076, 7
        %v6078 = vsub.s32 7, %v6077
        %v6079 = vrot.slane %v6046, %v6078
        %v6088 = vmul.f32 %v5056, %v6051
        %v6089 = vmul.f32 %v5058, %v6055
        %v6090 = vmul.f32 %v5384, %v6059
        %v6091 = vmul.f32 %v5386, %v6063
        %v6092 = vmul.f32 %v5712, %v6067
        %v6093 = vmul.f32 %v5714, %v6071
        %v6094 = vmul.f32 %v6040, %v6075
        %v6095 = vmul.f32 %v6042, %v6079
        %p6096 = scmp.eq.s32.totalorder %s28, 0
        // Predicated region
        $region53: #{tpu_custom_call.1} parent=35 // pred_check
          %p6097 = pneg %p6096
        $region54: #{tpu_custom_call.1} parent=35 // pred_check_branch
          %6099 = sbr.rel (%p6097) target = $region56
        $region55: #{tpu_custom_call.1} parent=35 // pred_region
          %6100 = vst [vmem:[%s297] sm:$0xff] %v6088
          %6101 = vst [vmem:[%s297 + $0x8] sm:$0xff] %v6089
          %6102 = vst [vmem:[%s297 + $0x10] sm:$0xff] %v6090
          %6103 = vst [vmem:[%s297 + $0x18] sm:$0xff] %v6091
          %6104 = vst [vmem:[%s297 + $0x20] sm:$0xff] %v6092
          %6105 = vst [vmem:[%s297 + $0x28] sm:$0xff] %v6093
          %6106 = vst [vmem:[%s297 + $0x30] sm:$0xff] %v6094
          %6107 = vst [vmem:[%s297 + $0x38] sm:$0xff] %v6095
        $region56: #{tpu_custom_call.1} parent=35 // pred_fallthru
          _
        %p6108 = scmp.ne.s32.totalorder %s28, 0
        // Predicated region
        $region57: #{tpu_custom_call.1} parent=35 // pred_check
          %p6109 = pneg %p6108
        $region58: #{tpu_custom_call.1} parent=35 // pred_check_branch
          %6111 = sbr.rel (%p6109) target = $region60
        $region59: #{tpu_custom_call.1} parent=35 // pred_region
          %v6112 = vld [vmem:[%s297] sm:$0xff]
          %v6113 = vld [vmem:[%s297 + $0x8] sm:$0xff]
          %v6114 = vld [vmem:[%s297 + $0x10] sm:$0xff]
          %v6115 = vld [vmem:[%s297 + $0x18] sm:$0xff]
          %v6116 = vld [vmem:[%s297 + $0x20] sm:$0xff]
          %v6117 = vld [vmem:[%s297 + $0x28] sm:$0xff]
          %v6118 = vld [vmem:[%s297 + $0x30] sm:$0xff]
          %v6119 = vld [vmem:[%s297 + $0x38] sm:$0xff]
          %v6120 = vadd.f32 %v6112, %v6088
          %v6121 = vadd.f32 %v6113, %v6089
          %v6122 = vadd.f32 %v6114, %v6090
          %v6123 = vadd.f32 %v6115, %v6091
          %v6124 = vadd.f32 %v6116, %v6092
          %v6125 = vadd.f32 %v6117, %v6093
          %v6126 = vadd.f32 %v6118, %v6094
          %v6127 = vadd.f32 %v6119, %v6095
          %6128 = vst [vmem:[%s297] sm:$0xff] %v6120
          %6129 = vst [vmem:[%s297 + $0x8] sm:$0xff] %v6121
          %6130 = vst [vmem:[%s297 + $0x10] sm:$0xff] %v6122
          %6131 = vst [vmem:[%s297 + $0x18] sm:$0xff] %v6123
          %6132 = vst [vmem:[%s297 + $0x20] sm:$0xff] %v6124
          %6133 = vst [vmem:[%s297 + $0x28] sm:$0xff] %v6125
          %6134 = vst [vmem:[%s297 + $0x30] sm:$0xff] %v6126
          %6135 = vst [vmem:[%s297 + $0x38] sm:$0xff] %v6127
        $region60: #{tpu_custom_call.1} parent=35 // pred_fallthru
          _
        %s6136 = sand.u32 %s141, 1
        %s6137 = scalar_lea.sflag [#allocation4], %s6136
        %s6138 = sand.u32 %s141, 1
        %s6139 = smul.addr %s6138, 64
        %s6140 = scalar_lea.vmem [#allocation10], %s6139
        // Predicated region
        $region61: #{tpu_custom_call.1} parent=35 // pred_check
          %p6141 = pneg %p151
        $region62: #{tpu_custom_call.1} parent=35 // pred_check_branch
          %6143 = sbr.rel (%p6141) target = $region64
        $region63: #{tpu_custom_call.1} parent=35 // pred_region
          %s6145 = ssub.s32 1024, 1024
          %6146 = vsyncadd %s6137, %s6145
          %s6147 = smul.addr %s27, 8
          %s6148 = smul.addr %s6147, 128
          %s6149 = scalar_lea.hbm %s4, %s6148
          %s6151 = sshll.u32 %s6140, 4
          %s6152 = int_to_ptr.vmem [resolvable:$true] %s6151
          %6154 = dma.vmem_to_hbm [thread:$0]  %s6152, 1024, %s6149, %s6137
        $region64: #{tpu_custom_call.1} parent=35 // pred_fallthru
          _
      $region36: #{tpu_custom_call.1} parent=5 // pred_fallthru
        _
      %p6155 = scmp.le.s32.totalorder 2, %s18
      // Predicated region
      $region65: #{tpu_custom_call.1} parent=5 // pred_check
        %p6156 = pneg %p6155
      $region66: #{tpu_custom_call.1} parent=5 // pred_check_branch
        %6158 = sbr.rel (%p6156) target = $region68
      $region67: #{tpu_custom_call.1} parent=5 // pred_region
        %s6159 = ssub.s32 %s18, 2
        // Predicated region
        $region69: #{tpu_custom_call.1} parent=67 // pred_check
          %p6160 = pneg %p157
        $region70: #{tpu_custom_call.1} parent=67 // pred_check_branch
          %6162 = sbr.rel (%p6160) target = $region72
        $region71: #{tpu_custom_call.1} parent=67 // pred_region
          %s6163 = sand.u32 %s142, 1
          %s6164 = scalar_lea.sflag [#allocation4], %s6163
          %s6165 = sand.u32 %s142, 1
          %s6166 = smul.addr %s6165, 64
          %s6167 = scalar_lea.vmem [#allocation10], %s6166
          %6168 = dma.done %s6164, 1024
        $region72: #{tpu_custom_call.1} parent=67 // pred_fallthru
          _
      $region68: #{tpu_custom_call.1} parent=5 // pred_fallthru
        _
    $region6: #{tpu_custom_call.1} parent=1 // loop_footer
      %s22 = sadd.s32 1, %s18
    $region7: #{tpu_custom_call.1} parent=1 // loop_footer_branch
      %17 = sbr.rel target = $region3
    $region8: #{tpu_custom_call.1} parent=1 // loop_exit
      _
    %6169 = vsyncpa [#allocation3], 1
    %s6170 = scalar_lea.sflag [#allocation3], 1
    %6171 = vsyncpa %s6170, 1
    %6172 = vsyncpa [#allocation6], 1
    %s6173 = scalar_lea.sflag [#allocation6], 1
    %6174 = vsyncpa %s6173, 1
    %6175 = vsyncpa [#allocation9], 1
    %6176 = vsyncpa [#allocation4], 1
    %s6177 = scalar_lea.sflag [#allocation4], 1
    %6178 = vsyncpa %s6177, 1

</llo_original>
